<compile_context>
chip_gen: v6e
topology: v6e:2x2x1
jax: 0.10.0
libtpu: 0.0.40
codegen_flags: <defaults>
</compile_context>

<pallas_src>
import jax
import jax.numpy as jnp
import numpy as np
from jax.experimental import pallas as pl
from jax.experimental.pallas import tpu as pltpu

# ---- small synthetic config (consistent with Plamo2MambaMixer.__init__) ----
H = 128               # hidden_size
NH = 4                # mamba_num_heads
HD = 32               # hidden_size_per_head (head_dim)
I = NH * HD           # intermediate_size = 128
N = 16                # mamba_d_state
K = 4                 # mamba_d_conv
R = max(64, H // 16)  # time_step_rank = 64
T = 256               # number of prefill tokens (single sequence)
TB = 128              # token chunk (grid block) size -- fills the MXU M dim
NC = T // TB          # number of chunks
EPS = 1e-6            # rms_norm_eps
F32 = jnp.float32
BF16 = jnp.bfloat16
TAIL = 8              # aligned tail rows carried for the conv (>= K-1)


def _softplus(v):
    # matches torch softplus (threshold-style guard); shared by kernel + ref.
    return jnp.where(v > 20.0, v, jnp.log1p(jnp.exp(v)))


def _rms(v, w, eps):
    var = jnp.mean(v * v, axis=-1, keepdims=True)
    return v * jax.lax.rsqrt(var + eps) * w


# ----------------------------- Pallas kernel --------------------------------
def mamba_mixer_kernel(
    x_ref,         # (TB, H)       f32  hidden_states chunk
    w_in_ref,      # (H, 2I)       bf16 in_proj weight (transposed)
    conv_w_ref,    # (K, I)        f32  depthwise conv weight (transposed)
    w_bcdt_ref,    # (I, 2N+R)     bf16 bcdt_proj weight (transposed)
    bn_w_ref,      # (1, N)        f32  B_norm weight
    cn_w_ref,      # (1, N)        f32  C_norm weight
    w_dt_ref,      # (R, NH)       f32  dt_proj weight with dt_norm folded in
    dt_bias_ref,   # (1, NH)       f32
    a_head_ref,    # (1, NH)       f32  A (negative) per head
    d_head_ref,    # (1, NH)       f32  D per head
    w_out_ref,     # (I, H)        bf16 out_proj weight (transposed)
    out_ref,       # (TB, H)       f32
    state_ref,     # (N, I)        f32  SSM state carried across chunks
    win_ref,       # (TB+TAIL, I)  f32  conv window; rows [0,TAIL) = tail carry
):
    c = pl.program_id(0)

    @pl.when(c == 0)
    def _init():
        state_ref[...] = jnp.zeros_like(state_ref)
        win_ref[0:TAIL, :] = jnp.zeros((TAIL, I), F32)

    x = x_ref[...]

    # ---- in_proj: [TB,H] @ [H,2I] -> gate | hidden (bf16 MXU, f32 acc) ----
    proj = jnp.dot(x.astype(BF16), w_in_ref[...], preferred_element_type=F32)
    gate = proj[:, :I]
    hs = proj[:, I:]

    # ---- causal depthwise conv1d with aligned tail carry, then SiLU -------
    win_ref[TAIL:TAIL + TB, :] = hs            # aligned full-tile store
    window = win_ref[...]                      # one load, taps slice the value
    conv_w = conv_w_ref[...]                   # (K, I)
    off = TAIL - (K - 1)
    conv = conv_w[0:1, :] * window[off:off + TB, :]
    for k in range(1, K):
        conv = conv + conv_w[k:k + 1, :] * window[off + k:off + k + TB, :]
    win_ref[0:TAIL, :] = hs[TB - TAIL:TB, :]   # aligned tail for next chunk
    xconv = conv * jax.nn.sigmoid(conv)        # silu

    # ---- bcdt_proj + RMSNorms (dt_norm weight folded into w_dt) -----------
    ssm = jnp.dot(xconv.astype(BF16), w_bcdt_ref[...],
                  preferred_element_type=F32)
    Bmat = _rms(ssm[:, :N], bn_w_ref[...], EPS)           # (TB, N)
    Cmat = _rms(ssm[:, N:2 * N], cn_w_ref[...], EPS)      # (TB, N)
    ts = ssm[:, 2 * N:]                                   # (TB, R)
    tsn = ts * jax.lax.rsqrt(jnp.mean(ts * ts, axis=-1, keepdims=True) + EPS)

    # dt per head (f32: small matmul, feeds exp() chains)
    dt = _softplus(jnp.dot(tsn, w_dt_ref[...], preferred_element_type=F32)
                   + dt_bias_ref[...])                    # (TB, NH)

    a_head = a_head_ref[...]                              # (1, NH), A < 0
    a_tok = dt * a_head                                   # (TB, NH), <= 0

    # ---- chunkwise SSD structure ------------------------------------------
    row = jax.lax.broadcasted_iota(jnp.int32, (TB, TB), 0)
    col = jax.lax.broadcasted_iota(jnp.int32, (TB, TB), 1)
    causal = row >= col
    causal_f = causal.astype(F32)

    # inclusive cumsum over tokens via MXU: cum[t] = sum_{s<=t} a[s]
    cum = jnp.dot(causal_f, a_tok, preferred_element_type=F32)   # (TB, NH)
    cumT = cum.T                                                 # (NH, TB)
    dtT = dt.T                                                   # (NH, TB)

    B_T = Bmat.T                                                 # (N, TB)
    CB = jnp.dot(Cmat, B_T, preferred_element_type=F32)          # (TB, TB)

    gate_silu = gate * jax.nn.sigmoid(gate)                      # (TB, I)

    out_acc = jnp.zeros((TB, H), F32)
    for h in range(NH):
        sl = slice(h * HD, (h + 1) * HD)
        x_h = xconv[:, sl]                                       # (TB, HD)
        cum_col = cum[:, h:h + 1]                                # (TB, 1)
        cum_row = cumT[h:h + 1, :]                               # (1, TB)
        dt_row = dtT[h:h + 1, :]                                 # (1, TB)
        cum_last = cum[TB - 1:TB, h:h + 1]                       # (1, 1)

        # decay[t,s] = exp(cum[t]-cum[s]) for t>=s else 0 (all exponents <= 0)
        seg = jnp.where(causal, cum_col - cum_row, -1e30)        # (TB, TB)
        m_h = CB * jnp.exp(seg) * dt_row                         # (TB, TB)

        state_h = state_ref[:, sl]                               # (N, HD)
        # intra-chunk + carried-state contributions + skip (D) term
        y_h = jnp.dot(m_h, x_h, preferred_element_type=F32)
        y_h = y_h + (jnp.dot(Cmat, state_h, preferred_element_type=F32)
                     * jnp.exp(cum_col))
        y_h = y_h + d_head_ref[0:1, h:h + 1] * x_h
        y_h = y_h * gate_silu[:, sl]                             # gate

        # state update: state' = exp(cum_L)*state + (B * dt * decay_to_end)^T @ x
        w_row = dt_row * jnp.exp(cum_last - cum_row)             # (1, TB)
        state_ref[:, sl] = (jnp.exp(cum_last) * state_h
                            + jnp.dot(B_T * w_row, x_h,
                                      preferred_element_type=F32))

        # per-head slice of out_proj; accumulate in registers, store once
        out_acc = out_acc + jnp.dot(y_h.astype(BF16), w_out_ref[sl, :],
                                    preferred_element_type=F32)

    out_ref[...] = out_acc


# ------------------------------- wrapper -------------------------------------
def plamo2_mamba_mixer_pallas(x, kp):
    def full_spec(arr):
        shp = arr.shape
        return pl.BlockSpec(shp, lambda c: (0,) * len(shp))

    grid_spec = pltpu.PrefetchScalarGridSpec(
        num_scalar_prefetch=0,
        grid=(NC,),
        in_specs=[
            pl.BlockSpec((TB, H), lambda c: (c, 0)),   # x (chunked over tokens)
            full_spec(kp["w_in_T"]),                   # (H, 2I) bf16
            full_spec(kp["conv_w_T"]),                 # (K, I)  f32
            full_spec(kp["w_bcdt_T"]),                 # (I, 2N+R) bf16
            full_spec(kp["b_norm_w"]),                 # (1, N)
            full_spec(kp["c_norm_w"]),                 # (1, N)
            full_spec(kp["w_dt_T"]),                   # (R, NH) f32
            full_spec(kp["dt_bias"]),                  # (1, NH)
            full_spec(kp["a_head"]),                   # (1, NH)
            full_spec(kp["d_head"]),                   # (1, NH)
            full_spec(kp["w_out_T"]),                  # (I, H) bf16
        ],
        out_specs=pl.BlockSpec((TB, H), lambda c: (c, 0)),
        scratch_shapes=[
            pltpu.VMEM((N, I), F32),           # SSM state carry
            pltpu.VMEM((TB + TAIL, I), F32),   # conv window / tail carry
        ],
    )
    return pl.pallas_call(
        mamba_mixer_kernel,
        out_shape=jax.ShapeDtypeStruct((T, H), F32),
        grid_spec=grid_spec,
        compiler_params=pltpu.CompilerParams(
            dimension_semantics=("arbitrary",)),   # sequential: state carry
    )(x, kp["w_in_T"], kp["conv_w_T"], kp["w_bcdt_T"], kp["b_norm_w"],
      kp["c_norm_w"], kp["w_dt_T"], kp["dt_bias"], kp["a_head"], kp["d_head"],
      kp["w_out_T"])


# --------------------------- parameter setup ---------------------------------
def init_params(key):
    ks = jax.random.split(key, 12)
    rbf = lambda w: w.astype(jnp.bfloat16).astype(F32)   # weights live in bf16
    p = {}
    p["w_in"] = rbf(jax.random.normal(ks[0], (2 * I, H), F32) / np.sqrt(H))
    p["conv_w"] = jax.random.normal(ks[1], (I, K), F32) * 0.5
    p["w_bcdt"] = rbf(jax.random.normal(ks[2], (2 * N + R, I), F32) / np.sqrt(I))
    p["w_dt"] = jax.random.normal(ks[3], (NH, R), F32) * (0.5 / np.sqrt(R))
    p["w_out"] = rbf(jax.random.normal(ks[4], (H, I), F32) / np.sqrt(I))
    p["dt_norm_w"] = 1.0 + 0.1 * jax.random.normal(ks[5], (R,), F32)
    p["b_norm_w"] = 1.0 + 0.1 * jax.random.normal(ks[6], (N,), F32)
    p["c_norm_w"] = 1.0 + 0.1 * jax.random.normal(ks[7], (N,), F32)
    a_log = 0.3 * jax.random.normal(ks[8], (NH,), F32) - 2.3
    p["A"] = -jnp.exp(a_log)                  # A = -exp(A_log), weight loader
    p["D"] = 1.0 + 0.1 * jax.random.normal(ks[9], (NH,), F32)
    p["dt_bias"] = -2.0 + 0.2 * jax.random.normal(ks[10], (NH,), F32)
    return p


def make_kernel_params(p):
    kp = {}
    kp["w_in_T"] = p["w_in"].T.astype(BF16)               # (H, 2I)
    kp["conv_w_T"] = p["conv_w"].T                        # (K, I) f32
    kp["w_bcdt_T"] = p["w_bcdt"].T.astype(BF16)           # (I, 2N+R)
    kp["b_norm_w"] = p["b_norm_w"][None, :]               # (1, N)
    kp["c_norm_w"] = p["c_norm_w"][None, :]               # (1, N)
    # dt path: fold dt_norm weight into dt_proj (exact); keep per-head, f32
    kp["w_dt_T"] = p["dt_norm_w"][:, None] * p["w_dt"].T  # (R, NH)
    kp["dt_bias"] = p["dt_bias"][None, :]                 # (1, NH)
    kp["a_head"] = p["A"][None, :]                        # (1, NH)
    kp["d_head"] = p["D"][None, :]                        # (1, NH)
    kp["w_out_T"] = p["w_out"].T.astype(BF16)             # (I, H)
    return kp


# --------------------------- pure-JAX reference -------------------------------
def reference(x, p):
    proj = x @ p["w_in"].T
    gate, hs = proj[:, :I], proj[:, I:]
    xpad = jnp.concatenate([jnp.zeros((K - 1, I), F32), hs], axis=0)
    conv = jnp.zeros((T, I), F32)
    for k in range(K):
        conv = conv + p["conv_w"][:, k][None, :] * xpad[k:k + T, :]
    xconv = jax.nn.silu(conv)
    ssm = xconv @ p["w_bcdt"].T
    Bm = _rms(ssm[:, :N], p["b_norm_w"][None, :], EPS)
    Cm = _rms(ssm[:, N:2 * N], p["c_norm_w"][None, :], EPS)
    ts = _rms(ssm[:, 2 * N:], p["dt_norm_w"][None, :], EPS)
    dt = _softplus(ts @ p["w_dt"].T + p["dt_bias"][None, :])      # (T, NH)
    x3 = xconv.reshape(T, NH, HD)
    z3 = gate.reshape(T, NH, HD)

    def step(state, inp):
        x_t, z_t, b_t, c_t, dt_t = inp
        dA = jnp.exp(dt_t * p["A"])                               # (NH,)
        state = (state * dA[:, None, None]
                 + dt_t[:, None, None] * x_t[:, :, None] * b_t[None, None, :])
        y = (state * c_t[None, None, :]).sum(-1) + p["D"][:, None] * x_t
        y = y * jax.nn.silu(z_t)
        return state, y.reshape(-1)

    state0 = jnp.zeros((NH, HD, N), F32)
    _, Y = jax.lax.scan(step, state0, (x3, z3, Bm, Cm, dt))
    return Y @ p["w_out"].T


# ----------------------------------- main -------------------------------------
if __name__ == "__main__":
    key = jax.random.PRNGKey(0)
    params = init_params(key)
    kparams = make_kernel_params(params)
    x = jax.random.normal(jax.random.fold_in(key, 99), (T, H), F32)

    out = plamo2_mamba_mixer_pallas(x, kparams)
    out = jax.block_until_ready(out)

    ref = jax.block_until_ready(jax.jit(reference)(x, params))

    err = float(jnp.max(jnp.abs(out - ref)))
    bound = 5e-2 * max(1.0, float(jnp.max(jnp.abs(ref))))
    if not np.isfinite(err) or err > bound:
        raise SystemExit(
            f"mismatch vs reference: max abs err = {err} (bound {bound})")
    print("KERNEL_OK")
</pallas_src>

<mosaic_0001>
module attributes {stable_mosaic.version = 11 : i64} {
  func.func @mamba_mixer_kernel(%arg0: i32, %arg1: memref<128x128xf32, #tpu.memory_space<vmem>>, %arg2: memref<128x256xbf16, #tpu.memory_space<vmem>>, %arg3: memref<4x128xf32, #tpu.memory_space<vmem>>, %arg4: memref<128x96xbf16, #tpu.memory_space<vmem>>, %arg5: memref<1x16xf32, #tpu.memory_space<vmem>>, %arg6: memref<1x16xf32, #tpu.memory_space<vmem>>, %arg7: memref<64x4xf32, #tpu.memory_space<vmem>>, %arg8: memref<1x4xf32, #tpu.memory_space<vmem>>, %arg9: memref<1x4xf32, #tpu.memory_space<vmem>>, %arg10: memref<1x4xf32, #tpu.memory_space<vmem>>, %arg11: memref<128x128xbf16, #tpu.memory_space<vmem>>, %arg12: memref<128x128xf32, #tpu.memory_space<vmem>>, %arg13: memref<16x128xf32, #tpu.memory_space<vmem>>, %arg14: memref<136x128xf32, #tpu.memory_space<vmem>>) attributes {dimension_semantics = [#tpu.dimension_semantics<arbitrary>], iteration_bounds = array<i64: 2>, scalar_prefetch = 0 : i64, scratch_operands = 2 : i64, tpu.core_type = #tpu.core_type<tc>, window_params = [{transform_indices = @transform_0, window_bounds = array<i64: 128, 128>}, {pipeline_mode = #tpu.pipeline_mode<synchronous>, transform_indices = @transform_1, window_bounds = array<i64: 128, 256>}, {pipeline_mode = #tpu.pipeline_mode<synchronous>, transform_indices = @transform_2, window_bounds = array<i64: 4, 128>}, {pipeline_mode = #tpu.pipeline_mode<synchronous>, transform_indices = @transform_3, window_bounds = array<i64: 128, 96>}, {pipeline_mode = #tpu.pipeline_mode<synchronous>, transform_indices = @transform_4, window_bounds = array<i64: 1, 16>}, {pipeline_mode = #tpu.pipeline_mode<synchronous>, transform_indices = @transform_5, window_bounds = array<i64: 1, 16>}, {pipeline_mode = #tpu.pipeline_mode<synchronous>, transform_indices = @transform_6, window_bounds = array<i64: 64, 4>}, {pipeline_mode = #tpu.pipeline_mode<synchronous>, transform_indices = @transform_7, window_bounds = array<i64: 1, 4>}, {pipeline_mode = #tpu.pipeline_mode<synchronous>, transform_indices = @transform_8, window_bounds = array<i64: 1, 4>}, {pipeline_mode = #tpu.pipeline_mode<synchronous>, transform_indices = @transform_9, window_bounds = array<i64: 1, 4>}, {pipeline_mode = #tpu.pipeline_mode<synchronous>, transform_indices = @transform_10, window_bounds = array<i64: 128, 128>}, {transform_indices = @transform_11, window_bounds = array<i64: 128, 128>}]} {
    %c0_i32 = arith.constant 0 : i32
    %0 = arith.cmpi eq, %arg0, %c0_i32 : i32
    %1 = arith.extui %0 : i1 to i32
    %c0_i32_0 = arith.constant 0 : i32
    %2 = arith.cmpi ne, %1, %c0_i32_0 : i32
    scf.if %2 {
      %cst_88 = arith.constant 0.000000e+00 : f32
      %284 = vector.broadcast %cst_88 : f32 to vector<16x128xf32>
      %c0_89 = arith.constant 0 : index
      %c0_90 = arith.constant 0 : index
      %285 = vector.load %arg13[%c0_89, %c0_90] : memref<16x128xf32, #tpu.memory_space<vmem>>, vector<16x128xf32>
      tpu.vector_store %arg13[%c0_89, %c0_90], %284 {strides = array<i32>} : memref<16x128xf32, #tpu.memory_space<vmem>>, vector<16x128xf32>,
      %cst_91 = arith.constant 0.000000e+00 : f32
      %286 = vector.broadcast %cst_91 : f32 to vector<8x128xf32>
      %c0_92 = arith.constant 0 : index
      %c0_93 = arith.constant 0 : index
      %287 = vector.load %arg14[%c0_92, %c0_93] : memref<136x128xf32, #tpu.memory_space<vmem>>, vector<8x128xf32>
      tpu.vector_store %arg14[%c0_92, %c0_93], %286 {strides = array<i32>} : memref<136x128xf32, #tpu.memory_space<vmem>>, vector<8x128xf32>,
    } else {
    }
    %c0 = arith.constant 0 : index
    %c0_1 = arith.constant 0 : index
    %3 = vector.load %arg1[%c0, %c0_1] : memref<128x128xf32, #tpu.memory_space<vmem>>, vector<128x128xf32>
    %4 = arith.truncf %3 : vector<128x128xf32> to vector<128x128xbf16>
    %c0_2 = arith.constant 0 : index
    %c0_3 = arith.constant 0 : index
    %5 = vector.load %arg2[%c0_2, %c0_3] : memref<128x256xbf16, #tpu.memory_space<vmem>>, vector<128x256xbf16>
    %cst = arith.constant dense<0.000000e+00> : vector<128x256xf32>
    %6 = tpu.matmul %4, %5, %cst {dimension_numbers = #tpu.dot_dimension_numbers<[1], [0], [0], [1], [0, 0, 1, 1], [], []>} : vector<128x128xbf16>, vector<128x256xbf16>, vector<128x256xf32> -> vector<128x256xf32>
    %7 = vector.extract_strided_slice %6 {offsets = [0, 0], sizes = [128, 128], strides = [1, 1]} : vector<128x256xf32> to vector<128x128xf32>
    %8 = vector.extract_strided_slice %6 {offsets = [0, 128], sizes = [128, 128], strides = [1, 1]} : vector<128x256xf32> to vector<128x128xf32>
    %c8 = arith.constant 8 : index
    %c0_4 = arith.constant 0 : index
    %9 = vector.load %arg14[%c8, %c0_4] : memref<136x128xf32, #tpu.memory_space<vmem>>, vector<128x128xf32>
    tpu.vector_store %arg14[%c8, %c0_4], %8 {strides = array<i32>} : memref<136x128xf32, #tpu.memory_space<vmem>>, vector<128x128xf32>,
    %c0_5 = arith.constant 0 : index
    %c0_6 = arith.constant 0 : index
    %10 = vector.load %arg14[%c0_5, %c0_6] : memref<136x128xf32, #tpu.memory_space<vmem>>, vector<136x128xf32>
    %c0_7 = arith.constant 0 : index
    %c0_8 = arith.constant 0 : index
    %11 = vector.load %arg3[%c0_7, %c0_8] : memref<4x128xf32, #tpu.memory_space<vmem>>, vector<4x128xf32>
    %12 = vector.extract_strided_slice %11 {offsets = [0, 0], sizes = [1, 128], strides = [1, 1]} : vector<4x128xf32> to vector<1x128xf32>
    %13 = vector.extract_strided_slice %10 {offsets = [5, 0], sizes = [128, 128], strides = [1, 1]} : vector<136x128xf32> to vector<128x128xf32>
    %14 = vector.broadcast %12 : vector<1x128xf32> to vector<128x128xf32>
    %15 = arith.mulf %14, %13 : vector<128x128xf32>
    %16 = vector.extract_strided_slice %11 {offsets = [1, 0], sizes = [1, 128], strides = [1, 1]} : vector<4x128xf32> to vector<1x128xf32>
    %17 = vector.extract_strided_slice %10 {offsets = [6, 0], sizes = [128, 128], strides = [1, 1]} : vector<136x128xf32> to vector<128x128xf32>
    %18 = vector.broadcast %16 : vector<1x128xf32> to vector<128x128xf32>
    %19 = arith.mulf %18, %17 : vector<128x128xf32>
    %20 = arith.addf %15, %19 : vector<128x128xf32>
    %21 = vector.extract_strided_slice %11 {offsets = [2, 0], sizes = [1, 128], strides = [1, 1]} : vector<4x128xf32> to vector<1x128xf32>
    %22 = vector.extract_strided_slice %10 {offsets = [7, 0], sizes = [128, 128], strides = [1, 1]} : vector<136x128xf32> to vector<128x128xf32>
    %23 = vector.broadcast %21 : vector<1x128xf32> to vector<128x128xf32>
    %24 = arith.mulf %23, %22 : vector<128x128xf32>
    %25 = arith.addf %20, %24 : vector<128x128xf32>
    %26 = vector.extract_strided_slice %11 {offsets = [3, 0], sizes = [1, 128], strides = [1, 1]} : vector<4x128xf32> to vector<1x128xf32>
    %27 = vector.extract_strided_slice %10 {offsets = [8, 0], sizes = [128, 128], strides = [1, 1]} : vector<136x128xf32> to vector<128x128xf32>
    %28 = vector.broadcast %26 : vector<1x128xf32> to vector<128x128xf32>
    %29 = arith.mulf %28, %27 : vector<128x128xf32>
    %30 = arith.addf %25, %29 : vector<128x128xf32>
    %31 = vector.extract_strided_slice %8 {offsets = [120, 0], sizes = [8, 128], strides = [1, 1]} : vector<128x128xf32> to vector<8x128xf32>
    %c0_9 = arith.constant 0 : index
    %c0_10 = arith.constant 0 : index
    %32 = vector.load %arg14[%c0_9, %c0_10] : memref<136x128xf32, #tpu.memory_space<vmem>>, vector<8x128xf32>
    tpu.vector_store %arg14[%c0_9, %c0_10], %31 {strides = array<i32>} : memref<136x128xf32, #tpu.memory_space<vmem>>, vector<8x128xf32>,
    %33 = arith.negf %30 : vector<128x128xf32>
    %34 = math.exp %33 : vector<128x128xf32>
    %cst_11 = arith.constant 1.000000e+00 : f32
    %35 = vector.broadcast %cst_11 : f32 to vector<128x128xf32>
    %36 = arith.addf %35, %34 : vector<128x128xf32>
    %37 = arith.divf %35, %36 : vector<128x128xf32>
    %38 = arith.mulf %30, %37 : vector<128x128xf32>
    %39 = arith.truncf %38 : vector<128x128xf32> to vector<128x128xbf16>
    %c0_12 = arith.constant 0 : index
    %c0_13 = arith.constant 0 : index
    %40 = vector.load %arg4[%c0_12, %c0_13] : memref<128x96xbf16, #tpu.memory_space<vmem>>, vector<128x96xbf16>
    %cst_14 = arith.constant dense<0.000000e+00> : vector<128x96xf32>
    %41 = tpu.matmul %39, %40, %cst_14 {dimension_numbers = #tpu.dot_dimension_numbers<[1], [0], [0], [1], [0, 0, 1, 1], [], []>} : vector<128x128xbf16>, vector<128x96xbf16>, vector<128x96xf32> -> vector<128x96xf32>
    %42 = vector.extract_strided_slice %41 {offsets = [0, 0], sizes = [128, 16], strides = [1, 1]} : vector<128x96xf32> to vector<128x16xf32>
    %c0_15 = arith.constant 0 : index
    %c0_16 = arith.constant 0 : index
    %43 = vector.load %arg5[%c0_15, %c0_16] : memref<1x16xf32, #tpu.memory_space<vmem>>, vector<1x16xf32>
    %44 = arith.mulf %42, %42 : vector<128x16xf32>
    %cst_17 = arith.constant dense<0.000000e+00> : vector<128xf32>
    %45 = vector.multi_reduction <add>, %44, %cst_17 [1] : vector<128x16xf32> to vector<128xf32>
    %46 = vector.shape_cast %45 : vector<128xf32> to vector<128x1xf32>
    %cst_18 = arith.constant 1.600000e+01 : f32
    %47 = vector.broadcast %cst_18 : f32 to vector<128x1xf32>
    %48 = arith.divf %46, %47 : vector<128x1xf32>
    %cst_19 = arith.constant 9.99999997E-7 : f32
    %49 = vector.broadcast %cst_19 : f32 to vector<128x1xf32>
    %50 = arith.addf %48, %49 : vector<128x1xf32>
    %51 = math.rsqrt %50 : vector<128x1xf32>
    %52 = vector.broadcast %51 : vector<128x1xf32> to vector<128x16xf32>
    %53 = arith.mulf %42, %52 : vector<128x16xf32>
    %54 = vector.broadcast %43 : vector<1x16xf32> to vector<128x16xf32>
    %55 = arith.mulf %53, %54 : vector<128x16xf32>
    %56 = vector.extract_strided_slice %41 {offsets = [0, 16], sizes = [128, 16], strides = [1, 1]} : vector<128x96xf32> to vector<128x16xf32>
    %c0_20 = arith.constant 0 : index
    %c0_21 = arith.constant 0 : index
    %57 = vector.load %arg6[%c0_20, %c0_21] : memref<1x16xf32, #tpu.memory_space<vmem>>, vector<1x16xf32>
    %58 = arith.mulf %56, %56 : vector<128x16xf32>
    %cst_22 = arith.constant dense<0.000000e+00> : vector<128xf32>
    %59 = vector.multi_reduction <add>, %58, %cst_22 [1] : vector<128x16xf32> to vector<128xf32>
    %60 = vector.shape_cast %59 : vector<128xf32> to vector<128x1xf32>
    %cst_23 = arith.constant 1.600000e+01 : f32
    %61 = vector.broadcast %cst_23 : f32 to vector<128x1xf32>
    %62 = arith.divf %60, %61 : vector<128x1xf32>
    %cst_24 = arith.constant 9.99999997E-7 : f32
    %63 = vector.broadcast %cst_24 : f32 to vector<128x1xf32>
    %64 = arith.addf %62, %63 : vector<128x1xf32>
    %65 = math.rsqrt %64 : vector<128x1xf32>
    %66 = vector.broadcast %65 : vector<128x1xf32> to vector<128x16xf32>
    %67 = arith.mulf %56, %66 : vector<128x16xf32>
    %68 = vector.broadcast %57 : vector<1x16xf32> to vector<128x16xf32>
    %69 = arith.mulf %67, %68 : vector<128x16xf32>
    %70 = vector.extract_strided_slice %41 {offsets = [0, 32], sizes = [128, 64], strides = [1, 1]} : vector<128x96xf32> to vector<128x64xf32>
    %71 = arith.mulf %70, %70 : vector<128x64xf32>
    %cst_25 = arith.constant dense<0.000000e+00> : vector<128xf32>
    %72 = vector.multi_reduction <add>, %71, %cst_25 [1] : vector<128x64xf32> to vector<128xf32>
    %73 = vector.shape_cast %72 : vector<128xf32> to vector<128x1xf32>
    %cst_26 = arith.constant 6.400000e+01 : f32
    %74 = vector.broadcast %cst_26 : f32 to vector<128x1xf32>
    %75 = arith.divf %73, %74 : vector<128x1xf32>
    %cst_27 = arith.constant 9.99999997E-7 : f32
    %76 = vector.broadcast %cst_27 : f32 to vector<128x1xf32>
    %77 = arith.addf %75, %76 : vector<128x1xf32>
    %78 = math.rsqrt %77 : vector<128x1xf32>
    %79 = vector.broadcast %78 : vector<128x1xf32> to vector<128x64xf32>
    %80 = arith.mulf %70, %79 : vector<128x64xf32>
    %c0_28 = arith.constant 0 : index
    %c0_29 = arith.constant 0 : index
    %81 = vector.load %arg7[%c0_28, %c0_29] : memref<64x4xf32, #tpu.memory_space<vmem>>, vector<64x4xf32>
    %cst_30 = arith.constant dense<0.000000e+00> : vector<128x4xf32>
    %82 = tpu.matmul %80, %81, %cst_30 {dimension_numbers = #tpu.dot_dimension_numbers<[1], [0], [0], [1], [0, 0, 1, 1], [], []>} : vector<128x64xf32>, vector<64x4xf32>, vector<128x4xf32> -> vector<128x4xf32>
    %c0_31 = arith.constant 0 : index
    %c0_32 = arith.constant 0 : index
    %83 = vector.load %arg8[%c0_31, %c0_32] : memref<1x4xf32, #tpu.memory_space<vmem>>, vector<1x4xf32>
    %84 = vector.broadcast %83 : vector<1x4xf32> to vector<128x4xf32>
    %85 = arith.addf %82, %84 : vector<128x4xf32>
    %cst_33 = arith.constant 2.000000e+01 : f32
    %86 = vector.broadcast %cst_33 : f32 to vector<128x4xf32>
    %87 = arith.cmpf ogt, %85, %86 : vector<128x4xf32>
    %88 = math.exp %85 : vector<128x4xf32>
    %89 = math.log1p %88 : vector<128x4xf32>
    %90 = arith.select %87, %85, %89 : vector<128x4xi1>, vector<128x4xf32>
    %c0_34 = arith.constant 0 : index
    %c0_35 = arith.constant 0 : index
    %91 = vector.load %arg9[%c0_34, %c0_35] : memref<1x4xf32, #tpu.memory_space<vmem>>, vector<1x4xf32>
    %92 = vector.broadcast %91 : vector<1x4xf32> to vector<128x4xf32>
    %93 = arith.mulf %90, %92 : vector<128x4xf32>
    %94 = tpu.iota {dimensions = array<i32: 0>} : vector<128x128xi32>
    %95 = tpu.iota {dimensions = array<i32: 1>} : vector<128x128xi32>
    %96 = arith.cmpi sge, %94, %95 : vector<128x128xi32>
    %97 = arith.extui %96 : vector<128x128xi1> to vector<128x128xi32>
    %98 = arith.sitofp %97 : vector<128x128xi32> to vector<128x128xf32>
    %cst_36 = arith.constant dense<0.000000e+00> : vector<128x4xf32>
    %99 = tpu.matmul %98, %93, %cst_36 {dimension_numbers = #tpu.dot_dimension_numbers<[1], [0], [0], [1], [0, 0, 1, 1], [], []>} : vector<128x128xf32>, vector<128x4xf32>, vector<128x4xf32> -> vector<128x4xf32>
    %100 = tpu.transpose %99, [1, 0] : vector<128x4xf32> -> vector<4x128xf32>
    %101 = tpu.transpose %90, [1, 0] : vector<128x4xf32> -> vector<4x128xf32>
    %102 = tpu.transpose %55, [1, 0] : vector<128x16xf32> -> vector<16x128xf32>
    %cst_37 = arith.constant dense<0.000000e+00> : vector<128x128xf32>
    %103 = tpu.matmul %69, %102, %cst_37 {dimension_numbers = #tpu.dot_dimension_numbers<[1], [0], [0], [1], [0, 0, 1, 1], [], []>} : vector<128x16xf32>, vector<16x128xf32>, vector<128x128xf32> -> vector<128x128xf32>
    %104 = arith.negf %7 : vector<128x128xf32>
    %105 = math.exp %104 : vector<128x128xf32>
    %cst_38 = arith.constant 1.000000e+00 : f32
    %106 = vector.broadcast %cst_38 : f32 to vector<128x128xf32>
    %107 = arith.addf %106, %105 : vector<128x128xf32>
    %108 = arith.divf %106, %107 : vector<128x128xf32>
    %109 = arith.mulf %7, %108 : vector<128x128xf32>
    %cst_39 = arith.constant 0.000000e+00 : f32
    %110 = vector.broadcast %cst_39 : f32 to vector<128x128xf32>
    %111 = vector.extract_strided_slice %38 {offsets = [0, 0], sizes = [128, 32], strides = [1, 1]} : vector<128x128xf32> to vector<128x32xf32>
    %112 = vector.extract_strided_slice %99 {offsets = [0, 0], sizes = [128, 1], strides = [1, 1]} : vector<128x4xf32> to vector<128x1xf32>
    %113 = vector.extract_strided_slice %100 {offsets = [0, 0], sizes = [1, 128], strides = [1, 1]} : vector<4x128xf32> to vector<1x128xf32>
    %114 = vector.extract_strided_slice %101 {offsets = [0, 0], sizes = [1, 128], strides = [1, 1]} : vector<4x128xf32> to vector<1x128xf32>
    %115 = vector.extract_strided_slice %99 {offsets = [127, 0], sizes = [1, 1], strides = [1, 1]} : vector<128x4xf32> to vector<1x1xf32>
    %116 = vector.broadcast %112 : vector<128x1xf32> to vector<128x128xf32>
    %117 = vector.broadcast %113 : vector<1x128xf32> to vector<128x128xf32>
    %118 = arith.subf %116, %117 : vector<128x128xf32>
    %cst_40 = arith.constant -1.000000e+30 : f32
    %119 = vector.broadcast %cst_40 : f32 to vector<128x128xf32>
    %120 = arith.select %96, %118, %119 : vector<128x128xi1>, vector<128x128xf32>
    %121 = math.exp %120 : vector<128x128xf32>
    %122 = arith.mulf %103, %121 : vector<128x128xf32>
    %123 = vector.broadcast %114 : vector<1x128xf32> to vector<128x128xf32>
    %124 = arith.mulf %122, %123 : vector<128x128xf32>
    %c0_41 = arith.constant 0 : index
    %c0_42 = arith.constant 0 : index
    %125 = vector.load %arg13[%c0_41, %c0_42] : memref<16x128xf32, #tpu.memory_space<vmem>>, vector<16x32xf32>
    %cst_43 = arith.constant dense<0.000000e+00> : vector<128x32xf32>
    %126 = tpu.matmul %124, %111, %cst_43 {dimension_numbers = #tpu.dot_dimension_numbers<[1], [0], [0], [1], [0, 0, 1, 1], [], []>} : vector<128x128xf32>, vector<128x32xf32>, vector<128x32xf32> -> vector<128x32xf32>
    %cst_44 = arith.constant dense<0.000000e+00> : vector<128x32xf32>
    %127 = tpu.matmul %69, %125, %cst_44 {dimension_numbers = #tpu.dot_dimension_numbers<[1], [0], [0], [1], [0, 0, 1, 1], [], []>} : vector<128x16xf32>, vector<16x32xf32>, vector<128x32xf32> -> vector<128x32xf32>
    %128 = math.exp %112 : vector<128x1xf32>
    %129 = vector.broadcast %128 : vector<128x1xf32> to vector<128x32xf32>
    %130 = arith.mulf %127, %129 : vector<128x32xf32>
    %131 = arith.addf %126, %130 : vector<128x32xf32>
    %c0_45 = arith.constant 0 : index
    %c0_46 = arith.constant 0 : index
    %132 = vector.load %arg10[%c0_45, %c0_46] : memref<1x4xf32, #tpu.memory_space<vmem>>, vector<1x1xf32>
    %133 = vector.broadcast %132 : vector<1x1xf32> to vector<128x32xf32>
    %134 = arith.mulf %133, %111 : vector<128x32xf32>
    %135 = arith.addf %131, %134 : vector<128x32xf32>
    %136 = vector.extract_strided_slice %109 {offsets = [0, 0], sizes = [128, 32], strides = [1, 1]} : vector<128x128xf32> to vector<128x32xf32>
    %137 = arith.mulf %135, %136 : vector<128x32xf32>
    %138 = vector.broadcast %115 : vector<1x1xf32> to vector<1x128xf32>
    %139 = arith.subf %138, %113 : vector<1x128xf32>
    %140 = math.exp %139 : vector<1x128xf32>
    %141 = arith.mulf %114, %140 : vector<1x128xf32>
    %142 = math.exp %115 : vector<1x1xf32>
    %143 = vector.broadcast %142 : vector<1x1xf32> to vector<16x32xf32>
    %144 = arith.mulf %143, %125 : vector<16x32xf32>
    %145 = vector.broadcast %141 : vector<1x128xf32> to vector<16x128xf32>
    %146 = arith.mulf %102, %145 : vector<16x128xf32>
    %cst_47 = arith.constant dense<0.000000e+00> : vector<16x32xf32>
    %147 = tpu.matmul %146, %111, %cst_47 {dimension_numbers = #tpu.dot_dimension_numbers<[1], [0], [0], [1], [0, 0, 1, 1], [], []>} : vector<16x128xf32>, vector<128x32xf32>, vector<16x32xf32> -> vector<16x32xf32>
    %148 = arith.addf %144, %147 : vector<16x32xf32>
    %c0_48 = arith.constant 0 : index
    %c0_49 = arith.constant 0 : index
    %149 = vector.load %arg13[%c0_48, %c0_49] : memref<16x128xf32, #tpu.memory_space<vmem>>, vector<16x32xf32>
    tpu.vector_store %arg13[%c0_48, %c0_49], %148 {strides = array<i32>} : memref<16x128xf32, #tpu.memory_space<vmem>>, vector<16x32xf32>,
    %150 = arith.truncf %137 : vector<128x32xf32> to vector<128x32xbf16>
    %c0_50 = arith.constant 0 : index
    %c0_51 = arith.constant 0 : index
    %151 = vector.load %arg11[%c0_50, %c0_51] : memref<128x128xbf16, #tpu.memory_space<vmem>>, vector<32x128xbf16>
    %cst_52 = arith.constant dense<0.000000e+00> : vector<128x128xf32>
    %152 = tpu.matmul %150, %151, %cst_52 {dimension_numbers = #tpu.dot_dimension_numbers<[1], [0], [0], [1], [0, 0, 1, 1], [], []>} : vector<128x32xbf16>, vector<32x128xbf16>, vector<128x128xf32> -> vector<128x128xf32>
    %153 = arith.addf %110, %152 : vector<128x128xf32>
    %154 = vector.extract_strided_slice %38 {offsets = [0, 32], sizes = [128, 32], strides = [1, 1]} : vector<128x128xf32> to vector<128x32xf32>
    %155 = vector.extract_strided_slice %99 {offsets = [0, 1], sizes = [128, 1], strides = [1, 1]} : vector<128x4xf32> to vector<128x1xf32>
    %156 = vector.extract_strided_slice %100 {offsets = [1, 0], sizes = [1, 128], strides = [1, 1]} : vector<4x128xf32> to vector<1x128xf32>
    %157 = vector.extract_strided_slice %101 {offsets = [1, 0], sizes = [1, 128], strides = [1, 1]} : vector<4x128xf32> to vector<1x128xf32>
    %158 = vector.extract_strided_slice %99 {offsets = [127, 1], sizes = [1, 1], strides = [1, 1]} : vector<128x4xf32> to vector<1x1xf32>
    %159 = vector.broadcast %155 : vector<128x1xf32> to vector<128x128xf32>
    %160 = vector.broadcast %156 : vector<1x128xf32> to vector<128x128xf32>
    %161 = arith.subf %159, %160 : vector<128x128xf32>
    %cst_53 = arith.constant -1.000000e+30 : f32
    %162 = vector.broadcast %cst_53 : f32 to vector<128x128xf32>
    %163 = arith.select %96, %161, %162 : vector<128x128xi1>, vector<128x128xf32>
    %164 = math.exp %163 : vector<128x128xf32>
    %165 = arith.mulf %103, %164 : vector<128x128xf32>
    %166 = vector.broadcast %157 : vector<1x128xf32> to vector<128x128xf32>
    %167 = arith.mulf %165, %166 : vector<128x128xf32>
    %c0_54 = arith.constant 0 : index
    %c32 = arith.constant 32 : index
    %168 = vector.load %arg13[%c0_54, %c32] : memref<16x128xf32, #tpu.memory_space<vmem>>, vector<16x32xf32>
    %cst_55 = arith.constant dense<0.000000e+00> : vector<128x32xf32>
    %169 = tpu.matmul %167, %154, %cst_55 {dimension_numbers = #tpu.dot_dimension_numbers<[1], [0], [0], [1], [0, 0, 1, 1], [], []>} : vector<128x128xf32>, vector<128x32xf32>, vector<128x32xf32> -> vector<128x32xf32>
    %cst_56 = arith.constant dense<0.000000e+00> : vector<128x32xf32>
    %170 = tpu.matmul %69, %168, %cst_56 {dimension_numbers = #tpu.dot_dimension_numbers<[1], [0], [0], [1], [0, 0, 1, 1], [], []>} : vector<128x16xf32>, vector<16x32xf32>, vector<128x32xf32> -> vector<128x32xf32>
    %171 = math.exp %155 : vector<128x1xf32>
    %172 = vector.broadcast %171 : vector<128x1xf32> to vector<128x32xf32>
    %173 = arith.mulf %170, %172 : vector<128x32xf32>
    %174 = arith.addf %169, %173 : vector<128x32xf32>
    %c0_57 = arith.constant 0 : index
    %c1 = arith.constant 1 : index
    %175 = vector.load %arg10[%c0_57, %c1] : memref<1x4xf32, #tpu.memory_space<vmem>>, vector<1x1xf32>
    %176 = vector.broadcast %175 : vector<1x1xf32> to vector<128x32xf32>
    %177 = arith.mulf %176, %154 : vector<128x32xf32>
    %178 = arith.addf %174, %177 : vector<128x32xf32>
    %179 = vector.extract_strided_slice %109 {offsets = [0, 32], sizes = [128, 32], strides = [1, 1]} : vector<128x128xf32> to vector<128x32xf32>
    %180 = arith.mulf %178, %179 : vector<128x32xf32>
    %181 = vector.broadcast %158 : vector<1x1xf32> to vector<1x128xf32>
    %182 = arith.subf %181, %156 : vector<1x128xf32>
    %183 = math.exp %182 : vector<1x128xf32>
    %184 = arith.mulf %157, %183 : vector<1x128xf32>
    %185 = math.exp %158 : vector<1x1xf32>
    %186 = vector.broadcast %185 : vector<1x1xf32> to vector<16x32xf32>
    %187 = arith.mulf %186, %168 : vector<16x32xf32>
    %188 = vector.broadcast %184 : vector<1x128xf32> to vector<16x128xf32>
    %189 = arith.mulf %102, %188 : vector<16x128xf32>
    %cst_58 = arith.constant dense<0.000000e+00> : vector<16x32xf32>
    %190 = tpu.matmul %189, %154, %cst_58 {dimension_numbers = #tpu.dot_dimension_numbers<[1], [0], [0], [1], [0, 0, 1, 1], [], []>} : vector<16x128xf32>, vector<128x32xf32>, vector<16x32xf32> -> vector<16x32xf32>
    %191 = arith.addf %187, %190 : vector<16x32xf32>
    %c0_59 = arith.constant 0 : index
    %c32_60 = arith.constant 32 : index
    %192 = vector.load %arg13[%c0_59, %c32_60] : memref<16x128xf32, #tpu.memory_space<vmem>>, vector<16x32xf32>
    tpu.vector_store %arg13[%c0_59, %c32_60], %191 {strides = array<i32>} : memref<16x128xf32, #tpu.memory_space<vmem>>, vector<16x32xf32>,
    %193 = arith.truncf %180 : vector<128x32xf32> to vector<128x32xbf16>
    %c32_61 = arith.constant 32 : index
    %c0_62 = arith.constant 0 : index
    %194 = vector.load %arg11[%c32_61, %c0_62] : memref<128x128xbf16, #tpu.memory_space<vmem>>, vector<32x128xbf16>
    %cst_63 = arith.constant dense<0.000000e+00> : vector<128x128xf32>
    %195 = tpu.matmul %193, %194, %cst_63 {dimension_numbers = #tpu.dot_dimension_numbers<[1], [0], [0], [1], [0, 0, 1, 1], [], []>} : vector<128x32xbf16>, vector<32x128xbf16>, vector<128x128xf32> -> vector<128x128xf32>
    %196 = arith.addf %153, %195 : vector<128x128xf32>
    %197 = vector.extract_strided_slice %38 {offsets = [0, 64], sizes = [128, 32], strides = [1, 1]} : vector<128x128xf32> to vector<128x32xf32>
    %198 = vector.extract_strided_slice %99 {offsets = [0, 2], sizes = [128, 1], strides = [1, 1]} : vector<128x4xf32> to vector<128x1xf32>
    %199 = vector.extract_strided_slice %100 {offsets = [2, 0], sizes = [1, 128], strides = [1, 1]} : vector<4x128xf32> to vector<1x128xf32>
    %200 = vector.extract_strided_slice %101 {offsets = [2, 0], sizes = [1, 128], strides = [1, 1]} : vector<4x128xf32> to vector<1x128xf32>
    %201 = vector.extract_strided_slice %99 {offsets = [127, 2], sizes = [1, 1], strides = [1, 1]} : vector<128x4xf32> to vector<1x1xf32>
    %202 = vector.broadcast %198 : vector<128x1xf32> to vector<128x128xf32>
    %203 = vector.broadcast %199 : vector<1x128xf32> to vector<128x128xf32>
    %204 = arith.subf %202, %203 : vector<128x128xf32>
    %cst_64 = arith.constant -1.000000e+30 : f32
    %205 = vector.broadcast %cst_64 : f32 to vector<128x128xf32>
    %206 = arith.select %96, %204, %205 : vector<128x128xi1>, vector<128x128xf32>
    %207 = math.exp %206 : vector<128x128xf32>
    %208 = arith.mulf %103, %207 : vector<128x128xf32>
    %209 = vector.broadcast %200 : vector<1x128xf32> to vector<128x128xf32>
    %210 = arith.mulf %208, %209 : vector<128x128xf32>
    %c0_65 = arith.constant 0 : index
    %c64 = arith.constant 64 : index
    %211 = vector.load %arg13[%c0_65, %c64] : memref<16x128xf32, #tpu.memory_space<vmem>>, vector<16x32xf32>
    %cst_66 = arith.constant dense<0.000000e+00> : vector<128x32xf32>
    %212 = tpu.matmul %210, %197, %cst_66 {dimension_numbers = #tpu.dot_dimension_numbers<[1], [0], [0], [1], [0, 0, 1, 1], [], []>} : vector<128x128xf32>, vector<128x32xf32>, vector<128x32xf32> -> vector<128x32xf32>
    %cst_67 = arith.constant dense<0.000000e+00> : vector<128x32xf32>
    %213 = tpu.matmul %69, %211, %cst_67 {dimension_numbers = #tpu.dot_dimension_numbers<[1], [0], [0], [1], [0, 0, 1, 1], [], []>} : vector<128x16xf32>, vector<16x32xf32>, vector<128x32xf32> -> vector<128x32xf32>
    %214 = math.exp %198 : vector<128x1xf32>
    %215 = vector.broadcast %214 : vector<128x1xf32> to vector<128x32xf32>
    %216 = arith.mulf %213, %215 : vector<128x32xf32>
    %217 = arith.addf %212, %216 : vector<128x32xf32>
    %c0_68 = arith.constant 0 : index
    %c2 = arith.constant 2 : index
    %218 = vector.load %arg10[%c0_68, %c2] : memref<1x4xf32, #tpu.memory_space<vmem>>, vector<1x1xf32>
    %219 = vector.broadcast %218 : vector<1x1xf32> to vector<128x32xf32>
    %220 = arith.mulf %219, %197 : vector<128x32xf32>
    %221 = arith.addf %217, %220 : vector<128x32xf32>
    %222 = vector.extract_strided_slice %109 {offsets = [0, 64], sizes = [128, 32], strides = [1, 1]} : vector<128x128xf32> to vector<128x32xf32>
    %223 = arith.mulf %221, %222 : vector<128x32xf32>
    %224 = vector.broadcast %201 : vector<1x1xf32> to vector<1x128xf32>
    %225 = arith.subf %224, %199 : vector<1x128xf32>
    %226 = math.exp %225 : vector<1x128xf32>
    %227 = arith.mulf %200, %226 : vector<1x128xf32>
    %228 = math.exp %201 : vector<1x1xf32>
    %229 = vector.broadcast %228 : vector<1x1xf32> to vector<16x32xf32>
    %230 = arith.mulf %229, %211 : vector<16x32xf32>
    %231 = vector.broadcast %227 : vector<1x128xf32> to vector<16x128xf32>
    %232 = arith.mulf %102, %231 : vector<16x128xf32>
    %cst_69 = arith.constant dense<0.000000e+00> : vector<16x32xf32>
    %233 = tpu.matmul %232, %197, %cst_69 {dimension_numbers = #tpu.dot_dimension_numbers<[1], [0], [0], [1], [0, 0, 1, 1], [], []>} : vector<16x128xf32>, vector<128x32xf32>, vector<16x32xf32> -> vector<16x32xf32>
    %234 = arith.addf %230, %233 : vector<16x32xf32>
    %c0_70 = arith.constant 0 : index
    %c64_71 = arith.constant 64 : index
    %235 = vector.load %arg13[%c0_70, %c64_71] : memref<16x128xf32, #tpu.memory_space<vmem>>, vector<16x32xf32>
    tpu.vector_store %arg13[%c0_70, %c64_71], %234 {strides = array<i32>} : memref<16x128xf32, #tpu.memory_space<vmem>>, vector<16x32xf32>,
    %236 = arith.truncf %223 : vector<128x32xf32> to vector<128x32xbf16>
    %c64_72 = arith.constant 64 : index
    %c0_73 = arith.constant 0 : index
    %237 = vector.load %arg11[%c64_72, %c0_73] : memref<128x128xbf16, #tpu.memory_space<vmem>>, vector<32x128xbf16>
    %cst_74 = arith.constant dense<0.000000e+00> : vector<128x128xf32>
    %238 = tpu.matmul %236, %237, %cst_74 {dimension_numbers = #tpu.dot_dimension_numbers<[1], [0], [0], [1], [0, 0, 1, 1], [], []>} : vector<128x32xbf16>, vector<32x128xbf16>, vector<128x128xf32> -> vector<128x128xf32>
    %239 = arith.addf %196, %238 : vector<128x128xf32>
    %240 = vector.extract_strided_slice %38 {offsets = [0, 96], sizes = [128, 32], strides = [1, 1]} : vector<128x128xf32> to vector<128x32xf32>
    %241 = vector.extract_strided_slice %99 {offsets = [0, 3], sizes = [128, 1], strides = [1, 1]} : vector<128x4xf32> to vector<128x1xf32>
    %242 = vector.extract_strided_slice %100 {offsets = [3, 0], sizes = [1, 128], strides = [1, 1]} : vector<4x128xf32> to vector<1x128xf32>
    %243 = vector.extract_strided_slice %101 {offsets = [3, 0], sizes = [1, 128], strides = [1, 1]} : vector<4x128xf32> to vector<1x128xf32>
    %244 = vector.extract_strided_slice %99 {offsets = [127, 3], sizes = [1, 1], strides = [1, 1]} : vector<128x4xf32> to vector<1x1xf32>
    %245 = vector.broadcast %241 : vector<128x1xf32> to vector<128x128xf32>
    %246 = vector.broadcast %242 : vector<1x128xf32> to vector<128x128xf32>
    %247 = arith.subf %245, %246 : vector<128x128xf32>
    %cst_75 = arith.constant -1.000000e+30 : f32
    %248 = vector.broadcast %cst_75 : f32 to vector<128x128xf32>
    %249 = arith.select %96, %247, %248 : vector<128x128xi1>, vector<128x128xf32>
    %250 = math.exp %249 : vector<128x128xf32>
    %251 = arith.mulf %103, %250 : vector<128x128xf32>
    %252 = vector.broadcast %243 : vector<1x128xf32> to vector<128x128xf32>
    %253 = arith.mulf %251, %252 : vector<128x128xf32>
    %c0_76 = arith.constant 0 : index
    %c96 = arith.constant 96 : index
    %254 = vector.load %arg13[%c0_76, %c96] : memref<16x128xf32, #tpu.memory_space<vmem>>, vector<16x32xf32>
    %cst_77 = arith.constant dense<0.000000e+00> : vector<128x32xf32>
    %255 = tpu.matmul %253, %240, %cst_77 {dimension_numbers = #tpu.dot_dimension_numbers<[1], [0], [0], [1], [0, 0, 1, 1], [], []>} : vector<128x128xf32>, vector<128x32xf32>, vector<128x32xf32> -> vector<128x32xf32>
    %cst_78 = arith.constant dense<0.000000e+00> : vector<128x32xf32>
    %256 = tpu.matmul %69, %254, %cst_78 {dimension_numbers = #tpu.dot_dimension_numbers<[1], [0], [0], [1], [0, 0, 1, 1], [], []>} : vector<128x16xf32>, vector<16x32xf32>, vector<128x32xf32> -> vector<128x32xf32>
    %257 = math.exp %241 : vector<128x1xf32>
    %258 = vector.broadcast %257 : vector<128x1xf32> to vector<128x32xf32>
    %259 = arith.mulf %256, %258 : vector<128x32xf32>
    %260 = arith.addf %255, %259 : vector<128x32xf32>
    %c0_79 = arith.constant 0 : index
    %c3 = arith.constant 3 : index
    %261 = vector.load %arg10[%c0_79, %c3] : memref<1x4xf32, #tpu.memory_space<vmem>>, vector<1x1xf32>
    %262 = vector.broadcast %261 : vector<1x1xf32> to vector<128x32xf32>
    %263 = arith.mulf %262, %240 : vector<128x32xf32>
    %264 = arith.addf %260, %263 : vector<128x32xf32>
    %265 = vector.extract_strided_slice %109 {offsets = [0, 96], sizes = [128, 32], strides = [1, 1]} : vector<128x128xf32> to vector<128x32xf32>
    %266 = arith.mulf %264, %265 : vector<128x32xf32>
    %267 = vector.broadcast %244 : vector<1x1xf32> to vector<1x128xf32>
    %268 = arith.subf %267, %242 : vector<1x128xf32>
    %269 = math.exp %268 : vector<1x128xf32>
    %270 = arith.mulf %243, %269 : vector<1x128xf32>
    %271 = math.exp %244 : vector<1x1xf32>
    %272 = vector.broadcast %271 : vector<1x1xf32> to vector<16x32xf32>
    %273 = arith.mulf %272, %254 : vector<16x32xf32>
    %274 = vector.broadcast %270 : vector<1x128xf32> to vector<16x128xf32>
    %275 = arith.mulf %102, %274 : vector<16x128xf32>
    %cst_80 = arith.constant dense<0.000000e+00> : vector<16x32xf32>
    %276 = tpu.matmul %275, %240, %cst_80 {dimension_numbers = #tpu.dot_dimension_numbers<[1], [0], [0], [1], [0, 0, 1, 1], [], []>} : vector<16x128xf32>, vector<128x32xf32>, vector<16x32xf32> -> vector<16x32xf32>
    %277 = arith.addf %273, %276 : vector<16x32xf32>
    %c0_81 = arith.constant 0 : index
    %c96_82 = arith.constant 96 : index
    %278 = vector.load %arg13[%c0_81, %c96_82] : memref<16x128xf32, #tpu.memory_space<vmem>>, vector<16x32xf32>
    tpu.vector_store %arg13[%c0_81, %c96_82], %277 {strides = array<i32>} : memref<16x128xf32, #tpu.memory_space<vmem>>, vector<16x32xf32>,
    %279 = arith.truncf %266 : vector<128x32xf32> to vector<128x32xbf16>
    %c96_83 = arith.constant 96 : index
    %c0_84 = arith.constant 0 : index
    %280 = vector.load %arg11[%c96_83, %c0_84] : memref<128x128xbf16, #tpu.memory_space<vmem>>, vector<32x128xbf16>
    %cst_85 = arith.constant dense<0.000000e+00> : vector<128x128xf32>
    %281 = tpu.matmul %279, %280, %cst_85 {dimension_numbers = #tpu.dot_dimension_numbers<[1], [0], [0], [1], [0, 0, 1, 1], [], []>} : vector<128x32xbf16>, vector<32x128xbf16>, vector<128x128xf32> -> vector<128x128xf32>
    %282 = arith.addf %239, %281 : vector<128x128xf32>
    %c0_86 = arith.constant 0 : index
    %c0_87 = arith.constant 0 : index
    %283 = vector.load %arg12[%c0_86, %c0_87] : memref<128x128xf32, #tpu.memory_space<vmem>>, vector<128x128xf32>
    tpu.vector_store %arg12[%c0_86, %c0_87], %282 {strides = array<i32>} : memref<128x128xf32, #tpu.memory_space<vmem>>, vector<128x128xf32>,
    return
  }
  func.func @transform_0(%arg0: i32) -> (i32, i32) {
    %c0_i32 = arith.constant 0 : i32
    %c0_i32_0 = arith.constant 0 : i32
    return %arg0, %c0_i32 : i32, i32
  }
  func.func @transform_1(%arg0: i32) -> (i32, i32) {
    %c0_i32 = arith.constant 0 : i32
    %c0_i32_0 = arith.constant 0 : i32
    %c0_i32_1 = arith.constant 0 : i32
    return %c0_i32, %c0_i32_0 : i32, i32
  }
  func.func @transform_2(%arg0: i32) -> (i32, i32) {
    %c0_i32 = arith.constant 0 : i32
    %c0_i32_0 = arith.constant 0 : i32
    %c0_i32_1 = arith.constant 0 : i32
    return %c0_i32, %c0_i32_0 : i32, i32
  }
  func.func @transform_3(%arg0: i32) -> (i32, i32) {
    %c0_i32 = arith.constant 0 : i32
    %c0_i32_0 = arith.constant 0 : i32
    %c0_i32_1 = arith.constant 0 : i32
    return %c0_i32, %c0_i32_0 : i32, i32
  }
  func.func @transform_4(%arg0: i32) -> (i32, i32) {
    %c0_i32 = arith.constant 0 : i32
    %c0_i32_0 = arith.constant 0 : i32
    %c0_i32_1 = arith.constant 0 : i32
    return %c0_i32, %c0_i32_0 : i32, i32
  }
  func.func @transform_5(%arg0: i32) -> (i32, i32) {
    %c0_i32 = arith.constant 0 : i32
    %c0_i32_0 = arith.constant 0 : i32
    %c0_i32_1 = arith.constant 0 : i32
    return %c0_i32, %c0_i32_0 : i32, i32
  }
  func.func @transform_6(%arg0: i32) -> (i32, i32) {
    %c0_i32 = arith.constant 0 : i32
    %c0_i32_0 = arith.constant 0 : i32
    %c0_i32_1 = arith.constant 0 : i32
    return %c0_i32, %c0_i32_0 : i32, i32
  }
  func.func @transform_7(%arg0: i32) -> (i32, i32) {
    %c0_i32 = arith.constant 0 : i32
    %c0_i32_0 = arith.constant 0 : i32
    %c0_i32_1 = arith.constant 0 : i32
    return %c0_i32, %c0_i32_0 : i32, i32
  }
  func.func @transform_8(%arg0: i32) -> (i32, i32) {
    %c0_i32 = arith.constant 0 : i32
    %c0_i32_0 = arith.constant 0 : i32
    %c0_i32_1 = arith.constant 0 : i32
    return %c0_i32, %c0_i32_0 : i32, i32
  }
  func.func @transform_9(%arg0: i32) -> (i32, i32) {
    %c0_i32 = arith.constant 0 : i32
    %c0_i32_0 = arith.constant 0 : i32
    %c0_i32_1 = arith.constant 0 : i32
    return %c0_i32, %c0_i32_0 : i32, i32
  }
  func.func @transform_10(%arg0: i32) -> (i32, i32) {
    %c0_i32 = arith.constant 0 : i32
    %c0_i32_0 = arith.constant 0 : i32
    %c0_i32_1 = arith.constant 0 : i32
    return %c0_i32, %c0_i32_0 : i32, i32
  }
  func.func @transform_11(%arg0: i32) -> (i32, i32) {
    %c0_i32 = arith.constant 0 : i32
    %c0_i32_0 = arith.constant 0 : i32
    return %arg0, %c0_i32 : i32, i32
  }
}

</mosaic_0001>

<llo_original>
// kernel: tpu_custom_call.1
$region0: #{tpu_custom_call.1}
  #allocation0 [shape = 'u32[]', space=smem, size = 0x4, offset = 0x4, fixed_abs, tag = 'smem constant byte address 0x4 - core index']
  #allocation1 [shape = 'u32[144,128]{1,0:T(1,128)}', space=vmem, size = 0x12000, scoped, tag = 'internal scratch']
  #allocation2 [shape = 'f32[16,128]{1,0:T(8,128)}', space=vmem, size = 0x2000, scoped, tag = 'scratch operand']
  #allocation3 [shape = 'f32[136,128]{1,0:T(8,128)}', space=vmem, size = 0x11000, scoped, tag = 'scratch operand']
  %s0 = inlined_call_operand.hbm [shape: f32[256,128], index: 0, kind: input, shape index: {}]
  %s1 = inlined_call_operand.vmem [shape: bf16[128,256], index: 1, kind: input, shape index: {}]
  %s2 = inlined_call_operand.hbm [shape: f32[4,128], index: 2, kind: input, shape index: {}]
  %s3 = inlined_call_operand.vmem [shape: bf16[128,96], index: 3, kind: input, shape index: {}]
  %s4 = inlined_call_operand.hbm [shape: f32[1,16], index: 4, kind: input, shape index: {}]
  %s5 = inlined_call_operand.hbm [shape: f32[1,16], index: 5, kind: input, shape index: {}]
  %s6 = inlined_call_operand.vmem [shape: f32[64,4], index: 6, kind: input, shape index: {}]
  %s7 = inlined_call_operand.hbm [shape: f32[1,4], index: 7, kind: input, shape index: {}]
  %s8 = inlined_call_operand.vmem [shape: f32[1,4], index: 8, kind: input, shape index: {}]
  %s9 = inlined_call_operand.vmem [shape: f32[1,4], index: 9, kind: input, shape index: {}]
  %s10 = inlined_call_operand.vmem [shape: bf16[128,128], index: 10, kind: input, shape index: {}]
  %s11 = inlined_call_operand.hbm [shape: f32[256,128], index: 11, kind: output, shape index: {}]
  %s12 = sld [smem:[#allocation0]]
  $region101: #{tpu_custom_call.1} parent=0
    _
  %s14 = ssub.s32 1, %s12
  %s15 = scalar_select 0, %s14, %s12
  $region1: #{tpu_custom_call.1} parent=0
    #allocation4 [shape = 'u8[131072]{0}', space=vmem, size = 0x20000, scoped, tag = 'input window, operand 0']
    #allocation5 [shape = 's32[2]{0}', space=sflag, size = 0x8, scoped, tag = 'scoped memory for tpu_custom_call.1']
    #allocation6 [shape = 's32[2]{0}', space=sflag, size = 0x8, scoped, tag = 'scoped memory for tpu_custom_call.1']
    #allocation7 [shape = 'u8[2048]{0}', space=vmem, size = 0x800, scoped, tag = 'input window, operand 2, single buffered']
    #allocation8 [shape = 's32[1]{0}', space=sflag, size = 0x4, scoped, tag = 'scoped memory for tpu_custom_call.1']
    #allocation9 [shape = 'u8[512]{0}', space=vmem, size = 0x400, scoped, tag = 'input window, operand 4, single buffered']
    #allocation10 [shape = 'u8[512]{0}', space=vmem, size = 0x400, scoped, tag = 'input window, operand 5, single buffered']
    #allocation11 [shape = 's32[1]{0}', space=sflag, size = 0x4, scoped, tag = 'scoped memory for tpu_custom_call.1']
    #allocation12 [shape = 'u8[512]{0}', space=vmem, size = 0x400, scoped, tag = 'input window, operand 7, single buffered']
    #allocation13 [shape = 'u8[131072]{0}', space=vmem, size = 0x20000, scoped, tag = 'output window, operand 0']
    %16 = vsyncpa [#allocation5], 0
    %s17 = scalar_lea.sflag [#allocation5], 1
    %18 = vsyncpa %s17, 0
    %19 = vsyncpa [#allocation8], 0
    %20 = vsyncpa [#allocation11], 0
    %21 = vsyncpa [#allocation6], 0
    %s22 = scalar_lea.sflag [#allocation6], 1
    %23 = vsyncpa %s22, 0
    loop: start=0, step=1, limit=4
    $region2: #{tpu_custom_call.1} parent=1 // loop_pre_header
      _
    $region3: #{tpu_custom_call.1} parent=1 // loop_header
      %s25 = sphi 0, %s29
      %p26 = scmp.ge.s32.totalorder %s25, 4
      %s35 = sphi 0, %s37
      %s38 = sphi 0, %s35
      %s39 = sphi 0, %s38
      %s55 = sphi 0, %s39
      %s59 = sphi 0, %s59
      %s61 = sphi 0, %s59
      %s62 = sphi 0, %s61
      %s76 = sphi 0, %s62
      %s80 = sphi 0, %s80
      %s82 = sphi 0, %s80
      %s83 = sphi 0, %s82
      %s97 = sphi 0, %s83
      %s101 = sphi 0, %s101
      %s103 = sphi 0, %s101
      %s104 = sphi 0, %s103
      %s118 = sphi 0, %s104
      %s122 = sphi 0, %s122
      %s124 = sphi 0, %s122
      %s125 = sphi 0, %s124
      %s139 = sphi 0, %s125
      %s143 = sphi 0, %s143
      %s145 = sphi 0, %s143
      %s146 = sphi 0, %s145
      %s160 = sphi 0, %s146
      %s164 = sphi 0, %s164
      %s166 = sphi 0, %s164
      %s167 = sphi 0, %s166
      %s181 = sphi 0, %s167
      %s185 = sphi 0, %s185
      %s187 = sphi 0, %s185
      %s188 = sphi 0, %s187
      %s202 = sphi 0, %s188
      %s206 = sphi 0, %s206
      %s208 = sphi 0, %s206
      %s209 = sphi 0, %s208
      %s223 = sphi 0, %s209
      %s227 = sphi 0, %s227
      %s229 = sphi 0, %s227
      %s230 = sphi 0, %s229
      %s244 = sphi 0, %s230
      %s248 = sphi 0, %s248
      %s250 = sphi 0, %s248
      %s251 = sphi 0, %s250
      %s265 = sphi 0, %s251
      %s271 = sphi 0, %s273
      %s274 = sphi 0, %s271
      %s275 = sphi 0, %s274
      %s291 = sphi 0, %s275
    $region4: #{tpu_custom_call.1} parent=1 // loop_header_branch
      %28 = sbr.rel (%p26) target = $region8
    $region5: #{tpu_custom_call.1} parent=1 // loop_body
      %s30 = ssub.s32 %s25, 1
      %s31 = ssub.s32 %s25, 2
      %s32 = sadd.s32 %s25, 1
      %s33 = ssub.s32 %s25, %s32
      %p34 = scmp.eq.s32.totalorder %s33, 0
      %s36 = sadd.s32 %s35, 1
      %s37 = scalar_select %p34, %s35, %s36
      %p40 = pneg %p34
      %p41 = scmp.eq.s32.totalorder %s25, 1
      %p42 = por %p40, %p41
      %p43 = scmp.ne.s32.totalorder %s35, %s38
      %p44 = scmp.eq.s32.totalorder %s25, 0
      %p45 = por %p43, %p44
      %p46 = scmp.ne.s32.totalorder %s35, %s38
      %p47 = scmp.eq.s32.totalorder %s30, 1
      %p48 = por %p46, %p47
      %p49 = scmp.ne.s32.totalorder %s38, %s39
      %p50 = scmp.eq.s32.totalorder %s30, 0
      %p51 = por %p49, %p50
      %p52 = scmp.ne.s32.totalorder %s38, %s39
      %p53 = scmp.eq.s32.totalorder %s31, 1
      %p54 = por %p52, %p53
      %p56 = scmp.ne.s32.totalorder %s39, %s55
      %p57 = scmp.eq.s32.totalorder %s31, 0
      %p58 = por %p56, %p57
      %s60 = sadd.s32 %s59, 1
      %p63 = scmp.eq.s32.totalorder %s25, 1
      %p64 = scmp.ne.s32.totalorder %s59, %s61
      %p65 = scmp.eq.s32.totalorder %s25, 0
      %p66 = por %p64, %p65
      %p67 = scmp.ne.s32.totalorder %s59, %s61
      %p68 = scmp.eq.s32.totalorder %s30, 1
      %p69 = por %p67, %p68
      %p70 = scmp.ne.s32.totalorder %s61, %s62
      %p71 = scmp.eq.s32.totalorder %s30, 0
      %p72 = por %p70, %p71
      %p73 = scmp.ne.s32.totalorder %s61, %s62
      %p74 = scmp.eq.s32.totalorder %s31, 1
      %p75 = por %p73, %p74
      %p77 = scmp.ne.s32.totalorder %s62, %s76
      %p78 = scmp.eq.s32.totalorder %s31, 0
      %p79 = por %p77, %p78
      %s81 = sadd.s32 %s80, 1
      %p84 = scmp.eq.s32.totalorder %s25, 1
      %p85 = scmp.ne.s32.totalorder %s80, %s82
      %p86 = scmp.eq.s32.totalorder %s25, 0
      %p87 = por %p85, %p86
      %p88 = scmp.ne.s32.totalorder %s80, %s82
      %p89 = scmp.eq.s32.totalorder %s30, 1
      %p90 = por %p88, %p89
      %p91 = scmp.ne.s32.totalorder %s82, %s83
      %p92 = scmp.eq.s32.totalorder %s30, 0
      %p93 = por %p91, %p92
      %p94 = scmp.ne.s32.totalorder %s82, %s83
      %p95 = scmp.eq.s32.totalorder %s31, 1
      %p96 = por %p94, %p95
      %p98 = scmp.ne.s32.totalorder %s83, %s97
      %p99 = scmp.eq.s32.totalorder %s31, 0
      %p100 = por %p98, %p99
      %s102 = sadd.s32 %s101, 1
      %p105 = scmp.eq.s32.totalorder %s25, 1
      %p106 = scmp.ne.s32.totalorder %s101, %s103
      %p107 = scmp.eq.s32.totalorder %s25, 0
      %p108 = por %p106, %p107
      %p109 = scmp.ne.s32.totalorder %s101, %s103
      %p110 = scmp.eq.s32.totalorder %s30, 1
      %p111 = por %p109, %p110
      %p112 = scmp.ne.s32.totalorder %s103, %s104
      %p113 = scmp.eq.s32.totalorder %s30, 0
      %p114 = por %p112, %p113
      %p115 = scmp.ne.s32.totalorder %s103, %s104
      %p116 = scmp.eq.s32.totalorder %s31, 1
      %p117 = por %p115, %p116
      %p119 = scmp.ne.s32.totalorder %s104, %s118
      %p120 = scmp.eq.s32.totalorder %s31, 0
      %p121 = por %p119, %p120
      %s123 = sadd.s32 %s122, 1
      %p126 = scmp.eq.s32.totalorder %s25, 1
      %p127 = scmp.ne.s32.totalorder %s122, %s124
      %p128 = scmp.eq.s32.totalorder %s25, 0
      %p129 = por %p127, %p128
      %p130 = scmp.ne.s32.totalorder %s122, %s124
      %p131 = scmp.eq.s32.totalorder %s30, 1
      %p132 = por %p130, %p131
      %p133 = scmp.ne.s32.totalorder %s124, %s125
      %p134 = scmp.eq.s32.totalorder %s30, 0
      %p135 = por %p133, %p134
      %p136 = scmp.ne.s32.totalorder %s124, %s125
      %p137 = scmp.eq.s32.totalorder %s31, 1
      %p138 = por %p136, %p137
      %p140 = scmp.ne.s32.totalorder %s125, %s139
      %p141 = scmp.eq.s32.totalorder %s31, 0
      %p142 = por %p140, %p141
      %s144 = sadd.s32 %s143, 1
      %p147 = scmp.eq.s32.totalorder %s25, 1
      %p148 = scmp.ne.s32.totalorder %s143, %s145
      %p149 = scmp.eq.s32.totalorder %s25, 0
      %p150 = por %p148, %p149
      %p151 = scmp.ne.s32.totalorder %s143, %s145
      %p152 = scmp.eq.s32.totalorder %s30, 1
      %p153 = por %p151, %p152
      %p154 = scmp.ne.s32.totalorder %s145, %s146
      %p155 = scmp.eq.s32.totalorder %s30, 0
      %p156 = por %p154, %p155
      %p157 = scmp.ne.s32.totalorder %s145, %s146
      %p158 = scmp.eq.s32.totalorder %s31, 1
      %p159 = por %p157, %p158
      %p161 = scmp.ne.s32.totalorder %s146, %s160
      %p162 = scmp.eq.s32.totalorder %s31, 0
      %p163 = por %p161, %p162
      %s165 = sadd.s32 %s164, 1
      %p168 = scmp.eq.s32.totalorder %s25, 1
      %p169 = scmp.ne.s32.totalorder %s164, %s166
      %p170 = scmp.eq.s32.totalorder %s25, 0
      %p171 = por %p169, %p170
      %p172 = scmp.ne.s32.totalorder %s164, %s166
      %p173 = scmp.eq.s32.totalorder %s30, 1
      %p174 = por %p172, %p173
      %p175 = scmp.ne.s32.totalorder %s166, %s167
      %p176 = scmp.eq.s32.totalorder %s30, 0
      %p177 = por %p175, %p176
      %p178 = scmp.ne.s32.totalorder %s166, %s167
      %p179 = scmp.eq.s32.totalorder %s31, 1
      %p180 = por %p178, %p179
      %p182 = scmp.ne.s32.totalorder %s167, %s181
      %p183 = scmp.eq.s32.totalorder %s31, 0
      %p184 = por %p182, %p183
      %s186 = sadd.s32 %s185, 1
      %p189 = scmp.eq.s32.totalorder %s25, 1
      %p190 = scmp.ne.s32.totalorder %s185, %s187
      %p191 = scmp.eq.s32.totalorder %s25, 0
      %p192 = por %p190, %p191
      %p193 = scmp.ne.s32.totalorder %s185, %s187
      %p194 = scmp.eq.s32.totalorder %s30, 1
      %p195 = por %p193, %p194
      %p196 = scmp.ne.s32.totalorder %s187, %s188
      %p197 = scmp.eq.s32.totalorder %s30, 0
      %p198 = por %p196, %p197
      %p199 = scmp.ne.s32.totalorder %s187, %s188
      %p200 = scmp.eq.s32.totalorder %s31, 1
      %p201 = por %p199, %p200
      %p203 = scmp.ne.s32.totalorder %s188, %s202
      %p204 = scmp.eq.s32.totalorder %s31, 0
      %p205 = por %p203, %p204
      %s207 = sadd.s32 %s206, 1
      %p210 = scmp.eq.s32.totalorder %s25, 1
      %p211 = scmp.ne.s32.totalorder %s206, %s208
      %p212 = scmp.eq.s32.totalorder %s25, 0
      %p213 = por %p211, %p212
      %p214 = scmp.ne.s32.totalorder %s206, %s208
      %p215 = scmp.eq.s32.totalorder %s30, 1
      %p216 = por %p214, %p215
      %p217 = scmp.ne.s32.totalorder %s208, %s209
      %p218 = scmp.eq.s32.totalorder %s30, 0
      %p219 = por %p217, %p218
      %p220 = scmp.ne.s32.totalorder %s208, %s209
      %p221 = scmp.eq.s32.totalorder %s31, 1
      %p222 = por %p220, %p221
      %p224 = scmp.ne.s32.totalorder %s209, %s223
      %p225 = scmp.eq.s32.totalorder %s31, 0
      %p226 = por %p224, %p225
      %s228 = sadd.s32 %s227, 1
      %p231 = scmp.eq.s32.totalorder %s25, 1
      %p232 = scmp.ne.s32.totalorder %s227, %s229
      %p233 = scmp.eq.s32.totalorder %s25, 0
      %p234 = por %p232, %p233
      %p235 = scmp.ne.s32.totalorder %s227, %s229
      %p236 = scmp.eq.s32.totalorder %s30, 1
      %p237 = por %p235, %p236
      %p238 = scmp.ne.s32.totalorder %s229, %s230
      %p239 = scmp.eq.s32.totalorder %s30, 0
      %p240 = por %p238, %p239
      %p241 = scmp.ne.s32.totalorder %s229, %s230
      %p242 = scmp.eq.s32.totalorder %s31, 1
      %p243 = por %p241, %p242
      %p245 = scmp.ne.s32.totalorder %s230, %s244
      %p246 = scmp.eq.s32.totalorder %s31, 0
      %p247 = por %p245, %p246
      %s249 = sadd.s32 %s248, 1
      %p252 = scmp.eq.s32.totalorder %s25, 1
      %p253 = scmp.ne.s32.totalorder %s248, %s250
      %p254 = scmp.eq.s32.totalorder %s25, 0
      %p255 = por %p253, %p254
      %p256 = scmp.ne.s32.totalorder %s248, %s250
      %p257 = scmp.eq.s32.totalorder %s30, 1
      %p258 = por %p256, %p257
      %p259 = scmp.ne.s32.totalorder %s250, %s251
      %p260 = scmp.eq.s32.totalorder %s30, 0
      %p261 = por %p259, %p260
      %p262 = scmp.ne.s32.totalorder %s250, %s251
      %p263 = scmp.eq.s32.totalorder %s31, 1
      %p264 = por %p262, %p263
      %p266 = scmp.ne.s32.totalorder %s251, %s265
      %p267 = scmp.eq.s32.totalorder %s31, 0
      %p268 = por %p266, %p267
      %s269 = ssub.s32 %s25, %s32
      %p270 = scmp.eq.s32.totalorder %s269, 0
      %s272 = sadd.s32 %s271, 1
      %s273 = scalar_select %p270, %s271, %s272
      %p276 = pneg %p270
      %p277 = scmp.eq.s32.totalorder %s25, 1
      %p278 = por %p276, %p277
      %p279 = scmp.ne.s32.totalorder %s271, %s274
      %p280 = scmp.eq.s32.totalorder %s25, 0
      %p281 = por %p279, %p280
      %p282 = scmp.ne.s32.totalorder %s271, %s274
      %p283 = scmp.eq.s32.totalorder %s30, 1
      %p284 = por %p282, %p283
      %p285 = scmp.ne.s32.totalorder %s274, %s275
      %p286 = scmp.eq.s32.totalorder %s30, 0
      %p287 = por %p285, %p286
      %p288 = scmp.ne.s32.totalorder %s274, %s275
      %p289 = scmp.eq.s32.totalorder %s31, 1
      %p290 = por %p288, %p289
      %p292 = scmp.ne.s32.totalorder %s275, %s291
      %p293 = scmp.eq.s32.totalorder %s31, 0
      %p294 = por %p292, %p293
      %p295 = scmp.le.s32.totalorder 1, %s25
      %p296 = scmp.lt.s32.totalorder %s25, 3
      %p297 = pnand %p295, %p296
      %p298 = pneg %p297
      // Predicated region
      $region9: #{tpu_custom_call.1} parent=5 // pred_check
        _
      $region10: #{tpu_custom_call.1} parent=5 // pred_check_branch
        %300 = sbr.rel (%p297) target = $region12
      $region11: #{tpu_custom_call.1} parent=5 // pred_region
        %s301 = ssub.s32 %s25, 1
        // Predicated region
        $region13: #{tpu_custom_call.1} parent=11 // pred_check
          %p302 = pneg %p72
        $region14: #{tpu_custom_call.1} parent=11 // pred_check_branch
          %304 = sbr.rel (%p302) target = $region16
        $region15: #{tpu_custom_call.1} parent=11 // pred_region
          _
        $region16: #{tpu_custom_call.1} parent=11 // pred_fallthru
          _
        // Predicated region
        $region17: #{tpu_custom_call.1} parent=11 // pred_check
          %p305 = pneg %p93
        $region18: #{tpu_custom_call.1} parent=11 // pred_check_branch
          %307 = sbr.rel (%p305) target = $region20
        $region19: #{tpu_custom_call.1} parent=11 // pred_region
          %s309 = ssub.s32 64, 64
          %310 = vsyncadd [#allocation8], %s309
          %s312 = sshll.u32 [#allocation7], 4
          %s313 = int_to_ptr.vmem [resolvable:$true] %s312
          %315 = dma.hbm_to_vmem [thread:$0]  %s2, 64, %s313, [#allocation8]
        $region20: #{tpu_custom_call.1} parent=11 // pred_fallthru
          _
        // Predicated region
        $region21: #{tpu_custom_call.1} parent=11 // pred_check
          %p316 = pneg %p114
        $region22: #{tpu_custom_call.1} parent=11 // pred_check_branch
          %318 = sbr.rel (%p316) target = $region24
        $region23: #{tpu_custom_call.1} parent=11 // pred_region
          _
        $region24: #{tpu_custom_call.1} parent=11 // pred_fallthru
          _
        // Predicated region
        $region25: #{tpu_custom_call.1} parent=11 // pred_check
          %p319 = pneg %p135
        $region26: #{tpu_custom_call.1} parent=11 // pred_check_branch
          %321 = sbr.rel (%p319) target = $region28
        $region27: #{tpu_custom_call.1} parent=11 // pred_region
          %s323 = ssub.s32 16, 16
          %324 = vsyncadd [#allocation8], %s323
          %s326 = sshll.u32 [#allocation9], 4
          %s327 = int_to_ptr.vmem [resolvable:$true] %s326
          %329 = dma.hbm_to_vmem [thread:$0]  %s4, 16, %s327, [#allocation8]
        $region28: #{tpu_custom_call.1} parent=11 // pred_fallthru
          _
        // Predicated region
        $region29: #{tpu_custom_call.1} parent=11 // pred_check
          %p330 = pneg %p156
        $region30: #{tpu_custom_call.1} parent=11 // pred_check_branch
          %332 = sbr.rel (%p330) target = $region32
        $region31: #{tpu_custom_call.1} parent=11 // pred_region
          %s334 = ssub.s32 16, 16
          %335 = vsyncadd [#allocation11], %s334
          %s337 = sshll.u32 [#allocation10], 4
          %s338 = int_to_ptr.vmem [resolvable:$true] %s337
          %340 = dma.hbm_to_vmem [thread:$0]  %s5, 16, %s338, [#allocation11]
        $region32: #{tpu_custom_call.1} parent=11 // pred_fallthru
          _
        // Predicated region
        $region33: #{tpu_custom_call.1} parent=11 // pred_check
          %p341 = pneg %p177
        $region34: #{tpu_custom_call.1} parent=11 // pred_check_branch
          %343 = sbr.rel (%p341) target = $region36
        $region35: #{tpu_custom_call.1} parent=11 // pred_region
          _
        $region36: #{tpu_custom_call.1} parent=11 // pred_fallthru
          _
        // Predicated region
        $region37: #{tpu_custom_call.1} parent=11 // pred_check
          %p344 = pneg %p198
        $region38: #{tpu_custom_call.1} parent=11 // pred_check_branch
          %346 = sbr.rel (%p344) target = $region40
        $region39: #{tpu_custom_call.1} parent=11 // pred_region
          %s348 = ssub.s32 16, 16
          %349 = vsyncadd [#allocation11], %s348
          %s351 = sshll.u32 [#allocation12], 4
          %s352 = int_to_ptr.vmem [resolvable:$true] %s351
          %354 = dma.hbm_to_vmem [thread:$0]  %s7, 16, %s352, [#allocation11]
        $region40: #{tpu_custom_call.1} parent=11 // pred_fallthru
          _
        // Predicated region
        $region41: #{tpu_custom_call.1} parent=11 // pred_check
          %p355 = pneg %p219
        $region42: #{tpu_custom_call.1} parent=11 // pred_check_branch
          %357 = sbr.rel (%p355) target = $region44
        $region43: #{tpu_custom_call.1} parent=11 // pred_region
          _
        $region44: #{tpu_custom_call.1} parent=11 // pred_fallthru
          _
        // Predicated region
        $region45: #{tpu_custom_call.1} parent=11 // pred_check
          %p358 = pneg %p240
        $region46: #{tpu_custom_call.1} parent=11 // pred_check_branch
          %360 = sbr.rel (%p358) target = $region48
        $region47: #{tpu_custom_call.1} parent=11 // pred_region
          _
        $region48: #{tpu_custom_call.1} parent=11 // pred_fallthru
          _
        // Predicated region
        $region49: #{tpu_custom_call.1} parent=11 // pred_check
          %p361 = pneg %p261
        $region50: #{tpu_custom_call.1} parent=11 // pred_check_branch
          %363 = sbr.rel (%p361) target = $region52
        $region51: #{tpu_custom_call.1} parent=11 // pred_region
          _
        $region52: #{tpu_custom_call.1} parent=11 // pred_fallthru
          _
      $region12: #{tpu_custom_call.1} parent=5 // pred_fallthru
        _
      %p364 = scmp.lt.s32.totalorder %s25, 2
      // Predicated region
      $region53: #{tpu_custom_call.1} parent=5 // pred_check
        %p365 = pneg %p364
      $region54: #{tpu_custom_call.1} parent=5 // pred_check_branch
        %367 = sbr.rel (%p365) target = $region56
      $region55: #{tpu_custom_call.1} parent=5 // pred_region
        // Predicated region
        $region57: #{tpu_custom_call.1} parent=55 // pred_check
          %p368 = pneg %p45
        $region58: #{tpu_custom_call.1} parent=55 // pred_check_branch
          %370 = sbr.rel (%p368) target = $region60
        $region59: #{tpu_custom_call.1} parent=55 // pred_region
          %s371 = sand.u32 %s35, 1
          %s372 = scalar_lea.sflag [#allocation5], %s371
          %s373 = sand.u32 %s35, 1
          %s374 = smul.addr %s373, 128
          %s375 = scalar_lea.vmem [#allocation4], %s374
          %s376 = smul.u32 16, %s25
          %s378 = ssub.s32 2048, 2048
          %379 = vsyncadd %s372, %s378
          %s380 = smul.addr %s376, 128
          %s381 = scalar_lea.hbm %s0, %s380
          %s382 = sshll.u32 %s375, 4
          %s383 = int_to_ptr.vmem [resolvable:$true] %s382
          %388 = dma.hbm_to_vmem [thread:$0]  %s381, 2048, %s383, %s372, 128, 128, 8
        $region60: #{tpu_custom_call.1} parent=55 // pred_fallthru
          _
      $region56: #{tpu_custom_call.1} parent=5 // pred_fallthru
        _
      %p389 = scmp.le.s32.totalorder 1, %s25
      %p390 = scmp.lt.s32.totalorder %s25, 3
      %p391 = pnand %p389, %p390
      %p392 = pneg %p391
      // Predicated region
      $region61: #{tpu_custom_call.1} parent=5 // pred_check
        _
      $region62: #{tpu_custom_call.1} parent=5 // pred_check_branch
        %394 = sbr.rel (%p391) target = $region64
      $region63: #{tpu_custom_call.1} parent=5 // pred_region
        %s395 = ssub.s32 %s25, 1
        %s396 = sand.u32 %s38, 1
        %s397 = scalar_lea.sflag [#allocation5], %s396
        %s398 = sand.u32 %s38, 1
        %s399 = smul.addr %s398, 128
        %s400 = scalar_lea.vmem [#allocation4], %s399
        // Predicated region
        $region65: #{tpu_custom_call.1} parent=63 // pred_check
          %p401 = pneg %p51
        $region66: #{tpu_custom_call.1} parent=63 // pred_check_branch
          %403 = sbr.rel (%p401) target = $region68
        $region67: #{tpu_custom_call.1} parent=63 // pred_region
          %404 = dma.done %s397, 2048
        $region68: #{tpu_custom_call.1} parent=63 // pred_fallthru
          _
        // Predicated region
        $region69: #{tpu_custom_call.1} parent=63 // pred_check
          %p405 = pneg %p93
        $region70: #{tpu_custom_call.1} parent=63 // pred_check_branch
          %407 = sbr.rel (%p405) target = $region72
        $region71: #{tpu_custom_call.1} parent=63 // pred_region
          %408 = dma.done [#allocation8], 64
        $region72: #{tpu_custom_call.1} parent=63 // pred_fallthru
          _
        // Predicated region
        $region73: #{tpu_custom_call.1} parent=63 // pred_check
          %p409 = pneg %p135
        $region74: #{tpu_custom_call.1} parent=63 // pred_check_branch
          %411 = sbr.rel (%p409) target = $region76
        $region75: #{tpu_custom_call.1} parent=63 // pred_region
          %412 = dma.done [#allocation8], 16
        $region76: #{tpu_custom_call.1} parent=63 // pred_fallthru
          _
        // Predicated region
        $region77: #{tpu_custom_call.1} parent=63 // pred_check
          %p413 = pneg %p156
        $region78: #{tpu_custom_call.1} parent=63 // pred_check_branch
          %415 = sbr.rel (%p413) target = $region80
        $region79: #{tpu_custom_call.1} parent=63 // pred_region
          %416 = dma.done [#allocation11], 16
        $region80: #{tpu_custom_call.1} parent=63 // pred_fallthru
          _
        // Predicated region
        $region81: #{tpu_custom_call.1} parent=63 // pred_check
          %p417 = pneg %p198
        $region82: #{tpu_custom_call.1} parent=63 // pred_check_branch
          %419 = sbr.rel (%p417) target = $region84
        $region83: #{tpu_custom_call.1} parent=63 // pred_region
          %420 = dma.done [#allocation11], 16
        $region84: #{tpu_custom_call.1} parent=63 // pred_fallthru
          _
        %s421 = sand.u32 %s38, 1
        %s422 = scalar_lea.sflag [#allocation5], %s421
        %s423 = sand.u32 %s38, 1
        %s424 = smul.addr %s423, 128
        %s425 = scalar_lea.vmem [#allocation4], %s424
        %p426 = pneg %p51
        %p427 = pneg %p48
        %p428 = pneg %p72
        %p429 = pneg %p69
        %p430 = pneg %p93
        %p431 = pneg %p90
        %p432 = pneg %p114
        %p433 = pneg %p111
        %p434 = pneg %p135
        %p435 = pneg %p132
        %p436 = pneg %p156
        %p437 = pneg %p153
        %p438 = pneg %p177
        %p439 = pneg %p174
        %p440 = pneg %p198
        %p441 = pneg %p195
        %p442 = pneg %p219
        %p443 = pneg %p216
        %p444 = pneg %p240
        %p445 = pneg %p237
        %p446 = pneg %p261
        %p447 = pneg %p258
        %p448 = pneg %p287
        %p449 = pneg %p284
        %s450 = sand.u32 %s274, 1
        %s451 = scalar_lea.sflag [#allocation6], %s450
        %s452 = sand.u32 %s274, 1
        %s453 = smul.addr %s452, 128
        %s454 = scalar_lea.vmem [#allocation13], %s453
        %s455 = smul.u32 16, %s30
        %s456 = smul.u32 16, %s30
        %p458 = scmp.eq.s32.totalorder %s30, 0
        // Predicated region
        $region85: #{tpu_custom_call.1} parent=63 // pred_check
          %p459 = pneg %p458
        $region86: #{tpu_custom_call.1} parent=63 // pred_check_branch
          %461 = sbr.rel (%p459) target = $region88
        $region87: #{tpu_custom_call.1} parent=63 // pred_region
          %462 = vst [vmem:[#allocation2] sm:$0xff] 0.0
          %463 = vst [vmem:[#allocation2 + $0x8] sm:$0xff] 0.0
          %464 = vst [vmem:[#allocation3] sm:$0xff] 0.0
        $region88: #{tpu_custom_call.1} parent=63 // pred_fallthru
          _
        %v465 = vld [vmem:[%s400] sm:$0xff]
        %v466 = vld [vmem:[%s400 + $0x8] sm:$0xff]
        %v467 = vld [vmem:[%s400 + $0x10] sm:$0xff]
        %v468 = vld [vmem:[%s400 + $0x18] sm:$0xff]
        %v469 = vld [vmem:[%s400 + $0x20] sm:$0xff]
        %v470 = vld [vmem:[%s400 + $0x28] sm:$0xff]
        %v471 = vld [vmem:[%s400 + $0x30] sm:$0xff]
        %v472 = vld [vmem:[%s400 + $0x38] sm:$0xff]
        %v473 = vld [vmem:[%s400 + $0x40] sm:$0xff]
        %v474 = vld [vmem:[%s400 + $0x48] sm:$0xff]
        %v475 = vld [vmem:[%s400 + $0x50] sm:$0xff]
        %v476 = vld [vmem:[%s400 + $0x58] sm:$0xff]
        %v477 = vld [vmem:[%s400 + $0x60] sm:$0xff]
        %v478 = vld [vmem:[%s400 + $0x68] sm:$0xff]
        %v479 = vld [vmem:[%s400 + $0x70] sm:$0xff]
        %v480 = vld [vmem:[%s400 + $0x78] sm:$0xff]
        %v481 = vpack.c.bf16 %v466, %v465
        %v482 = vpack.c.bf16 %v468, %v467
        %v483 = vpack.c.bf16 %v470, %v469
        %v484 = vpack.c.bf16 %v472, %v471
        %v485 = vpack.c.bf16 %v474, %v473
        %v486 = vpack.c.bf16 %v476, %v475
        %v487 = vpack.c.bf16 %v478, %v477
        %v488 = vpack.c.bf16 %v480, %v479
        %v489 = vld [vmem:[%s1] sm:$0xff]
        %v490 = vld [vmem:[%s1 + $0x8] sm:$0xff]
        %v491 = vld [vmem:[%s1 + $0x10] sm:$0xff]
        %v492 = vld [vmem:[%s1 + $0x18] sm:$0xff]
        %v493 = vld [vmem:[%s1 + $0x20] sm:$0xff]
        %v494 = vld [vmem:[%s1 + $0x28] sm:$0xff]
        %v495 = vld [vmem:[%s1 + $0x30] sm:$0xff]
        %v496 = vld [vmem:[%s1 + $0x38] sm:$0xff]
        %v497 = vld [vmem:[%s1 + $0x40] sm:$0xff]
        %v498 = vld [vmem:[%s1 + $0x48] sm:$0xff]
        %v499 = vld [vmem:[%s1 + $0x50] sm:$0xff]
        %v500 = vld [vmem:[%s1 + $0x58] sm:$0xff]
        %v501 = vld [vmem:[%s1 + $0x60] sm:$0xff]
        %v502 = vld [vmem:[%s1 + $0x68] sm:$0xff]
        %v503 = vld [vmem:[%s1 + $0x70] sm:$0xff]
        %v504 = vld [vmem:[%s1 + $0x78] sm:$0xff]
        %v521 = vunpack.c.l.b16 %v489
        %v522 = vunpack.c.h.b16 %v489
        %v523 = vunpack.c.l.b16 %v490
        %v524 = vunpack.c.h.b16 %v490
        %v525 = vunpack.c.l.b16 %v491
        %v526 = vunpack.c.h.b16 %v491
        %v527 = vunpack.c.l.b16 %v492
        %v528 = vunpack.c.h.b16 %v492
        %v529 = vunpack.c.l.b16 %v493
        %v530 = vunpack.c.h.b16 %v493
        %v531 = vunpack.c.l.b16 %v494
        %v532 = vunpack.c.h.b16 %v494
        %v533 = vunpack.c.l.b16 %v495
        %v534 = vunpack.c.h.b16 %v495
        %v535 = vunpack.c.l.b16 %v496
        %v536 = vunpack.c.h.b16 %v496
        %v537 = vunpack.c.l.b16 %v497
        %v538 = vunpack.c.h.b16 %v497
        %v539 = vunpack.c.l.b16 %v498
        %v540 = vunpack.c.h.b16 %v498
        %v541 = vunpack.c.l.b16 %v499
        %v542 = vunpack.c.h.b16 %v499
        %v543 = vunpack.c.l.b16 %v500
        %v544 = vunpack.c.h.b16 %v500
        %v545 = vunpack.c.l.b16 %v501
        %v546 = vunpack.c.h.b16 %v501
        %v547 = vunpack.c.l.b16 %v502
        %v548 = vunpack.c.h.b16 %v502
        %v549 = vunpack.c.l.b16 %v503
        %v550 = vunpack.c.h.b16 %v503
        %v551 = vunpack.c.l.b16 %v504
        %v552 = vunpack.c.h.b16 %v504
        %v553 = vpack.c.b16 %v523, %v521
        %v554 = vpack.c.b16 %v524, %v522
        %v555 = vpack.c.b16 %v527, %v525
        %v556 = vpack.c.b16 %v528, %v526
        %v557 = vpack.c.b16 %v531, %v529
        %v558 = vpack.c.b16 %v532, %v530
        %v559 = vpack.c.b16 %v535, %v533
        %v560 = vpack.c.b16 %v536, %v534
        %v561 = vpack.c.b16 %v539, %v537
        %v562 = vpack.c.b16 %v540, %v538
        %v563 = vpack.c.b16 %v543, %v541
        %v564 = vpack.c.b16 %v544, %v542
        %v565 = vpack.c.b16 %v547, %v545
        %v566 = vpack.c.b16 %v548, %v546
        %v567 = vpack.c.b16 %v551, %v549
        %v568 = vpack.c.b16 %v552, %v550
        %585 = vmatprep.subr.bf16.mxu0 %v568
        %586 = vmatpush1.bf16.msra.mxu0 %v567
        %587 = vmatprep.subr.bf16.mxu0 %v566
        %588 = vmatpush1.bf16.msra.mxu0 %v565
        %589 = vmatprep.subr.bf16.mxu0 %v564
        %590 = vmatpush1.bf16.msra.mxu0 %v563
        %591 = vmatprep.subr.bf16.mxu0 %v562
        %592 = vmatpush1.bf16.msra.mxu0 %v561
        %593 = vmatprep.subr.bf16.mxu0 %v560
        %594 = vmatpush1.bf16.msra.mxu0 %v559
        %595 = vmatprep.subr.bf16.mxu0 %v558
        %596 = vmatpush1.bf16.msra.mxu0 %v557
        %597 = vmatprep.subr.bf16.mxu0 %v556
        %598 = vmatpush1.bf16.msra.mxu0 %v555
        %599 = vmatprep.subr.bf16.mxu0 %v554
        %600 = vmatpush1.bf16.msra.mxu0 %v553
        %601 = vmatprep.subr.bf16.mxu0 0
        %602 = vmatpush2.bf16.msra.mxu0 0
        %603 = vmatprep.subr.bf16.mxu0 0
        %604 = vmatpush2.bf16.msra.mxu0 0
        %605 = vmatprep.subr.bf16.mxu0 0
        %606 = vmatpush2.bf16.msra.mxu0 0
        %607 = vmatprep.subr.bf16.mxu0 0
        %608 = vmatpush2.bf16.msra.mxu0 0
        %609 = vmatprep.subr.bf16.mxu0 0
        %610 = vmatpush2.bf16.msra.mxu0 0
        %611 = vmatprep.subr.bf16.mxu0 0
        %612 = vmatpush2.bf16.msra.mxu0 0
        %613 = vmatprep.subr.bf16.mxu0 0
        %614 = vmatpush2.bf16.msra.mxu0 0
        %615 = vmatprep.subr.bf16.mxu0 0
        %616 = vmatpush2.bf16.msra.mxu0 0
        %617 = vmatprep.mubr.bf16.mxu0 0
        %618 = vmatmul.mubr.bf16.gmra.mxu0 %v481
        %v619 = vpop.f32.mrf.mxu0
        %v620 = vadd.f32 0.0, %v619
        %v621 = vpop.f32.mrf.mxu0
        %v622 = vadd.f32 0.0, %v621
        %v623 = vpop.f32.mrf.mxu0
        %v624 = vadd.f32 0.0, %v623
        %v625 = vpop.f32.mrf.mxu0
        %v626 = vadd.f32 0.0, %v625
        %627 = vmatprep.mubr.bf16.mxu0 0
        %628 = vmatmul.mubr.bf16.gmra.mxu0 %v482
        %v629 = vpop.f32.mrf.mxu0
        %v630 = vadd.f32 0.0, %v629
        %v631 = vpop.f32.mrf.mxu0
        %v632 = vadd.f32 0.0, %v631
        %v633 = vpop.f32.mrf.mxu0
        %v634 = vadd.f32 0.0, %v633
        %v635 = vpop.f32.mrf.mxu0
        %v636 = vadd.f32 0.0, %v635
        %637 = vmatprep.mubr.bf16.mxu0 0
        %638 = vmatmul.mubr.bf16.gmra.mxu0 %v483
        %v639 = vpop.f32.mrf.mxu0
        %v640 = vadd.f32 0.0, %v639
        %v641 = vpop.f32.mrf.mxu0
        %v642 = vadd.f32 0.0, %v641
        %v643 = vpop.f32.mrf.mxu0
        %v644 = vadd.f32 0.0, %v643
        %v645 = vpop.f32.mrf.mxu0
        %v646 = vadd.f32 0.0, %v645
        %647 = vmatprep.mubr.bf16.mxu0 0
        %648 = vmatmul.mubr.bf16.gmra.mxu0 %v484
        %v649 = vpop.f32.mrf.mxu0
        %v650 = vadd.f32 0.0, %v649
        %v651 = vpop.f32.mrf.mxu0
        %v652 = vadd.f32 0.0, %v651
        %v653 = vpop.f32.mrf.mxu0
        %v654 = vadd.f32 0.0, %v653
        %v655 = vpop.f32.mrf.mxu0
        %v656 = vadd.f32 0.0, %v655
        %657 = vmatprep.mubr.bf16.mxu0 0
        %658 = vmatmul.mubr.bf16.gmra.mxu0 %v485
        %v659 = vpop.f32.mrf.mxu0
        %v660 = vadd.f32 0.0, %v659
        %v661 = vpop.f32.mrf.mxu0
        %v662 = vadd.f32 0.0, %v661
        %v663 = vpop.f32.mrf.mxu0
        %v664 = vadd.f32 0.0, %v663
        %v665 = vpop.f32.mrf.mxu0
        %v666 = vadd.f32 0.0, %v665
        %667 = vmatprep.mubr.bf16.mxu0 0
        %668 = vmatmul.mubr.bf16.gmra.mxu0 %v486
        %v669 = vpop.f32.mrf.mxu0
        %v670 = vadd.f32 0.0, %v669
        %v671 = vpop.f32.mrf.mxu0
        %v672 = vadd.f32 0.0, %v671
        %v673 = vpop.f32.mrf.mxu0
        %v674 = vadd.f32 0.0, %v673
        %v675 = vpop.f32.mrf.mxu0
        %v676 = vadd.f32 0.0, %v675
        %677 = vmatprep.mubr.bf16.mxu0 0
        %678 = vmatmul.mubr.bf16.gmra.mxu0 %v487
        %v679 = vpop.f32.mrf.mxu0
        %v680 = vadd.f32 0.0, %v679
        %v681 = vpop.f32.mrf.mxu0
        %v682 = vadd.f32 0.0, %v681
        %v683 = vpop.f32.mrf.mxu0
        %v684 = vadd.f32 0.0, %v683
        %v685 = vpop.f32.mrf.mxu0
        %v686 = vadd.f32 0.0, %v685
        %687 = vmatprep.mubr.bf16.mxu0 0
        %688 = vmatmul.mubr.bf16.gmra.mxu0 %v488
        %v689 = vpop.f32.mrf.mxu0
        %v690 = vadd.f32 0.0, %v689
        %v691 = vpop.f32.mrf.mxu0
        %v692 = vadd.f32 0.0, %v691
        %v693 = vpop.f32.mrf.mxu0
        %v694 = vadd.f32 0.0, %v693
        %v695 = vpop.f32.mrf.mxu0
        %v696 = vadd.f32 0.0, %v695
        %697 = vdwg.mxu0
        %698 = vst [vmem:[#allocation3 + $0x8] sm:$0xff] %v622
        %699 = vst [vmem:[#allocation3 + $0x10] sm:$0xff] %v626
        %700 = vst [vmem:[#allocation3 + $0x18] sm:$0xff] %v632
        %701 = vst [vmem:[#allocation3 + $0x20] sm:$0xff] %v636
        %702 = vst [vmem:[#allocation3 + $0x28] sm:$0xff] %v642
        %703 = vst [vmem:[#allocation3 + $0x30] sm:$0xff] %v646
        %704 = vst [vmem:[#allocation3 + $0x38] sm:$0xff] %v652
        %705 = vst [vmem:[#allocation3 + $0x40] sm:$0xff] %v656
        %706 = vst [vmem:[#allocation3 + $0x48] sm:$0xff] %v662
        %707 = vst [vmem:[#allocation3 + $0x50] sm:$0xff] %v666
        %708 = vst [vmem:[#allocation3 + $0x58] sm:$0xff] %v672
        %709 = vst [vmem:[#allocation3 + $0x60] sm:$0xff] %v676
        %710 = vst [vmem:[#allocation3 + $0x68] sm:$0xff] %v682
        %711 = vst [vmem:[#allocation3 + $0x70] sm:$0xff] %v686
        %712 = vst [vmem:[#allocation3 + $0x78] sm:$0xff] %v692
        %713 = vst [vmem:[#allocation3 + $0x80] sm:$0xff] %v696
        %v714 = vld [vmem:[#allocation3] sm:$0xff]
        %v715 = vld [vmem:[#allocation3 + $0x8] sm:$0xff]
        %v716 = vld [vmem:[#allocation3 + $0x10] sm:$0xff]
        %v717 = vld [vmem:[#allocation3 + $0x18] sm:$0xff]
        %v718 = vld [vmem:[#allocation3 + $0x20] sm:$0xff]
        %v719 = vld [vmem:[#allocation3 + $0x28] sm:$0xff]
        %v720 = vld [vmem:[#allocation3 + $0x30] sm:$0xff]
        %v721 = vld [vmem:[#allocation3 + $0x38] sm:$0xff]
        %v722 = vld [vmem:[#allocation3 + $0x40] sm:$0xff]
        %v723 = vld [vmem:[#allocation3 + $0x48] sm:$0xff]
        %v724 = vld [vmem:[#allocation3 + $0x50] sm:$0xff]
        %v725 = vld [vmem:[#allocation3 + $0x58] sm:$0xff]
        %v726 = vld [vmem:[#allocation3 + $0x60] sm:$0xff]
        %v727 = vld [vmem:[#allocation3 + $0x68] sm:$0xff]
        %v728 = vld [vmem:[#allocation3 + $0x70] sm:$0xff]
        %v729 = vld [vmem:[#allocation3 + $0x78] sm:$0xff]
        %v730 = vld [vmem:[#allocation3 + $0x80] sm:$0xff]
        %v731 = vld [vmem:[#allocation7] sm:$0xf]
        %v732 = vlaneseq
        %v733 = vshrl.u32 %v732, 7
        %v734 = vsub.s32 0, %v733
        %v735 = vrot.slane %v731, %v734
        %v736 = vmul.f32 %v735, %v714
        %v737 = vmul.f32 %v735, %v715
        %v738 = vmul.f32 %v735, %v716
        %v739 = vmul.f32 %v735, %v717
        %v740 = vmul.f32 %v735, %v718
        %v741 = vmul.f32 %v735, %v719
        %v742 = vmul.f32 %v735, %v720
        %v743 = vmul.f32 %v735, %v721
        %v744 = vmul.f32 %v735, %v722
        %v745 = vmul.f32 %v735, %v723
        %v746 = vmul.f32 %v735, %v724
        %v747 = vmul.f32 %v735, %v725
        %v748 = vmul.f32 %v735, %v726
        %v749 = vmul.f32 %v735, %v727
        %v750 = vmul.f32 %v735, %v728
        %v751 = vmul.f32 %v735, %v729
        %v752 = vmul.f32 %v735, %v730
        %v753 = vlaneseq
        %v754 = vshrl.u32 %v753, 7
        %v755 = vsub.s32 1, %v754
        %v756 = vrot.slane %v731, %v755
        %v757 = vmul.f32 %v756, %v714
        %v758 = vmul.f32 %v756, %v715
        %v759 = vmul.f32 %v756, %v716
        %v760 = vmul.f32 %v756, %v717
        %v761 = vmul.f32 %v756, %v718
        %v762 = vmul.f32 %v756, %v719
        %v763 = vmul.f32 %v756, %v720
        %v764 = vmul.f32 %v756, %v721
        %v765 = vmul.f32 %v756, %v722
        %v766 = vmul.f32 %v756, %v723
        %v767 = vmul.f32 %v756, %v724
        %v768 = vmul.f32 %v756, %v725
        %v769 = vmul.f32 %v756, %v726
        %v770 = vmul.f32 %v756, %v727
        %v771 = vmul.f32 %v756, %v728
        %v772 = vmul.f32 %v756, %v729
        %v773 = vmul.f32 %v756, %v730
        %vm791 = vcmask 1046528
        %v792 = vrot.slane %v757, 1
        %v793 = vrot.slane %v758, 1
        %v794 = vsel %vm791, %v792, %v793
        %v795 = vrot.slane %v759, 1
        %v796 = vsel %vm791, %v793, %v795
        %v797 = vrot.slane %v760, 1
        %v798 = vsel %vm791, %v795, %v797
        %v799 = vrot.slane %v761, 1
        %v800 = vsel %vm791, %v797, %v799
        %v801 = vrot.slane %v762, 1
        %v802 = vsel %vm791, %v799, %v801
        %v803 = vrot.slane %v763, 1
        %v804 = vsel %vm791, %v801, %v803
        %v805 = vrot.slane %v764, 1
        %v806 = vsel %vm791, %v803, %v805
        %v807 = vrot.slane %v765, 1
        %v808 = vsel %vm791, %v805, %v807
        %v809 = vrot.slane %v766, 1
        %v810 = vsel %vm791, %v807, %v809
        %v811 = vrot.slane %v767, 1
        %v812 = vsel %vm791, %v809, %v811
        %v813 = vrot.slane %v768, 1
        %v814 = vsel %vm791, %v811, %v813
        %v815 = vrot.slane %v769, 1
        %v816 = vsel %vm791, %v813, %v815
        %v817 = vrot.slane %v770, 1
        %v818 = vsel %vm791, %v815, %v817
        %v819 = vrot.slane %v771, 1
        %v820 = vsel %vm791, %v817, %v819
        %v821 = vrot.slane %v772, 1
        %v822 = vsel %vm791, %v819, %v821
        %v823 = vrot.slane %v773, 1
        %v824 = vsel %vm791, %v821, %v823
        %v842 = vadd.f32 %v736, %v794
        %v843 = vadd.f32 %v737, %v796
        %v844 = vadd.f32 %v738, %v798
        %v845 = vadd.f32 %v739, %v800
        %v846 = vadd.f32 %v740, %v802
        %v847 = vadd.f32 %v741, %v804
        %v848 = vadd.f32 %v742, %v806
        %v849 = vadd.f32 %v743, %v808
        %v850 = vadd.f32 %v744, %v810
        %v851 = vadd.f32 %v745, %v812
        %v852 = vadd.f32 %v746, %v814
        %v853 = vadd.f32 %v747, %v816
        %v854 = vadd.f32 %v748, %v818
        %v855 = vadd.f32 %v749, %v820
        %v856 = vadd.f32 %v750, %v822
        %v857 = vadd.f32 %v751, %v824
        %v858 = vadd.f32 %v752, %v823
        %v859 = vlaneseq
        %v860 = vshrl.u32 %v859, 7
        %v861 = vsub.s32 2, %v860
        %v862 = vrot.slane %v731, %v861
        %v863 = vmul.f32 %v862, %v714
        %v864 = vmul.f32 %v862, %v715
        %v865 = vmul.f32 %v862, %v716
        %v866 = vmul.f32 %v862, %v717
        %v867 = vmul.f32 %v862, %v718
        %v868 = vmul.f32 %v862, %v719
        %v869 = vmul.f32 %v862, %v720
        %v870 = vmul.f32 %v862, %v721
        %v871 = vmul.f32 %v862, %v722
        %v872 = vmul.f32 %v862, %v723
        %v873 = vmul.f32 %v862, %v724
        %v874 = vmul.f32 %v862, %v725
        %v875 = vmul.f32 %v862, %v726
        %v876 = vmul.f32 %v862, %v727
        %v877 = vmul.f32 %v862, %v728
        %v878 = vmul.f32 %v862, %v729
        %v879 = vmul.f32 %v862, %v730
        %vm897 = vcmask 1045504
        %v898 = vrot.slane %v863, 2
        %v899 = vrot.slane %v864, 2
        %v900 = vsel %vm897, %v898, %v899
        %v901 = vrot.slane %v865, 2
        %v902 = vsel %vm897, %v899, %v901
        %v903 = vrot.slane %v866, 2
        %v904 = vsel %vm897, %v901, %v903
        %v905 = vrot.slane %v867, 2
        %v906 = vsel %vm897, %v903, %v905
        %v907 = vrot.slane %v868, 2
        %v908 = vsel %vm897, %v905, %v907
        %v909 = vrot.slane %v869, 2
        %v910 = vsel %vm897, %v907, %v909
        %v911 = vrot.slane %v870, 2
        %v912 = vsel %vm897, %v909, %v911
        %v913 = vrot.slane %v871, 2
        %v914 = vsel %vm897, %v911, %v913
        %v915 = vrot.slane %v872, 2
        %v916 = vsel %vm897, %v913, %v915
        %v917 = vrot.slane %v873, 2
        %v918 = vsel %vm897, %v915, %v917
        %v919 = vrot.slane %v874, 2
        %v920 = vsel %vm897, %v917, %v919
        %v921 = vrot.slane %v875, 2
        %v922 = vsel %vm897, %v919, %v921
        %v923 = vrot.slane %v876, 2
        %v924 = vsel %vm897, %v921, %v923
        %v925 = vrot.slane %v877, 2
        %v926 = vsel %vm897, %v923, %v925
        %v927 = vrot.slane %v878, 2
        %v928 = vsel %vm897, %v925, %v927
        %v929 = vrot.slane %v879, 2
        %v930 = vsel %vm897, %v927, %v929
        %v948 = vadd.f32 %v842, %v900
        %v949 = vadd.f32 %v843, %v902
        %v950 = vadd.f32 %v844, %v904
        %v951 = vadd.f32 %v845, %v906
        %v952 = vadd.f32 %v846, %v908
        %v953 = vadd.f32 %v847, %v910
        %v954 = vadd.f32 %v848, %v912
        %v955 = vadd.f32 %v849, %v914
        %v956 = vadd.f32 %v850, %v916
        %v957 = vadd.f32 %v851, %v918
        %v958 = vadd.f32 %v852, %v920
        %v959 = vadd.f32 %v853, %v922
        %v960 = vadd.f32 %v854, %v924
        %v961 = vadd.f32 %v855, %v926
        %v962 = vadd.f32 %v856, %v928
        %v963 = vadd.f32 %v857, %v930
        %v964 = vadd.f32 %v858, %v929
        %v965 = vlaneseq
        %v966 = vshrl.u32 %v965, 7
        %v967 = vsub.s32 3, %v966
        %v968 = vrot.slane %v731, %v967
        %v969 = vmul.f32 %v968, %v715
        %v970 = vmul.f32 %v968, %v716
        %v971 = vmul.f32 %v968, %v717
        %v972 = vmul.f32 %v968, %v718
        %v973 = vmul.f32 %v968, %v719
        %v974 = vmul.f32 %v968, %v720
        %v975 = vmul.f32 %v968, %v721
        %v976 = vmul.f32 %v968, %v722
        %v977 = vmul.f32 %v968, %v723
        %v978 = vmul.f32 %v968, %v724
        %v979 = vmul.f32 %v968, %v725
        %v980 = vmul.f32 %v968, %v726
        %v981 = vmul.f32 %v968, %v727
        %v982 = vmul.f32 %v968, %v728
        %v983 = vmul.f32 %v968, %v729
        %v984 = vmul.f32 %v968, %v730
        %vm1001 = vcmask 1044480
        %v1002 = vrot.slane %v969, 3
        %v1003 = vrot.slane %v970, 3
        %v1004 = vsel %vm1001, %v1002, %v1003
        %v1005 = vrot.slane %v971, 3
        %v1006 = vsel %vm1001, %v1003, %v1005
        %v1007 = vrot.slane %v972, 3
        %v1008 = vsel %vm1001, %v1005, %v1007
        %v1009 = vrot.slane %v973, 3
        %v1010 = vsel %vm1001, %v1007, %v1009
        %v1011 = vrot.slane %v974, 3
        %v1012 = vsel %vm1001, %v1009, %v1011
        %v1013 = vrot.slane %v975, 3
        %v1014 = vsel %vm1001, %v1011, %v1013
        %v1015 = vrot.slane %v976, 3
        %v1016 = vsel %vm1001, %v1013, %v1015
        %v1017 = vrot.slane %v977, 3
        %v1018 = vsel %vm1001, %v1015, %v1017
        %v1019 = vrot.slane %v978, 3
        %v1020 = vsel %vm1001, %v1017, %v1019
        %v1021 = vrot.slane %v979, 3
        %v1022 = vsel %vm1001, %v1019, %v1021
        %v1023 = vrot.slane %v980, 3
        %v1024 = vsel %vm1001, %v1021, %v1023
        %v1025 = vrot.slane %v981, 3
        %v1026 = vsel %vm1001, %v1023, %v1025
        %v1027 = vrot.slane %v982, 3
        %v1028 = vsel %vm1001, %v1025, %v1027
        %v1029 = vrot.slane %v983, 3
        %v1030 = vsel %vm1001, %v1027, %v1029
        %v1031 = vrot.slane %v984, 3
        %v1032 = vsel %vm1001, %v1029, %v1031
        %v1050 = vadd.f32 %v948, %v1002
        %v1051 = vadd.f32 %v949, %v1004
        %v1052 = vadd.f32 %v950, %v1006
        %v1053 = vadd.f32 %v951, %v1008
        %v1054 = vadd.f32 %v952, %v1010
        %v1055 = vadd.f32 %v953, %v1012
        %v1056 = vadd.f32 %v954, %v1014
        %v1057 = vadd.f32 %v955, %v1016
        %v1058 = vadd.f32 %v956, %v1018
        %v1059 = vadd.f32 %v957, %v1020
        %v1060 = vadd.f32 %v958, %v1022
        %v1061 = vadd.f32 %v959, %v1024
        %v1062 = vadd.f32 %v960, %v1026
        %v1063 = vadd.f32 %v961, %v1028
        %v1064 = vadd.f32 %v962, %v1030
        %v1065 = vadd.f32 %v963, %v1032
        %v1066 = vadd.f32 %v964, %v1031
        %1067 = vst [vmem:[#allocation3] sm:$0xff] %v696
        %v1068 = vxor.u32 %v1050, 2147483648
        %v1069 = vxor.u32 %v1051, 2147483648
        %v1070 = vxor.u32 %v1052, 2147483648
        %v1071 = vxor.u32 %v1053, 2147483648
        %v1072 = vxor.u32 %v1054, 2147483648
        %v1073 = vxor.u32 %v1055, 2147483648
        %v1074 = vxor.u32 %v1056, 2147483648
        %v1075 = vxor.u32 %v1057, 2147483648
        %v1076 = vxor.u32 %v1058, 2147483648
        %v1077 = vxor.u32 %v1059, 2147483648
        %v1078 = vxor.u32 %v1060, 2147483648
        %v1079 = vxor.u32 %v1061, 2147483648
        %v1080 = vxor.u32 %v1062, 2147483648
        %v1081 = vxor.u32 %v1063, 2147483648
        %v1082 = vxor.u32 %v1064, 2147483648
        %v1083 = vxor.u32 %v1065, 2147483648
        %v1084 = vxor.u32 %v1066, 2147483648
        %v1085 = vmul.f32 %v1068, 1.442695
        %v1086 = vpow.pop %v1085
        %v1087 = vmul.f32 %v1069, 1.442695
        %v1088 = vpow.pop %v1087
        %v1089 = vmul.f32 %v1070, 1.442695
        %v1090 = vpow.pop %v1089
        %v1091 = vmul.f32 %v1071, 1.442695
        %v1092 = vpow.pop %v1091
        %v1093 = vmul.f32 %v1072, 1.442695
        %v1094 = vpow.pop %v1093
        %v1095 = vmul.f32 %v1073, 1.442695
        %v1096 = vpow.pop %v1095
        %v1097 = vmul.f32 %v1074, 1.442695
        %v1098 = vpow.pop %v1097
        %v1099 = vmul.f32 %v1075, 1.442695
        %v1100 = vpow.pop %v1099
        %v1101 = vmul.f32 %v1076, 1.442695
        %v1102 = vpow.pop %v1101
        %v1103 = vmul.f32 %v1077, 1.442695
        %v1104 = vpow.pop %v1103
        %v1105 = vmul.f32 %v1078, 1.442695
        %v1106 = vpow.pop %v1105
        %v1107 = vmul.f32 %v1079, 1.442695
        %v1108 = vpow.pop %v1107
        %v1109 = vmul.f32 %v1080, 1.442695
        %v1110 = vpow.pop %v1109
        %v1111 = vmul.f32 %v1081, 1.442695
        %v1112 = vpow.pop %v1111
        %v1113 = vmul.f32 %v1082, 1.442695
        %v1114 = vpow.pop %v1113
        %v1115 = vmul.f32 %v1083, 1.442695
        %v1116 = vpow.pop %v1115
        %v1117 = vmul.f32 %v1084, 1.442695
        %v1118 = vpow.pop %v1117
        %v1119 = vadd.f32 %v1086, 1.0
        %v1120 = vadd.f32 %v1088, 1.0
        %v1121 = vadd.f32 %v1090, 1.0
        %v1122 = vadd.f32 %v1092, 1.0
        %v1123 = vadd.f32 %v1094, 1.0
        %v1124 = vadd.f32 %v1096, 1.0
        %v1125 = vadd.f32 %v1098, 1.0
        %v1126 = vadd.f32 %v1100, 1.0
        %v1127 = vadd.f32 %v1102, 1.0
        %v1128 = vadd.f32 %v1104, 1.0
        %v1129 = vadd.f32 %v1106, 1.0
        %v1130 = vadd.f32 %v1108, 1.0
        %v1131 = vadd.f32 %v1110, 1.0
        %v1132 = vadd.f32 %v1112, 1.0
        %v1133 = vadd.f32 %v1114, 1.0
        %v1134 = vadd.f32 %v1116, 1.0
        %v1135 = vadd.f32 %v1118, 1.0
        %v1136 = vrcp.pop %v1119
        %v1137 = vmul.f32 1.0, %v1136
        %v1138 = vrcp.pop %v1120
        %v1139 = vmul.f32 1.0, %v1138
        %v1140 = vrcp.pop %v1121
        %v1141 = vmul.f32 1.0, %v1140
        %v1142 = vrcp.pop %v1122
        %v1143 = vmul.f32 1.0, %v1142
        %v1144 = vrcp.pop %v1123
        %v1145 = vmul.f32 1.0, %v1144
        %v1146 = vrcp.pop %v1124
        %v1147 = vmul.f32 1.0, %v1146
        %v1148 = vrcp.pop %v1125
        %v1149 = vmul.f32 1.0, %v1148
        %v1150 = vrcp.pop %v1126
        %v1151 = vmul.f32 1.0, %v1150
        %v1152 = vrcp.pop %v1127
        %v1153 = vmul.f32 1.0, %v1152
        %v1154 = vrcp.pop %v1128
        %v1155 = vmul.f32 1.0, %v1154
        %v1156 = vrcp.pop %v1129
        %v1157 = vmul.f32 1.0, %v1156
        %v1158 = vrcp.pop %v1130
        %v1159 = vmul.f32 1.0, %v1158
        %v1160 = vrcp.pop %v1131
        %v1161 = vmul.f32 1.0, %v1160
        %v1162 = vrcp.pop %v1132
        %v1163 = vmul.f32 1.0, %v1162
        %v1164 = vrcp.pop %v1133
        %v1165 = vmul.f32 1.0, %v1164
        %v1166 = vrcp.pop %v1134
        %v1167 = vmul.f32 1.0, %v1166
        %v1168 = vrcp.pop %v1135
        %v1169 = vmul.f32 1.0, %v1168
        %v1170 = vmul.f32 %v1050, %v1137
        %v1171 = vmul.f32 %v1051, %v1139
        %v1172 = vmul.f32 %v1052, %v1141
        %v1173 = vmul.f32 %v1053, %v1143
        %v1174 = vmul.f32 %v1054, %v1145
        %v1175 = vmul.f32 %v1055, %v1147
        %v1176 = vmul.f32 %v1056, %v1149
        %v1177 = vmul.f32 %v1057, %v1151
        %v1178 = vmul.f32 %v1058, %v1153
        %v1179 = vmul.f32 %v1059, %v1155
        %v1180 = vmul.f32 %v1060, %v1157
        %v1181 = vmul.f32 %v1061, %v1159
        %v1182 = vmul.f32 %v1062, %v1161
        %v1183 = vmul.f32 %v1063, %v1163
        %v1184 = vmul.f32 %v1064, %v1165
        %v1185 = vmul.f32 %v1065, %v1167
        %v1186 = vmul.f32 %v1066, %v1169
        %v1187 = vpack.c.bf16 %v1171, %v1170
        %v1188 = vpack.c.bf16 %v1173, %v1172
        %v1189 = vpack.c.bf16 %v1175, %v1174
        %v1190 = vpack.c.bf16 %v1177, %v1176
        %v1191 = vpack.c.bf16 %v1179, %v1178
        %v1192 = vpack.c.bf16 %v1181, %v1180
        %v1193 = vpack.c.bf16 %v1183, %v1182
        %v1194 = vpack.c.bf16 %v1185, %v1184
        %v1195 = vpack.c.bf16 %v1186, %v1186
        %v1196 = vld [vmem:[%s3] sm:$0xf]
        %v1197 = vld [vmem:[%s3 + $0x4] sm:$0xf]
        %v1198 = vld [vmem:[%s3 + $0x8] sm:$0xf]
        %v1199 = vld [vmem:[%s3 + $0xc] sm:$0xf]
        %v1200 = vld [vmem:[%s3 + $0x10] sm:$0xf]
        %v1201 = vld [vmem:[%s3 + $0x14] sm:$0xf]
        %v1202 = vld [vmem:[%s3 + $0x18] sm:$0xf]
        %v1203 = vld [vmem:[%s3 + $0x1c] sm:$0xf]
        %v1204 = vld [vmem:[%s3 + $0x20] sm:$0xf]
        %v1205 = vld [vmem:[%s3 + $0x24] sm:$0xf]
        %v1206 = vld [vmem:[%s3 + $0x28] sm:$0xf]
        %v1207 = vld [vmem:[%s3 + $0x2c] sm:$0xf]
        %v1208 = vld [vmem:[%s3 + $0x30] sm:$0xf]
        %v1209 = vld [vmem:[%s3 + $0x34] sm:$0xf]
        %v1210 = vld [vmem:[%s3 + $0x38] sm:$0xf]
        %v1211 = vld [vmem:[%s3 + $0x3c] sm:$0xf]
        %vm1212 = vsmask.f32 5376
        %v1214 = vshrl.u32 %v1187, 16
        %v1216 = vrot.slane %v1214, 2
        %v1217 = vshll.u32 %v1187, 16
        %v1219 = vrot.slane %v1217, 3
        %v1220 = vor.u32 %v1216, %v1219
        %v1222 = vshrl.u32 %v1188, 16
        %v1224 = vrot.slane %v1222, 2
        %v1225 = vshll.u32 %v1188, 16
        %v1227 = vrot.slane %v1225, 3
        %v1228 = vor.u32 %v1224, %v1227
        %v1229 = vsel %vm1212, %v1220, %v1228
        %v1231 = vshrl.u32 %v1189, 16
        %v1233 = vrot.slane %v1231, 2
        %v1234 = vshll.u32 %v1189, 16
        %v1236 = vrot.slane %v1234, 3
        %v1237 = vor.u32 %v1233, %v1236
        %v1238 = vsel %vm1212, %v1228, %v1237
        %v1240 = vshrl.u32 %v1190, 16
        %v1242 = vrot.slane %v1240, 2
        %v1243 = vshll.u32 %v1190, 16
        %v1245 = vrot.slane %v1243, 3
        %v1246 = vor.u32 %v1242, %v1245
        %v1247 = vsel %vm1212, %v1237, %v1246
        %v1249 = vshrl.u32 %v1191, 16
        %v1251 = vrot.slane %v1249, 2
        %v1252 = vshll.u32 %v1191, 16
        %v1254 = vrot.slane %v1252, 3
        %v1255 = vor.u32 %v1251, %v1254
        %v1256 = vsel %vm1212, %v1246, %v1255
        %v1258 = vshrl.u32 %v1192, 16
        %v1260 = vrot.slane %v1258, 2
        %v1261 = vshll.u32 %v1192, 16
        %v1263 = vrot.slane %v1261, 3
        %v1264 = vor.u32 %v1260, %v1263
        %v1265 = vsel %vm1212, %v1255, %v1264
        %v1267 = vshrl.u32 %v1193, 16
        %v1269 = vrot.slane %v1267, 2
        %v1270 = vshll.u32 %v1193, 16
        %v1272 = vrot.slane %v1270, 3
        %v1273 = vor.u32 %v1269, %v1272
        %v1274 = vsel %vm1212, %v1264, %v1273
        %v1276 = vshrl.u32 %v1194, 16
        %v1278 = vrot.slane %v1276, 2
        %v1279 = vshll.u32 %v1194, 16
        %v1281 = vrot.slane %v1279, 3
        %v1282 = vor.u32 %v1278, %v1281
        %v1283 = vsel %vm1212, %v1273, %v1282
        %v1285 = vshrl.u32 %v1195, 16
        %v1287 = vrot.slane %v1285, 2
        %v1288 = vshll.u32 %v1195, 16
        %v1290 = vrot.slane %v1288, 3
        %v1291 = vor.u32 %v1287, %v1290
        %v1292 = vsel %vm1212, %v1282, %v1291
        %v1317 = vunpack.c.l.b16 %v1196
        %v1318 = vunpack.c.l.b16 %v1197
        %v1319 = vunpack.c.l.b16 %v1198
        %v1320 = vunpack.c.l.b16 %v1199
        %v1321 = vunpack.c.l.b16 %v1200
        %v1322 = vunpack.c.l.b16 %v1201
        %v1323 = vunpack.c.l.b16 %v1202
        %v1324 = vunpack.c.l.b16 %v1203
        %v1325 = vunpack.c.l.b16 %v1204
        %v1326 = vunpack.c.l.b16 %v1205
        %v1327 = vunpack.c.l.b16 %v1206
        %v1328 = vunpack.c.l.b16 %v1207
        %v1329 = vunpack.c.l.b16 %v1208
        %v1330 = vunpack.c.l.b16 %v1209
        %v1331 = vunpack.c.l.b16 %v1210
        %v1332 = vunpack.c.l.b16 %v1211
        %v1333 = vpack.c.b16 %v1318, %v1317
        %v1334 = vpack.c.b16 %v1320, %v1319
        %v1335 = vpack.c.b16 %v1322, %v1321
        %v1336 = vpack.c.b16 %v1324, %v1323
        %v1337 = vpack.c.b16 %v1326, %v1325
        %v1338 = vpack.c.b16 %v1328, %v1327
        %v1339 = vpack.c.b16 %v1330, %v1329
        %v1340 = vpack.c.b16 %v1332, %v1331
        %1349 = vmatprep.subr.bf16.mxu0 0
        %1350 = vmatpush1.bf16.msra.mxu0 %v1340
        %1351 = vmatprep.subr.bf16.mxu0 0
        %1352 = vmatpush1.bf16.msra.mxu0 %v1339
        %1353 = vmatprep.subr.bf16.mxu0 0
        %1354 = vmatpush1.bf16.msra.mxu0 %v1338
        %1355 = vmatprep.subr.bf16.mxu0 0
        %1356 = vmatpush1.bf16.msra.mxu0 %v1337
        %1357 = vmatprep.subr.bf16.mxu0 0
        %1358 = vmatpush1.bf16.msra.mxu0 %v1336
        %1359 = vmatprep.subr.bf16.mxu0 0
        %1360 = vmatpush1.bf16.msra.mxu0 %v1335
        %1361 = vmatprep.subr.bf16.mxu0 0
        %1362 = vmatpush1.bf16.msra.mxu0 %v1334
        %1363 = vmatprep.subr.bf16.mxu0 0
        %1364 = vmatpush1.bf16.msra.mxu0 %v1333
        %1365 = vmatprep.subr.bf16.mxu0 0
        %1366 = vmatpush2.bf16.msra.mxu0 0
        %1367 = vmatprep.subr.bf16.mxu0 0
        %1368 = vmatpush2.bf16.msra.mxu0 0
        %1369 = vmatprep.subr.bf16.mxu0 0
        %1370 = vmatpush2.bf16.msra.mxu0 0
        %1371 = vmatprep.subr.bf16.mxu0 0
        %1372 = vmatpush2.bf16.msra.mxu0 0
        %1373 = vmatprep.subr.bf16.mxu0 0
        %1374 = vmatpush2.bf16.msra.mxu0 0
        %1375 = vmatprep.subr.bf16.mxu0 0
        %1376 = vmatpush2.bf16.msra.mxu0 0
        %1377 = vmatprep.subr.bf16.mxu0 0
        %1378 = vmatpush2.bf16.msra.mxu0 0
        %1379 = vmatprep.subr.bf16.mxu0 0
        %1380 = vmatpush2.bf16.msra.mxu0 0
        %1381 = vmatprep.mubr.bf16.mxu0 0
        %1382 = vmatmul.mubr.bf16.gmra.mxu0 %v1229
        %v1383 = vpop.f32.mrf.mxu0
        %v1384 = vadd.f32 0.0, %v1383
        %v1385 = vpop.f32.mrf.mxu0
        %v1386 = vpop.f32.mrf.mxu0
        %v1387 = vadd.f32 0.0, %v1386
        %v1388 = vpop.f32.mrf.mxu0
        %1389 = vmatprep.mubr.bf16.mxu0 0
        %1390 = vmatmul.mubr.bf16.gmra.mxu0 %v1238
        %v1391 = vpop.f32.mrf.mxu0
        %v1392 = vadd.f32 0.0, %v1391
        %v1393 = vpop.f32.mrf.mxu0
        %v1394 = vpop.f32.mrf.mxu0
        %v1395 = vadd.f32 0.0, %v1394
        %v1396 = vpop.f32.mrf.mxu0
        %1397 = vmatprep.mubr.bf16.mxu0 0
        %1398 = vmatmul.mubr.bf16.gmra.mxu0 %v1247
        %v1399 = vpop.f32.mrf.mxu0
        %v1400 = vadd.f32 0.0, %v1399
        %v1401 = vpop.f32.mrf.mxu0
        %v1402 = vpop.f32.mrf.mxu0
        %v1403 = vadd.f32 0.0, %v1402
        %v1404 = vpop.f32.mrf.mxu0
        %1405 = vmatprep.mubr.bf16.mxu0 0
        %1406 = vmatmul.mubr.bf16.gmra.mxu0 %v1256
        %v1407 = vpop.f32.mrf.mxu0
        %v1408 = vadd.f32 0.0, %v1407
        %v1409 = vpop.f32.mrf.mxu0
        %v1410 = vpop.f32.mrf.mxu0
        %v1411 = vadd.f32 0.0, %v1410
        %v1412 = vpop.f32.mrf.mxu0
        %1413 = vmatprep.mubr.bf16.mxu0 0
        %1414 = vmatmul.mubr.bf16.gmra.mxu0 %v1265
        %v1415 = vpop.f32.mrf.mxu0
        %v1416 = vadd.f32 0.0, %v1415
        %v1417 = vpop.f32.mrf.mxu0
        %v1418 = vpop.f32.mrf.mxu0
        %v1419 = vadd.f32 0.0, %v1418
        %v1420 = vpop.f32.mrf.mxu0
        %1421 = vmatprep.mubr.bf16.mxu0 0
        %1422 = vmatmul.mubr.bf16.gmra.mxu0 %v1274
        %v1423 = vpop.f32.mrf.mxu0
        %v1424 = vadd.f32 0.0, %v1423
        %v1425 = vpop.f32.mrf.mxu0
        %v1426 = vpop.f32.mrf.mxu0
        %v1427 = vadd.f32 0.0, %v1426
        %v1428 = vpop.f32.mrf.mxu0
        %1429 = vmatprep.mubr.bf16.mxu0 0
        %1430 = vmatmul.mubr.bf16.gmra.mxu0 %v1283
        %v1431 = vpop.f32.mrf.mxu0
        %v1432 = vadd.f32 0.0, %v1431
        %v1433 = vpop.f32.mrf.mxu0
        %v1434 = vpop.f32.mrf.mxu0
        %v1435 = vadd.f32 0.0, %v1434
        %v1436 = vpop.f32.mrf.mxu0
        %1437 = vmatprep.mubr.bf16.mxu0 0
        %1438 = vmatmul.mubr.bf16.gmra.mxu0 %v1292
        %v1439 = vpop.f32.mrf.mxu0
        %v1440 = vadd.f32 0.0, %v1439
        %v1441 = vpop.f32.mrf.mxu0
        %v1442 = vpop.f32.mrf.mxu0
        %v1443 = vadd.f32 0.0, %v1442
        %v1444 = vpop.f32.mrf.mxu0
        %1445 = vdwg.mxu0
        %v1446 = vld [vmem:[#allocation9] sm:$0x1]
        %v1447 = vmul.f32 %v1384, %v1384
        %v1448 = vmul.f32 %v1387, %v1387
        %v1449 = vmul.f32 %v1392, %v1392
        %v1450 = vmul.f32 %v1395, %v1395
        %v1451 = vmul.f32 %v1400, %v1400
        %v1452 = vmul.f32 %v1403, %v1403
        %v1453 = vmul.f32 %v1408, %v1408
        %v1454 = vmul.f32 %v1411, %v1411
        %v1455 = vmul.f32 %v1416, %v1416
        %v1456 = vmul.f32 %v1419, %v1419
        %v1457 = vmul.f32 %v1424, %v1424
        %v1458 = vmul.f32 %v1427, %v1427
        %v1459 = vmul.f32 %v1432, %v1432
        %v1460 = vmul.f32 %v1435, %v1435
        %v1461 = vmul.f32 %v1440, %v1440
        %v1462 = vmul.f32 %v1443, %v1443
        %vm1463 = vcmask 130048
        %v1464 = vsel %vm1463, %v1447, 0.0
        %1465 = vadd.xlane.f32.xlu0 %v1464
        %v1466 = vpop.xlane.xlu0 %1465
        %v1467 = vsel %vm1463, %v1448, 0.0
        %1468 = vadd.xlane.f32.xlu0 %v1467
        %v1469 = vpop.xlane.xlu0 %1468
        %v1470 = vsel %vm1463, %v1449, 0.0
        %1471 = vadd.xlane.f32.xlu0 %v1470
        %v1472 = vpop.xlane.xlu0 %1471
        %v1473 = vsel %vm1463, %v1450, 0.0
        %1474 = vadd.xlane.f32.xlu0 %v1473
        %v1475 = vpop.xlane.xlu0 %1474
        %v1476 = vsel %vm1463, %v1451, 0.0
        %1477 = vadd.xlane.f32.xlu0 %v1476
        %v1478 = vpop.xlane.xlu0 %1477
        %v1479 = vsel %vm1463, %v1452, 0.0
        %1480 = vadd.xlane.f32.xlu0 %v1479
        %v1481 = vpop.xlane.xlu0 %1480
        %v1482 = vsel %vm1463, %v1453, 0.0
        %1483 = vadd.xlane.f32.xlu0 %v1482
        %v1484 = vpop.xlane.xlu0 %1483
        %v1485 = vsel %vm1463, %v1454, 0.0
        %1486 = vadd.xlane.f32.xlu0 %v1485
        %v1487 = vpop.xlane.xlu0 %1486
        %v1488 = vsel %vm1463, %v1455, 0.0
        %1489 = vadd.xlane.f32.xlu0 %v1488
        %v1490 = vpop.xlane.xlu0 %1489
        %v1491 = vsel %vm1463, %v1456, 0.0
        %1492 = vadd.xlane.f32.xlu0 %v1491
        %v1493 = vpop.xlane.xlu0 %1492
        %v1494 = vsel %vm1463, %v1457, 0.0
        %1495 = vadd.xlane.f32.xlu0 %v1494
        %v1496 = vpop.xlane.xlu0 %1495
        %v1497 = vsel %vm1463, %v1458, 0.0
        %1498 = vadd.xlane.f32.xlu0 %v1497
        %v1499 = vpop.xlane.xlu0 %1498
        %v1500 = vsel %vm1463, %v1459, 0.0
        %1501 = vadd.xlane.f32.xlu0 %v1500
        %v1502 = vpop.xlane.xlu0 %1501
        %v1503 = vsel %vm1463, %v1460, 0.0
        %1504 = vadd.xlane.f32.xlu0 %v1503
        %v1505 = vpop.xlane.xlu0 %1504
        %v1506 = vsel %vm1463, %v1461, 0.0
        %1507 = vadd.xlane.f32.xlu0 %v1506
        %v1508 = vpop.xlane.xlu0 %1507
        %v1509 = vsel %vm1463, %v1462, 0.0
        %1510 = vadd.xlane.f32.xlu0 %v1509
        %v1511 = vpop.xlane.xlu0 %1510
        %v1512 = vrcp.pop 16.0
        %v1513 = vmul.f32 %v1466, %v1512
        %v1514 = vmul.f32 %v1469, %v1512
        %v1515 = vmul.f32 %v1472, %v1512
        %v1516 = vmul.f32 %v1475, %v1512
        %v1517 = vmul.f32 %v1478, %v1512
        %v1518 = vmul.f32 %v1481, %v1512
        %v1519 = vmul.f32 %v1484, %v1512
        %v1520 = vmul.f32 %v1487, %v1512
        %v1521 = vmul.f32 %v1490, %v1512
        %v1522 = vmul.f32 %v1493, %v1512
        %v1523 = vmul.f32 %v1496, %v1512
        %v1524 = vmul.f32 %v1499, %v1512
        %v1525 = vmul.f32 %v1502, %v1512
        %v1526 = vmul.f32 %v1505, %v1512
        %v1527 = vmul.f32 %v1508, %v1512
        %v1528 = vmul.f32 %v1511, %v1512
        %v1529 = vadd.f32 %v1513, 1e-06
        %v1530 = vadd.f32 %v1514, 1e-06
        %v1531 = vadd.f32 %v1515, 1e-06
        %v1532 = vadd.f32 %v1516, 1e-06
        %v1533 = vadd.f32 %v1517, 1e-06
        %v1534 = vadd.f32 %v1518, 1e-06
        %v1535 = vadd.f32 %v1519, 1e-06
        %v1536 = vadd.f32 %v1520, 1e-06
        %v1537 = vadd.f32 %v1521, 1e-06
        %v1538 = vadd.f32 %v1522, 1e-06
        %v1539 = vadd.f32 %v1523, 1e-06
        %v1540 = vadd.f32 %v1524, 1e-06
        %v1541 = vadd.f32 %v1525, 1e-06
        %v1542 = vadd.f32 %v1526, 1e-06
        %v1543 = vadd.f32 %v1527, 1e-06
        %v1544 = vadd.f32 %v1528, 1e-06
        %v1545 = vrsqrt.pop %v1529
        %v1546 = vrsqrt.pop %v1530
        %v1547 = vrsqrt.pop %v1531
        %v1548 = vrsqrt.pop %v1532
        %v1549 = vrsqrt.pop %v1533
        %v1550 = vrsqrt.pop %v1534
        %v1551 = vrsqrt.pop %v1535
        %v1552 = vrsqrt.pop %v1536
        %v1553 = vrsqrt.pop %v1537
        %v1554 = vrsqrt.pop %v1538
        %v1555 = vrsqrt.pop %v1539
        %v1556 = vrsqrt.pop %v1540
        %v1557 = vrsqrt.pop %v1541
        %v1558 = vrsqrt.pop %v1542
        %v1559 = vrsqrt.pop %v1543
        %v1560 = vrsqrt.pop %v1544
        %v1561 = vmul.f32 %v1384, %v1545
        %v1562 = vmul.f32 %v1387, %v1546
        %v1563 = vmul.f32 %v1392, %v1547
        %v1564 = vmul.f32 %v1395, %v1548
        %v1565 = vmul.f32 %v1400, %v1549
        %v1566 = vmul.f32 %v1403, %v1550
        %v1567 = vmul.f32 %v1408, %v1551
        %v1568 = vmul.f32 %v1411, %v1552
        %v1569 = vmul.f32 %v1416, %v1553
        %v1570 = vmul.f32 %v1419, %v1554
        %v1571 = vmul.f32 %v1424, %v1555
        %v1572 = vmul.f32 %v1427, %v1556
        %v1573 = vmul.f32 %v1432, %v1557
        %v1574 = vmul.f32 %v1435, %v1558
        %v1575 = vmul.f32 %v1440, %v1559
        %v1576 = vmul.f32 %v1443, %v1560
        %v1578 = vlaneseq
        %v1579 = vshrl.u32 %v1578, 7
        %v1580 = vsub.s32 0, %v1579
        %v1581 = vrot.slane %v1446, %v1580
        %v1583 = vmul.f32 %v1561, %v1581
        %v1584 = vmul.f32 %v1562, %v1581
        %v1585 = vmul.f32 %v1563, %v1581
        %v1586 = vmul.f32 %v1564, %v1581
        %v1587 = vmul.f32 %v1565, %v1581
        %v1588 = vmul.f32 %v1566, %v1581
        %v1589 = vmul.f32 %v1567, %v1581
        %v1590 = vmul.f32 %v1568, %v1581
        %v1591 = vmul.f32 %v1569, %v1581
        %v1592 = vmul.f32 %v1570, %v1581
        %v1593 = vmul.f32 %v1571, %v1581
        %v1594 = vmul.f32 %v1572, %v1581
        %v1595 = vmul.f32 %v1573, %v1581
        %v1596 = vmul.f32 %v1574, %v1581
        %v1597 = vmul.f32 %v1575, %v1581
        %v1598 = vmul.f32 %v1576, %v1581
        %v1599 = vld [vmem:[#allocation10] sm:$0x1]
        %1616 = vrot.lane.b32.xlu0 %v1447, 112
        %v1617 = vpop.permute.xlu0 %1616
        %1618 = vrot.lane.b32.xlu0 %v1448, 112
        %v1619 = vpop.permute.xlu0 %1618
        %1620 = vrot.lane.b32.xlu0 %v1449, 112
        %v1621 = vpop.permute.xlu0 %1620
        %1622 = vrot.lane.b32.xlu0 %v1450, 112
        %v1623 = vpop.permute.xlu0 %1622
        %1624 = vrot.lane.b32.xlu0 %v1451, 112
        %v1625 = vpop.permute.xlu0 %1624
        %1626 = vrot.lane.b32.xlu0 %v1452, 112
        %v1627 = vpop.permute.xlu0 %1626
        %1628 = vrot.lane.b32.xlu0 %v1453, 112
        %v1629 = vpop.permute.xlu0 %1628
        %1630 = vrot.lane.b32.xlu0 %v1454, 112
        %v1631 = vpop.permute.xlu0 %1630
        %1632 = vrot.lane.b32.xlu0 %v1455, 112
        %v1633 = vpop.permute.xlu0 %1632
        %1634 = vrot.lane.b32.xlu0 %v1456, 112
        %v1635 = vpop.permute.xlu0 %1634
        %1636 = vrot.lane.b32.xlu0 %v1457, 112
        %v1637 = vpop.permute.xlu0 %1636
        %1638 = vrot.lane.b32.xlu0 %v1458, 112
        %v1639 = vpop.permute.xlu0 %1638
        %1640 = vrot.lane.b32.xlu0 %v1459, 112
        %v1641 = vpop.permute.xlu0 %1640
        %1642 = vrot.lane.b32.xlu0 %v1460, 112
        %v1643 = vpop.permute.xlu0 %1642
        %1644 = vrot.lane.b32.xlu0 %v1461, 112
        %v1645 = vpop.permute.xlu0 %1644
        %1646 = vrot.lane.b32.xlu0 %v1462, 112
        %v1647 = vpop.permute.xlu0 %1646
        %v1664 = vsel %vm1463, %v1617, 0.0
        %1665 = vadd.xlane.f32.xlu0 %v1664
        %v1666 = vpop.xlane.xlu0 %1665
        %v1667 = vsel %vm1463, %v1619, 0.0
        %1668 = vadd.xlane.f32.xlu0 %v1667
        %v1669 = vpop.xlane.xlu0 %1668
        %v1670 = vsel %vm1463, %v1621, 0.0
        %1671 = vadd.xlane.f32.xlu0 %v1670
        %v1672 = vpop.xlane.xlu0 %1671
        %v1673 = vsel %vm1463, %v1623, 0.0
        %1674 = vadd.xlane.f32.xlu0 %v1673
        %v1675 = vpop.xlane.xlu0 %1674
        %v1676 = vsel %vm1463, %v1625, 0.0
        %1677 = vadd.xlane.f32.xlu0 %v1676
        %v1678 = vpop.xlane.xlu0 %1677
        %v1679 = vsel %vm1463, %v1627, 0.0
        %1680 = vadd.xlane.f32.xlu0 %v1679
        %v1681 = vpop.xlane.xlu0 %1680
        %v1682 = vsel %vm1463, %v1629, 0.0
        %1683 = vadd.xlane.f32.xlu0 %v1682
        %v1684 = vpop.xlane.xlu0 %1683
        %v1685 = vsel %vm1463, %v1631, 0.0
        %1686 = vadd.xlane.f32.xlu0 %v1685
        %v1687 = vpop.xlane.xlu0 %1686
        %v1688 = vsel %vm1463, %v1633, 0.0
        %1689 = vadd.xlane.f32.xlu0 %v1688
        %v1690 = vpop.xlane.xlu0 %1689
        %v1691 = vsel %vm1463, %v1635, 0.0
        %1692 = vadd.xlane.f32.xlu0 %v1691
        %v1693 = vpop.xlane.xlu0 %1692
        %v1694 = vsel %vm1463, %v1637, 0.0
        %1695 = vadd.xlane.f32.xlu0 %v1694
        %v1696 = vpop.xlane.xlu0 %1695
        %v1697 = vsel %vm1463, %v1639, 0.0
        %1698 = vadd.xlane.f32.xlu0 %v1697
        %v1699 = vpop.xlane.xlu0 %1698
        %v1700 = vsel %vm1463, %v1641, 0.0
        %1701 = vadd.xlane.f32.xlu0 %v1700
        %v1702 = vpop.xlane.xlu0 %1701
        %v1703 = vsel %vm1463, %v1643, 0.0
        %1704 = vadd.xlane.f32.xlu0 %v1703
        %v1705 = vpop.xlane.xlu0 %1704
        %v1706 = vsel %vm1463, %v1645, 0.0
        %1707 = vadd.xlane.f32.xlu0 %v1706
        %v1708 = vpop.xlane.xlu0 %1707
        %v1709 = vsel %vm1463, %v1647, 0.0
        %1710 = vadd.xlane.f32.xlu0 %v1709
        %v1711 = vpop.xlane.xlu0 %1710
        %v1712 = vmul.f32 %v1666, %v1512
        %v1713 = vmul.f32 %v1669, %v1512
        %v1714 = vmul.f32 %v1672, %v1512
        %v1715 = vmul.f32 %v1675, %v1512
        %v1716 = vmul.f32 %v1678, %v1512
        %v1717 = vmul.f32 %v1681, %v1512
        %v1718 = vmul.f32 %v1684, %v1512
        %v1719 = vmul.f32 %v1687, %v1512
        %v1720 = vmul.f32 %v1690, %v1512
        %v1721 = vmul.f32 %v1693, %v1512
        %v1722 = vmul.f32 %v1696, %v1512
        %v1723 = vmul.f32 %v1699, %v1512
        %v1724 = vmul.f32 %v1702, %v1512
        %v1725 = vmul.f32 %v1705, %v1512
        %v1726 = vmul.f32 %v1708, %v1512
        %v1727 = vmul.f32 %v1711, %v1512
        %v1728 = vadd.f32 %v1712, 1e-06
        %v1729 = vadd.f32 %v1713, 1e-06
        %v1730 = vadd.f32 %v1714, 1e-06
        %v1731 = vadd.f32 %v1715, 1e-06
        %v1732 = vadd.f32 %v1716, 1e-06
        %v1733 = vadd.f32 %v1717, 1e-06
        %v1734 = vadd.f32 %v1718, 1e-06
        %v1735 = vadd.f32 %v1719, 1e-06
        %v1736 = vadd.f32 %v1720, 1e-06
        %v1737 = vadd.f32 %v1721, 1e-06
        %v1738 = vadd.f32 %v1722, 1e-06
        %v1739 = vadd.f32 %v1723, 1e-06
        %v1740 = vadd.f32 %v1724, 1e-06
        %v1741 = vadd.f32 %v1725, 1e-06
        %v1742 = vadd.f32 %v1726, 1e-06
        %v1743 = vadd.f32 %v1727, 1e-06
        %v1744 = vrsqrt.pop %v1728
        %v1745 = vrsqrt.pop %v1729
        %v1746 = vrsqrt.pop %v1730
        %v1747 = vrsqrt.pop %v1731
        %v1748 = vrsqrt.pop %v1732
        %v1749 = vrsqrt.pop %v1733
        %v1750 = vrsqrt.pop %v1734
        %v1751 = vrsqrt.pop %v1735
        %v1752 = vrsqrt.pop %v1736
        %v1753 = vrsqrt.pop %v1737
        %v1754 = vrsqrt.pop %v1738
        %v1755 = vrsqrt.pop %v1739
        %v1756 = vrsqrt.pop %v1740
        %v1757 = vrsqrt.pop %v1741
        %v1758 = vrsqrt.pop %v1742
        %v1759 = vrsqrt.pop %v1743
        %v1760 = vmul.f32 %v1384, %v1744
        %v1761 = vmul.f32 %v1387, %v1745
        %v1762 = vmul.f32 %v1392, %v1746
        %v1763 = vmul.f32 %v1395, %v1747
        %v1764 = vmul.f32 %v1400, %v1748
        %v1765 = vmul.f32 %v1403, %v1749
        %v1766 = vmul.f32 %v1408, %v1750
        %v1767 = vmul.f32 %v1411, %v1751
        %v1768 = vmul.f32 %v1416, %v1752
        %v1769 = vmul.f32 %v1419, %v1753
        %v1770 = vmul.f32 %v1424, %v1754
        %v1771 = vmul.f32 %v1427, %v1755
        %v1772 = vmul.f32 %v1432, %v1756
        %v1773 = vmul.f32 %v1435, %v1757
        %v1774 = vmul.f32 %v1440, %v1758
        %v1775 = vmul.f32 %v1443, %v1759
        %v1777 = vlaneseq
        %v1778 = vshrl.u32 %v1777, 7
        %v1779 = vsub.s32 0, %v1778
        %v1780 = vrot.slane %v1599, %v1779
        %1781 = vrot.lane.b32.xlu0 %v1780, 16
        %v1782 = vpop.permute.xlu0 %1781
        %v1784 = vmul.f32 %v1760, %v1782
        %v1785 = vmul.f32 %v1761, %v1782
        %v1786 = vmul.f32 %v1762, %v1782
        %v1787 = vmul.f32 %v1763, %v1782
        %v1788 = vmul.f32 %v1764, %v1782
        %v1789 = vmul.f32 %v1765, %v1782
        %v1790 = vmul.f32 %v1766, %v1782
        %v1791 = vmul.f32 %v1767, %v1782
        %v1792 = vmul.f32 %v1768, %v1782
        %v1793 = vmul.f32 %v1769, %v1782
        %v1794 = vmul.f32 %v1770, %v1782
        %v1795 = vmul.f32 %v1771, %v1782
        %v1796 = vmul.f32 %v1772, %v1782
        %v1797 = vmul.f32 %v1773, %v1782
        %v1798 = vmul.f32 %v1774, %v1782
        %v1799 = vmul.f32 %v1775, %v1782
        %1800 = vrot.lane.b32.xlu0 %v1447, 96
        %v1801 = vpop.permute.xlu0 %1800
        %1802 = vrot.lane.b32.xlu0 %v1448, 96
        %v1803 = vpop.permute.xlu0 %1802
        %1804 = vrot.lane.b32.xlu0 %v1449, 96
        %v1805 = vpop.permute.xlu0 %1804
        %1806 = vrot.lane.b32.xlu0 %v1450, 96
        %v1807 = vpop.permute.xlu0 %1806
        %1808 = vrot.lane.b32.xlu0 %v1451, 96
        %v1809 = vpop.permute.xlu0 %1808
        %1810 = vrot.lane.b32.xlu0 %v1452, 96
        %v1811 = vpop.permute.xlu0 %1810
        %1812 = vrot.lane.b32.xlu0 %v1453, 96
        %v1813 = vpop.permute.xlu0 %1812
        %1814 = vrot.lane.b32.xlu0 %v1454, 96
        %v1815 = vpop.permute.xlu0 %1814
        %1816 = vrot.lane.b32.xlu0 %v1455, 96
        %v1817 = vpop.permute.xlu0 %1816
        %1818 = vrot.lane.b32.xlu0 %v1456, 96
        %v1819 = vpop.permute.xlu0 %1818
        %1820 = vrot.lane.b32.xlu0 %v1457, 96
        %v1821 = vpop.permute.xlu0 %1820
        %1822 = vrot.lane.b32.xlu0 %v1458, 96
        %v1823 = vpop.permute.xlu0 %1822
        %1824 = vrot.lane.b32.xlu0 %v1459, 96
        %v1825 = vpop.permute.xlu0 %1824
        %1826 = vrot.lane.b32.xlu0 %v1460, 96
        %v1827 = vpop.permute.xlu0 %1826
        %1828 = vrot.lane.b32.xlu0 %v1461, 96
        %v1829 = vpop.permute.xlu0 %1828
        %1830 = vrot.lane.b32.xlu0 %v1462, 96
        %v1831 = vpop.permute.xlu0 %1830
        %vm1848 = vcmask 523264
        %v1849 = vsel %vm1848, %v1801, 0.0
        %1850 = vadd.xlane.f32.xlu0 %v1849
        %v1851 = vpop.xlane.xlu0 %1850
        %v1852 = vsel %vm1848, %v1803, 0.0
        %1853 = vadd.xlane.f32.xlu0 %v1852
        %v1854 = vpop.xlane.xlu0 %1853
        %v1855 = vsel %vm1848, %v1805, 0.0
        %1856 = vadd.xlane.f32.xlu0 %v1855
        %v1857 = vpop.xlane.xlu0 %1856
        %v1858 = vsel %vm1848, %v1807, 0.0
        %1859 = vadd.xlane.f32.xlu0 %v1858
        %v1860 = vpop.xlane.xlu0 %1859
        %v1861 = vsel %vm1848, %v1809, 0.0
        %1862 = vadd.xlane.f32.xlu0 %v1861
        %v1863 = vpop.xlane.xlu0 %1862
        %v1864 = vsel %vm1848, %v1811, 0.0
        %1865 = vadd.xlane.f32.xlu0 %v1864
        %v1866 = vpop.xlane.xlu0 %1865
        %v1867 = vsel %vm1848, %v1813, 0.0
        %1868 = vadd.xlane.f32.xlu0 %v1867
        %v1869 = vpop.xlane.xlu0 %1868
        %v1870 = vsel %vm1848, %v1815, 0.0
        %1871 = vadd.xlane.f32.xlu0 %v1870
        %v1872 = vpop.xlane.xlu0 %1871
        %v1873 = vsel %vm1848, %v1817, 0.0
        %1874 = vadd.xlane.f32.xlu0 %v1873
        %v1875 = vpop.xlane.xlu0 %1874
        %v1876 = vsel %vm1848, %v1819, 0.0
        %1877 = vadd.xlane.f32.xlu0 %v1876
        %v1878 = vpop.xlane.xlu0 %1877
        %v1879 = vsel %vm1848, %v1821, 0.0
        %1880 = vadd.xlane.f32.xlu0 %v1879
        %v1881 = vpop.xlane.xlu0 %1880
        %v1882 = vsel %vm1848, %v1823, 0.0
        %1883 = vadd.xlane.f32.xlu0 %v1882
        %v1884 = vpop.xlane.xlu0 %1883
        %v1885 = vsel %vm1848, %v1825, 0.0
        %1886 = vadd.xlane.f32.xlu0 %v1885
        %v1887 = vpop.xlane.xlu0 %1886
        %v1888 = vsel %vm1848, %v1827, 0.0
        %1889 = vadd.xlane.f32.xlu0 %v1888
        %v1890 = vpop.xlane.xlu0 %1889
        %v1891 = vsel %vm1848, %v1829, 0.0
        %1892 = vadd.xlane.f32.xlu0 %v1891
        %v1893 = vpop.xlane.xlu0 %1892
        %v1894 = vsel %vm1848, %v1831, 0.0
        %1895 = vadd.xlane.f32.xlu0 %v1894
        %v1896 = vpop.xlane.xlu0 %1895
        %v1897 = vrcp.pop 64.0
        %v1898 = vmul.f32 %v1851, %v1897
        %v1899 = vmul.f32 %v1854, %v1897
        %v1900 = vmul.f32 %v1857, %v1897
        %v1901 = vmul.f32 %v1860, %v1897
        %v1902 = vmul.f32 %v1863, %v1897
        %v1903 = vmul.f32 %v1866, %v1897
        %v1904 = vmul.f32 %v1869, %v1897
        %v1905 = vmul.f32 %v1872, %v1897
        %v1906 = vmul.f32 %v1875, %v1897
        %v1907 = vmul.f32 %v1878, %v1897
        %v1908 = vmul.f32 %v1881, %v1897
        %v1909 = vmul.f32 %v1884, %v1897
        %v1910 = vmul.f32 %v1887, %v1897
        %v1911 = vmul.f32 %v1890, %v1897
        %v1912 = vmul.f32 %v1893, %v1897
        %v1913 = vmul.f32 %v1896, %v1897
        %v1914 = vadd.f32 %v1898, 1e-06
        %v1915 = vadd.f32 %v1899, 1e-06
        %v1916 = vadd.f32 %v1900, 1e-06
        %v1917 = vadd.f32 %v1901, 1e-06
        %v1918 = vadd.f32 %v1902, 1e-06
        %v1919 = vadd.f32 %v1903, 1e-06
        %v1920 = vadd.f32 %v1904, 1e-06
        %v1921 = vadd.f32 %v1905, 1e-06
        %v1922 = vadd.f32 %v1906, 1e-06
        %v1923 = vadd.f32 %v1907, 1e-06
        %v1924 = vadd.f32 %v1908, 1e-06
        %v1925 = vadd.f32 %v1909, 1e-06
        %v1926 = vadd.f32 %v1910, 1e-06
        %v1927 = vadd.f32 %v1911, 1e-06
        %v1928 = vadd.f32 %v1912, 1e-06
        %v1929 = vadd.f32 %v1913, 1e-06
        %v1930 = vrsqrt.pop %v1914
        %v1931 = vrsqrt.pop %v1915
        %v1932 = vrsqrt.pop %v1916
        %v1933 = vrsqrt.pop %v1917
        %v1934 = vrsqrt.pop %v1918
        %v1935 = vrsqrt.pop %v1919
        %v1936 = vrsqrt.pop %v1920
        %v1937 = vrsqrt.pop %v1921
        %v1938 = vrsqrt.pop %v1922
        %v1939 = vrsqrt.pop %v1923
        %v1940 = vrsqrt.pop %v1924
        %v1941 = vrsqrt.pop %v1925
        %v1942 = vrsqrt.pop %v1926
        %v1943 = vrsqrt.pop %v1927
        %v1944 = vrsqrt.pop %v1928
        %v1945 = vrsqrt.pop %v1929
        %v1946 = vmul.f32 %v1384, %v1930
        %v1947 = vmul.f32 %v1387, %v1931
        %v1948 = vmul.f32 %v1392, %v1932
        %v1949 = vmul.f32 %v1395, %v1933
        %v1950 = vmul.f32 %v1400, %v1934
        %v1951 = vmul.f32 %v1403, %v1935
        %v1952 = vmul.f32 %v1408, %v1936
        %v1953 = vmul.f32 %v1411, %v1937
        %v1954 = vmul.f32 %v1416, %v1938
        %v1955 = vmul.f32 %v1419, %v1939
        %v1956 = vmul.f32 %v1424, %v1940
        %v1957 = vmul.f32 %v1427, %v1941
        %v1958 = vmul.f32 %v1432, %v1942
        %v1959 = vmul.f32 %v1435, %v1943
        %v1960 = vmul.f32 %v1440, %v1944
        %v1961 = vmul.f32 %v1443, %v1945
        %v1962 = vld [vmem:[%s6] sm:$0xff]
        %v1963 = vld [vmem:[%s6 + $0x8] sm:$0xff]
        %v1964 = vld [vmem:[%s6 + $0x10] sm:$0xff]
        %v1965 = vld [vmem:[%s6 + $0x18] sm:$0xff]
        %v1966 = vld [vmem:[%s6 + $0x20] sm:$0xff]
        %v1967 = vld [vmem:[%s6 + $0x28] sm:$0xff]
        %v1968 = vld [vmem:[%s6 + $0x30] sm:$0xff]
        %v1969 = vld [vmem:[%s6 + $0x38] sm:$0xff]
        %v1970 = vld [vmem:[#allocation12] sm:$0x1]
        %v1972 = vlaneseq
        %v1973 = vshrl.u32 %v1972, 7
        %v1974 = vsub.s32 0, %v1973
        %v1975 = vrot.slane %v1970, %v1974
        %1993 = vrot.lane.b32.xlu0 %v1946, 96
        %v1994 = vpop.permute.xlu0 %1993
        %1995 = vrot.lane.b32.xlu0 %v1947, 96
        %v1996 = vpop.permute.xlu0 %1995
        %1997 = vrot.lane.b32.xlu0 %v1948, 96
        %v1998 = vpop.permute.xlu0 %1997
        %1999 = vrot.lane.b32.xlu0 %v1949, 96
        %v2000 = vpop.permute.xlu0 %1999
        %2001 = vrot.lane.b32.xlu0 %v1950, 96
        %v2002 = vpop.permute.xlu0 %2001
        %2003 = vrot.lane.b32.xlu0 %v1951, 96
        %v2004 = vpop.permute.xlu0 %2003
        %2005 = vrot.lane.b32.xlu0 %v1952, 96
        %v2006 = vpop.permute.xlu0 %2005
        %2007 = vrot.lane.b32.xlu0 %v1953, 96
        %v2008 = vpop.permute.xlu0 %2007
        %2009 = vrot.lane.b32.xlu0 %v1954, 96
        %v2010 = vpop.permute.xlu0 %2009
        %2011 = vrot.lane.b32.xlu0 %v1955, 96
        %v2012 = vpop.permute.xlu0 %2011
        %2013 = vrot.lane.b32.xlu0 %v1956, 96
        %v2014 = vpop.permute.xlu0 %2013
        %2015 = vrot.lane.b32.xlu0 %v1957, 96
        %v2016 = vpop.permute.xlu0 %2015
        %2017 = vrot.lane.b32.xlu0 %v1958, 96
        %v2018 = vpop.permute.xlu0 %2017
        %2019 = vrot.lane.b32.xlu0 %v1959, 96
        %v2020 = vpop.permute.xlu0 %2019
        %2021 = vrot.lane.b32.xlu0 %v1960, 96
        %v2022 = vpop.permute.xlu0 %2021
        %2023 = vrot.lane.b32.xlu0 %v1961, 96
        %v2024 = vpop.permute.xlu0 %2023
        %v2025 = vsel %vm1848, %v1994, 0
        %v2027 = vsel %vm1848, %v1996, 0
        %v2029 = vsel %vm1848, %v1998, 0
        %v2031 = vsel %vm1848, %v2000, 0
        %v2033 = vsel %vm1848, %v2002, 0
        %v2035 = vsel %vm1848, %v2004, 0
        %v2037 = vsel %vm1848, %v2006, 0
        %v2039 = vsel %vm1848, %v2008, 0
        %v2041 = vsel %vm1848, %v2010, 0
        %v2043 = vsel %vm1848, %v2012, 0
        %v2045 = vsel %vm1848, %v2014, 0
        %v2047 = vsel %vm1848, %v2016, 0
        %v2049 = vsel %vm1848, %v2018, 0
        %v2051 = vsel %vm1848, %v2020, 0
        %v2053 = vsel %vm1848, %v2022, 0
        %v2055 = vsel %vm1848, %v2024, 0
        %2057 = vmatprep.subr.mxu0 0.0
        %2058 = vmatpush1.msra.mxu0 0.0
        %2059 = vmatprep.subr.mxu0 0.0
        %2060 = vmatpush1.msra.mxu0 0.0
        %2061 = vmatprep.subr.mxu0 0.0
        %2062 = vmatpush1.msra.mxu0 0.0
        %2063 = vmatprep.subr.mxu0 0.0
        %2064 = vmatpush1.msra.mxu0 0.0
        %2065 = vmatprep.subr.mxu0 0.0
        %2066 = vmatpush1.msra.mxu0 0.0
        %2067 = vmatprep.subr.mxu0 0.0
        %2068 = vmatpush1.msra.mxu0 0.0
        %2069 = vmatprep.subr.mxu0 0.0
        %2070 = vmatpush1.msra.mxu0 0.0
        %2071 = vmatprep.subr.mxu0 0.0
        %2072 = vmatpush1.msra.mxu0 0.0
        %2073 = vmatprep.subr.mxu0 0.0
        %2074 = vmatpush1.msra.mxu0 %v1969
        %2075 = vmatprep.subr.mxu0 0.0
        %2076 = vmatpush1.msra.mxu0 %v1968
        %2077 = vmatprep.subr.mxu0 0.0
        %2078 = vmatpush1.msra.mxu0 %v1967
        %2079 = vmatprep.subr.mxu0 0.0
        %2080 = vmatpush1.msra.mxu0 %v1966
        %2081 = vmatprep.subr.mxu0 0.0
        %2082 = vmatpush1.msra.mxu0 %v1965
        %2083 = vmatprep.subr.mxu0 0.0
        %2084 = vmatpush1.msra.mxu0 %v1964
        %2085 = vmatprep.subr.mxu0 0.0
        %2086 = vmatpush1.msra.mxu0 %v1963
        %2087 = vmatprep.subr.mxu0 0.0
        %2088 = vmatpush1.msra.mxu0 %v1962
        %2089 = vmatprep.subr.mxu0 0.0
        %2090 = vmatpush2.msra.mxu0 0.0
        %2091 = vmatprep.subr.mxu0 0.0
        %2092 = vmatpush2.msra.mxu0 0.0
        %2093 = vmatprep.subr.mxu0 0.0
        %2094 = vmatpush2.msra.mxu0 0.0
        %2095 = vmatprep.subr.mxu0 0.0
        %2096 = vmatpush2.msra.mxu0 0.0
        %2097 = vmatprep.subr.mxu0 0.0
        %2098 = vmatpush2.msra.mxu0 0.0
        %2099 = vmatprep.subr.mxu0 0.0
        %2100 = vmatpush2.msra.mxu0 0.0
        %2101 = vmatprep.subr.mxu0 0.0
        %2102 = vmatpush2.msra.mxu0 0.0
        %2103 = vmatprep.subr.mxu0 0.0
        %2104 = vmatpush2.msra.mxu0 0.0
        %2105 = vmatprep.subr.mxu0 0.0
        %2106 = vmatpush2.msra.mxu0 0.0
        %2107 = vmatprep.subr.mxu0 0.0
        %2108 = vmatpush2.msra.mxu0 0.0
        %2109 = vmatprep.subr.mxu0 0.0
        %2110 = vmatpush2.msra.mxu0 0.0
        %2111 = vmatprep.subr.mxu0 0.0
        %2112 = vmatpush2.msra.mxu0 0.0
        %2113 = vmatprep.subr.mxu0 0.0
        %2114 = vmatpush2.msra.mxu0 0.0
        %2115 = vmatprep.subr.mxu0 0.0
        %2116 = vmatpush2.msra.mxu0 0.0
        %2117 = vmatprep.subr.mxu0 0.0
        %2118 = vmatpush2.msra.mxu0 0.0
        %2119 = vmatprep.subr.mxu0 0.0
        %2120 = vmatpush2.msra.mxu0 0.0
        %2121 = vmatprep.mubr.f32.mxu0 0.0
        %2122 = vmatmul.mubr.f32.gmra.mxu0 %v2025
        %v2123 = vpop.f32.mrf.mxu0
        %v2124 = vadd.f32 %v1975, %v2123
        %v2125 = vpop.f32.mrf.mxu0
        %2126 = vmatprep.mubr.f32.mxu0 0.0
        %2127 = vmatmul.mubr.f32.gmra.mxu0 %v2027
        %v2128 = vpop.f32.mrf.mxu0
        %v2129 = vadd.f32 %v1975, %v2128
        %v2130 = vpop.f32.mrf.mxu0
        %2131 = vmatprep.mubr.f32.mxu0 0.0
        %2132 = vmatmul.mubr.f32.gmra.mxu0 %v2029
        %v2133 = vpop.f32.mrf.mxu0
        %v2134 = vadd.f32 %v1975, %v2133
        %v2135 = vpop.f32.mrf.mxu0
        %2136 = vmatprep.mubr.f32.mxu0 0.0
        %2137 = vmatmul.mubr.f32.gmra.mxu0 %v2031
        %v2138 = vpop.f32.mrf.mxu0
        %v2139 = vadd.f32 %v1975, %v2138
        %v2140 = vpop.f32.mrf.mxu0
        %2141 = vmatprep.mubr.f32.mxu0 0.0
        %2142 = vmatmul.mubr.f32.gmra.mxu0 %v2033
        %v2143 = vpop.f32.mrf.mxu0
        %v2144 = vadd.f32 %v1975, %v2143
        %v2145 = vpop.f32.mrf.mxu0
        %2146 = vmatprep.mubr.f32.mxu0 0.0
        %2147 = vmatmul.mubr.f32.gmra.mxu0 %v2035
        %v2148 = vpop.f32.mrf.mxu0
        %v2149 = vadd.f32 %v1975, %v2148
        %v2150 = vpop.f32.mrf.mxu0
        %2151 = vmatprep.mubr.f32.mxu0 0.0
        %2152 = vmatmul.mubr.f32.gmra.mxu0 %v2037
        %v2153 = vpop.f32.mrf.mxu0
        %v2154 = vadd.f32 %v1975, %v2153
        %v2155 = vpop.f32.mrf.mxu0
        %2156 = vmatprep.mubr.f32.mxu0 0.0
        %2157 = vmatmul.mubr.f32.gmra.mxu0 %v2039
        %v2158 = vpop.f32.mrf.mxu0
        %v2159 = vadd.f32 %v1975, %v2158
        %v2160 = vpop.f32.mrf.mxu0
        %2161 = vmatprep.mubr.f32.mxu0 0.0
        %2162 = vmatmul.mubr.f32.gmra.mxu0 %v2041
        %v2163 = vpop.f32.mrf.mxu0
        %v2164 = vadd.f32 %v1975, %v2163
        %v2165 = vpop.f32.mrf.mxu0
        %2166 = vmatprep.mubr.f32.mxu0 0.0
        %2167 = vmatmul.mubr.f32.gmra.mxu0 %v2043
        %v2168 = vpop.f32.mrf.mxu0
        %v2169 = vadd.f32 %v1975, %v2168
        %v2170 = vpop.f32.mrf.mxu0
        %2171 = vmatprep.mubr.f32.mxu0 0.0
        %2172 = vmatmul.mubr.f32.gmra.mxu0 %v2045
        %v2173 = vpop.f32.mrf.mxu0
        %v2174 = vadd.f32 %v1975, %v2173
        %v2175 = vpop.f32.mrf.mxu0
        %2176 = vmatprep.mubr.f32.mxu0 0.0
        %2177 = vmatmul.mubr.f32.gmra.mxu0 %v2047
        %v2178 = vpop.f32.mrf.mxu0
        %v2179 = vadd.f32 %v1975, %v2178
        %v2180 = vpop.f32.mrf.mxu0
        %2181 = vmatprep.mubr.f32.mxu0 0.0
        %2182 = vmatmul.mubr.f32.gmra.mxu0 %v2049
        %v2183 = vpop.f32.mrf.mxu0
        %v2184 = vadd.f32 %v1975, %v2183
        %v2185 = vpop.f32.mrf.mxu0
        %2186 = vmatprep.mubr.f32.mxu0 0.0
        %2187 = vmatmul.mubr.f32.gmra.mxu0 %v2051
        %v2188 = vpop.f32.mrf.mxu0
        %v2189 = vadd.f32 %v1975, %v2188
        %v2190 = vpop.f32.mrf.mxu0
        %2191 = vmatprep.mubr.f32.mxu0 0.0
        %2192 = vmatmul.mubr.f32.gmra.mxu0 %v2053
        %v2193 = vpop.f32.mrf.mxu0
        %v2194 = vadd.f32 %v1975, %v2193
        %v2195 = vpop.f32.mrf.mxu0
        %2196 = vmatprep.mubr.f32.mxu0 0.0
        %2197 = vmatmul.mubr.f32.gmra.mxu0 %v2055
        %v2198 = vpop.f32.mrf.mxu0
        %v2199 = vadd.f32 %v1975, %v2198
        %v2200 = vpop.f32.mrf.mxu0
        %2201 = vdwg.mxu0
        %vm2202 = vcmp.gt.f32.partialorder %v2124, 20.0
        %vm2203 = vcmp.gt.f32.partialorder %v2129, 20.0
        %vm2204 = vcmp.gt.f32.partialorder %v2134, 20.0
        %vm2205 = vcmp.gt.f32.partialorder %v2139, 20.0
        %vm2206 = vcmp.gt.f32.partialorder %v2144, 20.0
        %vm2207 = vcmp.gt.f32.partialorder %v2149, 20.0
        %vm2208 = vcmp.gt.f32.partialorder %v2154, 20.0
        %vm2209 = vcmp.gt.f32.partialorder %v2159, 20.0
        %vm2210 = vcmp.gt.f32.partialorder %v2164, 20.0
        %vm2211 = vcmp.gt.f32.partialorder %v2169, 20.0
        %vm2212 = vcmp.gt.f32.partialorder %v2174, 20.0
        %vm2213 = vcmp.gt.f32.partialorder %v2179, 20.0
        %vm2214 = vcmp.gt.f32.partialorder %v2184, 20.0
        %vm2215 = vcmp.gt.f32.partialorder %v2189, 20.0
        %vm2216 = vcmp.gt.f32.partialorder %v2194, 20.0
        %vm2217 = vcmp.gt.f32.partialorder %v2199, 20.0
        %v2218 = vmul.f32 %v2124, 1.442695
        %v2219 = vpow.pop %v2218
        %v2220 = vmul.f32 %v2129, 1.442695
        %v2221 = vpow.pop %v2220
        %v2222 = vmul.f32 %v2134, 1.442695
        %v2223 = vpow.pop %v2222
        %v2224 = vmul.f32 %v2139, 1.442695
        %v2225 = vpow.pop %v2224
        %v2226 = vmul.f32 %v2144, 1.442695
        %v2227 = vpow.pop %v2226
        %v2228 = vmul.f32 %v2149, 1.442695
        %v2229 = vpow.pop %v2228
        %v2230 = vmul.f32 %v2154, 1.442695
        %v2231 = vpow.pop %v2230
        %v2232 = vmul.f32 %v2159, 1.442695
        %v2233 = vpow.pop %v2232
        %v2234 = vmul.f32 %v2164, 1.442695
        %v2235 = vpow.pop %v2234
        %v2236 = vmul.f32 %v2169, 1.442695
        %v2237 = vpow.pop %v2236
        %v2238 = vmul.f32 %v2174, 1.442695
        %v2239 = vpow.pop %v2238
        %v2240 = vmul.f32 %v2179, 1.442695
        %v2241 = vpow.pop %v2240
        %v2242 = vmul.f32 %v2184, 1.442695
        %v2243 = vpow.pop %v2242
        %v2244 = vmul.f32 %v2189, 1.442695
        %v2245 = vpow.pop %v2244
        %v2246 = vmul.f32 %v2194, 1.442695
        %v2247 = vpow.pop %v2246
        %v2248 = vmul.f32 %v2199, 1.442695
        %v2249 = vpow.pop %v2248
        %v2250 = vadd.f32 %v2219, 1.0
        %v2251 = vlog2.pop %v2250
        %v2252 = vmul.f32 %v2251, 0.6931472
        %v2253 = vmul.f32 -0.5, %v2219
        %v2254 = vadd.f32 %v2253, 1.0
        %v2255 = vmul.f32 %v2254, %v2219
        %v2256 = vand.u32 2147483647, %v2219
        %vm2257 = vcmp.lt.f32.partialorder %v2256, 0.0004427343
        %v2258 = vsel %vm2257, %v2255, %v2252
        %v2259 = vadd.f32 %v2221, 1.0
        %v2260 = vlog2.pop %v2259
        %v2261 = vmul.f32 %v2260, 0.6931472
        %v2262 = vmul.f32 -0.5, %v2221
        %v2263 = vadd.f32 %v2262, 1.0
        %v2264 = vmul.f32 %v2263, %v2221
        %v2265 = vand.u32 2147483647, %v2221
        %vm2266 = vcmp.lt.f32.partialorder %v2265, 0.0004427343
        %v2267 = vsel %vm2266, %v2264, %v2261
        %v2268 = vadd.f32 %v2223, 1.0
        %v2269 = vlog2.pop %v2268
        %v2270 = vmul.f32 %v2269, 0.6931472
        %v2271 = vmul.f32 -0.5, %v2223
        %v2272 = vadd.f32 %v2271, 1.0
        %v2273 = vmul.f32 %v2272, %v2223
        %v2274 = vand.u32 2147483647, %v2223
        %vm2275 = vcmp.lt.f32.partialorder %v2274, 0.0004427343
        %v2276 = vsel %vm2275, %v2273, %v2270
        %v2277 = vadd.f32 %v2225, 1.0
        %v2278 = vlog2.pop %v2277
        %v2279 = vmul.f32 %v2278, 0.6931472
        %v2280 = vmul.f32 -0.5, %v2225
        %v2281 = vadd.f32 %v2280, 1.0
        %v2282 = vmul.f32 %v2281, %v2225
        %v2283 = vand.u32 2147483647, %v2225
        %vm2284 = vcmp.lt.f32.partialorder %v2283, 0.0004427343
        %v2285 = vsel %vm2284, %v2282, %v2279
        %v2286 = vadd.f32 %v2227, 1.0
        %v2287 = vlog2.pop %v2286
        %v2288 = vmul.f32 %v2287, 0.6931472
        %v2289 = vmul.f32 -0.5, %v2227
        %v2290 = vadd.f32 %v2289, 1.0
        %v2291 = vmul.f32 %v2290, %v2227
        %v2292 = vand.u32 2147483647, %v2227
        %vm2293 = vcmp.lt.f32.partialorder %v2292, 0.0004427343
        %v2294 = vsel %vm2293, %v2291, %v2288
        %v2295 = vadd.f32 %v2229, 1.0
        %v2296 = vlog2.pop %v2295
        %v2297 = vmul.f32 %v2296, 0.6931472
        %v2298 = vmul.f32 -0.5, %v2229
        %v2299 = vadd.f32 %v2298, 1.0
        %v2300 = vmul.f32 %v2299, %v2229
        %v2301 = vand.u32 2147483647, %v2229
        %vm2302 = vcmp.lt.f32.partialorder %v2301, 0.0004427343
        %v2303 = vsel %vm2302, %v2300, %v2297
        %v2304 = vadd.f32 %v2231, 1.0
        %v2305 = vlog2.pop %v2304
        %v2306 = vmul.f32 %v2305, 0.6931472
        %v2307 = vmul.f32 -0.5, %v2231
        %v2308 = vadd.f32 %v2307, 1.0
        %v2309 = vmul.f32 %v2308, %v2231
        %v2310 = vand.u32 2147483647, %v2231
        %vm2311 = vcmp.lt.f32.partialorder %v2310, 0.0004427343
        %v2312 = vsel %vm2311, %v2309, %v2306
        %v2313 = vadd.f32 %v2233, 1.0
        %v2314 = vlog2.pop %v2313
        %v2315 = vmul.f32 %v2314, 0.6931472
        %v2316 = vmul.f32 -0.5, %v2233
        %v2317 = vadd.f32 %v2316, 1.0
        %v2318 = vmul.f32 %v2317, %v2233
        %v2319 = vand.u32 2147483647, %v2233
        %vm2320 = vcmp.lt.f32.partialorder %v2319, 0.0004427343
        %v2321 = vsel %vm2320, %v2318, %v2315
        %v2322 = vadd.f32 %v2235, 1.0
        %v2323 = vlog2.pop %v2322
        %v2324 = vmul.f32 %v2323, 0.6931472
        %v2325 = vmul.f32 -0.5, %v2235
        %v2326 = vadd.f32 %v2325, 1.0
        %v2327 = vmul.f32 %v2326, %v2235
        %v2328 = vand.u32 2147483647, %v2235
        %vm2329 = vcmp.lt.f32.partialorder %v2328, 0.0004427343
        %v2330 = vsel %vm2329, %v2327, %v2324
        %v2331 = vadd.f32 %v2237, 1.0
        %v2332 = vlog2.pop %v2331
        %v2333 = vmul.f32 %v2332, 0.6931472
        %v2334 = vmul.f32 -0.5, %v2237
        %v2335 = vadd.f32 %v2334, 1.0
        %v2336 = vmul.f32 %v2335, %v2237
        %v2337 = vand.u32 2147483647, %v2237
        %vm2338 = vcmp.lt.f32.partialorder %v2337, 0.0004427343
        %v2339 = vsel %vm2338, %v2336, %v2333
        %v2340 = vadd.f32 %v2239, 1.0
        %v2341 = vlog2.pop %v2340
        %v2342 = vmul.f32 %v2341, 0.6931472
        %v2343 = vmul.f32 -0.5, %v2239
        %v2344 = vadd.f32 %v2343, 1.0
        %v2345 = vmul.f32 %v2344, %v2239
        %v2346 = vand.u32 2147483647, %v2239
        %vm2347 = vcmp.lt.f32.partialorder %v2346, 0.0004427343
        %v2348 = vsel %vm2347, %v2345, %v2342
        %v2349 = vadd.f32 %v2241, 1.0
        %v2350 = vlog2.pop %v2349
        %v2351 = vmul.f32 %v2350, 0.6931472
        %v2352 = vmul.f32 -0.5, %v2241
        %v2353 = vadd.f32 %v2352, 1.0
        %v2354 = vmul.f32 %v2353, %v2241
        %v2355 = vand.u32 2147483647, %v2241
        %vm2356 = vcmp.lt.f32.partialorder %v2355, 0.0004427343
        %v2357 = vsel %vm2356, %v2354, %v2351
        %v2358 = vadd.f32 %v2243, 1.0
        %v2359 = vlog2.pop %v2358
        %v2360 = vmul.f32 %v2359, 0.6931472
        %v2361 = vmul.f32 -0.5, %v2243
        %v2362 = vadd.f32 %v2361, 1.0
        %v2363 = vmul.f32 %v2362, %v2243
        %v2364 = vand.u32 2147483647, %v2243
        %vm2365 = vcmp.lt.f32.partialorder %v2364, 0.0004427343
        %v2366 = vsel %vm2365, %v2363, %v2360
        %v2367 = vadd.f32 %v2245, 1.0
        %v2368 = vlog2.pop %v2367
        %v2369 = vmul.f32 %v2368, 0.6931472
        %v2370 = vmul.f32 -0.5, %v2245
        %v2371 = vadd.f32 %v2370, 1.0
        %v2372 = vmul.f32 %v2371, %v2245
        %v2373 = vand.u32 2147483647, %v2245
        %vm2374 = vcmp.lt.f32.partialorder %v2373, 0.0004427343
        %v2375 = vsel %vm2374, %v2372, %v2369
        %v2376 = vadd.f32 %v2247, 1.0
        %v2377 = vlog2.pop %v2376
        %v2378 = vmul.f32 %v2377, 0.6931472
        %v2379 = vmul.f32 -0.5, %v2247
        %v2380 = vadd.f32 %v2379, 1.0
        %v2381 = vmul.f32 %v2380, %v2247
        %v2382 = vand.u32 2147483647, %v2247
        %vm2383 = vcmp.lt.f32.partialorder %v2382, 0.0004427343
        %v2384 = vsel %vm2383, %v2381, %v2378
        %v2385 = vadd.f32 %v2249, 1.0
        %v2386 = vlog2.pop %v2385
        %v2387 = vmul.f32 %v2386, 0.6931472
        %v2388 = vmul.f32 -0.5, %v2249
        %v2389 = vadd.f32 %v2388, 1.0
        %v2390 = vmul.f32 %v2389, %v2249
        %v2391 = vand.u32 2147483647, %v2249
        %vm2392 = vcmp.lt.f32.partialorder %v2391, 0.0004427343
        %v2393 = vsel %vm2392, %v2390, %v2387
        %v2394 = vsel %vm2202, %v2124, %v2258
        %v2395 = vsel %vm2203, %v2129, %v2267
        %v2396 = vsel %vm2204, %v2134, %v2276
        %v2397 = vsel %vm2205, %v2139, %v2285
        %v2398 = vsel %vm2206, %v2144, %v2294
        %v2399 = vsel %vm2207, %v2149, %v2303
        %v2400 = vsel %vm2208, %v2154, %v2312
        %v2401 = vsel %vm2209, %v2159, %v2321
        %v2402 = vsel %vm2210, %v2164, %v2330
        %v2403 = vsel %vm2211, %v2169, %v2339
        %v2404 = vsel %vm2212, %v2174, %v2348
        %v2405 = vsel %vm2213, %v2179, %v2357
        %v2406 = vsel %vm2214, %v2184, %v2366
        %v2407 = vsel %vm2215, %v2189, %v2375
        %v2408 = vsel %vm2216, %v2194, %v2384
        %v2409 = vsel %vm2217, %v2199, %v2393
        %v2410 = vld [vmem:[%s8] sm:$0x1]
        %v2412 = vlaneseq
        %v2413 = vshrl.u32 %v2412, 7
        %v2414 = vsub.s32 0, %v2413
        %v2415 = vrot.slane %v2410, %v2414
        %v2417 = vmul.f32 %v2394, %v2415
        %v2418 = vmul.f32 %v2395, %v2415
        %v2419 = vmul.f32 %v2396, %v2415
        %v2420 = vmul.f32 %v2397, %v2415
        %v2421 = vmul.f32 %v2398, %v2415
        %v2422 = vmul.f32 %v2399, %v2415
        %v2423 = vmul.f32 %v2400, %v2415
        %v2424 = vmul.f32 %v2401, %v2415
        %v2425 = vmul.f32 %v2402, %v2415
        %v2426 = vmul.f32 %v2403, %v2415
        %v2427 = vmul.f32 %v2404, %v2415
        %v2428 = vmul.f32 %v2405, %v2415
        %v2429 = vmul.f32 %v2406, %v2415
        %v2430 = vmul.f32 %v2407, %v2415
        %v2431 = vmul.f32 %v2408, %v2415
        %v2432 = vmul.f32 %v2409, %v2415
        %v2433 = vlaneseq
        %v2434 = vshrl.u32 %v2433, 7
        %v2435 = vadd.s32 %v2434, 8
        %v2436 = vadd.s32 %v2434, 16
        %v2437 = vadd.s32 %v2434, 24
        %v2438 = vadd.s32 %v2434, 32
        %v2439 = vadd.s32 %v2434, 40
        %v2440 = vadd.s32 %v2434, 48
        %v2441 = vadd.s32 %v2434, 56
        %v2442 = vadd.s32 %v2434, 64
        %v2443 = vadd.s32 %v2434, 72
        %v2444 = vadd.s32 %v2434, 80
        %v2445 = vadd.s32 %v2434, 88
        %v2446 = vadd.s32 %v2434, 96
        %v2447 = vadd.s32 %v2434, 104
        %v2448 = vadd.s32 %v2434, 112
        %v2449 = vadd.s32 %v2434, 120
        %v2450 = vlaneseq
        %v2451 = vand.u32 %v2450, 127
        %vm2452 = vcmp.ge.s32.totalorder %v2434, %v2451
        %vm2453 = vcmp.ge.s32.totalorder %v2435, %v2451
        %vm2454 = vcmp.ge.s32.totalorder %v2436, %v2451
        %vm2455 = vcmp.ge.s32.totalorder %v2437, %v2451
        %vm2456 = vcmp.ge.s32.totalorder %v2438, %v2451
        %vm2457 = vcmp.ge.s32.totalorder %v2439, %v2451
        %vm2458 = vcmp.ge.s32.totalorder %v2440, %v2451
        %vm2459 = vcmp.ge.s32.totalorder %v2441, %v2451
        %vm2460 = vcmp.ge.s32.totalorder %v2442, %v2451
        %vm2461 = vcmp.ge.s32.totalorder %v2443, %v2451
        %vm2462 = vcmp.ge.s32.totalorder %v2444, %v2451
        %vm2463 = vcmp.ge.s32.totalorder %v2445, %v2451
        %vm2464 = vcmp.ge.s32.totalorder %v2446, %v2451
        %vm2465 = vcmp.ge.s32.totalorder %v2447, %v2451
        %vm2466 = vcmp.ge.s32.totalorder %v2448, %v2451
        %vm2467 = vcmp.ge.s32.totalorder %v2449, %v2451
        %v2468 = vsel %vm2452, 1, 0
        %v2469 = vsel %vm2453, 1, 0
        %v2470 = vsel %vm2454, 1, 0
        %v2471 = vsel %vm2455, 1, 0
        %v2472 = vsel %vm2456, 1, 0
        %v2473 = vsel %vm2457, 1, 0
        %v2474 = vsel %vm2458, 1, 0
        %v2475 = vsel %vm2459, 1, 0
        %v2476 = vsel %vm2460, 1, 0
        %v2477 = vsel %vm2461, 1, 0
        %v2478 = vsel %vm2462, 1, 0
        %v2479 = vsel %vm2463, 1, 0
        %v2480 = vsel %vm2464, 1, 0
        %v2481 = vsel %vm2465, 1, 0
        %v2482 = vsel %vm2466, 1, 0
        %v2483 = vsel %vm2467, 1, 0
        %v2484 = vcvt.s32.f32 %v2468
        %v2485 = vcvt.s32.f32 %v2469
        %v2486 = vcvt.s32.f32 %v2470
        %v2487 = vcvt.s32.f32 %v2471
        %v2488 = vcvt.s32.f32 %v2472
        %v2489 = vcvt.s32.f32 %v2473
        %v2490 = vcvt.s32.f32 %v2474
        %v2491 = vcvt.s32.f32 %v2475
        %v2492 = vcvt.s32.f32 %v2476
        %v2493 = vcvt.s32.f32 %v2477
        %v2494 = vcvt.s32.f32 %v2478
        %v2495 = vcvt.s32.f32 %v2479
        %v2496 = vcvt.s32.f32 %v2480
        %v2497 = vcvt.s32.f32 %v2481
        %v2498 = vcvt.s32.f32 %v2482
        %v2499 = vcvt.s32.f32 %v2483
        %2500 = vmatprep.subr.mxu0 0.0
        %2501 = vmatpush1.msra.mxu0 %v2432
        %2502 = vmatprep.subr.mxu0 0.0
        %2503 = vmatpush1.msra.mxu0 %v2431
        %2504 = vmatprep.subr.mxu0 0.0
        %2505 = vmatpush1.msra.mxu0 %v2430
        %2506 = vmatprep.subr.mxu0 0.0
        %2507 = vmatpush1.msra.mxu0 %v2429
        %2508 = vmatprep.subr.mxu0 0.0
        %2509 = vmatpush1.msra.mxu0 %v2428
        %2510 = vmatprep.subr.mxu0 0.0
        %2511 = vmatpush1.msra.mxu0 %v2427
        %2512 = vmatprep.subr.mxu0 0.0
        %2513 = vmatpush1.msra.mxu0 %v2426
        %2514 = vmatprep.subr.mxu0 0.0
        %2515 = vmatpush1.msra.mxu0 %v2425
        %2516 = vmatprep.subr.mxu0 0.0
        %2517 = vmatpush1.msra.mxu0 %v2424
        %2518 = vmatprep.subr.mxu0 0.0
        %2519 = vmatpush1.msra.mxu0 %v2423
        %2520 = vmatprep.subr.mxu0 0.0
        %2521 = vmatpush1.msra.mxu0 %v2422
        %2522 = vmatprep.subr.mxu0 0.0
        %2523 = vmatpush1.msra.mxu0 %v2421
        %2524 = vmatprep.subr.mxu0 0.0
        %2525 = vmatpush1.msra.mxu0 %v2420
        %2526 = vmatprep.subr.mxu0 0.0
        %2527 = vmatpush1.msra.mxu0 %v2419
        %2528 = vmatprep.subr.mxu0 0.0
        %2529 = vmatpush1.msra.mxu0 %v2418
        %2530 = vmatprep.subr.mxu0 0.0
        %2531 = vmatpush1.msra.mxu0 %v2417
        %2532 = vmatprep.subr.mxu0 0.0
        %2533 = vmatpush2.msra.mxu0 0.0
        %2534 = vmatprep.subr.mxu0 0.0
        %2535 = vmatpush2.msra.mxu0 0.0
        %2536 = vmatprep.subr.mxu0 0.0
        %2537 = vmatpush2.msra.mxu0 0.0
        %2538 = vmatprep.subr.mxu0 0.0
        %2539 = vmatpush2.msra.mxu0 0.0
        %2540 = vmatprep.subr.mxu0 0.0
        %2541 = vmatpush2.msra.mxu0 0.0
        %2542 = vmatprep.subr.mxu0 0.0
        %2543 = vmatpush2.msra.mxu0 0.0
        %2544 = vmatprep.subr.mxu0 0.0
        %2545 = vmatpush2.msra.mxu0 0.0
        %2546 = vmatprep.subr.mxu0 0.0
        %2547 = vmatpush2.msra.mxu0 0.0
        %2548 = vmatprep.subr.mxu0 0.0
        %2549 = vmatpush2.msra.mxu0 0.0
        %2550 = vmatprep.subr.mxu0 0.0
        %2551 = vmatpush2.msra.mxu0 0.0
        %2552 = vmatprep.subr.mxu0 0.0
        %2553 = vmatpush2.msra.mxu0 0.0
        %2554 = vmatprep.subr.mxu0 0.0
        %2555 = vmatpush2.msra.mxu0 0.0
        %2556 = vmatprep.subr.mxu0 0.0
        %2557 = vmatpush2.msra.mxu0 0.0
        %2558 = vmatprep.subr.mxu0 0.0
        %2559 = vmatpush2.msra.mxu0 0.0
        %2560 = vmatprep.subr.mxu0 0.0
        %2561 = vmatpush2.msra.mxu0 0.0
        %2562 = vmatprep.subr.mxu0 0.0
        %2563 = vmatpush2.msra.mxu0 0.0
        %2564 = vmatprep.mubr.f32.mxu0 0.0
        %2565 = vmatmul.mubr.f32.gmra.mxu0 %v2484
        %v2566 = vpop.f32.mrf.mxu0
        %v2567 = vadd.f32 0.0, %v2566
        %v2568 = vpop.f32.mrf.mxu0
        %2569 = vmatprep.mubr.f32.mxu0 0.0
        %2570 = vmatmul.mubr.f32.gmra.mxu0 %v2485
        %v2571 = vpop.f32.mrf.mxu0
        %v2572 = vadd.f32 0.0, %v2571
        %v2573 = vpop.f32.mrf.mxu0
        %2574 = vmatprep.mubr.f32.mxu0 0.0
        %2575 = vmatmul.mubr.f32.gmra.mxu0 %v2486
        %v2576 = vpop.f32.mrf.mxu0
        %v2577 = vadd.f32 0.0, %v2576
        %v2578 = vpop.f32.mrf.mxu0
        %2579 = vmatprep.mubr.f32.mxu0 0.0
        %2580 = vmatmul.mubr.f32.gmra.mxu0 %v2487
        %v2581 = vpop.f32.mrf.mxu0
        %v2582 = vadd.f32 0.0, %v2581
        %v2583 = vpop.f32.mrf.mxu0
        %2584 = vmatprep.mubr.f32.mxu0 0.0
        %2585 = vmatmul.mubr.f32.gmra.mxu0 %v2488
        %v2586 = vpop.f32.mrf.mxu0
        %v2587 = vadd.f32 0.0, %v2586
        %v2588 = vpop.f32.mrf.mxu0
        %2589 = vmatprep.mubr.f32.mxu0 0.0
        %2590 = vmatmul.mubr.f32.gmra.mxu0 %v2489
        %v2591 = vpop.f32.mrf.mxu0
        %v2592 = vadd.f32 0.0, %v2591
        %v2593 = vpop.f32.mrf.mxu0
        %2594 = vmatprep.mubr.f32.mxu0 0.0
        %2595 = vmatmul.mubr.f32.gmra.mxu0 %v2490
        %v2596 = vpop.f32.mrf.mxu0
        %v2597 = vadd.f32 0.0, %v2596
        %v2598 = vpop.f32.mrf.mxu0
        %2599 = vmatprep.mubr.f32.mxu0 0.0
        %2600 = vmatmul.mubr.f32.gmra.mxu0 %v2491
        %v2601 = vpop.f32.mrf.mxu0
        %v2602 = vadd.f32 0.0, %v2601
        %v2603 = vpop.f32.mrf.mxu0
        %2604 = vmatprep.mubr.f32.mxu0 0.0
        %2605 = vmatmul.mubr.f32.gmra.mxu0 %v2492
        %v2606 = vpop.f32.mrf.mxu0
        %v2607 = vadd.f32 0.0, %v2606
        %v2608 = vpop.f32.mrf.mxu0
        %2609 = vmatprep.mubr.f32.mxu0 0.0
        %2610 = vmatmul.mubr.f32.gmra.mxu0 %v2493
        %v2611 = vpop.f32.mrf.mxu0
        %v2612 = vadd.f32 0.0, %v2611
        %v2613 = vpop.f32.mrf.mxu0
        %2614 = vmatprep.mubr.f32.mxu0 0.0
        %2615 = vmatmul.mubr.f32.gmra.mxu0 %v2494
        %v2616 = vpop.f32.mrf.mxu0
        %v2617 = vadd.f32 0.0, %v2616
        %v2618 = vpop.f32.mrf.mxu0
        %2619 = vmatprep.mubr.f32.mxu0 0.0
        %2620 = vmatmul.mubr.f32.gmra.mxu0 %v2495
        %v2621 = vpop.f32.mrf.mxu0
        %v2622 = vadd.f32 0.0, %v2621
        %v2623 = vpop.f32.mrf.mxu0
        %2624 = vmatprep.mubr.f32.mxu0 0.0
        %2625 = vmatmul.mubr.f32.gmra.mxu0 %v2496
        %v2626 = vpop.f32.mrf.mxu0
        %v2627 = vadd.f32 0.0, %v2626
        %v2628 = vpop.f32.mrf.mxu0
        %2629 = vmatprep.mubr.f32.mxu0 0.0
        %2630 = vmatmul.mubr.f32.gmra.mxu0 %v2497
        %v2631 = vpop.f32.mrf.mxu0
        %v2632 = vadd.f32 0.0, %v2631
        %v2633 = vpop.f32.mrf.mxu0
        %2634 = vmatprep.mubr.f32.mxu0 0.0
        %2635 = vmatmul.mubr.f32.gmra.mxu0 %v2498
        %v2636 = vpop.f32.mrf.mxu0
        %v2637 = vadd.f32 0.0, %v2636
        %v2638 = vpop.f32.mrf.mxu0
        %2639 = vmatprep.mubr.f32.mxu0 0.0
        %2640 = vmatmul.mubr.f32.gmra.mxu0 %v2499
        %v2641 = vpop.f32.mrf.mxu0
        %v2642 = vadd.f32 0.0, %v2641
        %v2643 = vpop.f32.mrf.mxu0
        %2644 = vdwg.mxu0
        %2645 = vxpose.xlu0.b32.start [1/16] %v2567, 128
        %2646 = vxpose.xlu0.b32.cont [2/16] %v2572, 128
        %2647 = vxpose.xlu0.b32.cont [3/16] %v2577, 128
        %2648 = vxpose.xlu0.b32.cont [4/16] %v2582, 128
        %2649 = vxpose.xlu0.b32.cont [5/16] %v2587, 128
        %2650 = vxpose.xlu0.b32.cont [6/16] %v2592, 128
        %2651 = vxpose.xlu0.b32.cont [7/16] %v2597, 128
        %2652 = vxpose.xlu0.b32.cont [8/16] %v2602, 128
        %2653 = vxpose.xlu0.b32.cont [9/16] %v2607, 128
        %2654 = vxpose.xlu0.b32.cont [10/16] %v2612, 128
        %2655 = vxpose.xlu0.b32.cont [11/16] %v2617, 128
        %2656 = vxpose.xlu0.b32.cont [12/16] %v2622, 128
        %2657 = vxpose.xlu0.b32.cont [13/16] %v2627, 128
        %2658 = vxpose.xlu0.b32.cont [14/16] %v2632, 128
        %2659 = vxpose.xlu0.b32.cont [15/16] %v2637, 128
        %2660 = vxpose.xlu0.b32.end [16/16] %v2642, 128
        %v2661 = vpop.trf.xlu0
        %v2662 = vpop.trf.xlu0
        %v2663 = vpop.trf.xlu0
        %v2664 = vpop.trf.xlu0
        %v2665 = vpop.trf.xlu0
        %v2666 = vpop.trf.xlu0
        %v2667 = vpop.trf.xlu0
        %v2668 = vpop.trf.xlu0
        %v2669 = vpop.trf.xlu0
        %v2670 = vpop.trf.xlu0
        %v2671 = vpop.trf.xlu0
        %v2672 = vpop.trf.xlu0
        %v2673 = vpop.trf.xlu0
        %v2674 = vpop.trf.xlu0
        %v2675 = vpop.trf.xlu0
        %v2676 = vpop.trf.xlu0
        %2677 = vxpose.xlu0.b32.start [1/16] %v2394, 128
        %2678 = vxpose.xlu0.b32.cont [2/16] %v2395, 128
        %2679 = vxpose.xlu0.b32.cont [3/16] %v2396, 128
        %2680 = vxpose.xlu0.b32.cont [4/16] %v2397, 128
        %2681 = vxpose.xlu0.b32.cont [5/16] %v2398, 128
        %2682 = vxpose.xlu0.b32.cont [6/16] %v2399, 128
        %2683 = vxpose.xlu0.b32.cont [7/16] %v2400, 128
        %2684 = vxpose.xlu0.b32.cont [8/16] %v2401, 128
        %2685 = vxpose.xlu0.b32.cont [9/16] %v2402, 128
        %2686 = vxpose.xlu0.b32.cont [10/16] %v2403, 128
        %2687 = vxpose.xlu0.b32.cont [11/16] %v2404, 128
        %2688 = vxpose.xlu0.b32.cont [12/16] %v2405, 128
        %2689 = vxpose.xlu0.b32.cont [13/16] %v2406, 128
        %2690 = vxpose.xlu0.b32.cont [14/16] %v2407, 128
        %2691 = vxpose.xlu0.b32.cont [15/16] %v2408, 128
        %2692 = vxpose.xlu0.b32.end [16/16] %v2409, 128
        %v2693 = vpop.trf.xlu0
        %v2694 = vpop.trf.xlu0
        %v2695 = vpop.trf.xlu0
        %v2696 = vpop.trf.xlu0
        %v2697 = vpop.trf.xlu0
        %v2698 = vpop.trf.xlu0
        %v2699 = vpop.trf.xlu0
        %v2700 = vpop.trf.xlu0
        %v2701 = vpop.trf.xlu0
        %v2702 = vpop.trf.xlu0
        %v2703 = vpop.trf.xlu0
        %v2704 = vpop.trf.xlu0
        %v2705 = vpop.trf.xlu0
        %v2706 = vpop.trf.xlu0
        %v2707 = vpop.trf.xlu0
        %v2708 = vpop.trf.xlu0
        %2709 = vxpose.xlu0.b32.start [1/16] %v1583, 128
        %2710 = vxpose.xlu0.b32.cont [2/16] %v1584, 128
        %2711 = vxpose.xlu0.b32.cont [3/16] %v1585, 128
        %2712 = vxpose.xlu0.b32.cont [4/16] %v1586, 128
        %2713 = vxpose.xlu0.b32.cont [5/16] %v1587, 128
        %2714 = vxpose.xlu0.b32.cont [6/16] %v1588, 128
        %2715 = vxpose.xlu0.b32.cont [7/16] %v1589, 128
        %2716 = vxpose.xlu0.b32.cont [8/16] %v1590, 128
        %2717 = vxpose.xlu0.b32.cont [9/16] %v1591, 128
        %2718 = vxpose.xlu0.b32.cont [10/16] %v1592, 128
        %2719 = vxpose.xlu0.b32.cont [11/16] %v1593, 128
        %2720 = vxpose.xlu0.b32.cont [12/16] %v1594, 128
        %2721 = vxpose.xlu0.b32.cont [13/16] %v1595, 128
        %2722 = vxpose.xlu0.b32.cont [14/16] %v1596, 128
        %2723 = vxpose.xlu0.b32.cont [15/16] %v1597, 128
        %2724 = vxpose.xlu0.b32.end [16/16] %v1598, 128
        %v2725 = vpop.trf.xlu0
        %v2726 = vpop.trf.xlu0
        %v2727 = vpop.trf.xlu0
        %v2728 = vpop.trf.xlu0
        %v2729 = vpop.trf.xlu0
        %v2730 = vpop.trf.xlu0
        %v2731 = vpop.trf.xlu0
        %v2732 = vpop.trf.xlu0
        %v2733 = vpop.trf.xlu0
        %v2734 = vpop.trf.xlu0
        %v2735 = vpop.trf.xlu0
        %v2736 = vpop.trf.xlu0
        %v2737 = vpop.trf.xlu0
        %v2738 = vpop.trf.xlu0
        %v2739 = vpop.trf.xlu0
        %v2740 = vpop.trf.xlu0
        %2757 = vrot.lane.b32.xlu0 %v1784, 112
        %v2758 = vpop.permute.xlu0 %2757
        %2759 = vrot.lane.b32.xlu0 %v1785, 112
        %v2760 = vpop.permute.xlu0 %2759
        %2761 = vrot.lane.b32.xlu0 %v1786, 112
        %v2762 = vpop.permute.xlu0 %2761
        %2763 = vrot.lane.b32.xlu0 %v1787, 112
        %v2764 = vpop.permute.xlu0 %2763
        %2765 = vrot.lane.b32.xlu0 %v1788, 112
        %v2766 = vpop.permute.xlu0 %2765
        %2767 = vrot.lane.b32.xlu0 %v1789, 112
        %v2768 = vpop.permute.xlu0 %2767
        %2769 = vrot.lane.b32.xlu0 %v1790, 112
        %v2770 = vpop.permute.xlu0 %2769
        %2771 = vrot.lane.b32.xlu0 %v1791, 112
        %v2772 = vpop.permute.xlu0 %2771
        %2773 = vrot.lane.b32.xlu0 %v1792, 112
        %v2774 = vpop.permute.xlu0 %2773
        %2775 = vrot.lane.b32.xlu0 %v1793, 112
        %v2776 = vpop.permute.xlu0 %2775
        %2777 = vrot.lane.b32.xlu0 %v1794, 112
        %v2778 = vpop.permute.xlu0 %2777
        %2779 = vrot.lane.b32.xlu0 %v1795, 112
        %v2780 = vpop.permute.xlu0 %2779
        %2781 = vrot.lane.b32.xlu0 %v1796, 112
        %v2782 = vpop.permute.xlu0 %2781
        %2783 = vrot.lane.b32.xlu0 %v1797, 112
        %v2784 = vpop.permute.xlu0 %2783
        %2785 = vrot.lane.b32.xlu0 %v1798, 112
        %v2786 = vpop.permute.xlu0 %2785
        %2787 = vrot.lane.b32.xlu0 %v1799, 112
        %v2788 = vpop.permute.xlu0 %2787
        %v2789 = vsel %vm1463, %v2758, 0
        %v2791 = vsel %vm1463, %v2760, 0
        %v2793 = vsel %vm1463, %v2762, 0
        %v2795 = vsel %vm1463, %v2764, 0
        %v2797 = vsel %vm1463, %v2766, 0
        %v2799 = vsel %vm1463, %v2768, 0
        %v2801 = vsel %vm1463, %v2770, 0
        %v2803 = vsel %vm1463, %v2772, 0
        %v2805 = vsel %vm1463, %v2774, 0
        %v2807 = vsel %vm1463, %v2776, 0
        %v2809 = vsel %vm1463, %v2778, 0
        %v2811 = vsel %vm1463, %v2780, 0
        %v2813 = vsel %vm1463, %v2782, 0
        %v2815 = vsel %vm1463, %v2784, 0
        %v2817 = vsel %vm1463, %v2786, 0
        %v2819 = vsel %vm1463, %v2788, 0
        %2821 = vmatprep.subr.mxu0 0.0
        %2822 = vmatpush1.msra.mxu0 0.0
        %2823 = vmatprep.subr.mxu0 0.0
        %2824 = vmatpush1.msra.mxu0 0.0
        %2825 = vmatprep.subr.mxu0 0.0
        %2826 = vmatpush1.msra.mxu0 0.0
        %2827 = vmatprep.subr.mxu0 0.0
        %2828 = vmatpush1.msra.mxu0 0.0
        %2829 = vmatprep.subr.mxu0 0.0
        %2830 = vmatpush1.msra.mxu0 0.0
        %2831 = vmatprep.subr.mxu0 0.0
        %2832 = vmatpush1.msra.mxu0 0.0
        %2833 = vmatprep.subr.mxu0 0.0
        %2834 = vmatpush1.msra.mxu0 0.0
        %2835 = vmatprep.subr.mxu0 0.0
        %2836 = vmatpush1.msra.mxu0 0.0
        %2837 = vmatprep.subr.mxu0 0.0
        %2838 = vmatpush1.msra.mxu0 0.0
        %2839 = vmatprep.subr.mxu0 0.0
        %2840 = vmatpush1.msra.mxu0 0.0
        %2841 = vmatprep.subr.mxu0 0.0
        %2842 = vmatpush1.msra.mxu0 0.0
        %2843 = vmatprep.subr.mxu0 0.0
        %2844 = vmatpush1.msra.mxu0 0.0
        %2845 = vmatprep.subr.mxu0 0.0
        %2846 = vmatpush1.msra.mxu0 0.0
        %2847 = vmatprep.subr.mxu0 0.0
        %2848 = vmatpush1.msra.mxu0 0.0
        %2849 = vmatprep.subr.mxu0 0.0
        %2850 = vmatpush1.msra.mxu0 %v2726
        %2851 = vmatprep.subr.mxu0 0.0
        %2852 = vmatpush1.msra.mxu0 %v2725
        %2853 = vmatprep.subr.mxu0 0.0
        %2854 = vmatpush2.msra.mxu0 0.0
        %2855 = vmatprep.subr.mxu0 0.0
        %2856 = vmatpush2.msra.mxu0 0.0
        %2857 = vmatprep.subr.mxu0 0.0
        %2858 = vmatpush2.msra.mxu0 0.0
        %2859 = vmatprep.subr.mxu0 0.0
        %2860 = vmatpush2.msra.mxu0 0.0
        %2861 = vmatprep.subr.mxu0 0.0
        %2862 = vmatpush2.msra.mxu0 0.0
        %2863 = vmatprep.subr.mxu0 0.0
        %2864 = vmatpush2.msra.mxu0 0.0
        %2865 = vmatprep.subr.mxu0 0.0
        %2866 = vmatpush2.msra.mxu0 0.0
        %2867 = vmatprep.subr.mxu0 0.0
        %2868 = vmatpush2.msra.mxu0 0.0
        %2869 = vmatprep.subr.mxu0 0.0
        %2870 = vmatpush2.msra.mxu0 0.0
        %2871 = vmatprep.subr.mxu0 0.0
        %2872 = vmatpush2.msra.mxu0 0.0
        %2873 = vmatprep.subr.mxu0 0.0
        %2874 = vmatpush2.msra.mxu0 0.0
        %2875 = vmatprep.subr.mxu0 0.0
        %2876 = vmatpush2.msra.mxu0 0.0
        %2877 = vmatprep.subr.mxu0 0.0
        %2878 = vmatpush2.msra.mxu0 0.0
        %2879 = vmatprep.subr.mxu0 0.0
        %2880 = vmatpush2.msra.mxu0 0.0
        %2881 = vmatprep.subr.mxu0 0.0
        %2882 = vmatpush2.msra.mxu0 0.0
        %2883 = vmatprep.subr.mxu0 0.0
        %2884 = vmatpush2.msra.mxu0 0.0
        %2885 = vmatprep.mubr.f32.mxu0 0.0
        %2886 = vmatmul.mubr.f32.gmra.mxu0 %v2789
        %v2887 = vpop.f32.mrf.mxu0
        %v2888 = vadd.f32 0.0, %v2887
        %v2889 = vpop.f32.mrf.mxu0
        %2890 = vmatprep.mubr.f32.mxu0 0.0
        %2891 = vmatmul.mubr.f32.gmra.mxu0 %v2791
        %v2892 = vpop.f32.mrf.mxu0
        %v2893 = vadd.f32 0.0, %v2892
        %v2894 = vpop.f32.mrf.mxu0
        %2895 = vmatprep.mubr.f32.mxu0 0.0
        %2896 = vmatmul.mubr.f32.gmra.mxu0 %v2793
        %v2897 = vpop.f32.mrf.mxu0
        %v2898 = vadd.f32 0.0, %v2897
        %v2899 = vpop.f32.mrf.mxu0
        %2900 = vmatprep.mubr.f32.mxu0 0.0
        %2901 = vmatmul.mubr.f32.gmra.mxu0 %v2795
        %v2902 = vpop.f32.mrf.mxu0
        %v2903 = vadd.f32 0.0, %v2902
        %v2904 = vpop.f32.mrf.mxu0
        %2905 = vmatprep.mubr.f32.mxu0 0.0
        %2906 = vmatmul.mubr.f32.gmra.mxu0 %v2797
        %v2907 = vpop.f32.mrf.mxu0
        %v2908 = vadd.f32 0.0, %v2907
        %v2909 = vpop.f32.mrf.mxu0
        %2910 = vmatprep.mubr.f32.mxu0 0.0
        %2911 = vmatmul.mubr.f32.gmra.mxu0 %v2799
        %v2912 = vpop.f32.mrf.mxu0
        %v2913 = vadd.f32 0.0, %v2912
        %v2914 = vpop.f32.mrf.mxu0
        %2915 = vmatprep.mubr.f32.mxu0 0.0
        %2916 = vmatmul.mubr.f32.gmra.mxu0 %v2801
        %v2917 = vpop.f32.mrf.mxu0
        %v2918 = vadd.f32 0.0, %v2917
        %v2919 = vpop.f32.mrf.mxu0
        %2920 = vmatprep.mubr.f32.mxu0 0.0
        %2921 = vmatmul.mubr.f32.gmra.mxu0 %v2803
        %v2922 = vpop.f32.mrf.mxu0
        %v2923 = vadd.f32 0.0, %v2922
        %v2924 = vpop.f32.mrf.mxu0
        %2925 = vmatprep.mubr.f32.mxu0 0.0
        %2926 = vmatmul.mubr.f32.gmra.mxu0 %v2805
        %v2927 = vpop.f32.mrf.mxu0
        %v2928 = vadd.f32 0.0, %v2927
        %v2929 = vpop.f32.mrf.mxu0
        %2930 = vmatprep.mubr.f32.mxu0 0.0
        %2931 = vmatmul.mubr.f32.gmra.mxu0 %v2807
        %v2932 = vpop.f32.mrf.mxu0
        %v2933 = vadd.f32 0.0, %v2932
        %v2934 = vpop.f32.mrf.mxu0
        %2935 = vmatprep.mubr.f32.mxu0 0.0
        %2936 = vmatmul.mubr.f32.gmra.mxu0 %v2809
        %v2937 = vpop.f32.mrf.mxu0
        %v2938 = vadd.f32 0.0, %v2937
        %v2939 = vpop.f32.mrf.mxu0
        %2940 = vmatprep.mubr.f32.mxu0 0.0
        %2941 = vmatmul.mubr.f32.gmra.mxu0 %v2811
        %v2942 = vpop.f32.mrf.mxu0
        %v2943 = vadd.f32 0.0, %v2942
        %v2944 = vpop.f32.mrf.mxu0
        %2945 = vmatprep.mubr.f32.mxu0 0.0
        %2946 = vmatmul.mubr.f32.gmra.mxu0 %v2813
        %v2947 = vpop.f32.mrf.mxu0
        %v2948 = vadd.f32 0.0, %v2947
        %v2949 = vpop.f32.mrf.mxu0
        %2950 = vmatprep.mubr.f32.mxu0 0.0
        %2951 = vmatmul.mubr.f32.gmra.mxu0 %v2815
        %v2952 = vpop.f32.mrf.mxu0
        %v2953 = vadd.f32 0.0, %v2952
        %v2954 = vpop.f32.mrf.mxu0
        %2955 = vmatprep.mubr.f32.mxu0 0.0
        %2956 = vmatmul.mubr.f32.gmra.mxu0 %v2817
        %v2957 = vpop.f32.mrf.mxu0
        %v2958 = vadd.f32 0.0, %v2957
        %v2959 = vpop.f32.mrf.mxu0
        %2960 = vmatprep.mubr.f32.mxu0 0.0
        %2961 = vmatmul.mubr.f32.gmra.mxu0 %v2819
        %v2962 = vpop.f32.mrf.mxu0
        %v2963 = vadd.f32 0.0, %v2962
        %v2964 = vpop.f32.mrf.mxu0
        %2965 = vdwg.mxu0
        %v2966 = vxor.u32 %v620, 2147483648
        %v2967 = vxor.u32 %v624, 2147483648
        %v2968 = vxor.u32 %v630, 2147483648
        %v2969 = vxor.u32 %v634, 2147483648
        %v2970 = vxor.u32 %v640, 2147483648
        %v2971 = vxor.u32 %v644, 2147483648
        %v2972 = vxor.u32 %v650, 2147483648
        %v2973 = vxor.u32 %v654, 2147483648
        %v2974 = vxor.u32 %v660, 2147483648
        %v2975 = vxor.u32 %v664, 2147483648
        %v2976 = vxor.u32 %v670, 2147483648
        %v2977 = vxor.u32 %v674, 2147483648
        %v2978 = vxor.u32 %v680, 2147483648
        %v2979 = vxor.u32 %v684, 2147483648
        %v2980 = vxor.u32 %v690, 2147483648
        %v2981 = vxor.u32 %v694, 2147483648
        %v2982 = vmul.f32 %v2966, 1.442695
        %v2983 = vpow.pop %v2982
        %v2984 = vmul.f32 %v2967, 1.442695
        %v2985 = vpow.pop %v2984
        %v2986 = vmul.f32 %v2968, 1.442695
        %v2987 = vpow.pop %v2986
        %v2988 = vmul.f32 %v2969, 1.442695
        %v2989 = vpow.pop %v2988
        %v2990 = vmul.f32 %v2970, 1.442695
        %v2991 = vpow.pop %v2990
        %v2992 = vmul.f32 %v2971, 1.442695
        %v2993 = vpow.pop %v2992
        %v2994 = vmul.f32 %v2972, 1.442695
        %v2995 = vpow.pop %v2994
        %v2996 = vmul.f32 %v2973, 1.442695
        %v2997 = vpow.pop %v2996
        %v2998 = vmul.f32 %v2974, 1.442695
        %v2999 = vpow.pop %v2998
        %v3000 = vmul.f32 %v2975, 1.442695
        %v3001 = vpow.pop %v3000
        %v3002 = vmul.f32 %v2976, 1.442695
        %v3003 = vpow.pop %v3002
        %v3004 = vmul.f32 %v2977, 1.442695
        %v3005 = vpow.pop %v3004
        %v3006 = vmul.f32 %v2978, 1.442695
        %v3007 = vpow.pop %v3006
        %v3008 = vmul.f32 %v2979, 1.442695
        %v3009 = vpow.pop %v3008
        %v3010 = vmul.f32 %v2980, 1.442695
        %v3011 = vpow.pop %v3010
        %v3012 = vmul.f32 %v2981, 1.442695
        %v3013 = vpow.pop %v3012
        %v3014 = vadd.f32 %v2983, 1.0
        %v3015 = vadd.f32 %v2985, 1.0
        %v3016 = vadd.f32 %v2987, 1.0
        %v3017 = vadd.f32 %v2989, 1.0
        %v3018 = vadd.f32 %v2991, 1.0
        %v3019 = vadd.f32 %v2993, 1.0
        %v3020 = vadd.f32 %v2995, 1.0
        %v3021 = vadd.f32 %v2997, 1.0
        %v3022 = vadd.f32 %v2999, 1.0
        %v3023 = vadd.f32 %v3001, 1.0
        %v3024 = vadd.f32 %v3003, 1.0
        %v3025 = vadd.f32 %v3005, 1.0
        %v3026 = vadd.f32 %v3007, 1.0
        %v3027 = vadd.f32 %v3009, 1.0
        %v3028 = vadd.f32 %v3011, 1.0
        %v3029 = vadd.f32 %v3013, 1.0
        %v3030 = vrcp.pop %v3014
        %v3031 = vmul.f32 1.0, %v3030
        %v3032 = vrcp.pop %v3015
        %v3033 = vmul.f32 1.0, %v3032
        %v3034 = vrcp.pop %v3016
        %v3035 = vmul.f32 1.0, %v3034
        %v3036 = vrcp.pop %v3017
        %v3037 = vmul.f32 1.0, %v3036
        %v3038 = vrcp.pop %v3018
        %v3039 = vmul.f32 1.0, %v3038
        %v3040 = vrcp.pop %v3019
        %v3041 = vmul.f32 1.0, %v3040
        %v3042 = vrcp.pop %v3020
        %v3043 = vmul.f32 1.0, %v3042
        %v3044 = vrcp.pop %v3021
        %v3045 = vmul.f32 1.0, %v3044
        %v3046 = vrcp.pop %v3022
        %v3047 = vmul.f32 1.0, %v3046
        %v3048 = vrcp.pop %v3023
        %v3049 = vmul.f32 1.0, %v3048
        %v3050 = vrcp.pop %v3024
        %v3051 = vmul.f32 1.0, %v3050
        %v3052 = vrcp.pop %v3025
        %v3053 = vmul.f32 1.0, %v3052
        %v3054 = vrcp.pop %v3026
        %v3055 = vmul.f32 1.0, %v3054
        %v3056 = vrcp.pop %v3027
        %v3057 = vmul.f32 1.0, %v3056
        %v3058 = vrcp.pop %v3028
        %v3059 = vmul.f32 1.0, %v3058
        %v3060 = vrcp.pop %v3029
        %v3061 = vmul.f32 1.0, %v3060
        %v3062 = vmul.f32 %v620, %v3031
        %v3063 = vmul.f32 %v624, %v3033
        %v3064 = vmul.f32 %v630, %v3035
        %v3065 = vmul.f32 %v634, %v3037
        %v3066 = vmul.f32 %v640, %v3039
        %v3067 = vmul.f32 %v644, %v3041
        %v3068 = vmul.f32 %v650, %v3043
        %v3069 = vmul.f32 %v654, %v3045
        %v3070 = vmul.f32 %v660, %v3047
        %v3071 = vmul.f32 %v664, %v3049
        %v3072 = vmul.f32 %v670, %v3051
        %v3073 = vmul.f32 %v674, %v3053
        %v3074 = vmul.f32 %v680, %v3055
        %v3075 = vmul.f32 %v684, %v3057
        %v3076 = vmul.f32 %v690, %v3059
        %v3077 = vmul.f32 %v694, %v3061
        %3079 = vset.pattern.permute.xlu0 0
        %3080 = vperm.xlu0 %3079, %v2567
        %v3081 = vpop.permute.xlu0 %3080
        %3084 = vset.pattern.permute.xlu0 0
        %3085 = vperm.xlu0 %3084, %v2572
        %v3086 = vpop.permute.xlu0 %3085
        %3089 = vset.pattern.permute.xlu0 0
        %3090 = vperm.xlu0 %3089, %v2577
        %v3091 = vpop.permute.xlu0 %3090
        %3094 = vset.pattern.permute.xlu0 0
        %3095 = vperm.xlu0 %3094, %v2582
        %v3096 = vpop.permute.xlu0 %3095
        %3099 = vset.pattern.permute.xlu0 0
        %3100 = vperm.xlu0 %3099, %v2587
        %v3101 = vpop.permute.xlu0 %3100
        %3104 = vset.pattern.permute.xlu0 0
        %3105 = vperm.xlu0 %3104, %v2592
        %v3106 = vpop.permute.xlu0 %3105
        %3109 = vset.pattern.permute.xlu0 0
        %3110 = vperm.xlu0 %3109, %v2597
        %v3111 = vpop.permute.xlu0 %3110
        %3114 = vset.pattern.permute.xlu0 0
        %3115 = vperm.xlu0 %3114, %v2602
        %v3116 = vpop.permute.xlu0 %3115
        %3119 = vset.pattern.permute.xlu0 0
        %3120 = vperm.xlu0 %3119, %v2607
        %v3121 = vpop.permute.xlu0 %3120
        %3124 = vset.pattern.permute.xlu0 0
        %3125 = vperm.xlu0 %3124, %v2612
        %v3126 = vpop.permute.xlu0 %3125
        %3129 = vset.pattern.permute.xlu0 0
        %3130 = vperm.xlu0 %3129, %v2617
        %v3131 = vpop.permute.xlu0 %3130
        %3134 = vset.pattern.permute.xlu0 0
        %3135 = vperm.xlu0 %3134, %v2622
        %v3136 = vpop.permute.xlu0 %3135
        %3139 = vset.pattern.permute.xlu0 0
        %3140 = vperm.xlu0 %3139, %v2627
        %v3141 = vpop.permute.xlu0 %3140
        %3144 = vset.pattern.permute.xlu0 0
        %3145 = vperm.xlu0 %3144, %v2632
        %v3146 = vpop.permute.xlu0 %3145
        %3149 = vset.pattern.permute.xlu0 0
        %3150 = vperm.xlu0 %3149, %v2637
        %v3151 = vpop.permute.xlu0 %3150
        %3154 = vset.pattern.permute.xlu0 0
        %3155 = vperm.xlu0 %3154, %v2642
        %v3156 = vpop.permute.xlu0 %3155
        %v3158 = vlaneseq
        %v3159 = vshrl.u32 %v3158, 7
        %v3160 = vsub.s32 0, %v3159
        %v3161 = vrot.slane %v2661, %v3160
        %v3162 = vsub.f32 %v3081, %v3161
        %v3163 = vsub.f32 %v3086, %v3161
        %v3164 = vsub.f32 %v3091, %v3161
        %v3165 = vsub.f32 %v3096, %v3161
        %v3166 = vsub.f32 %v3101, %v3161
        %v3167 = vsub.f32 %v3106, %v3161
        %v3168 = vsub.f32 %v3111, %v3161
        %v3169 = vsub.f32 %v3116, %v3161
        %v3170 = vsub.f32 %v3121, %v3161
        %v3171 = vsub.f32 %v3126, %v3161
        %v3172 = vsub.f32 %v3131, %v3161
        %v3173 = vsub.f32 %v3136, %v3161
        %v3174 = vsub.f32 %v3141, %v3161
        %v3175 = vsub.f32 %v3146, %v3161
        %v3176 = vsub.f32 %v3151, %v3161
        %v3177 = vsub.f32 %v3156, %v3161
        %v3178 = vsel %vm2452, %v3162, -1e+30
        %v3179 = vsel %vm2453, %v3163, -1e+30
        %v3180 = vsel %vm2454, %v3164, -1e+30
        %v3181 = vsel %vm2455, %v3165, -1e+30
        %v3182 = vsel %vm2456, %v3166, -1e+30
        %v3183 = vsel %vm2457, %v3167, -1e+30
        %v3184 = vsel %vm2458, %v3168, -1e+30
        %v3185 = vsel %vm2459, %v3169, -1e+30
        %v3186 = vsel %vm2460, %v3170, -1e+30
        %v3187 = vsel %vm2461, %v3171, -1e+30
        %v3188 = vsel %vm2462, %v3172, -1e+30
        %v3189 = vsel %vm2463, %v3173, -1e+30
        %v3190 = vsel %vm2464, %v3174, -1e+30
        %v3191 = vsel %vm2465, %v3175, -1e+30
        %v3192 = vsel %vm2466, %v3176, -1e+30
        %v3193 = vsel %vm2467, %v3177, -1e+30
        %v3194 = vmul.f32 %v3178, 1.442695
        %v3195 = vpow.pop %v3194
        %v3196 = vmul.f32 %v3179, 1.442695
        %v3197 = vpow.pop %v3196
        %v3198 = vmul.f32 %v3180, 1.442695
        %v3199 = vpow.pop %v3198
        %v3200 = vmul.f32 %v3181, 1.442695
        %v3201 = vpow.pop %v3200
        %v3202 = vmul.f32 %v3182, 1.442695
        %v3203 = vpow.pop %v3202
        %v3204 = vmul.f32 %v3183, 1.442695
        %v3205 = vpow.pop %v3204
        %v3206 = vmul.f32 %v3184, 1.442695
        %v3207 = vpow.pop %v3206
        %v3208 = vmul.f32 %v3185, 1.442695
        %v3209 = vpow.pop %v3208
        %v3210 = vmul.f32 %v3186, 1.442695
        %v3211 = vpow.pop %v3210
        %v3212 = vmul.f32 %v3187, 1.442695
        %v3213 = vpow.pop %v3212
        %v3214 = vmul.f32 %v3188, 1.442695
        %v3215 = vpow.pop %v3214
        %v3216 = vmul.f32 %v3189, 1.442695
        %v3217 = vpow.pop %v3216
        %v3218 = vmul.f32 %v3190, 1.442695
        %v3219 = vpow.pop %v3218
        %v3220 = vmul.f32 %v3191, 1.442695
        %v3221 = vpow.pop %v3220
        %v3222 = vmul.f32 %v3192, 1.442695
        %v3223 = vpow.pop %v3222
        %v3224 = vmul.f32 %v3193, 1.442695
        %v3225 = vpow.pop %v3224
        %v3226 = vmul.f32 %v2888, %v3195
        %v3227 = vmul.f32 %v2893, %v3197
        %v3228 = vmul.f32 %v2898, %v3199
        %v3229 = vmul.f32 %v2903, %v3201
        %v3230 = vmul.f32 %v2908, %v3203
        %v3231 = vmul.f32 %v2913, %v3205
        %v3232 = vmul.f32 %v2918, %v3207
        %v3233 = vmul.f32 %v2923, %v3209
        %v3234 = vmul.f32 %v2928, %v3211
        %v3235 = vmul.f32 %v2933, %v3213
        %v3236 = vmul.f32 %v2938, %v3215
        %v3237 = vmul.f32 %v2943, %v3217
        %v3238 = vmul.f32 %v2948, %v3219
        %v3239 = vmul.f32 %v2953, %v3221
        %v3240 = vmul.f32 %v2958, %v3223
        %v3241 = vmul.f32 %v2963, %v3225
        %v3242 = vlaneseq
        %v3243 = vshrl.u32 %v3242, 7
        %v3244 = vsub.s32 0, %v3243
        %v3245 = vrot.slane %v2693, %v3244
        %v3246 = vmul.f32 %v3226, %v3245
        %v3247 = vmul.f32 %v3227, %v3245
        %v3248 = vmul.f32 %v3228, %v3245
        %v3249 = vmul.f32 %v3229, %v3245
        %v3250 = vmul.f32 %v3230, %v3245
        %v3251 = vmul.f32 %v3231, %v3245
        %v3252 = vmul.f32 %v3232, %v3245
        %v3253 = vmul.f32 %v3233, %v3245
        %v3254 = vmul.f32 %v3234, %v3245
        %v3255 = vmul.f32 %v3235, %v3245
        %v3256 = vmul.f32 %v3236, %v3245
        %v3257 = vmul.f32 %v3237, %v3245
        %v3258 = vmul.f32 %v3238, %v3245
        %v3259 = vmul.f32 %v3239, %v3245
        %v3260 = vmul.f32 %v3240, %v3245
        %v3261 = vmul.f32 %v3241, %v3245
        %v3262 = vld [vmem:[#allocation2] sm:$0xff]
        %v3263 = vld [vmem:[#allocation2 + $0x8] sm:$0xff]
        %3264 = vmatprep.subr.mxu0 0.0
        %3265 = vmatpush1.msra.mxu0 0.0
        %3266 = vmatprep.subr.mxu0 0.0
        %3267 = vmatpush1.msra.mxu0 0.0
        %3268 = vmatprep.subr.mxu0 0.0
        %3269 = vmatpush1.msra.mxu0 0.0
        %3270 = vmatprep.subr.mxu0 0.0
        %3271 = vmatpush1.msra.mxu0 0.0
        %3272 = vmatprep.subr.mxu0 0.0
        %3273 = vmatpush1.msra.mxu0 0.0
        %3274 = vmatprep.subr.mxu0 0.0
        %3275 = vmatpush1.msra.mxu0 0.0
        %3276 = vmatprep.subr.mxu0 0.0
        %3277 = vmatpush1.msra.mxu0 0.0
        %3278 = vmatprep.subr.mxu0 0.0
        %3279 = vmatpush1.msra.mxu0 0.0
        %3280 = vmatprep.subr.mxu0 0.0
        %3281 = vmatpush1.msra.mxu0 0.0
        %3282 = vmatprep.subr.mxu0 0.0
        %3283 = vmatpush1.msra.mxu0 0.0
        %3284 = vmatprep.subr.mxu0 0.0
        %3285 = vmatpush1.msra.mxu0 0.0
        %3286 = vmatprep.subr.mxu0 0.0
        %3287 = vmatpush1.msra.mxu0 0.0
        %3288 = vmatprep.subr.mxu0 0.0
        %3289 = vmatpush1.msra.mxu0 0.0
        %3290 = vmatprep.subr.mxu0 0.0
        %3291 = vmatpush1.msra.mxu0 0.0
        %3292 = vmatprep.subr.mxu0 0.0
        %3293 = vmatpush1.msra.mxu0 %v3263
        %3294 = vmatprep.subr.mxu0 0.0
        %3295 = vmatpush1.msra.mxu0 %v3262
        %3296 = vmatprep.subr.mxu0 0.0
        %3297 = vmatpush2.msra.mxu0 0.0
        %3298 = vmatprep.subr.mxu0 0.0
        %3299 = vmatpush2.msra.mxu0 0.0
        %3300 = vmatprep.subr.mxu0 0.0
        %3301 = vmatpush2.msra.mxu0 0.0
        %3302 = vmatprep.subr.mxu0 0.0
        %3303 = vmatpush2.msra.mxu0 0.0
        %3304 = vmatprep.subr.mxu0 0.0
        %3305 = vmatpush2.msra.mxu0 0.0
        %3306 = vmatprep.subr.mxu0 0.0
        %3307 = vmatpush2.msra.mxu0 0.0
        %3308 = vmatprep.subr.mxu0 0.0
        %3309 = vmatpush2.msra.mxu0 0.0
        %3310 = vmatprep.subr.mxu0 0.0
        %3311 = vmatpush2.msra.mxu0 0.0
        %3312 = vmatprep.subr.mxu0 0.0
        %3313 = vmatpush2.msra.mxu0 0.0
        %3314 = vmatprep.subr.mxu0 0.0
        %3315 = vmatpush2.msra.mxu0 0.0
        %3316 = vmatprep.subr.mxu0 0.0
        %3317 = vmatpush2.msra.mxu0 0.0
        %3318 = vmatprep.subr.mxu0 0.0
        %3319 = vmatpush2.msra.mxu0 0.0
        %3320 = vmatprep.subr.mxu0 0.0
        %3321 = vmatpush2.msra.mxu0 0.0
        %3322 = vmatprep.subr.mxu0 0.0
        %3323 = vmatpush2.msra.mxu0 0.0
        %3324 = vmatprep.subr.mxu0 0.0
        %3325 = vmatpush2.msra.mxu0 0.0
        %3326 = vmatprep.subr.mxu0 0.0
        %3327 = vmatpush2.msra.mxu0 0.0
        %3328 = vmatprep.mubr.f32.mxu0 0.0
        %3329 = vmatmul.mubr.f32.gmra.mxu0 %v2789
        %v3330 = vpop.f32.mrf.mxu0
        %v3331 = vadd.f32 0.0, %v3330
        %v3332 = vpop.f32.mrf.mxu0
        %3333 = vmatprep.mubr.f32.mxu0 0.0
        %3334 = vmatmul.mubr.f32.gmra.mxu0 %v2791
        %v3335 = vpop.f32.mrf.mxu0
        %v3336 = vadd.f32 0.0, %v3335
        %v3337 = vpop.f32.mrf.mxu0
        %3338 = vmatprep.mubr.f32.mxu0 0.0
        %3339 = vmatmul.mubr.f32.gmra.mxu0 %v2793
        %v3340 = vpop.f32.mrf.mxu0
        %v3341 = vadd.f32 0.0, %v3340
        %v3342 = vpop.f32.mrf.mxu0
        %3343 = vmatprep.mubr.f32.mxu0 0.0
        %3344 = vmatmul.mubr.f32.gmra.mxu0 %v2795
        %v3345 = vpop.f32.mrf.mxu0
        %v3346 = vadd.f32 0.0, %v3345
        %v3347 = vpop.f32.mrf.mxu0
        %3348 = vmatprep.mubr.f32.mxu0 0.0
        %3349 = vmatmul.mubr.f32.gmra.mxu0 %v2797
        %v3350 = vpop.f32.mrf.mxu0
        %v3351 = vadd.f32 0.0, %v3350
        %v3352 = vpop.f32.mrf.mxu0
        %3353 = vmatprep.mubr.f32.mxu0 0.0
        %3354 = vmatmul.mubr.f32.gmra.mxu0 %v2799
        %v3355 = vpop.f32.mrf.mxu0
        %v3356 = vadd.f32 0.0, %v3355
        %v3357 = vpop.f32.mrf.mxu0
        %3358 = vmatprep.mubr.f32.mxu0 0.0
        %3359 = vmatmul.mubr.f32.gmra.mxu0 %v2801
        %v3360 = vpop.f32.mrf.mxu0
        %v3361 = vadd.f32 0.0, %v3360
        %v3362 = vpop.f32.mrf.mxu0
        %3363 = vmatprep.mubr.f32.mxu0 0.0
        %3364 = vmatmul.mubr.f32.gmra.mxu0 %v2803
        %v3365 = vpop.f32.mrf.mxu0
        %v3366 = vadd.f32 0.0, %v3365
        %v3367 = vpop.f32.mrf.mxu0
        %3368 = vmatprep.mubr.f32.mxu0 0.0
        %3369 = vmatmul.mubr.f32.gmra.mxu0 %v2805
        %v3370 = vpop.f32.mrf.mxu0
        %v3371 = vadd.f32 0.0, %v3370
        %v3372 = vpop.f32.mrf.mxu0
        %3373 = vmatprep.mubr.f32.mxu0 0.0
        %3374 = vmatmul.mubr.f32.gmra.mxu0 %v2807
        %v3375 = vpop.f32.mrf.mxu0
        %v3376 = vadd.f32 0.0, %v3375
        %v3377 = vpop.f32.mrf.mxu0
        %3378 = vmatprep.mubr.f32.mxu0 0.0
        %3379 = vmatmul.mubr.f32.gmra.mxu0 %v2809
        %v3380 = vpop.f32.mrf.mxu0
        %v3381 = vadd.f32 0.0, %v3380
        %v3382 = vpop.f32.mrf.mxu0
        %3383 = vmatprep.mubr.f32.mxu0 0.0
        %3384 = vmatmul.mubr.f32.gmra.mxu0 %v2811
        %v3385 = vpop.f32.mrf.mxu0
        %v3386 = vadd.f32 0.0, %v3385
        %v3387 = vpop.f32.mrf.mxu0
        %3388 = vmatprep.mubr.f32.mxu0 0.0
        %3389 = vmatmul.mubr.f32.gmra.mxu0 %v2813
        %v3390 = vpop.f32.mrf.mxu0
        %v3391 = vadd.f32 0.0, %v3390
        %v3392 = vpop.f32.mrf.mxu0
        %3393 = vmatprep.mubr.f32.mxu0 0.0
        %3394 = vmatmul.mubr.f32.gmra.mxu0 %v2815
        %v3395 = vpop.f32.mrf.mxu0
        %v3396 = vadd.f32 0.0, %v3395
        %v3397 = vpop.f32.mrf.mxu0
        %3398 = vmatprep.mubr.f32.mxu0 0.0
        %3399 = vmatmul.mubr.f32.gmra.mxu0 %v2817
        %v3400 = vpop.f32.mrf.mxu0
        %v3401 = vadd.f32 0.0, %v3400
        %v3402 = vpop.f32.mrf.mxu0
        %3403 = vmatprep.mubr.f32.mxu0 0.0
        %3404 = vmatmul.mubr.f32.gmra.mxu0 %v2819
        %v3405 = vpop.f32.mrf.mxu0
        %v3406 = vadd.f32 0.0, %v3405
        %v3407 = vpop.f32.mrf.mxu0
        %3408 = vdwg.mxu0
        %v3409 = vmul.f32 %v2567, 1.442695
        %v3410 = vpow.pop %v3409
        %v3411 = vmul.f32 %v2572, 1.442695
        %v3412 = vpow.pop %v3411
        %v3413 = vmul.f32 %v2577, 1.442695
        %v3414 = vpow.pop %v3413
        %v3415 = vmul.f32 %v2582, 1.442695
        %v3416 = vpow.pop %v3415
        %v3417 = vmul.f32 %v2587, 1.442695
        %v3418 = vpow.pop %v3417
        %v3419 = vmul.f32 %v2592, 1.442695
        %v3420 = vpow.pop %v3419
        %v3421 = vmul.f32 %v2597, 1.442695
        %v3422 = vpow.pop %v3421
        %v3423 = vmul.f32 %v2602, 1.442695
        %v3424 = vpow.pop %v3423
        %v3425 = vmul.f32 %v2607, 1.442695
        %v3426 = vpow.pop %v3425
        %v3427 = vmul.f32 %v2612, 1.442695
        %v3428 = vpow.pop %v3427
        %v3429 = vmul.f32 %v2617, 1.442695
        %v3430 = vpow.pop %v3429
        %v3431 = vmul.f32 %v2622, 1.442695
        %v3432 = vpow.pop %v3431
        %v3433 = vmul.f32 %v2627, 1.442695
        %v3434 = vpow.pop %v3433
        %v3435 = vmul.f32 %v2632, 1.442695
        %v3436 = vpow.pop %v3435
        %v3437 = vmul.f32 %v2637, 1.442695
        %v3438 = vpow.pop %v3437
        %v3439 = vmul.f32 %v2642, 1.442695
        %v3440 = vpow.pop %v3439
        %3442 = vset.pattern.permute.xlu0 0
        %3443 = vperm.xlu0 %3442, %v3410
        %v3444 = vpop.permute.xlu0 %3443
        %3447 = vset.pattern.permute.xlu0 0
        %3448 = vperm.xlu0 %3447, %v3412
        %v3449 = vpop.permute.xlu0 %3448
        %3452 = vset.pattern.permute.xlu0 0
        %3453 = vperm.xlu0 %3452, %v3414
        %v3454 = vpop.permute.xlu0 %3453
        %3457 = vset.pattern.permute.xlu0 0
        %3458 = vperm.xlu0 %3457, %v3416
        %v3459 = vpop.permute.xlu0 %3458
        %3462 = vset.pattern.permute.xlu0 0
        %3463 = vperm.xlu0 %3462, %v3418
        %v3464 = vpop.permute.xlu0 %3463
        %3467 = vset.pattern.permute.xlu0 0
        %3468 = vperm.xlu0 %3467, %v3420
        %v3469 = vpop.permute.xlu0 %3468
        %3472 = vset.pattern.permute.xlu0 0
        %3473 = vperm.xlu0 %3472, %v3422
        %v3474 = vpop.permute.xlu0 %3473
        %3477 = vset.pattern.permute.xlu0 0
        %3478 = vperm.xlu0 %3477, %v3424
        %v3479 = vpop.permute.xlu0 %3478
        %3482 = vset.pattern.permute.xlu0 0
        %3483 = vperm.xlu0 %3482, %v3426
        %v3484 = vpop.permute.xlu0 %3483
        %3487 = vset.pattern.permute.xlu0 0
        %3488 = vperm.xlu0 %3487, %v3428
        %v3489 = vpop.permute.xlu0 %3488
        %3492 = vset.pattern.permute.xlu0 0
        %3493 = vperm.xlu0 %3492, %v3430
        %v3494 = vpop.permute.xlu0 %3493
        %3497 = vset.pattern.permute.xlu0 0
        %3498 = vperm.xlu0 %3497, %v3432
        %v3499 = vpop.permute.xlu0 %3498
        %3502 = vset.pattern.permute.xlu0 0
        %3503 = vperm.xlu0 %3502, %v3434
        %v3504 = vpop.permute.xlu0 %3503
        %3507 = vset.pattern.permute.xlu0 0
        %3508 = vperm.xlu0 %3507, %v3436
        %v3509 = vpop.permute.xlu0 %3508
        %3512 = vset.pattern.permute.xlu0 0
        %3513 = vperm.xlu0 %3512, %v3438
        %v3514 = vpop.permute.xlu0 %3513
        %3517 = vset.pattern.permute.xlu0 0
        %3518 = vperm.xlu0 %3517, %v3440
        %v3519 = vpop.permute.xlu0 %3518
        %v3521 = vmul.f32 %v3331, %v3444
        %v3522 = vmul.f32 %v3336, %v3449
        %v3523 = vmul.f32 %v3341, %v3454
        %v3524 = vmul.f32 %v3346, %v3459
        %v3525 = vmul.f32 %v3351, %v3464
        %v3526 = vmul.f32 %v3356, %v3469
        %v3527 = vmul.f32 %v3361, %v3474
        %v3528 = vmul.f32 %v3366, %v3479
        %v3529 = vmul.f32 %v3371, %v3484
        %v3530 = vmul.f32 %v3376, %v3489
        %v3531 = vmul.f32 %v3381, %v3494
        %v3532 = vmul.f32 %v3386, %v3499
        %v3533 = vmul.f32 %v3391, %v3504
        %v3534 = vmul.f32 %v3396, %v3509
        %v3535 = vmul.f32 %v3401, %v3514
        %v3536 = vmul.f32 %v3406, %v3519
        %vm3554 = vcmask 1042432
        %v3555 = vrot.slane %v1170, 5
        %v3556 = vrot.slane %v1171, 5
        %v3557 = vsel %vm3554, %v3555, %v3556
        %v3558 = vrot.slane %v1172, 5
        %v3559 = vsel %vm3554, %v3556, %v3558
        %v3560 = vrot.slane %v1173, 5
        %v3561 = vsel %vm3554, %v3558, %v3560
        %v3562 = vrot.slane %v1174, 5
        %v3563 = vsel %vm3554, %v3560, %v3562
        %v3564 = vrot.slane %v1175, 5
        %v3565 = vsel %vm3554, %v3562, %v3564
        %v3566 = vrot.slane %v1176, 5
        %v3567 = vsel %vm3554, %v3564, %v3566
        %v3568 = vrot.slane %v1177, 5
        %v3569 = vsel %vm3554, %v3566, %v3568
        %v3570 = vrot.slane %v1178, 5
        %v3571 = vsel %vm3554, %v3568, %v3570
        %v3572 = vrot.slane %v1179, 5
        %v3573 = vsel %vm3554, %v3570, %v3572
        %v3574 = vrot.slane %v1180, 5
        %v3575 = vsel %vm3554, %v3572, %v3574
        %v3576 = vrot.slane %v1181, 5
        %v3577 = vsel %vm3554, %v3574, %v3576
        %v3578 = vrot.slane %v1182, 5
        %v3579 = vsel %vm3554, %v3576, %v3578
        %v3580 = vrot.slane %v1183, 5
        %v3581 = vsel %vm3554, %v3578, %v3580
        %v3582 = vrot.slane %v1184, 5
        %v3583 = vsel %vm3554, %v3580, %v3582
        %v3584 = vrot.slane %v1185, 5
        %v3585 = vsel %vm3554, %v3582, %v3584
        %v3586 = vrot.slane %v1186, 5
        %v3587 = vsel %vm3554, %v3584, %v3586
        %3604 = vmatprep.subr.mxu0 0.0
        %3605 = vmatpush1.msra.mxu0 %v3587
        %3606 = vmatprep.subr.mxu0 0.0
        %3607 = vmatpush1.msra.mxu0 %v3585
        %3608 = vmatprep.subr.mxu0 0.0
        %3609 = vmatpush1.msra.mxu0 %v3583
        %3610 = vmatprep.subr.mxu0 0.0
        %3611 = vmatpush1.msra.mxu0 %v3581
        %3612 = vmatprep.subr.mxu0 0.0
        %3613 = vmatpush1.msra.mxu0 %v3579
        %3614 = vmatprep.subr.mxu0 0.0
        %3615 = vmatpush1.msra.mxu0 %v3577
        %3616 = vmatprep.subr.mxu0 0.0
        %3617 = vmatpush1.msra.mxu0 %v3575
        %3618 = vmatprep.subr.mxu0 0.0
        %3619 = vmatpush1.msra.mxu0 %v3573
        %3620 = vmatprep.subr.mxu0 0.0
        %3621 = vmatpush1.msra.mxu0 %v3571
        %3622 = vmatprep.subr.mxu0 0.0
        %3623 = vmatpush1.msra.mxu0 %v3569
        %3624 = vmatprep.subr.mxu0 0.0
        %3625 = vmatpush1.msra.mxu0 %v3567
        %3626 = vmatprep.subr.mxu0 0.0
        %3627 = vmatpush1.msra.mxu0 %v3565
        %3628 = vmatprep.subr.mxu0 0.0
        %3629 = vmatpush1.msra.mxu0 %v3563
        %3630 = vmatprep.subr.mxu0 0.0
        %3631 = vmatpush1.msra.mxu0 %v3561
        %3632 = vmatprep.subr.mxu0 0.0
        %3633 = vmatpush1.msra.mxu0 %v3559
        %3634 = vmatprep.subr.mxu0 0.0
        %3635 = vmatpush1.msra.mxu0 %v3557
        %3636 = vmatprep.subr.mxu0 0.0
        %3637 = vmatpush2.msra.mxu0 0.0
        %3638 = vmatprep.subr.mxu0 0.0
        %3639 = vmatpush2.msra.mxu0 0.0
        %3640 = vmatprep.subr.mxu0 0.0
        %3641 = vmatpush2.msra.mxu0 0.0
        %3642 = vmatprep.subr.mxu0 0.0
        %3643 = vmatpush2.msra.mxu0 0.0
        %3644 = vmatprep.subr.mxu0 0.0
        %3645 = vmatpush2.msra.mxu0 0.0
        %3646 = vmatprep.subr.mxu0 0.0
        %3647 = vmatpush2.msra.mxu0 0.0
        %3648 = vmatprep.subr.mxu0 0.0
        %3649 = vmatpush2.msra.mxu0 0.0
        %3650 = vmatprep.subr.mxu0 0.0
        %3651 = vmatpush2.msra.mxu0 0.0
        %3652 = vmatprep.subr.mxu0 0.0
        %3653 = vmatpush2.msra.mxu0 0.0
        %3654 = vmatprep.subr.mxu0 0.0
        %3655 = vmatpush2.msra.mxu0 0.0
        %3656 = vmatprep.subr.mxu0 0.0
        %3657 = vmatpush2.msra.mxu0 0.0
        %3658 = vmatprep.subr.mxu0 0.0
        %3659 = vmatpush2.msra.mxu0 0.0
        %3660 = vmatprep.subr.mxu0 0.0
        %3661 = vmatpush2.msra.mxu0 0.0
        %3662 = vmatprep.subr.mxu0 0.0
        %3663 = vmatpush2.msra.mxu0 0.0
        %3664 = vmatprep.subr.mxu0 0.0
        %3665 = vmatpush2.msra.mxu0 0.0
        %3666 = vmatprep.subr.mxu0 0.0
        %3667 = vmatpush2.msra.mxu0 0.0
        %3668 = vmatprep.mubr.f32.mxu0 0.0
        %3669 = vmatmul.mubr.f32.gmra.mxu0 %v3246
        %v3670 = vpop.f32.mrf.mxu0
        %v3671 = vadd.f32 %v3521, %v3670
        %v3672 = vpop.f32.mrf.mxu0
        %3673 = vmatprep.mubr.f32.mxu0 0.0
        %3674 = vmatmul.mubr.f32.gmra.mxu0 %v3247
        %v3675 = vpop.f32.mrf.mxu0
        %v3676 = vadd.f32 %v3522, %v3675
        %v3677 = vpop.f32.mrf.mxu0
        %3678 = vmatprep.mubr.f32.mxu0 0.0
        %3679 = vmatmul.mubr.f32.gmra.mxu0 %v3248
        %v3680 = vpop.f32.mrf.mxu0
        %v3681 = vadd.f32 %v3523, %v3680
        %v3682 = vpop.f32.mrf.mxu0
        %3683 = vmatprep.mubr.f32.mxu0 0.0
        %3684 = vmatmul.mubr.f32.gmra.mxu0 %v3249
        %v3685 = vpop.f32.mrf.mxu0
        %v3686 = vadd.f32 %v3524, %v3685
        %v3687 = vpop.f32.mrf.mxu0
        %3688 = vmatprep.mubr.f32.mxu0 0.0
        %3689 = vmatmul.mubr.f32.gmra.mxu0 %v3250
        %v3690 = vpop.f32.mrf.mxu0
        %v3691 = vadd.f32 %v3525, %v3690
        %v3692 = vpop.f32.mrf.mxu0
        %3693 = vmatprep.mubr.f32.mxu0 0.0
        %3694 = vmatmul.mubr.f32.gmra.mxu0 %v3251
        %v3695 = vpop.f32.mrf.mxu0
        %v3696 = vadd.f32 %v3526, %v3695
        %v3697 = vpop.f32.mrf.mxu0
        %3698 = vmatprep.mubr.f32.mxu0 0.0
        %3699 = vmatmul.mubr.f32.gmra.mxu0 %v3252
        %v3700 = vpop.f32.mrf.mxu0
        %v3701 = vadd.f32 %v3527, %v3700
        %v3702 = vpop.f32.mrf.mxu0
        %3703 = vmatprep.mubr.f32.mxu0 0.0
        %3704 = vmatmul.mubr.f32.gmra.mxu0 %v3253
        %v3705 = vpop.f32.mrf.mxu0
        %v3706 = vadd.f32 %v3528, %v3705
        %v3707 = vpop.f32.mrf.mxu0
        %3708 = vmatprep.mubr.f32.mxu0 0.0
        %3709 = vmatmul.mubr.f32.gmra.mxu0 %v3254
        %v3710 = vpop.f32.mrf.mxu0
        %v3711 = vadd.f32 %v3529, %v3710
        %v3712 = vpop.f32.mrf.mxu0
        %3713 = vmatprep.mubr.f32.mxu0 0.0
        %3714 = vmatmul.mubr.f32.gmra.mxu0 %v3255
        %v3715 = vpop.f32.mrf.mxu0
        %v3716 = vadd.f32 %v3530, %v3715
        %v3717 = vpop.f32.mrf.mxu0
        %3718 = vmatprep.mubr.f32.mxu0 0.0
        %3719 = vmatmul.mubr.f32.gmra.mxu0 %v3256
        %v3720 = vpop.f32.mrf.mxu0
        %v3721 = vadd.f32 %v3531, %v3720
        %v3722 = vpop.f32.mrf.mxu0
        %3723 = vmatprep.mubr.f32.mxu0 0.0
        %3724 = vmatmul.mubr.f32.gmra.mxu0 %v3257
        %v3725 = vpop.f32.mrf.mxu0
        %v3726 = vadd.f32 %v3532, %v3725
        %v3727 = vpop.f32.mrf.mxu0
        %3728 = vmatprep.mubr.f32.mxu0 0.0
        %3729 = vmatmul.mubr.f32.gmra.mxu0 %v3258
        %v3730 = vpop.f32.mrf.mxu0
        %v3731 = vadd.f32 %v3533, %v3730
        %v3732 = vpop.f32.mrf.mxu0
        %3733 = vmatprep.mubr.f32.mxu0 0.0
        %3734 = vmatmul.mubr.f32.gmra.mxu0 %v3259
        %v3735 = vpop.f32.mrf.mxu0
        %v3736 = vadd.f32 %v3534, %v3735
        %v3737 = vpop.f32.mrf.mxu0
        %3738 = vmatprep.mubr.f32.mxu0 0.0
        %3739 = vmatmul.mubr.f32.gmra.mxu0 %v3260
        %v3740 = vpop.f32.mrf.mxu0
        %v3741 = vadd.f32 %v3535, %v3740
        %v3742 = vpop.f32.mrf.mxu0
        %3743 = vmatprep.mubr.f32.mxu0 0.0
        %3744 = vmatmul.mubr.f32.gmra.mxu0 %v3261
        %v3745 = vpop.f32.mrf.mxu0
        %v3746 = vadd.f32 %v3536, %v3745
        %v3747 = vpop.f32.mrf.mxu0
        %3748 = vdwg.mxu0
        %v3749 = vld [vmem:[%s9] sm:$0x1]
        %v3751 = vlaneseq
        %v3752 = vshrl.u32 %v3751, 7
        %v3753 = vsub.s32 0, %v3752
        %v3754 = vrot.slane %v3749, %v3753
        %3755 = vset.pattern.permute.xlu0 0
        %3756 = vperm.xlu0 %3755, %v3754
        %v3757 = vpop.permute.xlu0 %3756
        %v3759 = vmul.f32 %v3757, %v1170
        %v3760 = vmul.f32 %v3757, %v1171
        %v3761 = vmul.f32 %v3757, %v1172
        %v3762 = vmul.f32 %v3757, %v1173
        %v3763 = vmul.f32 %v3757, %v1174
        %v3764 = vmul.f32 %v3757, %v1175
        %v3765 = vmul.f32 %v3757, %v1176
        %v3766 = vmul.f32 %v3757, %v1177
        %v3767 = vmul.f32 %v3757, %v1178
        %v3768 = vmul.f32 %v3757, %v1179
        %v3769 = vmul.f32 %v3757, %v1180
        %v3770 = vmul.f32 %v3757, %v1181
        %v3771 = vmul.f32 %v3757, %v1182
        %v3772 = vmul.f32 %v3757, %v1183
        %v3773 = vmul.f32 %v3757, %v1184
        %v3774 = vmul.f32 %v3757, %v1185
        %v3775 = vmul.f32 %v3757, %v1186
        %v3793 = vrot.slane %v3759, 5
        %v3794 = vrot.slane %v3760, 5
        %v3795 = vsel %vm3554, %v3793, %v3794
        %v3796 = vrot.slane %v3761, 5
        %v3797 = vsel %vm3554, %v3794, %v3796
        %v3798 = vrot.slane %v3762, 5
        %v3799 = vsel %vm3554, %v3796, %v3798
        %v3800 = vrot.slane %v3763, 5
        %v3801 = vsel %vm3554, %v3798, %v3800
        %v3802 = vrot.slane %v3764, 5
        %v3803 = vsel %vm3554, %v3800, %v3802
        %v3804 = vrot.slane %v3765, 5
        %v3805 = vsel %vm3554, %v3802, %v3804
        %v3806 = vrot.slane %v3766, 5
        %v3807 = vsel %vm3554, %v3804, %v3806
        %v3808 = vrot.slane %v3767, 5
        %v3809 = vsel %vm3554, %v3806, %v3808
        %v3810 = vrot.slane %v3768, 5
        %v3811 = vsel %vm3554, %v3808, %v3810
        %v3812 = vrot.slane %v3769, 5
        %v3813 = vsel %vm3554, %v3810, %v3812
        %v3814 = vrot.slane %v3770, 5
        %v3815 = vsel %vm3554, %v3812, %v3814
        %v3816 = vrot.slane %v3771, 5
        %v3817 = vsel %vm3554, %v3814, %v3816
        %v3818 = vrot.slane %v3772, 5
        %v3819 = vsel %vm3554, %v3816, %v3818
        %v3820 = vrot.slane %v3773, 5
        %v3821 = vsel %vm3554, %v3818, %v3820
        %v3822 = vrot.slane %v3774, 5
        %v3823 = vsel %vm3554, %v3820, %v3822
        %v3824 = vrot.slane %v3775, 5
        %v3825 = vsel %vm3554, %v3822, %v3824
        %v3842 = vadd.f32 %v3671, %v3795
        %v3843 = vadd.f32 %v3676, %v3797
        %v3844 = vadd.f32 %v3681, %v3799
        %v3845 = vadd.f32 %v3686, %v3801
        %v3846 = vadd.f32 %v3691, %v3803
        %v3847 = vadd.f32 %v3696, %v3805
        %v3848 = vadd.f32 %v3701, %v3807
        %v3849 = vadd.f32 %v3706, %v3809
        %v3850 = vadd.f32 %v3711, %v3811
        %v3851 = vadd.f32 %v3716, %v3813
        %v3852 = vadd.f32 %v3721, %v3815
        %v3853 = vadd.f32 %v3726, %v3817
        %v3854 = vadd.f32 %v3731, %v3819
        %v3855 = vadd.f32 %v3736, %v3821
        %v3856 = vadd.f32 %v3741, %v3823
        %v3857 = vadd.f32 %v3746, %v3825
        %v3858 = vmul.f32 %v3842, %v3062
        %v3859 = vmul.f32 %v3843, %v3063
        %v3860 = vmul.f32 %v3844, %v3064
        %v3861 = vmul.f32 %v3845, %v3065
        %v3862 = vmul.f32 %v3846, %v3066
        %v3863 = vmul.f32 %v3847, %v3067
        %v3864 = vmul.f32 %v3848, %v3068
        %v3865 = vmul.f32 %v3849, %v3069
        %v3866 = vmul.f32 %v3850, %v3070
        %v3867 = vmul.f32 %v3851, %v3071
        %v3868 = vmul.f32 %v3852, %v3072
        %v3869 = vmul.f32 %v3853, %v3073
        %v3870 = vmul.f32 %v3854, %v3074
        %v3871 = vmul.f32 %v3855, %v3075
        %v3872 = vmul.f32 %v3856, %v3076
        %v3873 = vmul.f32 %v3857, %v3077
        %v3875 = vrot.slane %v2661, 1
        %v3877 = vsub.f32 %v3156, %v3875
        %v3878 = vmul.f32 %v3877, 1.442695
        %v3879 = vpow.pop %v3878
        %v3881 = vrot.slane %v3879, 7
        %v3883 = vmul.f32 %v2693, %v3881
        %v3884 = vrot.slane %v3440, 7
        %s3885 = vtos %v3884
        %v3886 = vstv %s3885
        %v3888 = vmul.f32 %v3886, %v3262
        %v3889 = vmul.f32 %v3886, %v3263
        %v3890 = vlaneseq
        %v3891 = vshrl.u32 %v3890, 7
        %v3892 = vsub.s32 0, %v3891
        %v3893 = vrot.slane %v3883, %v3892
        %v3894 = vmul.f32 %v2725, %v3893
        %v3895 = vmul.f32 %v2726, %v3893
        %3896 = vmatprep.subr.mxu0 0.0
        %3897 = vmatpush1.msra.mxu0 %v3587
        %3898 = vmatprep.subr.mxu0 0.0
        %3899 = vmatpush1.msra.mxu0 %v3585
        %3900 = vmatprep.subr.mxu0 0.0
        %3901 = vmatpush1.msra.mxu0 %v3583
        %3902 = vmatprep.subr.mxu0 0.0
        %3903 = vmatpush1.msra.mxu0 %v3581
        %3904 = vmatprep.subr.mxu0 0.0
        %3905 = vmatpush1.msra.mxu0 %v3579
        %3906 = vmatprep.subr.mxu0 0.0
        %3907 = vmatpush1.msra.mxu0 %v3577
        %3908 = vmatprep.subr.mxu0 0.0
        %3909 = vmatpush1.msra.mxu0 %v3575
        %3910 = vmatprep.subr.mxu0 0.0
        %3911 = vmatpush1.msra.mxu0 %v3573
        %3912 = vmatprep.subr.mxu0 0.0
        %3913 = vmatpush1.msra.mxu0 %v3571
        %3914 = vmatprep.subr.mxu0 0.0
        %3915 = vmatpush1.msra.mxu0 %v3569
        %3916 = vmatprep.subr.mxu0 0.0
        %3917 = vmatpush1.msra.mxu0 %v3567
        %3918 = vmatprep.subr.mxu0 0.0
        %3919 = vmatpush1.msra.mxu0 %v3565
        %3920 = vmatprep.subr.mxu0 0.0
        %3921 = vmatpush1.msra.mxu0 %v3563
        %3922 = vmatprep.subr.mxu0 0.0
        %3923 = vmatpush1.msra.mxu0 %v3561
        %3924 = vmatprep.subr.mxu0 0.0
        %3925 = vmatpush1.msra.mxu0 %v3559
        %3926 = vmatprep.subr.mxu0 0.0
        %3927 = vmatpush1.msra.mxu0 %v3557
        %3928 = vmatprep.subr.mxu0 0.0
        %3929 = vmatpush2.msra.mxu0 0.0
        %3930 = vmatprep.subr.mxu0 0.0
        %3931 = vmatpush2.msra.mxu0 0.0
        %3932 = vmatprep.subr.mxu0 0.0
        %3933 = vmatpush2.msra.mxu0 0.0
        %3934 = vmatprep.subr.mxu0 0.0
        %3935 = vmatpush2.msra.mxu0 0.0
        %3936 = vmatprep.subr.mxu0 0.0
        %3937 = vmatpush2.msra.mxu0 0.0
        %3938 = vmatprep.subr.mxu0 0.0
        %3939 = vmatpush2.msra.mxu0 0.0
        %3940 = vmatprep.subr.mxu0 0.0
        %3941 = vmatpush2.msra.mxu0 0.0
        %3942 = vmatprep.subr.mxu0 0.0
        %3943 = vmatpush2.msra.mxu0 0.0
        %3944 = vmatprep.subr.mxu0 0.0
        %3945 = vmatpush2.msra.mxu0 0.0
        %3946 = vmatprep.subr.mxu0 0.0
        %3947 = vmatpush2.msra.mxu0 0.0
        %3948 = vmatprep.subr.mxu0 0.0
        %3949 = vmatpush2.msra.mxu0 0.0
        %3950 = vmatprep.subr.mxu0 0.0
        %3951 = vmatpush2.msra.mxu0 0.0
        %3952 = vmatprep.subr.mxu0 0.0
        %3953 = vmatpush2.msra.mxu0 0.0
        %3954 = vmatprep.subr.mxu0 0.0
        %3955 = vmatpush2.msra.mxu0 0.0
        %3956 = vmatprep.subr.mxu0 0.0
        %3957 = vmatpush2.msra.mxu0 0.0
        %3958 = vmatprep.subr.mxu0 0.0
        %3959 = vmatpush2.msra.mxu0 0.0
        %3960 = vmatprep.mubr.f32.mxu0 0.0
        %3961 = vmatmul.mubr.f32.gmra.mxu0 %v3894
        %v3962 = vpop.f32.mrf.mxu0
        %v3963 = vadd.f32 0.0, %v3962
        %v3964 = vpop.f32.mrf.mxu0
        %3965 = vmatprep.mubr.f32.mxu0 0.0
        %3966 = vmatmul.mubr.f32.gmra.mxu0 %v3895
        %v3967 = vpop.f32.mrf.mxu0
        %v3968 = vadd.f32 0.0, %v3967
        %v3969 = vpop.f32.mrf.mxu0
        %3970 = vdwg.mxu0
        %v3971 = vadd.f32 %v3888, %v3963
        %v3972 = vadd.f32 %v3889, %v3968
        %vm3973 = vcmask 261120
        %3974 = vst.msk [vmem:[#allocation2] sm:$0xff] %vm3973, %v3971
        %3975 = vst.msk [vmem:[#allocation2 + $0x8] sm:$0xff] %vm3973, %v3972
        %v3976 = vpack.c.bf16 %v3859, %v3858
        %v3977 = vpack.c.bf16 %v3861, %v3860
        %v3978 = vpack.c.bf16 %v3863, %v3862
        %v3979 = vpack.c.bf16 %v3865, %v3864
        %v3980 = vpack.c.bf16 %v3867, %v3866
        %v3981 = vpack.c.bf16 %v3869, %v3868
        %v3982 = vpack.c.bf16 %v3871, %v3870
        %v3983 = vpack.c.bf16 %v3873, %v3872
        %v3984 = vld [vmem:[%s10] sm:$0xf]
        %v3985 = vld [vmem:[%s10 + $0x4] sm:$0xf]
        %v3986 = vld [vmem:[%s10 + $0x8] sm:$0xf]
        %v3987 = vld [vmem:[%s10 + $0xc] sm:$0xf]
        %3988 = vset.pattern.permute.xlu0 1
        %3989 = vperm.xlu0 %3988, %v2567
        %v3990 = vpop.permute.xlu0 %3989
        %3992 = vset.pattern.permute.xlu0 1
        %3993 = vperm.xlu0 %3992, %v2572
        %v3994 = vpop.permute.xlu0 %3993
        %3996 = vset.pattern.permute.xlu0 1
        %3997 = vperm.xlu0 %3996, %v2577
        %v3998 = vpop.permute.xlu0 %3997
        %4000 = vset.pattern.permute.xlu0 1
        %4001 = vperm.xlu0 %4000, %v2582
        %v4002 = vpop.permute.xlu0 %4001
        %4004 = vset.pattern.permute.xlu0 1
        %4005 = vperm.xlu0 %4004, %v2587
        %v4006 = vpop.permute.xlu0 %4005
        %4008 = vset.pattern.permute.xlu0 1
        %4009 = vperm.xlu0 %4008, %v2592
        %v4010 = vpop.permute.xlu0 %4009
        %4012 = vset.pattern.permute.xlu0 1
        %4013 = vperm.xlu0 %4012, %v2597
        %v4014 = vpop.permute.xlu0 %4013
        %4016 = vset.pattern.permute.xlu0 1
        %4017 = vperm.xlu0 %4016, %v2602
        %v4018 = vpop.permute.xlu0 %4017
        %4020 = vset.pattern.permute.xlu0 1
        %4021 = vperm.xlu0 %4020, %v2607
        %v4022 = vpop.permute.xlu0 %4021
        %4024 = vset.pattern.permute.xlu0 1
        %4025 = vperm.xlu0 %4024, %v2612
        %v4026 = vpop.permute.xlu0 %4025
        %4028 = vset.pattern.permute.xlu0 1
        %4029 = vperm.xlu0 %4028, %v2617
        %v4030 = vpop.permute.xlu0 %4029
        %4032 = vset.pattern.permute.xlu0 1
        %4033 = vperm.xlu0 %4032, %v2622
        %v4034 = vpop.permute.xlu0 %4033
        %4036 = vset.pattern.permute.xlu0 1
        %4037 = vperm.xlu0 %4036, %v2627
        %v4038 = vpop.permute.xlu0 %4037
        %4040 = vset.pattern.permute.xlu0 1
        %4041 = vperm.xlu0 %4040, %v2632
        %v4042 = vpop.permute.xlu0 %4041
        %4044 = vset.pattern.permute.xlu0 1
        %4045 = vperm.xlu0 %4044, %v2637
        %v4046 = vpop.permute.xlu0 %4045
        %4048 = vset.pattern.permute.xlu0 1
        %4049 = vperm.xlu0 %4048, %v2642
        %v4050 = vpop.permute.xlu0 %4049
        %v4052 = vlaneseq
        %v4053 = vshrl.u32 %v4052, 7
        %v4054 = vsub.s32 1, %v4053
        %v4055 = vrot.slane %v2661, %v4054
        %v4056 = vsub.f32 %v3990, %v4055
        %v4057 = vsub.f32 %v3994, %v4055
        %v4058 = vsub.f32 %v3998, %v4055
        %v4059 = vsub.f32 %v4002, %v4055
        %v4060 = vsub.f32 %v4006, %v4055
        %v4061 = vsub.f32 %v4010, %v4055
        %v4062 = vsub.f32 %v4014, %v4055
        %v4063 = vsub.f32 %v4018, %v4055
        %v4064 = vsub.f32 %v4022, %v4055
        %v4065 = vsub.f32 %v4026, %v4055
        %v4066 = vsub.f32 %v4030, %v4055
        %v4067 = vsub.f32 %v4034, %v4055
        %v4068 = vsub.f32 %v4038, %v4055
        %v4069 = vsub.f32 %v4042, %v4055
        %v4070 = vsub.f32 %v4046, %v4055
        %v4071 = vsub.f32 %v4050, %v4055
        %v4072 = vsel %vm2452, %v4056, -1e+30
        %v4073 = vsel %vm2453, %v4057, -1e+30
        %v4074 = vsel %vm2454, %v4058, -1e+30
        %v4075 = vsel %vm2455, %v4059, -1e+30
        %v4076 = vsel %vm2456, %v4060, -1e+30
        %v4077 = vsel %vm2457, %v4061, -1e+30
        %v4078 = vsel %vm2458, %v4062, -1e+30
        %v4079 = vsel %vm2459, %v4063, -1e+30
        %v4080 = vsel %vm2460, %v4064, -1e+30
        %v4081 = vsel %vm2461, %v4065, -1e+30
        %v4082 = vsel %vm2462, %v4066, -1e+30
        %v4083 = vsel %vm2463, %v4067, -1e+30
        %v4084 = vsel %vm2464, %v4068, -1e+30
        %v4085 = vsel %vm2465, %v4069, -1e+30
        %v4086 = vsel %vm2466, %v4070, -1e+30
        %v4087 = vsel %vm2467, %v4071, -1e+30
        %v4088 = vmul.f32 %v4072, 1.442695
        %v4089 = vpow.pop %v4088
        %v4090 = vmul.f32 %v4073, 1.442695
        %v4091 = vpow.pop %v4090
        %v4092 = vmul.f32 %v4074, 1.442695
        %v4093 = vpow.pop %v4092
        %v4094 = vmul.f32 %v4075, 1.442695
        %v4095 = vpow.pop %v4094
        %v4096 = vmul.f32 %v4076, 1.442695
        %v4097 = vpow.pop %v4096
        %v4098 = vmul.f32 %v4077, 1.442695
        %v4099 = vpow.pop %v4098
        %v4100 = vmul.f32 %v4078, 1.442695
        %v4101 = vpow.pop %v4100
        %v4102 = vmul.f32 %v4079, 1.442695
        %v4103 = vpow.pop %v4102
        %v4104 = vmul.f32 %v4080, 1.442695
        %v4105 = vpow.pop %v4104
        %v4106 = vmul.f32 %v4081, 1.442695
        %v4107 = vpow.pop %v4106
        %v4108 = vmul.f32 %v4082, 1.442695
        %v4109 = vpow.pop %v4108
        %v4110 = vmul.f32 %v4083, 1.442695
        %v4111 = vpow.pop %v4110
        %v4112 = vmul.f32 %v4084, 1.442695
        %v4113 = vpow.pop %v4112
        %v4114 = vmul.f32 %v4085, 1.442695
        %v4115 = vpow.pop %v4114
        %v4116 = vmul.f32 %v4086, 1.442695
        %v4117 = vpow.pop %v4116
        %v4118 = vmul.f32 %v4087, 1.442695
        %v4119 = vpow.pop %v4118
        %v4120 = vmul.f32 %v2888, %v4089
        %v4121 = vmul.f32 %v2893, %v4091
        %v4122 = vmul.f32 %v2898, %v4093
        %v4123 = vmul.f32 %v2903, %v4095
        %v4124 = vmul.f32 %v2908, %v4097
        %v4125 = vmul.f32 %v2913, %v4099
        %v4126 = vmul.f32 %v2918, %v4101
        %v4127 = vmul.f32 %v2923, %v4103
        %v4128 = vmul.f32 %v2928, %v4105
        %v4129 = vmul.f32 %v2933, %v4107
        %v4130 = vmul.f32 %v2938, %v4109
        %v4131 = vmul.f32 %v2943, %v4111
        %v4132 = vmul.f32 %v2948, %v4113
        %v4133 = vmul.f32 %v2953, %v4115
        %v4134 = vmul.f32 %v2958, %v4117
        %v4135 = vmul.f32 %v2963, %v4119
        %v4136 = vlaneseq
        %v4137 = vshrl.u32 %v4136, 7
        %v4138 = vsub.s32 1, %v4137
        %v4139 = vrot.slane %v2693, %v4138
        %v4140 = vmul.f32 %v4120, %v4139
        %v4141 = vmul.f32 %v4121, %v4139
        %v4142 = vmul.f32 %v4122, %v4139
        %v4143 = vmul.f32 %v4123, %v4139
        %v4144 = vmul.f32 %v4124, %v4139
        %v4145 = vmul.f32 %v4125, %v4139
        %v4146 = vmul.f32 %v4126, %v4139
        %v4147 = vmul.f32 %v4127, %v4139
        %v4148 = vmul.f32 %v4128, %v4139
        %v4149 = vmul.f32 %v4129, %v4139
        %v4150 = vmul.f32 %v4130, %v4139
        %v4151 = vmul.f32 %v4131, %v4139
        %v4152 = vmul.f32 %v4132, %v4139
        %v4153 = vmul.f32 %v4133, %v4139
        %v4154 = vmul.f32 %v4134, %v4139
        %v4155 = vmul.f32 %v4135, %v4139
        %v4156 = vld [vmem:[#allocation2] sm:$0xff]
        %v4157 = vld [vmem:[#allocation2 + $0x8] sm:$0xff]
        %4160 = vrot.lane.b32.xlu0 %v4156, 96
        %v4161 = vpop.permute.xlu0 %4160
        %4162 = vrot.lane.b32.xlu0 %v4157, 96
        %v4163 = vpop.permute.xlu0 %4162
        %4166 = vmatprep.subr.mxu0 0.0
        %4167 = vmatpush1.msra.mxu0 0.0
        %4168 = vmatprep.subr.mxu0 0.0
        %4169 = vmatpush1.msra.mxu0 0.0
        %4170 = vmatprep.subr.mxu0 0.0
        %4171 = vmatpush1.msra.mxu0 0.0
        %4172 = vmatprep.subr.mxu0 0.0
        %4173 = vmatpush1.msra.mxu0 0.0
        %4174 = vmatprep.subr.mxu0 0.0
        %4175 = vmatpush1.msra.mxu0 0.0
        %4176 = vmatprep.subr.mxu0 0.0
        %4177 = vmatpush1.msra.mxu0 0.0
        %4178 = vmatprep.subr.mxu0 0.0
        %4179 = vmatpush1.msra.mxu0 0.0
        %4180 = vmatprep.subr.mxu0 0.0
        %4181 = vmatpush1.msra.mxu0 0.0
        %4182 = vmatprep.subr.mxu0 0.0
        %4183 = vmatpush1.msra.mxu0 0.0
        %4184 = vmatprep.subr.mxu0 0.0
        %4185 = vmatpush1.msra.mxu0 0.0
        %4186 = vmatprep.subr.mxu0 0.0
        %4187 = vmatpush1.msra.mxu0 0.0
        %4188 = vmatprep.subr.mxu0 0.0
        %4189 = vmatpush1.msra.mxu0 0.0
        %4190 = vmatprep.subr.mxu0 0.0
        %4191 = vmatpush1.msra.mxu0 0.0
        %4192 = vmatprep.subr.mxu0 0.0
        %4193 = vmatpush1.msra.mxu0 0.0
        %4194 = vmatprep.subr.mxu0 0.0
        %4195 = vmatpush1.msra.mxu0 %v4163
        %4196 = vmatprep.subr.mxu0 0.0
        %4197 = vmatpush1.msra.mxu0 %v4161
        %4198 = vmatprep.subr.mxu0 0.0
        %4199 = vmatpush2.msra.mxu0 0.0
        %4200 = vmatprep.subr.mxu0 0.0
        %4201 = vmatpush2.msra.mxu0 0.0
        %4202 = vmatprep.subr.mxu0 0.0
        %4203 = vmatpush2.msra.mxu0 0.0
        %4204 = vmatprep.subr.mxu0 0.0
        %4205 = vmatpush2.msra.mxu0 0.0
        %4206 = vmatprep.subr.mxu0 0.0
        %4207 = vmatpush2.msra.mxu0 0.0
        %4208 = vmatprep.subr.mxu0 0.0
        %4209 = vmatpush2.msra.mxu0 0.0
        %4210 = vmatprep.subr.mxu0 0.0
        %4211 = vmatpush2.msra.mxu0 0.0
        %4212 = vmatprep.subr.mxu0 0.0
        %4213 = vmatpush2.msra.mxu0 0.0
        %4214 = vmatprep.subr.mxu0 0.0
        %4215 = vmatpush2.msra.mxu0 0.0
        %4216 = vmatprep.subr.mxu0 0.0
        %4217 = vmatpush2.msra.mxu0 0.0
        %4218 = vmatprep.subr.mxu0 0.0
        %4219 = vmatpush2.msra.mxu0 0.0
        %4220 = vmatprep.subr.mxu0 0.0
        %4221 = vmatpush2.msra.mxu0 0.0
        %4222 = vmatprep.subr.mxu0 0.0
        %4223 = vmatpush2.msra.mxu0 0.0
        %4224 = vmatprep.subr.mxu0 0.0
        %4225 = vmatpush2.msra.mxu0 0.0
        %4226 = vmatprep.subr.mxu0 0.0
        %4227 = vmatpush2.msra.mxu0 0.0
        %4228 = vmatprep.subr.mxu0 0.0
        %4229 = vmatpush2.msra.mxu0 0.0
        %4230 = vmatprep.mubr.f32.mxu0 0.0
        %4231 = vmatmul.mubr.f32.gmra.mxu0 %v2789
        %v4232 = vpop.f32.mrf.mxu0
        %v4233 = vadd.f32 0.0, %v4232
        %v4234 = vpop.f32.mrf.mxu0
        %4235 = vmatprep.mubr.f32.mxu0 0.0
        %4236 = vmatmul.mubr.f32.gmra.mxu0 %v2791
        %v4237 = vpop.f32.mrf.mxu0
        %v4238 = vadd.f32 0.0, %v4237
        %v4239 = vpop.f32.mrf.mxu0
        %4240 = vmatprep.mubr.f32.mxu0 0.0
        %4241 = vmatmul.mubr.f32.gmra.mxu0 %v2793
        %v4242 = vpop.f32.mrf.mxu0
        %v4243 = vadd.f32 0.0, %v4242
        %v4244 = vpop.f32.mrf.mxu0
        %4245 = vmatprep.mubr.f32.mxu0 0.0
        %4246 = vmatmul.mubr.f32.gmra.mxu0 %v2795
        %v4247 = vpop.f32.mrf.mxu0
        %v4248 = vadd.f32 0.0, %v4247
        %v4249 = vpop.f32.mrf.mxu0
        %4250 = vmatprep.mubr.f32.mxu0 0.0
        %4251 = vmatmul.mubr.f32.gmra.mxu0 %v2797
        %v4252 = vpop.f32.mrf.mxu0
        %v4253 = vadd.f32 0.0, %v4252
        %v4254 = vpop.f32.mrf.mxu0
        %4255 = vmatprep.mubr.f32.mxu0 0.0
        %4256 = vmatmul.mubr.f32.gmra.mxu0 %v2799
        %v4257 = vpop.f32.mrf.mxu0
        %v4258 = vadd.f32 0.0, %v4257
        %v4259 = vpop.f32.mrf.mxu0
        %4260 = vmatprep.mubr.f32.mxu0 0.0
        %4261 = vmatmul.mubr.f32.gmra.mxu0 %v2801
        %v4262 = vpop.f32.mrf.mxu0
        %v4263 = vadd.f32 0.0, %v4262
        %v4264 = vpop.f32.mrf.mxu0
        %4265 = vmatprep.mubr.f32.mxu0 0.0
        %4266 = vmatmul.mubr.f32.gmra.mxu0 %v2803
        %v4267 = vpop.f32.mrf.mxu0
        %v4268 = vadd.f32 0.0, %v4267
        %v4269 = vpop.f32.mrf.mxu0
        %4270 = vmatprep.mubr.f32.mxu0 0.0
        %4271 = vmatmul.mubr.f32.gmra.mxu0 %v2805
        %v4272 = vpop.f32.mrf.mxu0
        %v4273 = vadd.f32 0.0, %v4272
        %v4274 = vpop.f32.mrf.mxu0
        %4275 = vmatprep.mubr.f32.mxu0 0.0
        %4276 = vmatmul.mubr.f32.gmra.mxu0 %v2807
        %v4277 = vpop.f32.mrf.mxu0
        %v4278 = vadd.f32 0.0, %v4277
        %v4279 = vpop.f32.mrf.mxu0
        %4280 = vmatprep.mubr.f32.mxu0 0.0
        %4281 = vmatmul.mubr.f32.gmra.mxu0 %v2809
        %v4282 = vpop.f32.mrf.mxu0
        %v4283 = vadd.f32 0.0, %v4282
        %v4284 = vpop.f32.mrf.mxu0
        %4285 = vmatprep.mubr.f32.mxu0 0.0
        %4286 = vmatmul.mubr.f32.gmra.mxu0 %v2811
        %v4287 = vpop.f32.mrf.mxu0
        %v4288 = vadd.f32 0.0, %v4287
        %v4289 = vpop.f32.mrf.mxu0
        %4290 = vmatprep.mubr.f32.mxu0 0.0
        %4291 = vmatmul.mubr.f32.gmra.mxu0 %v2813
        %v4292 = vpop.f32.mrf.mxu0
        %v4293 = vadd.f32 0.0, %v4292
        %v4294 = vpop.f32.mrf.mxu0
        %4295 = vmatprep.mubr.f32.mxu0 0.0
        %4296 = vmatmul.mubr.f32.gmra.mxu0 %v2815
        %v4297 = vpop.f32.mrf.mxu0
        %v4298 = vadd.f32 0.0, %v4297
        %v4299 = vpop.f32.mrf.mxu0
        %4300 = vmatprep.mubr.f32.mxu0 0.0
        %4301 = vmatmul.mubr.f32.gmra.mxu0 %v2817
        %v4302 = vpop.f32.mrf.mxu0
        %v4303 = vadd.f32 0.0, %v4302
        %v4304 = vpop.f32.mrf.mxu0
        %4305 = vmatprep.mubr.f32.mxu0 0.0
        %4306 = vmatmul.mubr.f32.gmra.mxu0 %v2819
        %v4307 = vpop.f32.mrf.mxu0
        %v4308 = vadd.f32 0.0, %v4307
        %v4309 = vpop.f32.mrf.mxu0
        %4310 = vdwg.mxu0
        %4311 = vset.pattern.permute.xlu0 1
        %4312 = vperm.xlu0 %4311, %v3410
        %v4313 = vpop.permute.xlu0 %4312
        %4315 = vset.pattern.permute.xlu0 1
        %4316 = vperm.xlu0 %4315, %v3412
        %v4317 = vpop.permute.xlu0 %4316
        %4319 = vset.pattern.permute.xlu0 1
        %4320 = vperm.xlu0 %4319, %v3414
        %v4321 = vpop.permute.xlu0 %4320
        %4323 = vset.pattern.permute.xlu0 1
        %4324 = vperm.xlu0 %4323, %v3416
        %v4325 = vpop.permute.xlu0 %4324
        %4327 = vset.pattern.permute.xlu0 1
        %4328 = vperm.xlu0 %4327, %v3418
        %v4329 = vpop.permute.xlu0 %4328
        %4331 = vset.pattern.permute.xlu0 1
        %4332 = vperm.xlu0 %4331, %v3420
        %v4333 = vpop.permute.xlu0 %4332
        %4335 = vset.pattern.permute.xlu0 1
        %4336 = vperm.xlu0 %4335, %v3422
        %v4337 = vpop.permute.xlu0 %4336
        %4339 = vset.pattern.permute.xlu0 1
        %4340 = vperm.xlu0 %4339, %v3424
        %v4341 = vpop.permute.xlu0 %4340
        %4343 = vset.pattern.permute.xlu0 1
        %4344 = vperm.xlu0 %4343, %v3426
        %v4345 = vpop.permute.xlu0 %4344
        %4347 = vset.pattern.permute.xlu0 1
        %4348 = vperm.xlu0 %4347, %v3428
        %v4349 = vpop.permute.xlu0 %4348
        %4351 = vset.pattern.permute.xlu0 1
        %4352 = vperm.xlu0 %4351, %v3430
        %v4353 = vpop.permute.xlu0 %4352
        %4355 = vset.pattern.permute.xlu0 1
        %4356 = vperm.xlu0 %4355, %v3432
        %v4357 = vpop.permute.xlu0 %4356
        %4359 = vset.pattern.permute.xlu0 1
        %4360 = vperm.xlu0 %4359, %v3434
        %v4361 = vpop.permute.xlu0 %4360
        %4363 = vset.pattern.permute.xlu0 1
        %4364 = vperm.xlu0 %4363, %v3436
        %v4365 = vpop.permute.xlu0 %4364
        %4367 = vset.pattern.permute.xlu0 1
        %4368 = vperm.xlu0 %4367, %v3438
        %v4369 = vpop.permute.xlu0 %4368
        %4371 = vset.pattern.permute.xlu0 1
        %4372 = vperm.xlu0 %4371, %v3440
        %v4373 = vpop.permute.xlu0 %4372
        %v4375 = vmul.f32 %v4233, %v4313
        %v4376 = vmul.f32 %v4238, %v4317
        %v4377 = vmul.f32 %v4243, %v4321
        %v4378 = vmul.f32 %v4248, %v4325
        %v4379 = vmul.f32 %v4253, %v4329
        %v4380 = vmul.f32 %v4258, %v4333
        %v4381 = vmul.f32 %v4263, %v4337
        %v4382 = vmul.f32 %v4268, %v4341
        %v4383 = vmul.f32 %v4273, %v4345
        %v4384 = vmul.f32 %v4278, %v4349
        %v4385 = vmul.f32 %v4283, %v4353
        %v4386 = vmul.f32 %v4288, %v4357
        %v4387 = vmul.f32 %v4293, %v4361
        %v4388 = vmul.f32 %v4298, %v4365
        %v4389 = vmul.f32 %v4303, %v4369
        %v4390 = vmul.f32 %v4308, %v4373
        %4391 = vrot.lane.b32.xlu0 %v3557, 96
        %v4392 = vpop.permute.xlu0 %4391
        %4393 = vrot.lane.b32.xlu0 %v3559, 96
        %v4394 = vpop.permute.xlu0 %4393
        %4395 = vrot.lane.b32.xlu0 %v3561, 96
        %v4396 = vpop.permute.xlu0 %4395
        %4397 = vrot.lane.b32.xlu0 %v3563, 96
        %v4398 = vpop.permute.xlu0 %4397
        %4399 = vrot.lane.b32.xlu0 %v3565, 96
        %v4400 = vpop.permute.xlu0 %4399
        %4401 = vrot.lane.b32.xlu0 %v3567, 96
        %v4402 = vpop.permute.xlu0 %4401
        %4403 = vrot.lane.b32.xlu0 %v3569, 96
        %v4404 = vpop.permute.xlu0 %4403
        %4405 = vrot.lane.b32.xlu0 %v3571, 96
        %v4406 = vpop.permute.xlu0 %4405
        %4407 = vrot.lane.b32.xlu0 %v3573, 96
        %v4408 = vpop.permute.xlu0 %4407
        %4409 = vrot.lane.b32.xlu0 %v3575, 96
        %v4410 = vpop.permute.xlu0 %4409
        %4411 = vrot.lane.b32.xlu0 %v3577, 96
        %v4412 = vpop.permute.xlu0 %4411
        %4413 = vrot.lane.b32.xlu0 %v3579, 96
        %v4414 = vpop.permute.xlu0 %4413
        %4415 = vrot.lane.b32.xlu0 %v3581, 96
        %v4416 = vpop.permute.xlu0 %4415
        %4417 = vrot.lane.b32.xlu0 %v3583, 96
        %v4418 = vpop.permute.xlu0 %4417
        %4419 = vrot.lane.b32.xlu0 %v3585, 96
        %v4420 = vpop.permute.xlu0 %4419
        %4421 = vrot.lane.b32.xlu0 %v3587, 96
        %v4422 = vpop.permute.xlu0 %4421
        %4439 = vmatprep.subr.mxu0 0.0
        %4440 = vmatpush1.msra.mxu0 %v4422
        %4441 = vmatprep.subr.mxu0 0.0
        %4442 = vmatpush1.msra.mxu0 %v4420
        %4443 = vmatprep.subr.mxu0 0.0
        %4444 = vmatpush1.msra.mxu0 %v4418
        %4445 = vmatprep.subr.mxu0 0.0
        %4446 = vmatpush1.msra.mxu0 %v4416
        %4447 = vmatprep.subr.mxu0 0.0
        %4448 = vmatpush1.msra.mxu0 %v4414
        %4449 = vmatprep.subr.mxu0 0.0
        %4450 = vmatpush1.msra.mxu0 %v4412
        %4451 = vmatprep.subr.mxu0 0.0
        %4452 = vmatpush1.msra.mxu0 %v4410
        %4453 = vmatprep.subr.mxu0 0.0
        %4454 = vmatpush1.msra.mxu0 %v4408
        %4455 = vmatprep.subr.mxu0 0.0
        %4456 = vmatpush1.msra.mxu0 %v4406
        %4457 = vmatprep.subr.mxu0 0.0
        %4458 = vmatpush1.msra.mxu0 %v4404
        %4459 = vmatprep.subr.mxu0 0.0
        %4460 = vmatpush1.msra.mxu0 %v4402
        %4461 = vmatprep.subr.mxu0 0.0
        %4462 = vmatpush1.msra.mxu0 %v4400
        %4463 = vmatprep.subr.mxu0 0.0
        %4464 = vmatpush1.msra.mxu0 %v4398
        %4465 = vmatprep.subr.mxu0 0.0
        %4466 = vmatpush1.msra.mxu0 %v4396
        %4467 = vmatprep.subr.mxu0 0.0
        %4468 = vmatpush1.msra.mxu0 %v4394
        %4469 = vmatprep.subr.mxu0 0.0
        %4470 = vmatpush1.msra.mxu0 %v4392
        %4471 = vmatprep.subr.mxu0 0.0
        %4472 = vmatpush2.msra.mxu0 0.0
        %4473 = vmatprep.subr.mxu0 0.0
        %4474 = vmatpush2.msra.mxu0 0.0
        %4475 = vmatprep.subr.mxu0 0.0
        %4476 = vmatpush2.msra.mxu0 0.0
        %4477 = vmatprep.subr.mxu0 0.0
        %4478 = vmatpush2.msra.mxu0 0.0
        %4479 = vmatprep.subr.mxu0 0.0
        %4480 = vmatpush2.msra.mxu0 0.0
        %4481 = vmatprep.subr.mxu0 0.0
        %4482 = vmatpush2.msra.mxu0 0.0
        %4483 = vmatprep.subr.mxu0 0.0
        %4484 = vmatpush2.msra.mxu0 0.0
        %4485 = vmatprep.subr.mxu0 0.0
        %4486 = vmatpush2.msra.mxu0 0.0
        %4487 = vmatprep.subr.mxu0 0.0
        %4488 = vmatpush2.msra.mxu0 0.0
        %4489 = vmatprep.subr.mxu0 0.0
        %4490 = vmatpush2.msra.mxu0 0.0
        %4491 = vmatprep.subr.mxu0 0.0
        %4492 = vmatpush2.msra.mxu0 0.0
        %4493 = vmatprep.subr.mxu0 0.0
        %4494 = vmatpush2.msra.mxu0 0.0
        %4495 = vmatprep.subr.mxu0 0.0
        %4496 = vmatpush2.msra.mxu0 0.0
        %4497 = vmatprep.subr.mxu0 0.0
        %4498 = vmatpush2.msra.mxu0 0.0
        %4499 = vmatprep.subr.mxu0 0.0
        %4500 = vmatpush2.msra.mxu0 0.0
        %4501 = vmatprep.subr.mxu0 0.0
        %4502 = vmatpush2.msra.mxu0 0.0
        %4503 = vmatprep.mubr.f32.mxu0 0.0
        %4504 = vmatmul.mubr.f32.gmra.mxu0 %v4140
        %v4505 = vpop.f32.mrf.mxu0
        %v4506 = vadd.f32 %v4375, %v4505
        %v4507 = vpop.f32.mrf.mxu0
        %4508 = vmatprep.mubr.f32.mxu0 0.0
        %4509 = vmatmul.mubr.f32.gmra.mxu0 %v4141
        %v4510 = vpop.f32.mrf.mxu0
        %v4511 = vadd.f32 %v4376, %v4510
        %v4512 = vpop.f32.mrf.mxu0
        %4513 = vmatprep.mubr.f32.mxu0 0.0
        %4514 = vmatmul.mubr.f32.gmra.mxu0 %v4142
        %v4515 = vpop.f32.mrf.mxu0
        %v4516 = vadd.f32 %v4377, %v4515
        %v4517 = vpop.f32.mrf.mxu0
        %4518 = vmatprep.mubr.f32.mxu0 0.0
        %4519 = vmatmul.mubr.f32.gmra.mxu0 %v4143
        %v4520 = vpop.f32.mrf.mxu0
        %v4521 = vadd.f32 %v4378, %v4520
        %v4522 = vpop.f32.mrf.mxu0
        %4523 = vmatprep.mubr.f32.mxu0 0.0
        %4524 = vmatmul.mubr.f32.gmra.mxu0 %v4144
        %v4525 = vpop.f32.mrf.mxu0
        %v4526 = vadd.f32 %v4379, %v4525
        %v4527 = vpop.f32.mrf.mxu0
        %4528 = vmatprep.mubr.f32.mxu0 0.0
        %4529 = vmatmul.mubr.f32.gmra.mxu0 %v4145
        %v4530 = vpop.f32.mrf.mxu0
        %v4531 = vadd.f32 %v4380, %v4530
        %v4532 = vpop.f32.mrf.mxu0
        %4533 = vmatprep.mubr.f32.mxu0 0.0
        %4534 = vmatmul.mubr.f32.gmra.mxu0 %v4146
        %v4535 = vpop.f32.mrf.mxu0
        %v4536 = vadd.f32 %v4381, %v4535
        %v4537 = vpop.f32.mrf.mxu0
        %4538 = vmatprep.mubr.f32.mxu0 0.0
        %4539 = vmatmul.mubr.f32.gmra.mxu0 %v4147
        %v4540 = vpop.f32.mrf.mxu0
        %v4541 = vadd.f32 %v4382, %v4540
        %v4542 = vpop.f32.mrf.mxu0
        %4543 = vmatprep.mubr.f32.mxu0 0.0
        %4544 = vmatmul.mubr.f32.gmra.mxu0 %v4148
        %v4545 = vpop.f32.mrf.mxu0
        %v4546 = vadd.f32 %v4383, %v4545
        %v4547 = vpop.f32.mrf.mxu0
        %4548 = vmatprep.mubr.f32.mxu0 0.0
        %4549 = vmatmul.mubr.f32.gmra.mxu0 %v4149
        %v4550 = vpop.f32.mrf.mxu0
        %v4551 = vadd.f32 %v4384, %v4550
        %v4552 = vpop.f32.mrf.mxu0
        %4553 = vmatprep.mubr.f32.mxu0 0.0
        %4554 = vmatmul.mubr.f32.gmra.mxu0 %v4150
        %v4555 = vpop.f32.mrf.mxu0
        %v4556 = vadd.f32 %v4385, %v4555
        %v4557 = vpop.f32.mrf.mxu0
        %4558 = vmatprep.mubr.f32.mxu0 0.0
        %4559 = vmatmul.mubr.f32.gmra.mxu0 %v4151
        %v4560 = vpop.f32.mrf.mxu0
        %v4561 = vadd.f32 %v4386, %v4560
        %v4562 = vpop.f32.mrf.mxu0
        %4563 = vmatprep.mubr.f32.mxu0 0.0
        %4564 = vmatmul.mubr.f32.gmra.mxu0 %v4152
        %v4565 = vpop.f32.mrf.mxu0
        %v4566 = vadd.f32 %v4387, %v4565
        %v4567 = vpop.f32.mrf.mxu0
        %4568 = vmatprep.mubr.f32.mxu0 0.0
        %4569 = vmatmul.mubr.f32.gmra.mxu0 %v4153
        %v4570 = vpop.f32.mrf.mxu0
        %v4571 = vadd.f32 %v4388, %v4570
        %v4572 = vpop.f32.mrf.mxu0
        %4573 = vmatprep.mubr.f32.mxu0 0.0
        %4574 = vmatmul.mubr.f32.gmra.mxu0 %v4154
        %v4575 = vpop.f32.mrf.mxu0
        %v4576 = vadd.f32 %v4389, %v4575
        %v4577 = vpop.f32.mrf.mxu0
        %4578 = vmatprep.mubr.f32.mxu0 0.0
        %4579 = vmatmul.mubr.f32.gmra.mxu0 %v4155
        %v4580 = vpop.f32.mrf.mxu0
        %v4581 = vadd.f32 %v4390, %v4580
        %v4582 = vpop.f32.mrf.mxu0
        %4583 = vdwg.mxu0
        %v4584 = vld [vmem:[%s9] sm:$0x1]
        %v4586 = vlaneseq
        %v4587 = vshrl.u32 %v4586, 7
        %v4588 = vsub.s32 0, %v4587
        %v4589 = vrot.slane %v4584, %v4588
        %4590 = vset.pattern.permute.xlu0 1
        %4591 = vperm.xlu0 %4590, %v4589
        %v4592 = vpop.permute.xlu0 %4591
        %v4594 = vmul.f32 %v4592, %v1170
        %v4595 = vmul.f32 %v4592, %v1171
        %v4596 = vmul.f32 %v4592, %v1172
        %v4597 = vmul.f32 %v4592, %v1173
        %v4598 = vmul.f32 %v4592, %v1174
        %v4599 = vmul.f32 %v4592, %v1175
        %v4600 = vmul.f32 %v4592, %v1176
        %v4601 = vmul.f32 %v4592, %v1177
        %v4602 = vmul.f32 %v4592, %v1178
        %v4603 = vmul.f32 %v4592, %v1179
        %v4604 = vmul.f32 %v4592, %v1180
        %v4605 = vmul.f32 %v4592, %v1181
        %v4606 = vmul.f32 %v4592, %v1182
        %v4607 = vmul.f32 %v4592, %v1183
        %v4608 = vmul.f32 %v4592, %v1184
        %v4609 = vmul.f32 %v4592, %v1185
        %v4610 = vmul.f32 %v4592, %v1186
        %v4628 = vrot.slane %v4594, 5
        %v4629 = vrot.slane %v4595, 5
        %v4630 = vsel %vm3554, %v4628, %v4629
        %v4631 = vrot.slane %v4596, 5
        %v4632 = vsel %vm3554, %v4629, %v4631
        %v4633 = vrot.slane %v4597, 5
        %v4634 = vsel %vm3554, %v4631, %v4633
        %v4635 = vrot.slane %v4598, 5
        %v4636 = vsel %vm3554, %v4633, %v4635
        %v4637 = vrot.slane %v4599, 5
        %v4638 = vsel %vm3554, %v4635, %v4637
        %v4639 = vrot.slane %v4600, 5
        %v4640 = vsel %vm3554, %v4637, %v4639
        %v4641 = vrot.slane %v4601, 5
        %v4642 = vsel %vm3554, %v4639, %v4641
        %v4643 = vrot.slane %v4602, 5
        %v4644 = vsel %vm3554, %v4641, %v4643
        %v4645 = vrot.slane %v4603, 5
        %v4646 = vsel %vm3554, %v4643, %v4645
        %v4647 = vrot.slane %v4604, 5
        %v4648 = vsel %vm3554, %v4645, %v4647
        %v4649 = vrot.slane %v4605, 5
        %v4650 = vsel %vm3554, %v4647, %v4649
        %v4651 = vrot.slane %v4606, 5
        %v4652 = vsel %vm3554, %v4649, %v4651
        %v4653 = vrot.slane %v4607, 5
        %v4654 = vsel %vm3554, %v4651, %v4653
        %v4655 = vrot.slane %v4608, 5
        %v4656 = vsel %vm3554, %v4653, %v4655
        %v4657 = vrot.slane %v4609, 5
        %v4658 = vsel %vm3554, %v4655, %v4657
        %v4659 = vrot.slane %v4610, 5
        %v4660 = vsel %vm3554, %v4657, %v4659
        %4661 = vrot.lane.b32.xlu0 %v4630, 96
        %v4662 = vpop.permute.xlu0 %4661
        %4663 = vrot.lane.b32.xlu0 %v4632, 96
        %v4664 = vpop.permute.xlu0 %4663
        %4665 = vrot.lane.b32.xlu0 %v4634, 96
        %v4666 = vpop.permute.xlu0 %4665
        %4667 = vrot.lane.b32.xlu0 %v4636, 96
        %v4668 = vpop.permute.xlu0 %4667
        %4669 = vrot.lane.b32.xlu0 %v4638, 96
        %v4670 = vpop.permute.xlu0 %4669
        %4671 = vrot.lane.b32.xlu0 %v4640, 96
        %v4672 = vpop.permute.xlu0 %4671
        %4673 = vrot.lane.b32.xlu0 %v4642, 96
        %v4674 = vpop.permute.xlu0 %4673
        %4675 = vrot.lane.b32.xlu0 %v4644, 96
        %v4676 = vpop.permute.xlu0 %4675
        %4677 = vrot.lane.b32.xlu0 %v4646, 96
        %v4678 = vpop.permute.xlu0 %4677
        %4679 = vrot.lane.b32.xlu0 %v4648, 96
        %v4680 = vpop.permute.xlu0 %4679
        %4681 = vrot.lane.b32.xlu0 %v4650, 96
        %v4682 = vpop.permute.xlu0 %4681
        %4683 = vrot.lane.b32.xlu0 %v4652, 96
        %v4684 = vpop.permute.xlu0 %4683
        %4685 = vrot.lane.b32.xlu0 %v4654, 96
        %v4686 = vpop.permute.xlu0 %4685
        %4687 = vrot.lane.b32.xlu0 %v4656, 96
        %v4688 = vpop.permute.xlu0 %4687
        %4689 = vrot.lane.b32.xlu0 %v4658, 96
        %v4690 = vpop.permute.xlu0 %4689
        %4691 = vrot.lane.b32.xlu0 %v4660, 96
        %v4692 = vpop.permute.xlu0 %4691
        %v4709 = vadd.f32 %v4506, %v4662
        %v4710 = vadd.f32 %v4511, %v4664
        %v4711 = vadd.f32 %v4516, %v4666
        %v4712 = vadd.f32 %v4521, %v4668
        %v4713 = vadd.f32 %v4526, %v4670
        %v4714 = vadd.f32 %v4531, %v4672
        %v4715 = vadd.f32 %v4536, %v4674
        %v4716 = vadd.f32 %v4541, %v4676
        %v4717 = vadd.f32 %v4546, %v4678
        %v4718 = vadd.f32 %v4551, %v4680
        %v4719 = vadd.f32 %v4556, %v4682
        %v4720 = vadd.f32 %v4561, %v4684
        %v4721 = vadd.f32 %v4566, %v4686
        %v4722 = vadd.f32 %v4571, %v4688
        %v4723 = vadd.f32 %v4576, %v4690
        %v4724 = vadd.f32 %v4581, %v4692
        %4741 = vrot.lane.b32.xlu0 %v3062, 96
        %v4742 = vpop.permute.xlu0 %4741
        %4743 = vrot.lane.b32.xlu0 %v3063, 96
        %v4744 = vpop.permute.xlu0 %4743
        %4745 = vrot.lane.b32.xlu0 %v3064, 96
        %v4746 = vpop.permute.xlu0 %4745
        %4747 = vrot.lane.b32.xlu0 %v3065, 96
        %v4748 = vpop.permute.xlu0 %4747
        %4749 = vrot.lane.b32.xlu0 %v3066, 96
        %v4750 = vpop.permute.xlu0 %4749
        %4751 = vrot.lane.b32.xlu0 %v3067, 96
        %v4752 = vpop.permute.xlu0 %4751
        %4753 = vrot.lane.b32.xlu0 %v3068, 96
        %v4754 = vpop.permute.xlu0 %4753
        %4755 = vrot.lane.b32.xlu0 %v3069, 96
        %v4756 = vpop.permute.xlu0 %4755
        %4757 = vrot.lane.b32.xlu0 %v3070, 96
        %v4758 = vpop.permute.xlu0 %4757
        %4759 = vrot.lane.b32.xlu0 %v3071, 96
        %v4760 = vpop.permute.xlu0 %4759
        %4761 = vrot.lane.b32.xlu0 %v3072, 96
        %v4762 = vpop.permute.xlu0 %4761
        %4763 = vrot.lane.b32.xlu0 %v3073, 96
        %v4764 = vpop.permute.xlu0 %4763
        %4765 = vrot.lane.b32.xlu0 %v3074, 96
        %v4766 = vpop.permute.xlu0 %4765
        %4767 = vrot.lane.b32.xlu0 %v3075, 96
        %v4768 = vpop.permute.xlu0 %4767
        %4769 = vrot.lane.b32.xlu0 %v3076, 96
        %v4770 = vpop.permute.xlu0 %4769
        %4771 = vrot.lane.b32.xlu0 %v3077, 96
        %v4772 = vpop.permute.xlu0 %4771
        %v4789 = vmul.f32 %v4709, %v4742
        %v4790 = vmul.f32 %v4710, %v4744
        %v4791 = vmul.f32 %v4711, %v4746
        %v4792 = vmul.f32 %v4712, %v4748
        %v4793 = vmul.f32 %v4713, %v4750
        %v4794 = vmul.f32 %v4714, %v4752
        %v4795 = vmul.f32 %v4715, %v4754
        %v4796 = vmul.f32 %v4716, %v4756
        %v4797 = vmul.f32 %v4717, %v4758
        %v4798 = vmul.f32 %v4718, %v4760
        %v4799 = vmul.f32 %v4719, %v4762
        %v4800 = vmul.f32 %v4720, %v4764
        %v4801 = vmul.f32 %v4721, %v4766
        %v4802 = vmul.f32 %v4722, %v4768
        %v4803 = vmul.f32 %v4723, %v4770
        %v4804 = vmul.f32 %v4724, %v4772
        %v4805 = vrot.slane %v2661, 2
        %v4807 = vsub.f32 %v4050, %v4805
        %v4808 = vmul.f32 %v4807, 1.442695
        %v4809 = vpow.pop %v4808
        %v4811 = vrot.slane %v4809, 6
        %v4813 = vmul.f32 %v2693, %v4811
        %4814 = vrot.lane.b32.xlu0 %v3884, 127
        %v4815 = vpop.permute.xlu0 %4814
        %s4816 = vtos %v4815
        %v4817 = vstv %s4816
        %v4819 = vmul.f32 %v4817, %v4156
        %v4820 = vmul.f32 %v4817, %v4157
        %v4821 = vlaneseq
        %v4822 = vshrl.u32 %v4821, 7
        %v4823 = vsub.s32 1, %v4822
        %v4824 = vrot.slane %v4813, %v4823
        %v4825 = vmul.f32 %v2725, %v4824
        %v4826 = vmul.f32 %v2726, %v4824
        %4827 = vmatprep.subr.mxu0 0.0
        %4828 = vmatpush1.msra.mxu0 %v4422
        %4829 = vmatprep.subr.mxu0 0.0
        %4830 = vmatpush1.msra.mxu0 %v4420
        %4831 = vmatprep.subr.mxu0 0.0
        %4832 = vmatpush1.msra.mxu0 %v4418
        %4833 = vmatprep.subr.mxu0 0.0
        %4834 = vmatpush1.msra.mxu0 %v4416
        %4835 = vmatprep.subr.mxu0 0.0
        %4836 = vmatpush1.msra.mxu0 %v4414
        %4837 = vmatprep.subr.mxu0 0.0
        %4838 = vmatpush1.msra.mxu0 %v4412
        %4839 = vmatprep.subr.mxu0 0.0
        %4840 = vmatpush1.msra.mxu0 %v4410
        %4841 = vmatprep.subr.mxu0 0.0
        %4842 = vmatpush1.msra.mxu0 %v4408
        %4843 = vmatprep.subr.mxu0 0.0
        %4844 = vmatpush1.msra.mxu0 %v4406
        %4845 = vmatprep.subr.mxu0 0.0
        %4846 = vmatpush1.msra.mxu0 %v4404
        %4847 = vmatprep.subr.mxu0 0.0
        %4848 = vmatpush1.msra.mxu0 %v4402
        %4849 = vmatprep.subr.mxu0 0.0
        %4850 = vmatpush1.msra.mxu0 %v4400
        %4851 = vmatprep.subr.mxu0 0.0
        %4852 = vmatpush1.msra.mxu0 %v4398
        %4853 = vmatprep.subr.mxu0 0.0
        %4854 = vmatpush1.msra.mxu0 %v4396
        %4855 = vmatprep.subr.mxu0 0.0
        %4856 = vmatpush1.msra.mxu0 %v4394
        %4857 = vmatprep.subr.mxu0 0.0
        %4858 = vmatpush1.msra.mxu0 %v4392
        %4859 = vmatprep.subr.mxu0 0.0
        %4860 = vmatpush2.msra.mxu0 0.0
        %4861 = vmatprep.subr.mxu0 0.0
        %4862 = vmatpush2.msra.mxu0 0.0
        %4863 = vmatprep.subr.mxu0 0.0
        %4864 = vmatpush2.msra.mxu0 0.0
        %4865 = vmatprep.subr.mxu0 0.0
        %4866 = vmatpush2.msra.mxu0 0.0
        %4867 = vmatprep.subr.mxu0 0.0
        %4868 = vmatpush2.msra.mxu0 0.0
        %4869 = vmatprep.subr.mxu0 0.0
        %4870 = vmatpush2.msra.mxu0 0.0
        %4871 = vmatprep.subr.mxu0 0.0
        %4872 = vmatpush2.msra.mxu0 0.0
        %4873 = vmatprep.subr.mxu0 0.0
        %4874 = vmatpush2.msra.mxu0 0.0
        %4875 = vmatprep.subr.mxu0 0.0
        %4876 = vmatpush2.msra.mxu0 0.0
        %4877 = vmatprep.subr.mxu0 0.0
        %4878 = vmatpush2.msra.mxu0 0.0
        %4879 = vmatprep.subr.mxu0 0.0
        %4880 = vmatpush2.msra.mxu0 0.0
        %4881 = vmatprep.subr.mxu0 0.0
        %4882 = vmatpush2.msra.mxu0 0.0
        %4883 = vmatprep.subr.mxu0 0.0
        %4884 = vmatpush2.msra.mxu0 0.0
        %4885 = vmatprep.subr.mxu0 0.0
        %4886 = vmatpush2.msra.mxu0 0.0
        %4887 = vmatprep.subr.mxu0 0.0
        %4888 = vmatpush2.msra.mxu0 0.0
        %4889 = vmatprep.subr.mxu0 0.0
        %4890 = vmatpush2.msra.mxu0 0.0
        %4891 = vmatprep.mubr.f32.mxu0 0.0
        %4892 = vmatmul.mubr.f32.gmra.mxu0 %v4825
        %v4893 = vpop.f32.mrf.mxu0
        %v4894 = vadd.f32 0.0, %v4893
        %v4895 = vpop.f32.mrf.mxu0
        %4896 = vmatprep.mubr.f32.mxu0 0.0
        %4897 = vmatmul.mubr.f32.gmra.mxu0 %v4826
        %v4898 = vpop.f32.mrf.mxu0
        %v4899 = vadd.f32 0.0, %v4898
        %v4900 = vpop.f32.mrf.mxu0
        %4901 = vdwg.mxu0
        %4904 = vrot.lane.b32.xlu0 %v4894, 32
        %v4905 = vpop.permute.xlu0 %4904
        %4906 = vrot.lane.b32.xlu0 %v4899, 32
        %v4907 = vpop.permute.xlu0 %4906
        %v4910 = vadd.f32 %v4819, %v4905
        %v4911 = vadd.f32 %v4820, %v4907
        %vm4912 = vcmask 523520
        %4913 = vst.msk [vmem:[#allocation2] sm:$0xff] %vm4912, %v4910
        %4914 = vst.msk [vmem:[#allocation2 + $0x8] sm:$0xff] %vm4912, %v4911
        %v4915 = vpack.c.bf16 %v4790, %v4789
        %v4916 = vpack.c.bf16 %v4792, %v4791
        %v4917 = vpack.c.bf16 %v4794, %v4793
        %v4918 = vpack.c.bf16 %v4796, %v4795
        %v4919 = vpack.c.bf16 %v4798, %v4797
        %v4920 = vpack.c.bf16 %v4800, %v4799
        %v4921 = vpack.c.bf16 %v4802, %v4801
        %v4922 = vpack.c.bf16 %v4804, %v4803
        %v4923 = vld [vmem:[%s10 + $0x10] sm:$0xf]
        %v4924 = vld [vmem:[%s10 + $0x14] sm:$0xf]
        %v4925 = vld [vmem:[%s10 + $0x18] sm:$0xf]
        %v4926 = vld [vmem:[%s10 + $0x1c] sm:$0xf]
        %v4931 = vunpack.c.l.b16 %v4923
        %v4932 = vunpack.c.l.b16 %v4924
        %v4933 = vunpack.c.l.b16 %v4925
        %v4934 = vunpack.c.l.b16 %v4926
        %v4935 = vpack.c.b16 %v4932, %v4931
        %v4936 = vpack.c.b16 %v4934, %v4933
        %v4940 = vsel %vm3973, %v4915, 0
        %v4943 = vsel %vm3973, %v4916, 0
        %v4946 = vsel %vm3973, %v4917, 0
        %v4949 = vsel %vm3973, %v4918, 0
        %v4952 = vsel %vm3973, %v4919, 0
        %v4955 = vsel %vm3973, %v4920, 0
        %v4958 = vsel %vm3973, %v4921, 0
        %v4961 = vsel %vm3973, %v4922, 0
        %4963 = vmatprep.subr.bf16.mxu0 0
        %4964 = vmatpush1.bf16.msra.mxu0 0
        %4965 = vmatprep.subr.bf16.mxu0 0
        %4966 = vmatpush1.bf16.msra.mxu0 0
        %4967 = vmatprep.subr.bf16.mxu0 0
        %4968 = vmatpush1.bf16.msra.mxu0 0
        %4969 = vmatprep.subr.bf16.mxu0 0
        %4970 = vmatpush1.bf16.msra.mxu0 0
        %4971 = vmatprep.subr.bf16.mxu0 0
        %4972 = vmatpush1.bf16.msra.mxu0 0
        %4973 = vmatprep.subr.bf16.mxu0 0
        %4974 = vmatpush1.bf16.msra.mxu0 0
        %4975 = vmatprep.subr.bf16.mxu0 0
        %4976 = vmatpush1.bf16.msra.mxu0 %v4936
        %4977 = vmatprep.subr.bf16.mxu0 0
        %4978 = vmatpush1.bf16.msra.mxu0 %v4935
        %4979 = vmatprep.subr.bf16.mxu0 0
        %4980 = vmatpush2.bf16.msra.mxu0 0
        %4981 = vmatprep.subr.bf16.mxu0 0
        %4982 = vmatpush2.bf16.msra.mxu0 0
        %4983 = vmatprep.subr.bf16.mxu0 0
        %4984 = vmatpush2.bf16.msra.mxu0 0
        %4985 = vmatprep.subr.bf16.mxu0 0
        %4986 = vmatpush2.bf16.msra.mxu0 0
        %4987 = vmatprep.subr.bf16.mxu0 0
        %4988 = vmatpush2.bf16.msra.mxu0 0
        %4989 = vmatprep.subr.bf16.mxu0 0
        %4990 = vmatpush2.bf16.msra.mxu0 0
        %4991 = vmatprep.subr.bf16.mxu0 0
        %4992 = vmatpush2.bf16.msra.mxu0 0
        %4993 = vmatprep.subr.bf16.mxu0 0
        %4994 = vmatpush2.bf16.msra.mxu0 0
        %4995 = vmatprep.mubr.bf16.mxu0 0
        %4996 = vmatmul.mubr.bf16.gmra.mxu0 %v4940
        %v4997 = vpop.f32.mrf.mxu0
        %v4998 = vadd.f32 0.0, %v4997
        %v4999 = vpop.f32.mrf.mxu0
        %v5000 = vpop.f32.mrf.mxu0
        %v5001 = vadd.f32 0.0, %v5000
        %v5002 = vpop.f32.mrf.mxu0
        %5003 = vmatprep.mubr.bf16.mxu0 0
        %5004 = vmatmul.mubr.bf16.gmra.mxu0 %v4943
        %v5005 = vpop.f32.mrf.mxu0
        %v5006 = vadd.f32 0.0, %v5005
        %v5007 = vpop.f32.mrf.mxu0
        %v5008 = vpop.f32.mrf.mxu0
        %v5009 = vadd.f32 0.0, %v5008
        %v5010 = vpop.f32.mrf.mxu0
        %5011 = vmatprep.mubr.bf16.mxu0 0
        %5012 = vmatmul.mubr.bf16.gmra.mxu0 %v4946
        %v5013 = vpop.f32.mrf.mxu0
        %v5014 = vadd.f32 0.0, %v5013
        %v5015 = vpop.f32.mrf.mxu0
        %v5016 = vpop.f32.mrf.mxu0
        %v5017 = vadd.f32 0.0, %v5016
        %v5018 = vpop.f32.mrf.mxu0
        %5019 = vmatprep.mubr.bf16.mxu0 0
        %5020 = vmatmul.mubr.bf16.gmra.mxu0 %v4949
        %v5021 = vpop.f32.mrf.mxu0
        %v5022 = vadd.f32 0.0, %v5021
        %v5023 = vpop.f32.mrf.mxu0
        %v5024 = vpop.f32.mrf.mxu0
        %v5025 = vadd.f32 0.0, %v5024
        %v5026 = vpop.f32.mrf.mxu0
        %5027 = vmatprep.mubr.bf16.mxu0 0
        %5028 = vmatmul.mubr.bf16.gmra.mxu0 %v4952
        %v5029 = vpop.f32.mrf.mxu0
        %v5030 = vadd.f32 0.0, %v5029
        %v5031 = vpop.f32.mrf.mxu0
        %v5032 = vpop.f32.mrf.mxu0
        %v5033 = vadd.f32 0.0, %v5032
        %v5034 = vpop.f32.mrf.mxu0
        %5035 = vmatprep.mubr.bf16.mxu0 0
        %5036 = vmatmul.mubr.bf16.gmra.mxu0 %v4955
        %v5037 = vpop.f32.mrf.mxu0
        %v5038 = vadd.f32 0.0, %v5037
        %v5039 = vpop.f32.mrf.mxu0
        %v5040 = vpop.f32.mrf.mxu0
        %v5041 = vadd.f32 0.0, %v5040
        %v5042 = vpop.f32.mrf.mxu0
        %5043 = vmatprep.mubr.bf16.mxu0 0
        %5044 = vmatmul.mubr.bf16.gmra.mxu0 %v4958
        %v5045 = vpop.f32.mrf.mxu0
        %v5046 = vadd.f32 0.0, %v5045
        %v5047 = vpop.f32.mrf.mxu0
        %v5048 = vpop.f32.mrf.mxu0
        %v5049 = vadd.f32 0.0, %v5048
        %v5050 = vpop.f32.mrf.mxu0
        %5051 = vmatprep.mubr.bf16.mxu0 0
        %5052 = vmatmul.mubr.bf16.gmra.mxu0 %v4961
        %v5053 = vpop.f32.mrf.mxu0
        %v5054 = vadd.f32 0.0, %v5053
        %v5055 = vpop.f32.mrf.mxu0
        %v5056 = vpop.f32.mrf.mxu0
        %v5057 = vadd.f32 0.0, %v5056
        %v5058 = vpop.f32.mrf.mxu0
        %5059 = vdwg.mxu0
        %v5064 = vunpack.c.l.b16 %v3984
        %v5065 = vunpack.c.l.b16 %v3985
        %v5066 = vunpack.c.l.b16 %v3986
        %v5067 = vunpack.c.l.b16 %v3987
        %v5068 = vpack.c.b16 %v5065, %v5064
        %v5069 = vpack.c.b16 %v5067, %v5066
        %v5073 = vsel %vm3973, %v3976, 0
        %v5076 = vsel %vm3973, %v3977, 0
        %v5079 = vsel %vm3973, %v3978, 0
        %v5082 = vsel %vm3973, %v3979, 0
        %v5085 = vsel %vm3973, %v3980, 0
        %v5088 = vsel %vm3973, %v3981, 0
        %v5091 = vsel %vm3973, %v3982, 0
        %v5094 = vsel %vm3973, %v3983, 0
        %5096 = vmatprep.subr.bf16.mxu0 0
        %5097 = vmatpush1.bf16.msra.mxu0 0
        %5098 = vmatprep.subr.bf16.mxu0 0
        %5099 = vmatpush1.bf16.msra.mxu0 0
        %5100 = vmatprep.subr.bf16.mxu0 0
        %5101 = vmatpush1.bf16.msra.mxu0 0
        %5102 = vmatprep.subr.bf16.mxu0 0
        %5103 = vmatpush1.bf16.msra.mxu0 0
        %5104 = vmatprep.subr.bf16.mxu0 0
        %5105 = vmatpush1.bf16.msra.mxu0 0
        %5106 = vmatprep.subr.bf16.mxu0 0
        %5107 = vmatpush1.bf16.msra.mxu0 0
        %5108 = vmatprep.subr.bf16.mxu0 0
        %5109 = vmatpush1.bf16.msra.mxu0 %v5069
        %5110 = vmatprep.subr.bf16.mxu0 0
        %5111 = vmatpush1.bf16.msra.mxu0 %v5068
        %5112 = vmatprep.subr.bf16.mxu0 0
        %5113 = vmatpush2.bf16.msra.mxu0 0
        %5114 = vmatprep.subr.bf16.mxu0 0
        %5115 = vmatpush2.bf16.msra.mxu0 0
        %5116 = vmatprep.subr.bf16.mxu0 0
        %5117 = vmatpush2.bf16.msra.mxu0 0
        %5118 = vmatprep.subr.bf16.mxu0 0
        %5119 = vmatpush2.bf16.msra.mxu0 0
        %5120 = vmatprep.subr.bf16.mxu0 0
        %5121 = vmatpush2.bf16.msra.mxu0 0
        %5122 = vmatprep.subr.bf16.mxu0 0
        %5123 = vmatpush2.bf16.msra.mxu0 0
        %5124 = vmatprep.subr.bf16.mxu0 0
        %5125 = vmatpush2.bf16.msra.mxu0 0
        %5126 = vmatprep.subr.bf16.mxu0 0
        %5127 = vmatpush2.bf16.msra.mxu0 0
        %5128 = vmatprep.mubr.bf16.mxu0 0
        %5129 = vmatmul.mubr.bf16.gmra.mxu0 %v5073
        %v5130 = vpop.f32.mrf.mxu0
        %v5131 = vadd.f32 %v4998, %v5130
        %v5132 = vpop.f32.mrf.mxu0
        %v5133 = vpop.f32.mrf.mxu0
        %v5134 = vadd.f32 %v5001, %v5133
        %v5135 = vpop.f32.mrf.mxu0
        %5136 = vmatprep.mubr.bf16.mxu0 0
        %5137 = vmatmul.mubr.bf16.gmra.mxu0 %v5076
        %v5138 = vpop.f32.mrf.mxu0
        %v5139 = vadd.f32 %v5006, %v5138
        %v5140 = vpop.f32.mrf.mxu0
        %v5141 = vpop.f32.mrf.mxu0
        %v5142 = vadd.f32 %v5009, %v5141
        %v5143 = vpop.f32.mrf.mxu0
        %5144 = vmatprep.mubr.bf16.mxu0 0
        %5145 = vmatmul.mubr.bf16.gmra.mxu0 %v5079
        %v5146 = vpop.f32.mrf.mxu0
        %v5147 = vadd.f32 %v5014, %v5146
        %v5148 = vpop.f32.mrf.mxu0
        %v5149 = vpop.f32.mrf.mxu0
        %v5150 = vadd.f32 %v5017, %v5149
        %v5151 = vpop.f32.mrf.mxu0
        %5152 = vmatprep.mubr.bf16.mxu0 0
        %5153 = vmatmul.mubr.bf16.gmra.mxu0 %v5082
        %v5154 = vpop.f32.mrf.mxu0
        %v5155 = vadd.f32 %v5022, %v5154
        %v5156 = vpop.f32.mrf.mxu0
        %v5157 = vpop.f32.mrf.mxu0
        %v5158 = vadd.f32 %v5025, %v5157
        %v5159 = vpop.f32.mrf.mxu0
        %5160 = vmatprep.mubr.bf16.mxu0 0
        %5161 = vmatmul.mubr.bf16.gmra.mxu0 %v5085
        %v5162 = vpop.f32.mrf.mxu0
        %v5163 = vadd.f32 %v5030, %v5162
        %v5164 = vpop.f32.mrf.mxu0
        %v5165 = vpop.f32.mrf.mxu0
        %v5166 = vadd.f32 %v5033, %v5165
        %v5167 = vpop.f32.mrf.mxu0
        %5168 = vmatprep.mubr.bf16.mxu0 0
        %5169 = vmatmul.mubr.bf16.gmra.mxu0 %v5088
        %v5170 = vpop.f32.mrf.mxu0
        %v5171 = vadd.f32 %v5038, %v5170
        %v5172 = vpop.f32.mrf.mxu0
        %v5173 = vpop.f32.mrf.mxu0
        %v5174 = vadd.f32 %v5041, %v5173
        %v5175 = vpop.f32.mrf.mxu0
        %5176 = vmatprep.mubr.bf16.mxu0 0
        %5177 = vmatmul.mubr.bf16.gmra.mxu0 %v5091
        %v5178 = vpop.f32.mrf.mxu0
        %v5179 = vadd.f32 %v5046, %v5178
        %v5180 = vpop.f32.mrf.mxu0
        %v5181 = vpop.f32.mrf.mxu0
        %v5182 = vadd.f32 %v5049, %v5181
        %v5183 = vpop.f32.mrf.mxu0
        %5184 = vmatprep.mubr.bf16.mxu0 0
        %5185 = vmatmul.mubr.bf16.gmra.mxu0 %v5094
        %v5186 = vpop.f32.mrf.mxu0
        %v5187 = vadd.f32 %v5054, %v5186
        %v5188 = vpop.f32.mrf.mxu0
        %v5189 = vpop.f32.mrf.mxu0
        %v5190 = vadd.f32 %v5057, %v5189
        %v5191 = vpop.f32.mrf.mxu0
        %5192 = vdwg.mxu0
        %5193 = vset.pattern.permute.xlu0 2
        %5194 = vperm.xlu0 %5193, %v2567
        %v5195 = vpop.permute.xlu0 %5194
        %5197 = vset.pattern.permute.xlu0 2
        %5198 = vperm.xlu0 %5197, %v2572
        %v5199 = vpop.permute.xlu0 %5198
        %5201 = vset.pattern.permute.xlu0 2
        %5202 = vperm.xlu0 %5201, %v2577
        %v5203 = vpop.permute.xlu0 %5202
        %5205 = vset.pattern.permute.xlu0 2
        %5206 = vperm.xlu0 %5205, %v2582
        %v5207 = vpop.permute.xlu0 %5206
        %5209 = vset.pattern.permute.xlu0 2
        %5210 = vperm.xlu0 %5209, %v2587
        %v5211 = vpop.permute.xlu0 %5210
        %5213 = vset.pattern.permute.xlu0 2
        %5214 = vperm.xlu0 %5213, %v2592
        %v5215 = vpop.permute.xlu0 %5214
        %5217 = vset.pattern.permute.xlu0 2
        %5218 = vperm.xlu0 %5217, %v2597
        %v5219 = vpop.permute.xlu0 %5218
        %5221 = vset.pattern.permute.xlu0 2
        %5222 = vperm.xlu0 %5221, %v2602
        %v5223 = vpop.permute.xlu0 %5222
        %5225 = vset.pattern.permute.xlu0 2
        %5226 = vperm.xlu0 %5225, %v2607
        %v5227 = vpop.permute.xlu0 %5226
        %5229 = vset.pattern.permute.xlu0 2
        %5230 = vperm.xlu0 %5229, %v2612
        %v5231 = vpop.permute.xlu0 %5230
        %5233 = vset.pattern.permute.xlu0 2
        %5234 = vperm.xlu0 %5233, %v2617
        %v5235 = vpop.permute.xlu0 %5234
        %5237 = vset.pattern.permute.xlu0 2
        %5238 = vperm.xlu0 %5237, %v2622
        %v5239 = vpop.permute.xlu0 %5238
        %5241 = vset.pattern.permute.xlu0 2
        %5242 = vperm.xlu0 %5241, %v2627
        %v5243 = vpop.permute.xlu0 %5242
        %5245 = vset.pattern.permute.xlu0 2
        %5246 = vperm.xlu0 %5245, %v2632
        %v5247 = vpop.permute.xlu0 %5246
        %5249 = vset.pattern.permute.xlu0 2
        %5250 = vperm.xlu0 %5249, %v2637
        %v5251 = vpop.permute.xlu0 %5250
        %5253 = vset.pattern.permute.xlu0 2
        %5254 = vperm.xlu0 %5253, %v2642
        %v5255 = vpop.permute.xlu0 %5254
        %v5257 = vlaneseq
        %v5258 = vshrl.u32 %v5257, 7
        %v5259 = vsub.s32 2, %v5258
        %v5260 = vrot.slane %v2661, %v5259
        %v5261 = vsub.f32 %v5195, %v5260
        %v5262 = vsub.f32 %v5199, %v5260
        %v5263 = vsub.f32 %v5203, %v5260
        %v5264 = vsub.f32 %v5207, %v5260
        %v5265 = vsub.f32 %v5211, %v5260
        %v5266 = vsub.f32 %v5215, %v5260
        %v5267 = vsub.f32 %v5219, %v5260
        %v5268 = vsub.f32 %v5223, %v5260
        %v5269 = vsub.f32 %v5227, %v5260
        %v5270 = vsub.f32 %v5231, %v5260
        %v5271 = vsub.f32 %v5235, %v5260
        %v5272 = vsub.f32 %v5239, %v5260
        %v5273 = vsub.f32 %v5243, %v5260
        %v5274 = vsub.f32 %v5247, %v5260
        %v5275 = vsub.f32 %v5251, %v5260
        %v5276 = vsub.f32 %v5255, %v5260
        %v5277 = vsel %vm2452, %v5261, -1e+30
        %v5278 = vsel %vm2453, %v5262, -1e+30
        %v5279 = vsel %vm2454, %v5263, -1e+30
        %v5280 = vsel %vm2455, %v5264, -1e+30
        %v5281 = vsel %vm2456, %v5265, -1e+30
        %v5282 = vsel %vm2457, %v5266, -1e+30
        %v5283 = vsel %vm2458, %v5267, -1e+30
        %v5284 = vsel %vm2459, %v5268, -1e+30
        %v5285 = vsel %vm2460, %v5269, -1e+30
        %v5286 = vsel %vm2461, %v5270, -1e+30
        %v5287 = vsel %vm2462, %v5271, -1e+30
        %v5288 = vsel %vm2463, %v5272, -1e+30
        %v5289 = vsel %vm2464, %v5273, -1e+30
        %v5290 = vsel %vm2465, %v5274, -1e+30
        %v5291 = vsel %vm2466, %v5275, -1e+30
        %v5292 = vsel %vm2467, %v5276, -1e+30
        %v5293 = vmul.f32 %v5277, 1.442695
        %v5294 = vpow.pop %v5293
        %v5295 = vmul.f32 %v5278, 1.442695
        %v5296 = vpow.pop %v5295
        %v5297 = vmul.f32 %v5279, 1.442695
        %v5298 = vpow.pop %v5297
        %v5299 = vmul.f32 %v5280, 1.442695
        %v5300 = vpow.pop %v5299
        %v5301 = vmul.f32 %v5281, 1.442695
        %v5302 = vpow.pop %v5301
        %v5303 = vmul.f32 %v5282, 1.442695
        %v5304 = vpow.pop %v5303
        %v5305 = vmul.f32 %v5283, 1.442695
        %v5306 = vpow.pop %v5305
        %v5307 = vmul.f32 %v5284, 1.442695
        %v5308 = vpow.pop %v5307
        %v5309 = vmul.f32 %v5285, 1.442695
        %v5310 = vpow.pop %v5309
        %v5311 = vmul.f32 %v5286, 1.442695
        %v5312 = vpow.pop %v5311
        %v5313 = vmul.f32 %v5287, 1.442695
        %v5314 = vpow.pop %v5313
        %v5315 = vmul.f32 %v5288, 1.442695
        %v5316 = vpow.pop %v5315
        %v5317 = vmul.f32 %v5289, 1.442695
        %v5318 = vpow.pop %v5317
        %v5319 = vmul.f32 %v5290, 1.442695
        %v5320 = vpow.pop %v5319
        %v5321 = vmul.f32 %v5291, 1.442695
        %v5322 = vpow.pop %v5321
        %v5323 = vmul.f32 %v5292, 1.442695
        %v5324 = vpow.pop %v5323
        %v5325 = vmul.f32 %v2888, %v5294
        %v5326 = vmul.f32 %v2893, %v5296
        %v5327 = vmul.f32 %v2898, %v5298
        %v5328 = vmul.f32 %v2903, %v5300
        %v5329 = vmul.f32 %v2908, %v5302
        %v5330 = vmul.f32 %v2913, %v5304
        %v5331 = vmul.f32 %v2918, %v5306
        %v5332 = vmul.f32 %v2923, %v5308
        %v5333 = vmul.f32 %v2928, %v5310
        %v5334 = vmul.f32 %v2933, %v5312
        %v5335 = vmul.f32 %v2938, %v5314
        %v5336 = vmul.f32 %v2943, %v5316
        %v5337 = vmul.f32 %v2948, %v5318
        %v5338 = vmul.f32 %v2953, %v5320
        %v5339 = vmul.f32 %v2958, %v5322
        %v5340 = vmul.f32 %v2963, %v5324
        %v5341 = vlaneseq
        %v5342 = vshrl.u32 %v5341, 7
        %v5343 = vsub.s32 2, %v5342
        %v5344 = vrot.slane %v2693, %v5343
        %v5345 = vmul.f32 %v5325, %v5344
        %v5346 = vmul.f32 %v5326, %v5344
        %v5347 = vmul.f32 %v5327, %v5344
        %v5348 = vmul.f32 %v5328, %v5344
        %v5349 = vmul.f32 %v5329, %v5344
        %v5350 = vmul.f32 %v5330, %v5344
        %v5351 = vmul.f32 %v5331, %v5344
        %v5352 = vmul.f32 %v5332, %v5344
        %v5353 = vmul.f32 %v5333, %v5344
        %v5354 = vmul.f32 %v5334, %v5344
        %v5355 = vmul.f32 %v5335, %v5344
        %v5356 = vmul.f32 %v5336, %v5344
        %v5357 = vmul.f32 %v5337, %v5344
        %v5358 = vmul.f32 %v5338, %v5344
        %v5359 = vmul.f32 %v5339, %v5344
        %v5360 = vmul.f32 %v5340, %v5344
        %v5361 = vld [vmem:[#allocation2] sm:$0xff]
        %v5362 = vld [vmem:[#allocation2 + $0x8] sm:$0xff]
        %5365 = vrot.lane.b32.xlu0 %v5361, 64
        %v5366 = vpop.permute.xlu0 %5365
        %5367 = vrot.lane.b32.xlu0 %v5362, 64
        %v5368 = vpop.permute.xlu0 %5367
        %5371 = vmatprep.subr.mxu0 0.0
        %5372 = vmatpush1.msra.mxu0 0.0
        %5373 = vmatprep.subr.mxu0 0.0
        %5374 = vmatpush1.msra.mxu0 0.0
        %5375 = vmatprep.subr.mxu0 0.0
        %5376 = vmatpush1.msra.mxu0 0.0
        %5377 = vmatprep.subr.mxu0 0.0
        %5378 = vmatpush1.msra.mxu0 0.0
        %5379 = vmatprep.subr.mxu0 0.0
        %5380 = vmatpush1.msra.mxu0 0.0
        %5381 = vmatprep.subr.mxu0 0.0
        %5382 = vmatpush1.msra.mxu0 0.0
        %5383 = vmatprep.subr.mxu0 0.0
        %5384 = vmatpush1.msra.mxu0 0.0
        %5385 = vmatprep.subr.mxu0 0.0
        %5386 = vmatpush1.msra.mxu0 0.0
        %5387 = vmatprep.subr.mxu0 0.0
        %5388 = vmatpush1.msra.mxu0 0.0
        %5389 = vmatprep.subr.mxu0 0.0
        %5390 = vmatpush1.msra.mxu0 0.0
        %5391 = vmatprep.subr.mxu0 0.0
        %5392 = vmatpush1.msra.mxu0 0.0
        %5393 = vmatprep.subr.mxu0 0.0
        %5394 = vmatpush1.msra.mxu0 0.0
        %5395 = vmatprep.subr.mxu0 0.0
        %5396 = vmatpush1.msra.mxu0 0.0
        %5397 = vmatprep.subr.mxu0 0.0
        %5398 = vmatpush1.msra.mxu0 0.0
        %5399 = vmatprep.subr.mxu0 0.0
        %5400 = vmatpush1.msra.mxu0 %v5368
        %5401 = vmatprep.subr.mxu0 0.0
        %5402 = vmatpush1.msra.mxu0 %v5366
        %5403 = vmatprep.subr.mxu0 0.0
        %5404 = vmatpush2.msra.mxu0 0.0
        %5405 = vmatprep.subr.mxu0 0.0
        %5406 = vmatpush2.msra.mxu0 0.0
        %5407 = vmatprep.subr.mxu0 0.0
        %5408 = vmatpush2.msra.mxu0 0.0
        %5409 = vmatprep.subr.mxu0 0.0
        %5410 = vmatpush2.msra.mxu0 0.0
        %5411 = vmatprep.subr.mxu0 0.0
        %5412 = vmatpush2.msra.mxu0 0.0
        %5413 = vmatprep.subr.mxu0 0.0
        %5414 = vmatpush2.msra.mxu0 0.0
        %5415 = vmatprep.subr.mxu0 0.0
        %5416 = vmatpush2.msra.mxu0 0.0
        %5417 = vmatprep.subr.mxu0 0.0
        %5418 = vmatpush2.msra.mxu0 0.0
        %5419 = vmatprep.subr.mxu0 0.0
        %5420 = vmatpush2.msra.mxu0 0.0
        %5421 = vmatprep.subr.mxu0 0.0
        %5422 = vmatpush2.msra.mxu0 0.0
        %5423 = vmatprep.subr.mxu0 0.0
        %5424 = vmatpush2.msra.mxu0 0.0
        %5425 = vmatprep.subr.mxu0 0.0
        %5426 = vmatpush2.msra.mxu0 0.0
        %5427 = vmatprep.subr.mxu0 0.0
        %5428 = vmatpush2.msra.mxu0 0.0
        %5429 = vmatprep.subr.mxu0 0.0
        %5430 = vmatpush2.msra.mxu0 0.0
        %5431 = vmatprep.subr.mxu0 0.0
        %5432 = vmatpush2.msra.mxu0 0.0
        %5433 = vmatprep.subr.mxu0 0.0
        %5434 = vmatpush2.msra.mxu0 0.0
        %5435 = vmatprep.mubr.f32.mxu0 0.0
        %5436 = vmatmul.mubr.f32.gmra.mxu0 %v2789
        %v5437 = vpop.f32.mrf.mxu0
        %v5438 = vadd.f32 0.0, %v5437
        %v5439 = vpop.f32.mrf.mxu0
        %5440 = vmatprep.mubr.f32.mxu0 0.0
        %5441 = vmatmul.mubr.f32.gmra.mxu0 %v2791
        %v5442 = vpop.f32.mrf.mxu0
        %v5443 = vadd.f32 0.0, %v5442
        %v5444 = vpop.f32.mrf.mxu0
        %5445 = vmatprep.mubr.f32.mxu0 0.0
        %5446 = vmatmul.mubr.f32.gmra.mxu0 %v2793
        %v5447 = vpop.f32.mrf.mxu0
        %v5448 = vadd.f32 0.0, %v5447
        %v5449 = vpop.f32.mrf.mxu0
        %5450 = vmatprep.mubr.f32.mxu0 0.0
        %5451 = vmatmul.mubr.f32.gmra.mxu0 %v2795
        %v5452 = vpop.f32.mrf.mxu0
        %v5453 = vadd.f32 0.0, %v5452
        %v5454 = vpop.f32.mrf.mxu0
        %5455 = vmatprep.mubr.f32.mxu0 0.0
        %5456 = vmatmul.mubr.f32.gmra.mxu0 %v2797
        %v5457 = vpop.f32.mrf.mxu0
        %v5458 = vadd.f32 0.0, %v5457
        %v5459 = vpop.f32.mrf.mxu0
        %5460 = vmatprep.mubr.f32.mxu0 0.0
        %5461 = vmatmul.mubr.f32.gmra.mxu0 %v2799
        %v5462 = vpop.f32.mrf.mxu0
        %v5463 = vadd.f32 0.0, %v5462
        %v5464 = vpop.f32.mrf.mxu0
        %5465 = vmatprep.mubr.f32.mxu0 0.0
        %5466 = vmatmul.mubr.f32.gmra.mxu0 %v2801
        %v5467 = vpop.f32.mrf.mxu0
        %v5468 = vadd.f32 0.0, %v5467
        %v5469 = vpop.f32.mrf.mxu0
        %5470 = vmatprep.mubr.f32.mxu0 0.0
        %5471 = vmatmul.mubr.f32.gmra.mxu0 %v2803
        %v5472 = vpop.f32.mrf.mxu0
        %v5473 = vadd.f32 0.0, %v5472
        %v5474 = vpop.f32.mrf.mxu0
        %5475 = vmatprep.mubr.f32.mxu0 0.0
        %5476 = vmatmul.mubr.f32.gmra.mxu0 %v2805
        %v5477 = vpop.f32.mrf.mxu0
        %v5478 = vadd.f32 0.0, %v5477
        %v5479 = vpop.f32.mrf.mxu0
        %5480 = vmatprep.mubr.f32.mxu0 0.0
        %5481 = vmatmul.mubr.f32.gmra.mxu0 %v2807
        %v5482 = vpop.f32.mrf.mxu0
        %v5483 = vadd.f32 0.0, %v5482
        %v5484 = vpop.f32.mrf.mxu0
        %5485 = vmatprep.mubr.f32.mxu0 0.0
        %5486 = vmatmul.mubr.f32.gmra.mxu0 %v2809
        %v5487 = vpop.f32.mrf.mxu0
        %v5488 = vadd.f32 0.0, %v5487
        %v5489 = vpop.f32.mrf.mxu0
        %5490 = vmatprep.mubr.f32.mxu0 0.0
        %5491 = vmatmul.mubr.f32.gmra.mxu0 %v2811
        %v5492 = vpop.f32.mrf.mxu0
        %v5493 = vadd.f32 0.0, %v5492
        %v5494 = vpop.f32.mrf.mxu0
        %5495 = vmatprep.mubr.f32.mxu0 0.0
        %5496 = vmatmul.mubr.f32.gmra.mxu0 %v2813
        %v5497 = vpop.f32.mrf.mxu0
        %v5498 = vadd.f32 0.0, %v5497
        %v5499 = vpop.f32.mrf.mxu0
        %5500 = vmatprep.mubr.f32.mxu0 0.0
        %5501 = vmatmul.mubr.f32.gmra.mxu0 %v2815
        %v5502 = vpop.f32.mrf.mxu0
        %v5503 = vadd.f32 0.0, %v5502
        %v5504 = vpop.f32.mrf.mxu0
        %5505 = vmatprep.mubr.f32.mxu0 0.0
        %5506 = vmatmul.mubr.f32.gmra.mxu0 %v2817
        %v5507 = vpop.f32.mrf.mxu0
        %v5508 = vadd.f32 0.0, %v5507
        %v5509 = vpop.f32.mrf.mxu0
        %5510 = vmatprep.mubr.f32.mxu0 0.0
        %5511 = vmatmul.mubr.f32.gmra.mxu0 %v2819
        %v5512 = vpop.f32.mrf.mxu0
        %v5513 = vadd.f32 0.0, %v5512
        %v5514 = vpop.f32.mrf.mxu0
        %5515 = vdwg.mxu0
        %5516 = vset.pattern.permute.xlu0 2
        %5517 = vperm.xlu0 %5516, %v3410
        %v5518 = vpop.permute.xlu0 %5517
        %5520 = vset.pattern.permute.xlu0 2
        %5521 = vperm.xlu0 %5520, %v3412
        %v5522 = vpop.permute.xlu0 %5521
        %5524 = vset.pattern.permute.xlu0 2
        %5525 = vperm.xlu0 %5524, %v3414
        %v5526 = vpop.permute.xlu0 %5525
        %5528 = vset.pattern.permute.xlu0 2
        %5529 = vperm.xlu0 %5528, %v3416
        %v5530 = vpop.permute.xlu0 %5529
        %5532 = vset.pattern.permute.xlu0 2
        %5533 = vperm.xlu0 %5532, %v3418
        %v5534 = vpop.permute.xlu0 %5533
        %5536 = vset.pattern.permute.xlu0 2
        %5537 = vperm.xlu0 %5536, %v3420
        %v5538 = vpop.permute.xlu0 %5537
        %5540 = vset.pattern.permute.xlu0 2
        %5541 = vperm.xlu0 %5540, %v3422
        %v5542 = vpop.permute.xlu0 %5541
        %5544 = vset.pattern.permute.xlu0 2
        %5545 = vperm.xlu0 %5544, %v3424
        %v5546 = vpop.permute.xlu0 %5545
        %5548 = vset.pattern.permute.xlu0 2
        %5549 = vperm.xlu0 %5548, %v3426
        %v5550 = vpop.permute.xlu0 %5549
        %5552 = vset.pattern.permute.xlu0 2
        %5553 = vperm.xlu0 %5552, %v3428
        %v5554 = vpop.permute.xlu0 %5553
        %5556 = vset.pattern.permute.xlu0 2
        %5557 = vperm.xlu0 %5556, %v3430
        %v5558 = vpop.permute.xlu0 %5557
        %5560 = vset.pattern.permute.xlu0 2
        %5561 = vperm.xlu0 %5560, %v3432
        %v5562 = vpop.permute.xlu0 %5561
        %5564 = vset.pattern.permute.xlu0 2
        %5565 = vperm.xlu0 %5564, %v3434
        %v5566 = vpop.permute.xlu0 %5565
        %5568 = vset.pattern.permute.xlu0 2
        %5569 = vperm.xlu0 %5568, %v3436
        %v5570 = vpop.permute.xlu0 %5569
        %5572 = vset.pattern.permute.xlu0 2
        %5573 = vperm.xlu0 %5572, %v3438
        %v5574 = vpop.permute.xlu0 %5573
        %5576 = vset.pattern.permute.xlu0 2
        %5577 = vperm.xlu0 %5576, %v3440
        %v5578 = vpop.permute.xlu0 %5577
        %v5580 = vmul.f32 %v5438, %v5518
        %v5581 = vmul.f32 %v5443, %v5522
        %v5582 = vmul.f32 %v5448, %v5526
        %v5583 = vmul.f32 %v5453, %v5530
        %v5584 = vmul.f32 %v5458, %v5534
        %v5585 = vmul.f32 %v5463, %v5538
        %v5586 = vmul.f32 %v5468, %v5542
        %v5587 = vmul.f32 %v5473, %v5546
        %v5588 = vmul.f32 %v5478, %v5550
        %v5589 = vmul.f32 %v5483, %v5554
        %v5590 = vmul.f32 %v5488, %v5558
        %v5591 = vmul.f32 %v5493, %v5562
        %v5592 = vmul.f32 %v5498, %v5566
        %v5593 = vmul.f32 %v5503, %v5570
        %v5594 = vmul.f32 %v5508, %v5574
        %v5595 = vmul.f32 %v5513, %v5578
        %5596 = vrot.lane.b32.xlu0 %v3557, 64
        %v5597 = vpop.permute.xlu0 %5596
        %5598 = vrot.lane.b32.xlu0 %v3559, 64
        %v5599 = vpop.permute.xlu0 %5598
        %5600 = vrot.lane.b32.xlu0 %v3561, 64
        %v5601 = vpop.permute.xlu0 %5600
        %5602 = vrot.lane.b32.xlu0 %v3563, 64
        %v5603 = vpop.permute.xlu0 %5602
        %5604 = vrot.lane.b32.xlu0 %v3565, 64
        %v5605 = vpop.permute.xlu0 %5604
        %5606 = vrot.lane.b32.xlu0 %v3567, 64
        %v5607 = vpop.permute.xlu0 %5606
        %5608 = vrot.lane.b32.xlu0 %v3569, 64
        %v5609 = vpop.permute.xlu0 %5608
        %5610 = vrot.lane.b32.xlu0 %v3571, 64
        %v5611 = vpop.permute.xlu0 %5610
        %5612 = vrot.lane.b32.xlu0 %v3573, 64
        %v5613 = vpop.permute.xlu0 %5612
        %5614 = vrot.lane.b32.xlu0 %v3575, 64
        %v5615 = vpop.permute.xlu0 %5614
        %5616 = vrot.lane.b32.xlu0 %v3577, 64
        %v5617 = vpop.permute.xlu0 %5616
        %5618 = vrot.lane.b32.xlu0 %v3579, 64
        %v5619 = vpop.permute.xlu0 %5618
        %5620 = vrot.lane.b32.xlu0 %v3581, 64
        %v5621 = vpop.permute.xlu0 %5620
        %5622 = vrot.lane.b32.xlu0 %v3583, 64
        %v5623 = vpop.permute.xlu0 %5622
        %5624 = vrot.lane.b32.xlu0 %v3585, 64
        %v5625 = vpop.permute.xlu0 %5624
        %5626 = vrot.lane.b32.xlu0 %v3587, 64
        %v5627 = vpop.permute.xlu0 %5626
        %5644 = vmatprep.subr.mxu0 0.0
        %5645 = vmatpush1.msra.mxu0 %v5627
        %5646 = vmatprep.subr.mxu0 0.0
        %5647 = vmatpush1.msra.mxu0 %v5625
        %5648 = vmatprep.subr.mxu0 0.0
        %5649 = vmatpush1.msra.mxu0 %v5623
        %5650 = vmatprep.subr.mxu0 0.0
        %5651 = vmatpush1.msra.mxu0 %v5621
        %5652 = vmatprep.subr.mxu0 0.0
        %5653 = vmatpush1.msra.mxu0 %v5619
        %5654 = vmatprep.subr.mxu0 0.0
        %5655 = vmatpush1.msra.mxu0 %v5617
        %5656 = vmatprep.subr.mxu0 0.0
        %5657 = vmatpush1.msra.mxu0 %v5615
        %5658 = vmatprep.subr.mxu0 0.0
        %5659 = vmatpush1.msra.mxu0 %v5613
        %5660 = vmatprep.subr.mxu0 0.0
        %5661 = vmatpush1.msra.mxu0 %v5611
        %5662 = vmatprep.subr.mxu0 0.0
        %5663 = vmatpush1.msra.mxu0 %v5609
        %5664 = vmatprep.subr.mxu0 0.0
        %5665 = vmatpush1.msra.mxu0 %v5607
        %5666 = vmatprep.subr.mxu0 0.0
        %5667 = vmatpush1.msra.mxu0 %v5605
        %5668 = vmatprep.subr.mxu0 0.0
        %5669 = vmatpush1.msra.mxu0 %v5603
        %5670 = vmatprep.subr.mxu0 0.0
        %5671 = vmatpush1.msra.mxu0 %v5601
        %5672 = vmatprep.subr.mxu0 0.0
        %5673 = vmatpush1.msra.mxu0 %v5599
        %5674 = vmatprep.subr.mxu0 0.0
        %5675 = vmatpush1.msra.mxu0 %v5597
        %5676 = vmatprep.subr.mxu0 0.0
        %5677 = vmatpush2.msra.mxu0 0.0
        %5678 = vmatprep.subr.mxu0 0.0
        %5679 = vmatpush2.msra.mxu0 0.0
        %5680 = vmatprep.subr.mxu0 0.0
        %5681 = vmatpush2.msra.mxu0 0.0
        %5682 = vmatprep.subr.mxu0 0.0
        %5683 = vmatpush2.msra.mxu0 0.0
        %5684 = vmatprep.subr.mxu0 0.0
        %5685 = vmatpush2.msra.mxu0 0.0
        %5686 = vmatprep.subr.mxu0 0.0
        %5687 = vmatpush2.msra.mxu0 0.0
        %5688 = vmatprep.subr.mxu0 0.0
        %5689 = vmatpush2.msra.mxu0 0.0
        %5690 = vmatprep.subr.mxu0 0.0
        %5691 = vmatpush2.msra.mxu0 0.0
        %5692 = vmatprep.subr.mxu0 0.0
        %5693 = vmatpush2.msra.mxu0 0.0
        %5694 = vmatprep.subr.mxu0 0.0
        %5695 = vmatpush2.msra.mxu0 0.0
        %5696 = vmatprep.subr.mxu0 0.0
        %5697 = vmatpush2.msra.mxu0 0.0
        %5698 = vmatprep.subr.mxu0 0.0
        %5699 = vmatpush2.msra.mxu0 0.0
        %5700 = vmatprep.subr.mxu0 0.0
        %5701 = vmatpush2.msra.mxu0 0.0
        %5702 = vmatprep.subr.mxu0 0.0
        %5703 = vmatpush2.msra.mxu0 0.0
        %5704 = vmatprep.subr.mxu0 0.0
        %5705 = vmatpush2.msra.mxu0 0.0
        %5706 = vmatprep.subr.mxu0 0.0
        %5707 = vmatpush2.msra.mxu0 0.0
        %5708 = vmatprep.mubr.f32.mxu0 0.0
        %5709 = vmatmul.mubr.f32.gmra.mxu0 %v5345
        %v5710 = vpop.f32.mrf.mxu0
        %v5711 = vadd.f32 %v5580, %v5710
        %v5712 = vpop.f32.mrf.mxu0
        %5713 = vmatprep.mubr.f32.mxu0 0.0
        %5714 = vmatmul.mubr.f32.gmra.mxu0 %v5346
        %v5715 = vpop.f32.mrf.mxu0
        %v5716 = vadd.f32 %v5581, %v5715
        %v5717 = vpop.f32.mrf.mxu0
        %5718 = vmatprep.mubr.f32.mxu0 0.0
        %5719 = vmatmul.mubr.f32.gmra.mxu0 %v5347
        %v5720 = vpop.f32.mrf.mxu0
        %v5721 = vadd.f32 %v5582, %v5720
        %v5722 = vpop.f32.mrf.mxu0
        %5723 = vmatprep.mubr.f32.mxu0 0.0
        %5724 = vmatmul.mubr.f32.gmra.mxu0 %v5348
        %v5725 = vpop.f32.mrf.mxu0
        %v5726 = vadd.f32 %v5583, %v5725
        %v5727 = vpop.f32.mrf.mxu0
        %5728 = vmatprep.mubr.f32.mxu0 0.0
        %5729 = vmatmul.mubr.f32.gmra.mxu0 %v5349
        %v5730 = vpop.f32.mrf.mxu0
        %v5731 = vadd.f32 %v5584, %v5730
        %v5732 = vpop.f32.mrf.mxu0
        %5733 = vmatprep.mubr.f32.mxu0 0.0
        %5734 = vmatmul.mubr.f32.gmra.mxu0 %v5350
        %v5735 = vpop.f32.mrf.mxu0
        %v5736 = vadd.f32 %v5585, %v5735
        %v5737 = vpop.f32.mrf.mxu0
        %5738 = vmatprep.mubr.f32.mxu0 0.0
        %5739 = vmatmul.mubr.f32.gmra.mxu0 %v5351
        %v5740 = vpop.f32.mrf.mxu0
        %v5741 = vadd.f32 %v5586, %v5740
        %v5742 = vpop.f32.mrf.mxu0
        %5743 = vmatprep.mubr.f32.mxu0 0.0
        %5744 = vmatmul.mubr.f32.gmra.mxu0 %v5352
        %v5745 = vpop.f32.mrf.mxu0
        %v5746 = vadd.f32 %v5587, %v5745
        %v5747 = vpop.f32.mrf.mxu0
        %5748 = vmatprep.mubr.f32.mxu0 0.0
        %5749 = vmatmul.mubr.f32.gmra.mxu0 %v5353
        %v5750 = vpop.f32.mrf.mxu0
        %v5751 = vadd.f32 %v5588, %v5750
        %v5752 = vpop.f32.mrf.mxu0
        %5753 = vmatprep.mubr.f32.mxu0 0.0
        %5754 = vmatmul.mubr.f32.gmra.mxu0 %v5354
        %v5755 = vpop.f32.mrf.mxu0
        %v5756 = vadd.f32 %v5589, %v5755
        %v5757 = vpop.f32.mrf.mxu0
        %5758 = vmatprep.mubr.f32.mxu0 0.0
        %5759 = vmatmul.mubr.f32.gmra.mxu0 %v5355
        %v5760 = vpop.f32.mrf.mxu0
        %v5761 = vadd.f32 %v5590, %v5760
        %v5762 = vpop.f32.mrf.mxu0
        %5763 = vmatprep.mubr.f32.mxu0 0.0
        %5764 = vmatmul.mubr.f32.gmra.mxu0 %v5356
        %v5765 = vpop.f32.mrf.mxu0
        %v5766 = vadd.f32 %v5591, %v5765
        %v5767 = vpop.f32.mrf.mxu0
        %5768 = vmatprep.mubr.f32.mxu0 0.0
        %5769 = vmatmul.mubr.f32.gmra.mxu0 %v5357
        %v5770 = vpop.f32.mrf.mxu0
        %v5771 = vadd.f32 %v5592, %v5770
        %v5772 = vpop.f32.mrf.mxu0
        %5773 = vmatprep.mubr.f32.mxu0 0.0
        %5774 = vmatmul.mubr.f32.gmra.mxu0 %v5358
        %v5775 = vpop.f32.mrf.mxu0
        %v5776 = vadd.f32 %v5593, %v5775
        %v5777 = vpop.f32.mrf.mxu0
        %5778 = vmatprep.mubr.f32.mxu0 0.0
        %5779 = vmatmul.mubr.f32.gmra.mxu0 %v5359
        %v5780 = vpop.f32.mrf.mxu0
        %v5781 = vadd.f32 %v5594, %v5780
        %v5782 = vpop.f32.mrf.mxu0
        %5783 = vmatprep.mubr.f32.mxu0 0.0
        %5784 = vmatmul.mubr.f32.gmra.mxu0 %v5360
        %v5785 = vpop.f32.mrf.mxu0
        %v5786 = vadd.f32 %v5595, %v5785
        %v5787 = vpop.f32.mrf.mxu0
        %5788 = vdwg.mxu0
        %v5789 = vld [vmem:[%s9] sm:$0x1]
        %v5791 = vlaneseq
        %v5792 = vshrl.u32 %v5791, 7
        %v5793 = vsub.s32 0, %v5792
        %v5794 = vrot.slane %v5789, %v5793
        %5795 = vset.pattern.permute.xlu0 2
        %5796 = vperm.xlu0 %5795, %v5794
        %v5797 = vpop.permute.xlu0 %5796
        %v5799 = vmul.f32 %v5797, %v1170
        %v5800 = vmul.f32 %v5797, %v1171
        %v5801 = vmul.f32 %v5797, %v1172
        %v5802 = vmul.f32 %v5797, %v1173
        %v5803 = vmul.f32 %v5797, %v1174
        %v5804 = vmul.f32 %v5797, %v1175
        %v5805 = vmul.f32 %v5797, %v1176
        %v5806 = vmul.f32 %v5797, %v1177
        %v5807 = vmul.f32 %v5797, %v1178
        %v5808 = vmul.f32 %v5797, %v1179
        %v5809 = vmul.f32 %v5797, %v1180
        %v5810 = vmul.f32 %v5797, %v1181
        %v5811 = vmul.f32 %v5797, %v1182
        %v5812 = vmul.f32 %v5797, %v1183
        %v5813 = vmul.f32 %v5797, %v1184
        %v5814 = vmul.f32 %v5797, %v1185
        %v5815 = vmul.f32 %v5797, %v1186
        %v5833 = vrot.slane %v5799, 5
        %v5834 = vrot.slane %v5800, 5
        %v5835 = vsel %vm3554, %v5833, %v5834
        %v5836 = vrot.slane %v5801, 5
        %v5837 = vsel %vm3554, %v5834, %v5836
        %v5838 = vrot.slane %v5802, 5
        %v5839 = vsel %vm3554, %v5836, %v5838
        %v5840 = vrot.slane %v5803, 5
        %v5841 = vsel %vm3554, %v5838, %v5840
        %v5842 = vrot.slane %v5804, 5
        %v5843 = vsel %vm3554, %v5840, %v5842
        %v5844 = vrot.slane %v5805, 5
        %v5845 = vsel %vm3554, %v5842, %v5844
        %v5846 = vrot.slane %v5806, 5
        %v5847 = vsel %vm3554, %v5844, %v5846
        %v5848 = vrot.slane %v5807, 5
        %v5849 = vsel %vm3554, %v5846, %v5848
        %v5850 = vrot.slane %v5808, 5
        %v5851 = vsel %vm3554, %v5848, %v5850
        %v5852 = vrot.slane %v5809, 5
        %v5853 = vsel %vm3554, %v5850, %v5852
        %v5854 = vrot.slane %v5810, 5
        %v5855 = vsel %vm3554, %v5852, %v5854
        %v5856 = vrot.slane %v5811, 5
        %v5857 = vsel %vm3554, %v5854, %v5856
        %v5858 = vrot.slane %v5812, 5
        %v5859 = vsel %vm3554, %v5856, %v5858
        %v5860 = vrot.slane %v5813, 5
        %v5861 = vsel %vm3554, %v5858, %v5860
        %v5862 = vrot.slane %v5814, 5
        %v5863 = vsel %vm3554, %v5860, %v5862
        %v5864 = vrot.slane %v5815, 5
        %v5865 = vsel %vm3554, %v5862, %v5864
        %5866 = vrot.lane.b32.xlu0 %v5835, 64
        %v5867 = vpop.permute.xlu0 %5866
        %5868 = vrot.lane.b32.xlu0 %v5837, 64
        %v5869 = vpop.permute.xlu0 %5868
        %5870 = vrot.lane.b32.xlu0 %v5839, 64
        %v5871 = vpop.permute.xlu0 %5870
        %5872 = vrot.lane.b32.xlu0 %v5841, 64
        %v5873 = vpop.permute.xlu0 %5872
        %5874 = vrot.lane.b32.xlu0 %v5843, 64
        %v5875 = vpop.permute.xlu0 %5874
        %5876 = vrot.lane.b32.xlu0 %v5845, 64
        %v5877 = vpop.permute.xlu0 %5876
        %5878 = vrot.lane.b32.xlu0 %v5847, 64
        %v5879 = vpop.permute.xlu0 %5878
        %5880 = vrot.lane.b32.xlu0 %v5849, 64
        %v5881 = vpop.permute.xlu0 %5880
        %5882 = vrot.lane.b32.xlu0 %v5851, 64
        %v5883 = vpop.permute.xlu0 %5882
        %5884 = vrot.lane.b32.xlu0 %v5853, 64
        %v5885 = vpop.permute.xlu0 %5884
        %5886 = vrot.lane.b32.xlu0 %v5855, 64
        %v5887 = vpop.permute.xlu0 %5886
        %5888 = vrot.lane.b32.xlu0 %v5857, 64
        %v5889 = vpop.permute.xlu0 %5888
        %5890 = vrot.lane.b32.xlu0 %v5859, 64
        %v5891 = vpop.permute.xlu0 %5890
        %5892 = vrot.lane.b32.xlu0 %v5861, 64
        %v5893 = vpop.permute.xlu0 %5892
        %5894 = vrot.lane.b32.xlu0 %v5863, 64
        %v5895 = vpop.permute.xlu0 %5894
        %5896 = vrot.lane.b32.xlu0 %v5865, 64
        %v5897 = vpop.permute.xlu0 %5896
        %v5914 = vadd.f32 %v5711, %v5867
        %v5915 = vadd.f32 %v5716, %v5869
        %v5916 = vadd.f32 %v5721, %v5871
        %v5917 = vadd.f32 %v5726, %v5873
        %v5918 = vadd.f32 %v5731, %v5875
        %v5919 = vadd.f32 %v5736, %v5877
        %v5920 = vadd.f32 %v5741, %v5879
        %v5921 = vadd.f32 %v5746, %v5881
        %v5922 = vadd.f32 %v5751, %v5883
        %v5923 = vadd.f32 %v5756, %v5885
        %v5924 = vadd.f32 %v5761, %v5887
        %v5925 = vadd.f32 %v5766, %v5889
        %v5926 = vadd.f32 %v5771, %v5891
        %v5927 = vadd.f32 %v5776, %v5893
        %v5928 = vadd.f32 %v5781, %v5895
        %v5929 = vadd.f32 %v5786, %v5897
        %5930 = vrot.lane.b32.xlu0 %v3062, 64
        %v5931 = vpop.permute.xlu0 %5930
        %5932 = vrot.lane.b32.xlu0 %v3063, 64
        %v5933 = vpop.permute.xlu0 %5932
        %5934 = vrot.lane.b32.xlu0 %v3064, 64
        %v5935 = vpop.permute.xlu0 %5934
        %5936 = vrot.lane.b32.xlu0 %v3065, 64
        %v5937 = vpop.permute.xlu0 %5936
        %5938 = vrot.lane.b32.xlu0 %v3066, 64
        %v5939 = vpop.permute.xlu0 %5938
        %5940 = vrot.lane.b32.xlu0 %v3067, 64
        %v5941 = vpop.permute.xlu0 %5940
        %5942 = vrot.lane.b32.xlu0 %v3068, 64
        %v5943 = vpop.permute.xlu0 %5942
        %5944 = vrot.lane.b32.xlu0 %v3069, 64
        %v5945 = vpop.permute.xlu0 %5944
        %5946 = vrot.lane.b32.xlu0 %v3070, 64
        %v5947 = vpop.permute.xlu0 %5946
        %5948 = vrot.lane.b32.xlu0 %v3071, 64
        %v5949 = vpop.permute.xlu0 %5948
        %5950 = vrot.lane.b32.xlu0 %v3072, 64
        %v5951 = vpop.permute.xlu0 %5950
        %5952 = vrot.lane.b32.xlu0 %v3073, 64
        %v5953 = vpop.permute.xlu0 %5952
        %5954 = vrot.lane.b32.xlu0 %v3074, 64
        %v5955 = vpop.permute.xlu0 %5954
        %5956 = vrot.lane.b32.xlu0 %v3075, 64
        %v5957 = vpop.permute.xlu0 %5956
        %5958 = vrot.lane.b32.xlu0 %v3076, 64
        %v5959 = vpop.permute.xlu0 %5958
        %5960 = vrot.lane.b32.xlu0 %v3077, 64
        %v5961 = vpop.permute.xlu0 %5960
        %v5978 = vmul.f32 %v5914, %v5931
        %v5979 = vmul.f32 %v5915, %v5933
        %v5980 = vmul.f32 %v5916, %v5935
        %v5981 = vmul.f32 %v5917, %v5937
        %v5982 = vmul.f32 %v5918, %v5939
        %v5983 = vmul.f32 %v5919, %v5941
        %v5984 = vmul.f32 %v5920, %v5943
        %v5985 = vmul.f32 %v5921, %v5945
        %v5986 = vmul.f32 %v5922, %v5947
        %v5987 = vmul.f32 %v5923, %v5949
        %v5988 = vmul.f32 %v5924, %v5951
        %v5989 = vmul.f32 %v5925, %v5953
        %v5990 = vmul.f32 %v5926, %v5955
        %v5991 = vmul.f32 %v5927, %v5957
        %v5992 = vmul.f32 %v5928, %v5959
        %v5993 = vmul.f32 %v5929, %v5961
        %v5994 = vrot.slane %v2661, 3
        %v5996 = vsub.f32 %v5255, %v5994
        %v5997 = vmul.f32 %v5996, 1.442695
        %v5998 = vpow.pop %v5997
        %v6000 = vrot.slane %v5998, 5
        %v6002 = vmul.f32 %v2693, %v6000
        %6003 = vrot.lane.b32.xlu0 %v3884, 126
        %v6004 = vpop.permute.xlu0 %6003
        %s6005 = vtos %v6004
        %v6006 = vstv %s6005
        %v6008 = vmul.f32 %v6006, %v5361
        %v6009 = vmul.f32 %v6006, %v5362
        %v6010 = vlaneseq
        %v6011 = vshrl.u32 %v6010, 7
        %v6012 = vsub.s32 2, %v6011
        %v6013 = vrot.slane %v6002, %v6012
        %v6014 = vmul.f32 %v2725, %v6013
        %v6015 = vmul.f32 %v2726, %v6013
        %6016 = vmatprep.subr.mxu0 0.0
        %6017 = vmatpush1.msra.mxu0 %v5627
        %6018 = vmatprep.subr.mxu0 0.0
        %6019 = vmatpush1.msra.mxu0 %v5625
        %6020 = vmatprep.subr.mxu0 0.0
        %6021 = vmatpush1.msra.mxu0 %v5623
        %6022 = vmatprep.subr.mxu0 0.0
        %6023 = vmatpush1.msra.mxu0 %v5621
        %6024 = vmatprep.subr.mxu0 0.0
        %6025 = vmatpush1.msra.mxu0 %v5619
        %6026 = vmatprep.subr.mxu0 0.0
        %6027 = vmatpush1.msra.mxu0 %v5617
        %6028 = vmatprep.subr.mxu0 0.0
        %6029 = vmatpush1.msra.mxu0 %v5615
        %6030 = vmatprep.subr.mxu0 0.0
        %6031 = vmatpush1.msra.mxu0 %v5613
        %6032 = vmatprep.subr.mxu0 0.0
        %6033 = vmatpush1.msra.mxu0 %v5611
        %6034 = vmatprep.subr.mxu0 0.0
        %6035 = vmatpush1.msra.mxu0 %v5609
        %6036 = vmatprep.subr.mxu0 0.0
        %6037 = vmatpush1.msra.mxu0 %v5607
        %6038 = vmatprep.subr.mxu0 0.0
        %6039 = vmatpush1.msra.mxu0 %v5605
        %6040 = vmatprep.subr.mxu0 0.0
        %6041 = vmatpush1.msra.mxu0 %v5603
        %6042 = vmatprep.subr.mxu0 0.0
        %6043 = vmatpush1.msra.mxu0 %v5601
        %6044 = vmatprep.subr.mxu0 0.0
        %6045 = vmatpush1.msra.mxu0 %v5599
        %6046 = vmatprep.subr.mxu0 0.0
        %6047 = vmatpush1.msra.mxu0 %v5597
        %6048 = vmatprep.subr.mxu0 0.0
        %6049 = vmatpush2.msra.mxu0 0.0
        %6050 = vmatprep.subr.mxu0 0.0
        %6051 = vmatpush2.msra.mxu0 0.0
        %6052 = vmatprep.subr.mxu0 0.0
        %6053 = vmatpush2.msra.mxu0 0.0
        %6054 = vmatprep.subr.mxu0 0.0
        %6055 = vmatpush2.msra.mxu0 0.0
        %6056 = vmatprep.subr.mxu0 0.0
        %6057 = vmatpush2.msra.mxu0 0.0
        %6058 = vmatprep.subr.mxu0 0.0
        %6059 = vmatpush2.msra.mxu0 0.0
        %6060 = vmatprep.subr.mxu0 0.0
        %6061 = vmatpush2.msra.mxu0 0.0
        %6062 = vmatprep.subr.mxu0 0.0
        %6063 = vmatpush2.msra.mxu0 0.0
        %6064 = vmatprep.subr.mxu0 0.0
        %6065 = vmatpush2.msra.mxu0 0.0
        %6066 = vmatprep.subr.mxu0 0.0
        %6067 = vmatpush2.msra.mxu0 0.0
        %6068 = vmatprep.subr.mxu0 0.0
        %6069 = vmatpush2.msra.mxu0 0.0
        %6070 = vmatprep.subr.mxu0 0.0
        %6071 = vmatpush2.msra.mxu0 0.0
        %6072 = vmatprep.subr.mxu0 0.0
        %6073 = vmatpush2.msra.mxu0 0.0
        %6074 = vmatprep.subr.mxu0 0.0
        %6075 = vmatpush2.msra.mxu0 0.0
        %6076 = vmatprep.subr.mxu0 0.0
        %6077 = vmatpush2.msra.mxu0 0.0
        %6078 = vmatprep.subr.mxu0 0.0
        %6079 = vmatpush2.msra.mxu0 0.0
        %6080 = vmatprep.mubr.f32.mxu0 0.0
        %6081 = vmatmul.mubr.f32.gmra.mxu0 %v6014
        %v6082 = vpop.f32.mrf.mxu0
        %v6083 = vadd.f32 0.0, %v6082
        %v6084 = vpop.f32.mrf.mxu0
        %6085 = vmatprep.mubr.f32.mxu0 0.0
        %6086 = vmatmul.mubr.f32.gmra.mxu0 %v6015
        %v6087 = vpop.f32.mrf.mxu0
        %v6088 = vadd.f32 0.0, %v6087
        %v6089 = vpop.f32.mrf.mxu0
        %6090 = vdwg.mxu0
        %6093 = vrot.lane.b32.xlu0 %v6083, 64
        %v6094 = vpop.permute.xlu0 %6093
        %6095 = vrot.lane.b32.xlu0 %v6088, 64
        %v6096 = vpop.permute.xlu0 %6095
        %v6099 = vadd.f32 %v6008, %v6094
        %v6100 = vadd.f32 %v6009, %v6096
        %vm6101 = vcmask 785920
        %6102 = vst.msk [vmem:[#allocation2] sm:$0xff] %vm6101, %v6099
        %6103 = vst.msk [vmem:[#allocation2 + $0x8] sm:$0xff] %vm6101, %v6100
        %v6104 = vpack.c.bf16 %v5979, %v5978
        %v6105 = vpack.c.bf16 %v5981, %v5980
        %v6106 = vpack.c.bf16 %v5983, %v5982
        %v6107 = vpack.c.bf16 %v5985, %v5984
        %v6108 = vpack.c.bf16 %v5987, %v5986
        %v6109 = vpack.c.bf16 %v5989, %v5988
        %v6110 = vpack.c.bf16 %v5991, %v5990
        %v6111 = vpack.c.bf16 %v5993, %v5992
        %v6112 = vld [vmem:[%s10 + $0x20] sm:$0xf]
        %v6113 = vld [vmem:[%s10 + $0x24] sm:$0xf]
        %v6114 = vld [vmem:[%s10 + $0x28] sm:$0xf]
        %v6115 = vld [vmem:[%s10 + $0x2c] sm:$0xf]
        %v6120 = vunpack.c.l.b16 %v6112
        %v6121 = vunpack.c.l.b16 %v6113
        %v6122 = vunpack.c.l.b16 %v6114
        %v6123 = vunpack.c.l.b16 %v6115
        %v6124 = vpack.c.b16 %v6121, %v6120
        %v6125 = vpack.c.b16 %v6123, %v6122
        %v6129 = vsel %vm3973, %v6104, 0
        %v6132 = vsel %vm3973, %v6105, 0
        %v6135 = vsel %vm3973, %v6106, 0
        %v6138 = vsel %vm3973, %v6107, 0
        %v6141 = vsel %vm3973, %v6108, 0
        %v6144 = vsel %vm3973, %v6109, 0
        %v6147 = vsel %vm3973, %v6110, 0
        %v6150 = vsel %vm3973, %v6111, 0
        %6152 = vmatprep.subr.bf16.mxu0 0
        %6153 = vmatpush1.bf16.msra.mxu0 0
        %6154 = vmatprep.subr.bf16.mxu0 0
        %6155 = vmatpush1.bf16.msra.mxu0 0
        %6156 = vmatprep.subr.bf16.mxu0 0
        %6157 = vmatpush1.bf16.msra.mxu0 0
        %6158 = vmatprep.subr.bf16.mxu0 0
        %6159 = vmatpush1.bf16.msra.mxu0 0
        %6160 = vmatprep.subr.bf16.mxu0 0
        %6161 = vmatpush1.bf16.msra.mxu0 0
        %6162 = vmatprep.subr.bf16.mxu0 0
        %6163 = vmatpush1.bf16.msra.mxu0 0
        %6164 = vmatprep.subr.bf16.mxu0 0
        %6165 = vmatpush1.bf16.msra.mxu0 %v6125
        %6166 = vmatprep.subr.bf16.mxu0 0
        %6167 = vmatpush1.bf16.msra.mxu0 %v6124
        %6168 = vmatprep.subr.bf16.mxu0 0
        %6169 = vmatpush2.bf16.msra.mxu0 0
        %6170 = vmatprep.subr.bf16.mxu0 0
        %6171 = vmatpush2.bf16.msra.mxu0 0
        %6172 = vmatprep.subr.bf16.mxu0 0
        %6173 = vmatpush2.bf16.msra.mxu0 0
        %6174 = vmatprep.subr.bf16.mxu0 0
        %6175 = vmatpush2.bf16.msra.mxu0 0
        %6176 = vmatprep.subr.bf16.mxu0 0
        %6177 = vmatpush2.bf16.msra.mxu0 0
        %6178 = vmatprep.subr.bf16.mxu0 0
        %6179 = vmatpush2.bf16.msra.mxu0 0
        %6180 = vmatprep.subr.bf16.mxu0 0
        %6181 = vmatpush2.bf16.msra.mxu0 0
        %6182 = vmatprep.subr.bf16.mxu0 0
        %6183 = vmatpush2.bf16.msra.mxu0 0
        %6184 = vmatprep.mubr.bf16.mxu0 0
        %6185 = vmatmul.mubr.bf16.gmra.mxu0 %v6129
        %v6186 = vpop.f32.mrf.mxu0
        %v6187 = vadd.f32 0.0, %v6186
        %v6188 = vpop.f32.mrf.mxu0
        %v6189 = vpop.f32.mrf.mxu0
        %v6190 = vadd.f32 0.0, %v6189
        %v6191 = vpop.f32.mrf.mxu0
        %6192 = vmatprep.mubr.bf16.mxu0 0
        %6193 = vmatmul.mubr.bf16.gmra.mxu0 %v6132
        %v6194 = vpop.f32.mrf.mxu0
        %v6195 = vadd.f32 0.0, %v6194
        %v6196 = vpop.f32.mrf.mxu0
        %v6197 = vpop.f32.mrf.mxu0
        %v6198 = vadd.f32 0.0, %v6197
        %v6199 = vpop.f32.mrf.mxu0
        %6200 = vmatprep.mubr.bf16.mxu0 0
        %6201 = vmatmul.mubr.bf16.gmra.mxu0 %v6135
        %v6202 = vpop.f32.mrf.mxu0
        %v6203 = vadd.f32 0.0, %v6202
        %v6204 = vpop.f32.mrf.mxu0
        %v6205 = vpop.f32.mrf.mxu0
        %v6206 = vadd.f32 0.0, %v6205
        %v6207 = vpop.f32.mrf.mxu0
        %6208 = vmatprep.mubr.bf16.mxu0 0
        %6209 = vmatmul.mubr.bf16.gmra.mxu0 %v6138
        %v6210 = vpop.f32.mrf.mxu0
        %v6211 = vadd.f32 0.0, %v6210
        %v6212 = vpop.f32.mrf.mxu0
        %v6213 = vpop.f32.mrf.mxu0
        %v6214 = vadd.f32 0.0, %v6213
        %v6215 = vpop.f32.mrf.mxu0
        %6216 = vmatprep.mubr.bf16.mxu0 0
        %6217 = vmatmul.mubr.bf16.gmra.mxu0 %v6141
        %v6218 = vpop.f32.mrf.mxu0
        %v6219 = vadd.f32 0.0, %v6218
        %v6220 = vpop.f32.mrf.mxu0
        %v6221 = vpop.f32.mrf.mxu0
        %v6222 = vadd.f32 0.0, %v6221
        %v6223 = vpop.f32.mrf.mxu0
        %6224 = vmatprep.mubr.bf16.mxu0 0
        %6225 = vmatmul.mubr.bf16.gmra.mxu0 %v6144
        %v6226 = vpop.f32.mrf.mxu0
        %v6227 = vadd.f32 0.0, %v6226
        %v6228 = vpop.f32.mrf.mxu0
        %v6229 = vpop.f32.mrf.mxu0
        %v6230 = vadd.f32 0.0, %v6229
        %v6231 = vpop.f32.mrf.mxu0
        %6232 = vmatprep.mubr.bf16.mxu0 0
        %6233 = vmatmul.mubr.bf16.gmra.mxu0 %v6147
        %v6234 = vpop.f32.mrf.mxu0
        %v6235 = vadd.f32 0.0, %v6234
        %v6236 = vpop.f32.mrf.mxu0
        %v6237 = vpop.f32.mrf.mxu0
        %v6238 = vadd.f32 0.0, %v6237
        %v6239 = vpop.f32.mrf.mxu0
        %6240 = vmatprep.mubr.bf16.mxu0 0
        %6241 = vmatmul.mubr.bf16.gmra.mxu0 %v6150
        %v6242 = vpop.f32.mrf.mxu0
        %v6243 = vadd.f32 0.0, %v6242
        %v6244 = vpop.f32.mrf.mxu0
        %v6245 = vpop.f32.mrf.mxu0
        %v6246 = vadd.f32 0.0, %v6245
        %v6247 = vpop.f32.mrf.mxu0
        %6248 = vdwg.mxu0
        %v6249 = vadd.f32 %v5131, %v6187
        %v6250 = vadd.f32 %v5134, %v6190
        %v6251 = vadd.f32 %v5139, %v6195
        %v6252 = vadd.f32 %v5142, %v6198
        %v6253 = vadd.f32 %v5147, %v6203
        %v6254 = vadd.f32 %v5150, %v6206
        %v6255 = vadd.f32 %v5155, %v6211
        %v6256 = vadd.f32 %v5158, %v6214
        %v6257 = vadd.f32 %v5163, %v6219
        %v6258 = vadd.f32 %v5166, %v6222
        %v6259 = vadd.f32 %v5171, %v6227
        %v6260 = vadd.f32 %v5174, %v6230
        %v6261 = vadd.f32 %v5179, %v6235
        %v6262 = vadd.f32 %v5182, %v6238
        %v6263 = vadd.f32 %v5187, %v6243
        %v6264 = vadd.f32 %v5190, %v6246
        %6265 = vset.pattern.permute.xlu0 3
        %6266 = vperm.xlu0 %6265, %v2567
        %v6267 = vpop.permute.xlu0 %6266
        %6269 = vset.pattern.permute.xlu0 3
        %6270 = vperm.xlu0 %6269, %v2572
        %v6271 = vpop.permute.xlu0 %6270
        %6273 = vset.pattern.permute.xlu0 3
        %6274 = vperm.xlu0 %6273, %v2577
        %v6275 = vpop.permute.xlu0 %6274
        %6277 = vset.pattern.permute.xlu0 3
        %6278 = vperm.xlu0 %6277, %v2582
        %v6279 = vpop.permute.xlu0 %6278
        %6281 = vset.pattern.permute.xlu0 3
        %6282 = vperm.xlu0 %6281, %v2587
        %v6283 = vpop.permute.xlu0 %6282
        %6285 = vset.pattern.permute.xlu0 3
        %6286 = vperm.xlu0 %6285, %v2592
        %v6287 = vpop.permute.xlu0 %6286
        %6289 = vset.pattern.permute.xlu0 3
        %6290 = vperm.xlu0 %6289, %v2597
        %v6291 = vpop.permute.xlu0 %6290
        %6293 = vset.pattern.permute.xlu0 3
        %6294 = vperm.xlu0 %6293, %v2602
        %v6295 = vpop.permute.xlu0 %6294
        %6297 = vset.pattern.permute.xlu0 3
        %6298 = vperm.xlu0 %6297, %v2607
        %v6299 = vpop.permute.xlu0 %6298
        %6301 = vset.pattern.permute.xlu0 3
        %6302 = vperm.xlu0 %6301, %v2612
        %v6303 = vpop.permute.xlu0 %6302
        %6305 = vset.pattern.permute.xlu0 3
        %6306 = vperm.xlu0 %6305, %v2617
        %v6307 = vpop.permute.xlu0 %6306
        %6309 = vset.pattern.permute.xlu0 3
        %6310 = vperm.xlu0 %6309, %v2622
        %v6311 = vpop.permute.xlu0 %6310
        %6313 = vset.pattern.permute.xlu0 3
        %6314 = vperm.xlu0 %6313, %v2627
        %v6315 = vpop.permute.xlu0 %6314
        %6317 = vset.pattern.permute.xlu0 3
        %6318 = vperm.xlu0 %6317, %v2632
        %v6319 = vpop.permute.xlu0 %6318
        %6321 = vset.pattern.permute.xlu0 3
        %6322 = vperm.xlu0 %6321, %v2637
        %v6323 = vpop.permute.xlu0 %6322
        %6325 = vset.pattern.permute.xlu0 3
        %6326 = vperm.xlu0 %6325, %v2642
        %v6327 = vpop.permute.xlu0 %6326
        %v6329 = vlaneseq
        %v6330 = vshrl.u32 %v6329, 7
        %v6331 = vsub.s32 3, %v6330
        %v6332 = vrot.slane %v2661, %v6331
        %v6333 = vsub.f32 %v6267, %v6332
        %v6334 = vsub.f32 %v6271, %v6332
        %v6335 = vsub.f32 %v6275, %v6332
        %v6336 = vsub.f32 %v6279, %v6332
        %v6337 = vsub.f32 %v6283, %v6332
        %v6338 = vsub.f32 %v6287, %v6332
        %v6339 = vsub.f32 %v6291, %v6332
        %v6340 = vsub.f32 %v6295, %v6332
        %v6341 = vsub.f32 %v6299, %v6332
        %v6342 = vsub.f32 %v6303, %v6332
        %v6343 = vsub.f32 %v6307, %v6332
        %v6344 = vsub.f32 %v6311, %v6332
        %v6345 = vsub.f32 %v6315, %v6332
        %v6346 = vsub.f32 %v6319, %v6332
        %v6347 = vsub.f32 %v6323, %v6332
        %v6348 = vsub.f32 %v6327, %v6332
        %v6349 = vsel %vm2452, %v6333, -1e+30
        %v6350 = vsel %vm2453, %v6334, -1e+30
        %v6351 = vsel %vm2454, %v6335, -1e+30
        %v6352 = vsel %vm2455, %v6336, -1e+30
        %v6353 = vsel %vm2456, %v6337, -1e+30
        %v6354 = vsel %vm2457, %v6338, -1e+30
        %v6355 = vsel %vm2458, %v6339, -1e+30
        %v6356 = vsel %vm2459, %v6340, -1e+30
        %v6357 = vsel %vm2460, %v6341, -1e+30
        %v6358 = vsel %vm2461, %v6342, -1e+30
        %v6359 = vsel %vm2462, %v6343, -1e+30
        %v6360 = vsel %vm2463, %v6344, -1e+30
        %v6361 = vsel %vm2464, %v6345, -1e+30
        %v6362 = vsel %vm2465, %v6346, -1e+30
        %v6363 = vsel %vm2466, %v6347, -1e+30
        %v6364 = vsel %vm2467, %v6348, -1e+30
        %v6365 = vmul.f32 %v6349, 1.442695
        %v6366 = vpow.pop %v6365
        %v6367 = vmul.f32 %v6350, 1.442695
        %v6368 = vpow.pop %v6367
        %v6369 = vmul.f32 %v6351, 1.442695
        %v6370 = vpow.pop %v6369
        %v6371 = vmul.f32 %v6352, 1.442695
        %v6372 = vpow.pop %v6371
        %v6373 = vmul.f32 %v6353, 1.442695
        %v6374 = vpow.pop %v6373
        %v6375 = vmul.f32 %v6354, 1.442695
        %v6376 = vpow.pop %v6375
        %v6377 = vmul.f32 %v6355, 1.442695
        %v6378 = vpow.pop %v6377
        %v6379 = vmul.f32 %v6356, 1.442695
        %v6380 = vpow.pop %v6379
        %v6381 = vmul.f32 %v6357, 1.442695
        %v6382 = vpow.pop %v6381
        %v6383 = vmul.f32 %v6358, 1.442695
        %v6384 = vpow.pop %v6383
        %v6385 = vmul.f32 %v6359, 1.442695
        %v6386 = vpow.pop %v6385
        %v6387 = vmul.f32 %v6360, 1.442695
        %v6388 = vpow.pop %v6387
        %v6389 = vmul.f32 %v6361, 1.442695
        %v6390 = vpow.pop %v6389
        %v6391 = vmul.f32 %v6362, 1.442695
        %v6392 = vpow.pop %v6391
        %v6393 = vmul.f32 %v6363, 1.442695
        %v6394 = vpow.pop %v6393
        %v6395 = vmul.f32 %v6364, 1.442695
        %v6396 = vpow.pop %v6395
        %v6397 = vmul.f32 %v2888, %v6366
        %v6398 = vmul.f32 %v2893, %v6368
        %v6399 = vmul.f32 %v2898, %v6370
        %v6400 = vmul.f32 %v2903, %v6372
        %v6401 = vmul.f32 %v2908, %v6374
        %v6402 = vmul.f32 %v2913, %v6376
        %v6403 = vmul.f32 %v2918, %v6378
        %v6404 = vmul.f32 %v2923, %v6380
        %v6405 = vmul.f32 %v2928, %v6382
        %v6406 = vmul.f32 %v2933, %v6384
        %v6407 = vmul.f32 %v2938, %v6386
        %v6408 = vmul.f32 %v2943, %v6388
        %v6409 = vmul.f32 %v2948, %v6390
        %v6410 = vmul.f32 %v2953, %v6392
        %v6411 = vmul.f32 %v2958, %v6394
        %v6412 = vmul.f32 %v2963, %v6396
        %v6413 = vlaneseq
        %v6414 = vshrl.u32 %v6413, 7
        %v6415 = vsub.s32 3, %v6414
        %v6416 = vrot.slane %v2693, %v6415
        %v6417 = vmul.f32 %v6397, %v6416
        %v6418 = vmul.f32 %v6398, %v6416
        %v6419 = vmul.f32 %v6399, %v6416
        %v6420 = vmul.f32 %v6400, %v6416
        %v6421 = vmul.f32 %v6401, %v6416
        %v6422 = vmul.f32 %v6402, %v6416
        %v6423 = vmul.f32 %v6403, %v6416
        %v6424 = vmul.f32 %v6404, %v6416
        %v6425 = vmul.f32 %v6405, %v6416
        %v6426 = vmul.f32 %v6406, %v6416
        %v6427 = vmul.f32 %v6407, %v6416
        %v6428 = vmul.f32 %v6408, %v6416
        %v6429 = vmul.f32 %v6409, %v6416
        %v6430 = vmul.f32 %v6410, %v6416
        %v6431 = vmul.f32 %v6411, %v6416
        %v6432 = vmul.f32 %v6412, %v6416
        %v6433 = vld [vmem:[#allocation2] sm:$0xff]
        %v6434 = vld [vmem:[#allocation2 + $0x8] sm:$0xff]
        %6437 = vrot.lane.b32.xlu0 %v6433, 32
        %v6438 = vpop.permute.xlu0 %6437
        %6439 = vrot.lane.b32.xlu0 %v6434, 32
        %v6440 = vpop.permute.xlu0 %6439
        %6443 = vmatprep.subr.mxu0 0.0
        %6444 = vmatpush1.msra.mxu0 0.0
        %6445 = vmatprep.subr.mxu0 0.0
        %6446 = vmatpush1.msra.mxu0 0.0
        %6447 = vmatprep.subr.mxu0 0.0
        %6448 = vmatpush1.msra.mxu0 0.0
        %6449 = vmatprep.subr.mxu0 0.0
        %6450 = vmatpush1.msra.mxu0 0.0
        %6451 = vmatprep.subr.mxu0 0.0
        %6452 = vmatpush1.msra.mxu0 0.0
        %6453 = vmatprep.subr.mxu0 0.0
        %6454 = vmatpush1.msra.mxu0 0.0
        %6455 = vmatprep.subr.mxu0 0.0
        %6456 = vmatpush1.msra.mxu0 0.0
        %6457 = vmatprep.subr.mxu0 0.0
        %6458 = vmatpush1.msra.mxu0 0.0
        %6459 = vmatprep.subr.mxu0 0.0
        %6460 = vmatpush1.msra.mxu0 0.0
        %6461 = vmatprep.subr.mxu0 0.0
        %6462 = vmatpush1.msra.mxu0 0.0
        %6463 = vmatprep.subr.mxu0 0.0
        %6464 = vmatpush1.msra.mxu0 0.0
        %6465 = vmatprep.subr.mxu0 0.0
        %6466 = vmatpush1.msra.mxu0 0.0
        %6467 = vmatprep.subr.mxu0 0.0
        %6468 = vmatpush1.msra.mxu0 0.0
        %6469 = vmatprep.subr.mxu0 0.0
        %6470 = vmatpush1.msra.mxu0 0.0
        %6471 = vmatprep.subr.mxu0 0.0
        %6472 = vmatpush1.msra.mxu0 %v6440
        %6473 = vmatprep.subr.mxu0 0.0
        %6474 = vmatpush1.msra.mxu0 %v6438
        %6475 = vmatprep.subr.mxu0 0.0
        %6476 = vmatpush2.msra.mxu0 0.0
        %6477 = vmatprep.subr.mxu0 0.0
        %6478 = vmatpush2.msra.mxu0 0.0
        %6479 = vmatprep.subr.mxu0 0.0
        %6480 = vmatpush2.msra.mxu0 0.0
        %6481 = vmatprep.subr.mxu0 0.0
        %6482 = vmatpush2.msra.mxu0 0.0
        %6483 = vmatprep.subr.mxu0 0.0
        %6484 = vmatpush2.msra.mxu0 0.0
        %6485 = vmatprep.subr.mxu0 0.0
        %6486 = vmatpush2.msra.mxu0 0.0
        %6487 = vmatprep.subr.mxu0 0.0
        %6488 = vmatpush2.msra.mxu0 0.0
        %6489 = vmatprep.subr.mxu0 0.0
        %6490 = vmatpush2.msra.mxu0 0.0
        %6491 = vmatprep.subr.mxu0 0.0
        %6492 = vmatpush2.msra.mxu0 0.0
        %6493 = vmatprep.subr.mxu0 0.0
        %6494 = vmatpush2.msra.mxu0 0.0
        %6495 = vmatprep.subr.mxu0 0.0
        %6496 = vmatpush2.msra.mxu0 0.0
        %6497 = vmatprep.subr.mxu0 0.0
        %6498 = vmatpush2.msra.mxu0 0.0
        %6499 = vmatprep.subr.mxu0 0.0
        %6500 = vmatpush2.msra.mxu0 0.0
        %6501 = vmatprep.subr.mxu0 0.0
        %6502 = vmatpush2.msra.mxu0 0.0
        %6503 = vmatprep.subr.mxu0 0.0
        %6504 = vmatpush2.msra.mxu0 0.0
        %6505 = vmatprep.subr.mxu0 0.0
        %6506 = vmatpush2.msra.mxu0 0.0
        %6507 = vmatprep.mubr.f32.mxu0 0.0
        %6508 = vmatmul.mubr.f32.gmra.mxu0 %v2789
        %v6509 = vpop.f32.mrf.mxu0
        %v6510 = vadd.f32 0.0, %v6509
        %v6511 = vpop.f32.mrf.mxu0
        %6512 = vmatprep.mubr.f32.mxu0 0.0
        %6513 = vmatmul.mubr.f32.gmra.mxu0 %v2791
        %v6514 = vpop.f32.mrf.mxu0
        %v6515 = vadd.f32 0.0, %v6514
        %v6516 = vpop.f32.mrf.mxu0
        %6517 = vmatprep.mubr.f32.mxu0 0.0
        %6518 = vmatmul.mubr.f32.gmra.mxu0 %v2793
        %v6519 = vpop.f32.mrf.mxu0
        %v6520 = vadd.f32 0.0, %v6519
        %v6521 = vpop.f32.mrf.mxu0
        %6522 = vmatprep.mubr.f32.mxu0 0.0
        %6523 = vmatmul.mubr.f32.gmra.mxu0 %v2795
        %v6524 = vpop.f32.mrf.mxu0
        %v6525 = vadd.f32 0.0, %v6524
        %v6526 = vpop.f32.mrf.mxu0
        %6527 = vmatprep.mubr.f32.mxu0 0.0
        %6528 = vmatmul.mubr.f32.gmra.mxu0 %v2797
        %v6529 = vpop.f32.mrf.mxu0
        %v6530 = vadd.f32 0.0, %v6529
        %v6531 = vpop.f32.mrf.mxu0
        %6532 = vmatprep.mubr.f32.mxu0 0.0
        %6533 = vmatmul.mubr.f32.gmra.mxu0 %v2799
        %v6534 = vpop.f32.mrf.mxu0
        %v6535 = vadd.f32 0.0, %v6534
        %v6536 = vpop.f32.mrf.mxu0
        %6537 = vmatprep.mubr.f32.mxu0 0.0
        %6538 = vmatmul.mubr.f32.gmra.mxu0 %v2801
        %v6539 = vpop.f32.mrf.mxu0
        %v6540 = vadd.f32 0.0, %v6539
        %v6541 = vpop.f32.mrf.mxu0
        %6542 = vmatprep.mubr.f32.mxu0 0.0
        %6543 = vmatmul.mubr.f32.gmra.mxu0 %v2803
        %v6544 = vpop.f32.mrf.mxu0
        %v6545 = vadd.f32 0.0, %v6544
        %v6546 = vpop.f32.mrf.mxu0
        %6547 = vmatprep.mubr.f32.mxu0 0.0
        %6548 = vmatmul.mubr.f32.gmra.mxu0 %v2805
        %v6549 = vpop.f32.mrf.mxu0
        %v6550 = vadd.f32 0.0, %v6549
        %v6551 = vpop.f32.mrf.mxu0
        %6552 = vmatprep.mubr.f32.mxu0 0.0
        %6553 = vmatmul.mubr.f32.gmra.mxu0 %v2807
        %v6554 = vpop.f32.mrf.mxu0
        %v6555 = vadd.f32 0.0, %v6554
        %v6556 = vpop.f32.mrf.mxu0
        %6557 = vmatprep.mubr.f32.mxu0 0.0
        %6558 = vmatmul.mubr.f32.gmra.mxu0 %v2809
        %v6559 = vpop.f32.mrf.mxu0
        %v6560 = vadd.f32 0.0, %v6559
        %v6561 = vpop.f32.mrf.mxu0
        %6562 = vmatprep.mubr.f32.mxu0 0.0
        %6563 = vmatmul.mubr.f32.gmra.mxu0 %v2811
        %v6564 = vpop.f32.mrf.mxu0
        %v6565 = vadd.f32 0.0, %v6564
        %v6566 = vpop.f32.mrf.mxu0
        %6567 = vmatprep.mubr.f32.mxu0 0.0
        %6568 = vmatmul.mubr.f32.gmra.mxu0 %v2813
        %v6569 = vpop.f32.mrf.mxu0
        %v6570 = vadd.f32 0.0, %v6569
        %v6571 = vpop.f32.mrf.mxu0
        %6572 = vmatprep.mubr.f32.mxu0 0.0
        %6573 = vmatmul.mubr.f32.gmra.mxu0 %v2815
        %v6574 = vpop.f32.mrf.mxu0
        %v6575 = vadd.f32 0.0, %v6574
        %v6576 = vpop.f32.mrf.mxu0
        %6577 = vmatprep.mubr.f32.mxu0 0.0
        %6578 = vmatmul.mubr.f32.gmra.mxu0 %v2817
        %v6579 = vpop.f32.mrf.mxu0
        %v6580 = vadd.f32 0.0, %v6579
        %v6581 = vpop.f32.mrf.mxu0
        %6582 = vmatprep.mubr.f32.mxu0 0.0
        %6583 = vmatmul.mubr.f32.gmra.mxu0 %v2819
        %v6584 = vpop.f32.mrf.mxu0
        %v6585 = vadd.f32 0.0, %v6584
        %v6586 = vpop.f32.mrf.mxu0
        %6587 = vdwg.mxu0
        %6588 = vset.pattern.permute.xlu0 3
        %6589 = vperm.xlu0 %6588, %v3410
        %v6590 = vpop.permute.xlu0 %6589
        %6592 = vset.pattern.permute.xlu0 3
        %6593 = vperm.xlu0 %6592, %v3412
        %v6594 = vpop.permute.xlu0 %6593
        %6596 = vset.pattern.permute.xlu0 3
        %6597 = vperm.xlu0 %6596, %v3414
        %v6598 = vpop.permute.xlu0 %6597
        %6600 = vset.pattern.permute.xlu0 3
        %6601 = vperm.xlu0 %6600, %v3416
        %v6602 = vpop.permute.xlu0 %6601
        %6604 = vset.pattern.permute.xlu0 3
        %6605 = vperm.xlu0 %6604, %v3418
        %v6606 = vpop.permute.xlu0 %6605
        %6608 = vset.pattern.permute.xlu0 3
        %6609 = vperm.xlu0 %6608, %v3420
        %v6610 = vpop.permute.xlu0 %6609
        %6612 = vset.pattern.permute.xlu0 3
        %6613 = vperm.xlu0 %6612, %v3422
        %v6614 = vpop.permute.xlu0 %6613
        %6616 = vset.pattern.permute.xlu0 3
        %6617 = vperm.xlu0 %6616, %v3424
        %v6618 = vpop.permute.xlu0 %6617
        %6620 = vset.pattern.permute.xlu0 3
        %6621 = vperm.xlu0 %6620, %v3426
        %v6622 = vpop.permute.xlu0 %6621
        %6624 = vset.pattern.permute.xlu0 3
        %6625 = vperm.xlu0 %6624, %v3428
        %v6626 = vpop.permute.xlu0 %6625
        %6628 = vset.pattern.permute.xlu0 3
        %6629 = vperm.xlu0 %6628, %v3430
        %v6630 = vpop.permute.xlu0 %6629
        %6632 = vset.pattern.permute.xlu0 3
        %6633 = vperm.xlu0 %6632, %v3432
        %v6634 = vpop.permute.xlu0 %6633
        %6636 = vset.pattern.permute.xlu0 3
        %6637 = vperm.xlu0 %6636, %v3434
        %v6638 = vpop.permute.xlu0 %6637
        %6640 = vset.pattern.permute.xlu0 3
        %6641 = vperm.xlu0 %6640, %v3436
        %v6642 = vpop.permute.xlu0 %6641
        %6644 = vset.pattern.permute.xlu0 3
        %6645 = vperm.xlu0 %6644, %v3438
        %v6646 = vpop.permute.xlu0 %6645
        %6648 = vset.pattern.permute.xlu0 3
        %6649 = vperm.xlu0 %6648, %v3440
        %v6650 = vpop.permute.xlu0 %6649
        %v6652 = vmul.f32 %v6510, %v6590
        %v6653 = vmul.f32 %v6515, %v6594
        %v6654 = vmul.f32 %v6520, %v6598
        %v6655 = vmul.f32 %v6525, %v6602
        %v6656 = vmul.f32 %v6530, %v6606
        %v6657 = vmul.f32 %v6535, %v6610
        %v6658 = vmul.f32 %v6540, %v6614
        %v6659 = vmul.f32 %v6545, %v6618
        %v6660 = vmul.f32 %v6550, %v6622
        %v6661 = vmul.f32 %v6555, %v6626
        %v6662 = vmul.f32 %v6560, %v6630
        %v6663 = vmul.f32 %v6565, %v6634
        %v6664 = vmul.f32 %v6570, %v6638
        %v6665 = vmul.f32 %v6575, %v6642
        %v6666 = vmul.f32 %v6580, %v6646
        %v6667 = vmul.f32 %v6585, %v6650
        %6668 = vrot.lane.b32.xlu0 %v3557, 32
        %v6669 = vpop.permute.xlu0 %6668
        %6670 = vrot.lane.b32.xlu0 %v3559, 32
        %v6671 = vpop.permute.xlu0 %6670
        %6672 = vrot.lane.b32.xlu0 %v3561, 32
        %v6673 = vpop.permute.xlu0 %6672
        %6674 = vrot.lane.b32.xlu0 %v3563, 32
        %v6675 = vpop.permute.xlu0 %6674
        %6676 = vrot.lane.b32.xlu0 %v3565, 32
        %v6677 = vpop.permute.xlu0 %6676
        %6678 = vrot.lane.b32.xlu0 %v3567, 32
        %v6679 = vpop.permute.xlu0 %6678
        %6680 = vrot.lane.b32.xlu0 %v3569, 32
        %v6681 = vpop.permute.xlu0 %6680
        %6682 = vrot.lane.b32.xlu0 %v3571, 32
        %v6683 = vpop.permute.xlu0 %6682
        %6684 = vrot.lane.b32.xlu0 %v3573, 32
        %v6685 = vpop.permute.xlu0 %6684
        %6686 = vrot.lane.b32.xlu0 %v3575, 32
        %v6687 = vpop.permute.xlu0 %6686
        %6688 = vrot.lane.b32.xlu0 %v3577, 32
        %v6689 = vpop.permute.xlu0 %6688
        %6690 = vrot.lane.b32.xlu0 %v3579, 32
        %v6691 = vpop.permute.xlu0 %6690
        %6692 = vrot.lane.b32.xlu0 %v3581, 32
        %v6693 = vpop.permute.xlu0 %6692
        %6694 = vrot.lane.b32.xlu0 %v3583, 32
        %v6695 = vpop.permute.xlu0 %6694
        %6696 = vrot.lane.b32.xlu0 %v3585, 32
        %v6697 = vpop.permute.xlu0 %6696
        %6698 = vrot.lane.b32.xlu0 %v3587, 32
        %v6699 = vpop.permute.xlu0 %6698
        %6716 = vmatprep.subr.mxu0 0.0
        %6717 = vmatpush1.msra.mxu0 %v6699
        %6718 = vmatprep.subr.mxu0 0.0
        %6719 = vmatpush1.msra.mxu0 %v6697
        %6720 = vmatprep.subr.mxu0 0.0
        %6721 = vmatpush1.msra.mxu0 %v6695
        %6722 = vmatprep.subr.mxu0 0.0
        %6723 = vmatpush1.msra.mxu0 %v6693
        %6724 = vmatprep.subr.mxu0 0.0
        %6725 = vmatpush1.msra.mxu0 %v6691
        %6726 = vmatprep.subr.mxu0 0.0
        %6727 = vmatpush1.msra.mxu0 %v6689
        %6728 = vmatprep.subr.mxu0 0.0
        %6729 = vmatpush1.msra.mxu0 %v6687
        %6730 = vmatprep.subr.mxu0 0.0
        %6731 = vmatpush1.msra.mxu0 %v6685
        %6732 = vmatprep.subr.mxu0 0.0
        %6733 = vmatpush1.msra.mxu0 %v6683
        %6734 = vmatprep.subr.mxu0 0.0
        %6735 = vmatpush1.msra.mxu0 %v6681
        %6736 = vmatprep.subr.mxu0 0.0
        %6737 = vmatpush1.msra.mxu0 %v6679
        %6738 = vmatprep.subr.mxu0 0.0
        %6739 = vmatpush1.msra.mxu0 %v6677
        %6740 = vmatprep.subr.mxu0 0.0
        %6741 = vmatpush1.msra.mxu0 %v6675
        %6742 = vmatprep.subr.mxu0 0.0
        %6743 = vmatpush1.msra.mxu0 %v6673
        %6744 = vmatprep.subr.mxu0 0.0
        %6745 = vmatpush1.msra.mxu0 %v6671
        %6746 = vmatprep.subr.mxu0 0.0
        %6747 = vmatpush1.msra.mxu0 %v6669
        %6748 = vmatprep.subr.mxu0 0.0
        %6749 = vmatpush2.msra.mxu0 0.0
        %6750 = vmatprep.subr.mxu0 0.0
        %6751 = vmatpush2.msra.mxu0 0.0
        %6752 = vmatprep.subr.mxu0 0.0
        %6753 = vmatpush2.msra.mxu0 0.0
        %6754 = vmatprep.subr.mxu0 0.0
        %6755 = vmatpush2.msra.mxu0 0.0
        %6756 = vmatprep.subr.mxu0 0.0
        %6757 = vmatpush2.msra.mxu0 0.0
        %6758 = vmatprep.subr.mxu0 0.0
        %6759 = vmatpush2.msra.mxu0 0.0
        %6760 = vmatprep.subr.mxu0 0.0
        %6761 = vmatpush2.msra.mxu0 0.0
        %6762 = vmatprep.subr.mxu0 0.0
        %6763 = vmatpush2.msra.mxu0 0.0
        %6764 = vmatprep.subr.mxu0 0.0
        %6765 = vmatpush2.msra.mxu0 0.0
        %6766 = vmatprep.subr.mxu0 0.0
        %6767 = vmatpush2.msra.mxu0 0.0
        %6768 = vmatprep.subr.mxu0 0.0
        %6769 = vmatpush2.msra.mxu0 0.0
        %6770 = vmatprep.subr.mxu0 0.0
        %6771 = vmatpush2.msra.mxu0 0.0
        %6772 = vmatprep.subr.mxu0 0.0
        %6773 = vmatpush2.msra.mxu0 0.0
        %6774 = vmatprep.subr.mxu0 0.0
        %6775 = vmatpush2.msra.mxu0 0.0
        %6776 = vmatprep.subr.mxu0 0.0
        %6777 = vmatpush2.msra.mxu0 0.0
        %6778 = vmatprep.subr.mxu0 0.0
        %6779 = vmatpush2.msra.mxu0 0.0
        %6780 = vmatprep.mubr.f32.mxu0 0.0
        %6781 = vmatmul.mubr.f32.gmra.mxu0 %v6417
        %v6782 = vpop.f32.mrf.mxu0
        %v6783 = vadd.f32 %v6652, %v6782
        %v6784 = vpop.f32.mrf.mxu0
        %6785 = vmatprep.mubr.f32.mxu0 0.0
        %6786 = vmatmul.mubr.f32.gmra.mxu0 %v6418
        %v6787 = vpop.f32.mrf.mxu0
        %v6788 = vadd.f32 %v6653, %v6787
        %v6789 = vpop.f32.mrf.mxu0
        %6790 = vmatprep.mubr.f32.mxu0 0.0
        %6791 = vmatmul.mubr.f32.gmra.mxu0 %v6419
        %v6792 = vpop.f32.mrf.mxu0
        %v6793 = vadd.f32 %v6654, %v6792
        %v6794 = vpop.f32.mrf.mxu0
        %6795 = vmatprep.mubr.f32.mxu0 0.0
        %6796 = vmatmul.mubr.f32.gmra.mxu0 %v6420
        %v6797 = vpop.f32.mrf.mxu0
        %v6798 = vadd.f32 %v6655, %v6797
        %v6799 = vpop.f32.mrf.mxu0
        %6800 = vmatprep.mubr.f32.mxu0 0.0
        %6801 = vmatmul.mubr.f32.gmra.mxu0 %v6421
        %v6802 = vpop.f32.mrf.mxu0
        %v6803 = vadd.f32 %v6656, %v6802
        %v6804 = vpop.f32.mrf.mxu0
        %6805 = vmatprep.mubr.f32.mxu0 0.0
        %6806 = vmatmul.mubr.f32.gmra.mxu0 %v6422
        %v6807 = vpop.f32.mrf.mxu0
        %v6808 = vadd.f32 %v6657, %v6807
        %v6809 = vpop.f32.mrf.mxu0
        %6810 = vmatprep.mubr.f32.mxu0 0.0
        %6811 = vmatmul.mubr.f32.gmra.mxu0 %v6423
        %v6812 = vpop.f32.mrf.mxu0
        %v6813 = vadd.f32 %v6658, %v6812
        %v6814 = vpop.f32.mrf.mxu0
        %6815 = vmatprep.mubr.f32.mxu0 0.0
        %6816 = vmatmul.mubr.f32.gmra.mxu0 %v6424
        %v6817 = vpop.f32.mrf.mxu0
        %v6818 = vadd.f32 %v6659, %v6817
        %v6819 = vpop.f32.mrf.mxu0
        %6820 = vmatprep.mubr.f32.mxu0 0.0
        %6821 = vmatmul.mubr.f32.gmra.mxu0 %v6425
        %v6822 = vpop.f32.mrf.mxu0
        %v6823 = vadd.f32 %v6660, %v6822
        %v6824 = vpop.f32.mrf.mxu0
        %6825 = vmatprep.mubr.f32.mxu0 0.0
        %6826 = vmatmul.mubr.f32.gmra.mxu0 %v6426
        %v6827 = vpop.f32.mrf.mxu0
        %v6828 = vadd.f32 %v6661, %v6827
        %v6829 = vpop.f32.mrf.mxu0
        %6830 = vmatprep.mubr.f32.mxu0 0.0
        %6831 = vmatmul.mubr.f32.gmra.mxu0 %v6427
        %v6832 = vpop.f32.mrf.mxu0
        %v6833 = vadd.f32 %v6662, %v6832
        %v6834 = vpop.f32.mrf.mxu0
        %6835 = vmatprep.mubr.f32.mxu0 0.0
        %6836 = vmatmul.mubr.f32.gmra.mxu0 %v6428
        %v6837 = vpop.f32.mrf.mxu0
        %v6838 = vadd.f32 %v6663, %v6837
        %v6839 = vpop.f32.mrf.mxu0
        %6840 = vmatprep.mubr.f32.mxu0 0.0
        %6841 = vmatmul.mubr.f32.gmra.mxu0 %v6429
        %v6842 = vpop.f32.mrf.mxu0
        %v6843 = vadd.f32 %v6664, %v6842
        %v6844 = vpop.f32.mrf.mxu0
        %6845 = vmatprep.mubr.f32.mxu0 0.0
        %6846 = vmatmul.mubr.f32.gmra.mxu0 %v6430
        %v6847 = vpop.f32.mrf.mxu0
        %v6848 = vadd.f32 %v6665, %v6847
        %v6849 = vpop.f32.mrf.mxu0
        %6850 = vmatprep.mubr.f32.mxu0 0.0
        %6851 = vmatmul.mubr.f32.gmra.mxu0 %v6431
        %v6852 = vpop.f32.mrf.mxu0
        %v6853 = vadd.f32 %v6666, %v6852
        %v6854 = vpop.f32.mrf.mxu0
        %6855 = vmatprep.mubr.f32.mxu0 0.0
        %6856 = vmatmul.mubr.f32.gmra.mxu0 %v6432
        %v6857 = vpop.f32.mrf.mxu0
        %v6858 = vadd.f32 %v6667, %v6857
        %v6859 = vpop.f32.mrf.mxu0
        %6860 = vdwg.mxu0
        %v6861 = vld [vmem:[%s9] sm:$0x1]
        %v6863 = vlaneseq
        %v6864 = vshrl.u32 %v6863, 7
        %v6865 = vsub.s32 0, %v6864
        %v6866 = vrot.slane %v6861, %v6865
        %6867 = vset.pattern.permute.xlu0 3
        %6868 = vperm.xlu0 %6867, %v6866
        %v6869 = vpop.permute.xlu0 %6868
        %v6871 = vmul.f32 %v6869, %v1170
        %v6872 = vmul.f32 %v6869, %v1171
        %v6873 = vmul.f32 %v6869, %v1172
        %v6874 = vmul.f32 %v6869, %v1173
        %v6875 = vmul.f32 %v6869, %v1174
        %v6876 = vmul.f32 %v6869, %v1175
        %v6877 = vmul.f32 %v6869, %v1176
        %v6878 = vmul.f32 %v6869, %v1177
        %v6879 = vmul.f32 %v6869, %v1178
        %v6880 = vmul.f32 %v6869, %v1179
        %v6881 = vmul.f32 %v6869, %v1180
        %v6882 = vmul.f32 %v6869, %v1181
        %v6883 = vmul.f32 %v6869, %v1182
        %v6884 = vmul.f32 %v6869, %v1183
        %v6885 = vmul.f32 %v6869, %v1184
        %v6886 = vmul.f32 %v6869, %v1185
        %v6887 = vmul.f32 %v6869, %v1186
        %v6905 = vrot.slane %v6871, 5
        %v6906 = vrot.slane %v6872, 5
        %v6907 = vsel %vm3554, %v6905, %v6906
        %v6908 = vrot.slane %v6873, 5
        %v6909 = vsel %vm3554, %v6906, %v6908
        %v6910 = vrot.slane %v6874, 5
        %v6911 = vsel %vm3554, %v6908, %v6910
        %v6912 = vrot.slane %v6875, 5
        %v6913 = vsel %vm3554, %v6910, %v6912
        %v6914 = vrot.slane %v6876, 5
        %v6915 = vsel %vm3554, %v6912, %v6914
        %v6916 = vrot.slane %v6877, 5
        %v6917 = vsel %vm3554, %v6914, %v6916
        %v6918 = vrot.slane %v6878, 5
        %v6919 = vsel %vm3554, %v6916, %v6918
        %v6920 = vrot.slane %v6879, 5
        %v6921 = vsel %vm3554, %v6918, %v6920
        %v6922 = vrot.slane %v6880, 5
        %v6923 = vsel %vm3554, %v6920, %v6922
        %v6924 = vrot.slane %v6881, 5
        %v6925 = vsel %vm3554, %v6922, %v6924
        %v6926 = vrot.slane %v6882, 5
        %v6927 = vsel %vm3554, %v6924, %v6926
        %v6928 = vrot.slane %v6883, 5
        %v6929 = vsel %vm3554, %v6926, %v6928
        %v6930 = vrot.slane %v6884, 5
        %v6931 = vsel %vm3554, %v6928, %v6930
        %v6932 = vrot.slane %v6885, 5
        %v6933 = vsel %vm3554, %v6930, %v6932
        %v6934 = vrot.slane %v6886, 5
        %v6935 = vsel %vm3554, %v6932, %v6934
        %v6936 = vrot.slane %v6887, 5
        %v6937 = vsel %vm3554, %v6934, %v6936
        %6938 = vrot.lane.b32.xlu0 %v6907, 32
        %v6939 = vpop.permute.xlu0 %6938
        %6940 = vrot.lane.b32.xlu0 %v6909, 32
        %v6941 = vpop.permute.xlu0 %6940
        %6942 = vrot.lane.b32.xlu0 %v6911, 32
        %v6943 = vpop.permute.xlu0 %6942
        %6944 = vrot.lane.b32.xlu0 %v6913, 32
        %v6945 = vpop.permute.xlu0 %6944
        %6946 = vrot.lane.b32.xlu0 %v6915, 32
        %v6947 = vpop.permute.xlu0 %6946
        %6948 = vrot.lane.b32.xlu0 %v6917, 32
        %v6949 = vpop.permute.xlu0 %6948
        %6950 = vrot.lane.b32.xlu0 %v6919, 32
        %v6951 = vpop.permute.xlu0 %6950
        %6952 = vrot.lane.b32.xlu0 %v6921, 32
        %v6953 = vpop.permute.xlu0 %6952
        %6954 = vrot.lane.b32.xlu0 %v6923, 32
        %v6955 = vpop.permute.xlu0 %6954
        %6956 = vrot.lane.b32.xlu0 %v6925, 32
        %v6957 = vpop.permute.xlu0 %6956
        %6958 = vrot.lane.b32.xlu0 %v6927, 32
        %v6959 = vpop.permute.xlu0 %6958
        %6960 = vrot.lane.b32.xlu0 %v6929, 32
        %v6961 = vpop.permute.xlu0 %6960
        %6962 = vrot.lane.b32.xlu0 %v6931, 32
        %v6963 = vpop.permute.xlu0 %6962
        %6964 = vrot.lane.b32.xlu0 %v6933, 32
        %v6965 = vpop.permute.xlu0 %6964
        %6966 = vrot.lane.b32.xlu0 %v6935, 32
        %v6967 = vpop.permute.xlu0 %6966
        %6968 = vrot.lane.b32.xlu0 %v6937, 32
        %v6969 = vpop.permute.xlu0 %6968
        %v6986 = vadd.f32 %v6783, %v6939
        %v6987 = vadd.f32 %v6788, %v6941
        %v6988 = vadd.f32 %v6793, %v6943
        %v6989 = vadd.f32 %v6798, %v6945
        %v6990 = vadd.f32 %v6803, %v6947
        %v6991 = vadd.f32 %v6808, %v6949
        %v6992 = vadd.f32 %v6813, %v6951
        %v6993 = vadd.f32 %v6818, %v6953
        %v6994 = vadd.f32 %v6823, %v6955
        %v6995 = vadd.f32 %v6828, %v6957
        %v6996 = vadd.f32 %v6833, %v6959
        %v6997 = vadd.f32 %v6838, %v6961
        %v6998 = vadd.f32 %v6843, %v6963
        %v6999 = vadd.f32 %v6848, %v6965
        %v7000 = vadd.f32 %v6853, %v6967
        %v7001 = vadd.f32 %v6858, %v6969
        %7002 = vrot.lane.b32.xlu0 %v3062, 32
        %v7003 = vpop.permute.xlu0 %7002
        %7004 = vrot.lane.b32.xlu0 %v3063, 32
        %v7005 = vpop.permute.xlu0 %7004
        %7006 = vrot.lane.b32.xlu0 %v3064, 32
        %v7007 = vpop.permute.xlu0 %7006
        %7008 = vrot.lane.b32.xlu0 %v3065, 32
        %v7009 = vpop.permute.xlu0 %7008
        %7010 = vrot.lane.b32.xlu0 %v3066, 32
        %v7011 = vpop.permute.xlu0 %7010
        %7012 = vrot.lane.b32.xlu0 %v3067, 32
        %v7013 = vpop.permute.xlu0 %7012
        %7014 = vrot.lane.b32.xlu0 %v3068, 32
        %v7015 = vpop.permute.xlu0 %7014
        %7016 = vrot.lane.b32.xlu0 %v3069, 32
        %v7017 = vpop.permute.xlu0 %7016
        %7018 = vrot.lane.b32.xlu0 %v3070, 32
        %v7019 = vpop.permute.xlu0 %7018
        %7020 = vrot.lane.b32.xlu0 %v3071, 32
        %v7021 = vpop.permute.xlu0 %7020
        %7022 = vrot.lane.b32.xlu0 %v3072, 32
        %v7023 = vpop.permute.xlu0 %7022
        %7024 = vrot.lane.b32.xlu0 %v3073, 32
        %v7025 = vpop.permute.xlu0 %7024
        %7026 = vrot.lane.b32.xlu0 %v3074, 32
        %v7027 = vpop.permute.xlu0 %7026
        %7028 = vrot.lane.b32.xlu0 %v3075, 32
        %v7029 = vpop.permute.xlu0 %7028
        %7030 = vrot.lane.b32.xlu0 %v3076, 32
        %v7031 = vpop.permute.xlu0 %7030
        %7032 = vrot.lane.b32.xlu0 %v3077, 32
        %v7033 = vpop.permute.xlu0 %7032
        %v7050 = vmul.f32 %v6986, %v7003
        %v7051 = vmul.f32 %v6987, %v7005
        %v7052 = vmul.f32 %v6988, %v7007
        %v7053 = vmul.f32 %v6989, %v7009
        %v7054 = vmul.f32 %v6990, %v7011
        %v7055 = vmul.f32 %v6991, %v7013
        %v7056 = vmul.f32 %v6992, %v7015
        %v7057 = vmul.f32 %v6993, %v7017
        %v7058 = vmul.f32 %v6994, %v7019
        %v7059 = vmul.f32 %v6995, %v7021
        %v7060 = vmul.f32 %v6996, %v7023
        %v7061 = vmul.f32 %v6997, %v7025
        %v7062 = vmul.f32 %v6998, %v7027
        %v7063 = vmul.f32 %v6999, %v7029
        %v7064 = vmul.f32 %v7000, %v7031
        %v7065 = vmul.f32 %v7001, %v7033
        %v7066 = vrot.slane %v2661, 4
        %v7068 = vsub.f32 %v6327, %v7066
        %v7069 = vmul.f32 %v7068, 1.442695
        %v7070 = vpow.pop %v7069
        %v7072 = vrot.slane %v7070, 4
        %v7074 = vmul.f32 %v2693, %v7072
        %7075 = vrot.lane.b32.xlu0 %v3884, 125
        %v7076 = vpop.permute.xlu0 %7075
        %s7077 = vtos %v7076
        %v7078 = vstv %s7077
        %v7080 = vmul.f32 %v7078, %v6433
        %v7081 = vmul.f32 %v7078, %v6434
        %v7082 = vlaneseq
        %v7083 = vshrl.u32 %v7082, 7
        %v7084 = vsub.s32 3, %v7083
        %v7085 = vrot.slane %v7074, %v7084
        %v7086 = vmul.f32 %v2725, %v7085
        %v7087 = vmul.f32 %v2726, %v7085
        %7088 = vmatprep.subr.mxu0 0.0
        %7089 = vmatpush1.msra.mxu0 %v6699
        %7090 = vmatprep.subr.mxu0 0.0
        %7091 = vmatpush1.msra.mxu0 %v6697
        %7092 = vmatprep.subr.mxu0 0.0
        %7093 = vmatpush1.msra.mxu0 %v6695
        %7094 = vmatprep.subr.mxu0 0.0
        %7095 = vmatpush1.msra.mxu0 %v6693
        %7096 = vmatprep.subr.mxu0 0.0
        %7097 = vmatpush1.msra.mxu0 %v6691
        %7098 = vmatprep.subr.mxu0 0.0
        %7099 = vmatpush1.msra.mxu0 %v6689
        %7100 = vmatprep.subr.mxu0 0.0
        %7101 = vmatpush1.msra.mxu0 %v6687
        %7102 = vmatprep.subr.mxu0 0.0
        %7103 = vmatpush1.msra.mxu0 %v6685
        %7104 = vmatprep.subr.mxu0 0.0
        %7105 = vmatpush1.msra.mxu0 %v6683
        %7106 = vmatprep.subr.mxu0 0.0
        %7107 = vmatpush1.msra.mxu0 %v6681
        %7108 = vmatprep.subr.mxu0 0.0
        %7109 = vmatpush1.msra.mxu0 %v6679
        %7110 = vmatprep.subr.mxu0 0.0
        %7111 = vmatpush1.msra.mxu0 %v6677
        %7112 = vmatprep.subr.mxu0 0.0
        %7113 = vmatpush1.msra.mxu0 %v6675
        %7114 = vmatprep.subr.mxu0 0.0
        %7115 = vmatpush1.msra.mxu0 %v6673
        %7116 = vmatprep.subr.mxu0 0.0
        %7117 = vmatpush1.msra.mxu0 %v6671
        %7118 = vmatprep.subr.mxu0 0.0
        %7119 = vmatpush1.msra.mxu0 %v6669
        %7120 = vmatprep.subr.mxu0 0.0
        %7121 = vmatpush2.msra.mxu0 0.0
        %7122 = vmatprep.subr.mxu0 0.0
        %7123 = vmatpush2.msra.mxu0 0.0
        %7124 = vmatprep.subr.mxu0 0.0
        %7125 = vmatpush2.msra.mxu0 0.0
        %7126 = vmatprep.subr.mxu0 0.0
        %7127 = vmatpush2.msra.mxu0 0.0
        %7128 = vmatprep.subr.mxu0 0.0
        %7129 = vmatpush2.msra.mxu0 0.0
        %7130 = vmatprep.subr.mxu0 0.0
        %7131 = vmatpush2.msra.mxu0 0.0
        %7132 = vmatprep.subr.mxu0 0.0
        %7133 = vmatpush2.msra.mxu0 0.0
        %7134 = vmatprep.subr.mxu0 0.0
        %7135 = vmatpush2.msra.mxu0 0.0
        %7136 = vmatprep.subr.mxu0 0.0
        %7137 = vmatpush2.msra.mxu0 0.0
        %7138 = vmatprep.subr.mxu0 0.0
        %7139 = vmatpush2.msra.mxu0 0.0
        %7140 = vmatprep.subr.mxu0 0.0
        %7141 = vmatpush2.msra.mxu0 0.0
        %7142 = vmatprep.subr.mxu0 0.0
        %7143 = vmatpush2.msra.mxu0 0.0
        %7144 = vmatprep.subr.mxu0 0.0
        %7145 = vmatpush2.msra.mxu0 0.0
        %7146 = vmatprep.subr.mxu0 0.0
        %7147 = vmatpush2.msra.mxu0 0.0
        %7148 = vmatprep.subr.mxu0 0.0
        %7149 = vmatpush2.msra.mxu0 0.0
        %7150 = vmatprep.subr.mxu0 0.0
        %7151 = vmatpush2.msra.mxu0 0.0
        %7152 = vmatprep.mubr.f32.mxu0 0.0
        %7153 = vmatmul.mubr.f32.gmra.mxu0 %v7086
        %v7154 = vpop.f32.mrf.mxu0
        %v7155 = vadd.f32 0.0, %v7154
        %v7156 = vpop.f32.mrf.mxu0
        %7157 = vmatprep.mubr.f32.mxu0 0.0
        %7158 = vmatmul.mubr.f32.gmra.mxu0 %v7087
        %v7159 = vpop.f32.mrf.mxu0
        %v7160 = vadd.f32 0.0, %v7159
        %v7161 = vpop.f32.mrf.mxu0
        %7162 = vdwg.mxu0
        %7165 = vrot.lane.b32.xlu0 %v7155, 96
        %v7166 = vpop.permute.xlu0 %7165
        %7167 = vrot.lane.b32.xlu0 %v7160, 96
        %v7168 = vpop.permute.xlu0 %7167
        %v7171 = vadd.f32 %v7080, %v7166
        %v7172 = vadd.f32 %v7081, %v7168
        %vm7173 = vcmask 1048320
        %7174 = vst.msk [vmem:[#allocation2] sm:$0xff] %vm7173, %v7171
        %7175 = vst.msk [vmem:[#allocation2 + $0x8] sm:$0xff] %vm7173, %v7172
        %v7176 = vpack.c.bf16 %v7051, %v7050
        %v7177 = vpack.c.bf16 %v7053, %v7052
        %v7178 = vpack.c.bf16 %v7055, %v7054
        %v7179 = vpack.c.bf16 %v7057, %v7056
        %v7180 = vpack.c.bf16 %v7059, %v7058
        %v7181 = vpack.c.bf16 %v7061, %v7060
        %v7182 = vpack.c.bf16 %v7063, %v7062
        %v7183 = vpack.c.bf16 %v7065, %v7064
        %v7184 = vld [vmem:[%s10 + $0x30] sm:$0xf]
        %v7185 = vld [vmem:[%s10 + $0x34] sm:$0xf]
        %v7186 = vld [vmem:[%s10 + $0x38] sm:$0xf]
        %v7187 = vld [vmem:[%s10 + $0x3c] sm:$0xf]
        %v7192 = vunpack.c.l.b16 %v7184
        %v7193 = vunpack.c.l.b16 %v7185
        %v7194 = vunpack.c.l.b16 %v7186
        %v7195 = vunpack.c.l.b16 %v7187
        %v7196 = vpack.c.b16 %v7193, %v7192
        %v7197 = vpack.c.b16 %v7195, %v7194
        %v7201 = vsel %vm3973, %v7176, 0
        %v7204 = vsel %vm3973, %v7177, 0
        %v7207 = vsel %vm3973, %v7178, 0
        %v7210 = vsel %vm3973, %v7179, 0
        %v7213 = vsel %vm3973, %v7180, 0
        %v7216 = vsel %vm3973, %v7181, 0
        %v7219 = vsel %vm3973, %v7182, 0
        %v7222 = vsel %vm3973, %v7183, 0
        %7224 = vmatprep.subr.bf16.mxu0 0
        %7225 = vmatpush1.bf16.msra.mxu0 0
        %7226 = vmatprep.subr.bf16.mxu0 0
        %7227 = vmatpush1.bf16.msra.mxu0 0
        %7228 = vmatprep.subr.bf16.mxu0 0
        %7229 = vmatpush1.bf16.msra.mxu0 0
        %7230 = vmatprep.subr.bf16.mxu0 0
        %7231 = vmatpush1.bf16.msra.mxu0 0
        %7232 = vmatprep.subr.bf16.mxu0 0
        %7233 = vmatpush1.bf16.msra.mxu0 0
        %7234 = vmatprep.subr.bf16.mxu0 0
        %7235 = vmatpush1.bf16.msra.mxu0 0
        %7236 = vmatprep.subr.bf16.mxu0 0
        %7237 = vmatpush1.bf16.msra.mxu0 %v7197
        %7238 = vmatprep.subr.bf16.mxu0 0
        %7239 = vmatpush1.bf16.msra.mxu0 %v7196
        %7240 = vmatprep.subr.bf16.mxu0 0
        %7241 = vmatpush2.bf16.msra.mxu0 0
        %7242 = vmatprep.subr.bf16.mxu0 0
        %7243 = vmatpush2.bf16.msra.mxu0 0
        %7244 = vmatprep.subr.bf16.mxu0 0
        %7245 = vmatpush2.bf16.msra.mxu0 0
        %7246 = vmatprep.subr.bf16.mxu0 0
        %7247 = vmatpush2.bf16.msra.mxu0 0
        %7248 = vmatprep.subr.bf16.mxu0 0
        %7249 = vmatpush2.bf16.msra.mxu0 0
        %7250 = vmatprep.subr.bf16.mxu0 0
        %7251 = vmatpush2.bf16.msra.mxu0 0
        %7252 = vmatprep.subr.bf16.mxu0 0
        %7253 = vmatpush2.bf16.msra.mxu0 0
        %7254 = vmatprep.subr.bf16.mxu0 0
        %7255 = vmatpush2.bf16.msra.mxu0 0
        %7256 = vmatprep.mubr.bf16.mxu0 0
        %7257 = vmatmul.mubr.bf16.gmra.mxu0 %v7201
        %v7258 = vpop.f32.mrf.mxu0
        %v7259 = vadd.f32 0.0, %v7258
        %v7260 = vpop.f32.mrf.mxu0
        %v7261 = vpop.f32.mrf.mxu0
        %v7262 = vadd.f32 0.0, %v7261
        %v7263 = vpop.f32.mrf.mxu0
        %7264 = vmatprep.mubr.bf16.mxu0 0
        %7265 = vmatmul.mubr.bf16.gmra.mxu0 %v7204
        %v7266 = vpop.f32.mrf.mxu0
        %v7267 = vadd.f32 0.0, %v7266
        %v7268 = vpop.f32.mrf.mxu0
        %v7269 = vpop.f32.mrf.mxu0
        %v7270 = vadd.f32 0.0, %v7269
        %v7271 = vpop.f32.mrf.mxu0
        %7272 = vmatprep.mubr.bf16.mxu0 0
        %7273 = vmatmul.mubr.bf16.gmra.mxu0 %v7207
        %v7274 = vpop.f32.mrf.mxu0
        %v7275 = vadd.f32 0.0, %v7274
        %v7276 = vpop.f32.mrf.mxu0
        %v7277 = vpop.f32.mrf.mxu0
        %v7278 = vadd.f32 0.0, %v7277
        %v7279 = vpop.f32.mrf.mxu0
        %7280 = vmatprep.mubr.bf16.mxu0 0
        %7281 = vmatmul.mubr.bf16.gmra.mxu0 %v7210
        %v7282 = vpop.f32.mrf.mxu0
        %v7283 = vadd.f32 0.0, %v7282
        %v7284 = vpop.f32.mrf.mxu0
        %v7285 = vpop.f32.mrf.mxu0
        %v7286 = vadd.f32 0.0, %v7285
        %v7287 = vpop.f32.mrf.mxu0
        %7288 = vmatprep.mubr.bf16.mxu0 0
        %7289 = vmatmul.mubr.bf16.gmra.mxu0 %v7213
        %v7290 = vpop.f32.mrf.mxu0
        %v7291 = vadd.f32 0.0, %v7290
        %v7292 = vpop.f32.mrf.mxu0
        %v7293 = vpop.f32.mrf.mxu0
        %v7294 = vadd.f32 0.0, %v7293
        %v7295 = vpop.f32.mrf.mxu0
        %7296 = vmatprep.mubr.bf16.mxu0 0
        %7297 = vmatmul.mubr.bf16.gmra.mxu0 %v7216
        %v7298 = vpop.f32.mrf.mxu0
        %v7299 = vadd.f32 0.0, %v7298
        %v7300 = vpop.f32.mrf.mxu0
        %v7301 = vpop.f32.mrf.mxu0
        %v7302 = vadd.f32 0.0, %v7301
        %v7303 = vpop.f32.mrf.mxu0
        %7304 = vmatprep.mubr.bf16.mxu0 0
        %7305 = vmatmul.mubr.bf16.gmra.mxu0 %v7219
        %v7306 = vpop.f32.mrf.mxu0
        %v7307 = vadd.f32 0.0, %v7306
        %v7308 = vpop.f32.mrf.mxu0
        %v7309 = vpop.f32.mrf.mxu0
        %v7310 = vadd.f32 0.0, %v7309
        %v7311 = vpop.f32.mrf.mxu0
        %7312 = vmatprep.mubr.bf16.mxu0 0
        %7313 = vmatmul.mubr.bf16.gmra.mxu0 %v7222
        %v7314 = vpop.f32.mrf.mxu0
        %v7315 = vadd.f32 0.0, %v7314
        %v7316 = vpop.f32.mrf.mxu0
        %v7317 = vpop.f32.mrf.mxu0
        %v7318 = vadd.f32 0.0, %v7317
        %v7319 = vpop.f32.mrf.mxu0
        %7320 = vdwg.mxu0
        %v7321 = vadd.f32 %v6249, %v7259
        %v7322 = vadd.f32 %v6250, %v7262
        %v7323 = vadd.f32 %v6251, %v7267
        %v7324 = vadd.f32 %v6252, %v7270
        %v7325 = vadd.f32 %v6253, %v7275
        %v7326 = vadd.f32 %v6254, %v7278
        %v7327 = vadd.f32 %v6255, %v7283
        %v7328 = vadd.f32 %v6256, %v7286
        %v7329 = vadd.f32 %v6257, %v7291
        %v7330 = vadd.f32 %v6258, %v7294
        %v7331 = vadd.f32 %v6259, %v7299
        %v7332 = vadd.f32 %v6260, %v7302
        %v7333 = vadd.f32 %v6261, %v7307
        %v7334 = vadd.f32 %v6262, %v7310
        %v7335 = vadd.f32 %v6263, %v7315
        %v7336 = vadd.f32 %v6264, %v7318
        %7337 = vst [vmem:[%s454] sm:$0xff] %v7321
        %7338 = vst [vmem:[%s454 + $0x8] sm:$0xff] %v7322
        %7339 = vst [vmem:[%s454 + $0x10] sm:$0xff] %v7323
        %7340 = vst [vmem:[%s454 + $0x18] sm:$0xff] %v7324
        %7341 = vst [vmem:[%s454 + $0x20] sm:$0xff] %v7325
        %7342 = vst [vmem:[%s454 + $0x28] sm:$0xff] %v7326
        %7343 = vst [vmem:[%s454 + $0x30] sm:$0xff] %v7327
        %7344 = vst [vmem:[%s454 + $0x38] sm:$0xff] %v7328
        %7345 = vst [vmem:[%s454 + $0x40] sm:$0xff] %v7329
        %7346 = vst [vmem:[%s454 + $0x48] sm:$0xff] %v7330
        %7347 = vst [vmem:[%s454 + $0x50] sm:$0xff] %v7331
        %7348 = vst [vmem:[%s454 + $0x58] sm:$0xff] %v7332
        %7349 = vst [vmem:[%s454 + $0x60] sm:$0xff] %v7333
        %7350 = vst [vmem:[%s454 + $0x68] sm:$0xff] %v7334
        %7351 = vst [vmem:[%s454 + $0x70] sm:$0xff] %v7335
        %7352 = vst [vmem:[%s454 + $0x78] sm:$0xff] %v7336
        %s7353 = sand.u32 %s274, 1
        %s7354 = scalar_lea.sflag [#allocation6], %s7353
        %s7355 = sand.u32 %s274, 1
        %s7356 = smul.addr %s7355, 128
        %s7357 = scalar_lea.vmem [#allocation13], %s7356
        // Predicated region
        $region89: #{tpu_custom_call.1} parent=63 // pred_check
          %p7358 = pneg %p284
        $region90: #{tpu_custom_call.1} parent=63 // pred_check_branch
          %7360 = sbr.rel (%p7358) target = $region92
        $region91: #{tpu_custom_call.1} parent=63 // pred_region
          %s7361 = smul.u32 16, %s30
          %s7363 = ssub.s32 2048, 2048
          %7364 = vsyncadd %s7354, %s7363
          %s7365 = smul.addr %s7361, 128
          %s7366 = scalar_lea.hbm %s11, %s7365
          %s7367 = sshll.u32 %s7357, 4
          %s7368 = int_to_ptr.vmem [resolvable:$true] %s7367
          %7373 = dma.vmem_to_hbm [thread:$0]  %s7368, 2048, %s7366, %s7354, 128, 128, 8
        $region92: #{tpu_custom_call.1} parent=63 // pred_fallthru
          _
      $region64: #{tpu_custom_call.1} parent=5 // pred_fallthru
        _
      %p7374 = scmp.le.s32.totalorder 2, %s25
      // Predicated region
      $region93: #{tpu_custom_call.1} parent=5 // pred_check
        %p7375 = pneg %p7374
      $region94: #{tpu_custom_call.1} parent=5 // pred_check_branch
        %7377 = sbr.rel (%p7375) target = $region96
      $region95: #{tpu_custom_call.1} parent=5 // pred_region
        %s7378 = ssub.s32 %s25, 2
        // Predicated region
        $region97: #{tpu_custom_call.1} parent=95 // pred_check
          %p7379 = pneg %p290
        $region98: #{tpu_custom_call.1} parent=95 // pred_check_branch
          %7381 = sbr.rel (%p7379) target = $region100
        $region99: #{tpu_custom_call.1} parent=95 // pred_region
          %s7382 = sand.u32 %s275, 1
          %s7383 = scalar_lea.sflag [#allocation6], %s7382
          %s7384 = sand.u32 %s275, 1
          %s7385 = smul.addr %s7384, 128
          %s7386 = scalar_lea.vmem [#allocation13], %s7385
          %7387 = dma.done %s7383, 2048
        $region100: #{tpu_custom_call.1} parent=95 // pred_fallthru
          _
      $region96: #{tpu_custom_call.1} parent=5 // pred_fallthru
        _
    $region6: #{tpu_custom_call.1} parent=1 // loop_footer
      %s29 = sadd.s32 1, %s25
    $region7: #{tpu_custom_call.1} parent=1 // loop_footer_branch
      %24 = sbr.rel target = $region3
    $region8: #{tpu_custom_call.1} parent=1 // loop_exit
      _
    %7388 = vsyncpa [#allocation5], 1
    %s7389 = scalar_lea.sflag [#allocation5], 1
    %7390 = vsyncpa %s7389, 1
    %7391 = vsyncpa [#allocation8], 1
    %7392 = vsyncpa [#allocation11], 1
    %7393 = vsyncpa [#allocation6], 1
    %s7394 = scalar_lea.sflag [#allocation6], 1
    %7395 = vsyncpa %s7394, 1

</llo_original>
